<compile_context>
chip_gen: v7x
topology: tpu7x:2x2x1
jax: 0.10.0
libtpu: 0.0.40
codegen_flags: <defaults>
</compile_context>

<pallas_src>
import functools

import jax
import jax.numpy as jnp
from jax.experimental import pallas as pl
from jax.experimental.pallas import tpu as pltpu

BN_EPS = 1e-5


def _pick_row_tile(m):
    if m >= 8192:
        return 2048
    if m >= 1024:
        return 1024
    return m          # full-slab block (allowed: equals full array dim)


# ------------------------------------------------------------------ K1: fused 1x1 convs + BN stats

def _mm_stats_kernel(x_ref, w_ref, y_ref, st_ref, *, tm, m_total):
    """y = bf16(x) @ w (f32 acc, stored bf16) + per-tile [sum; sum_sq] partial stats."""
    i = pl.program_id(0)
    y = jnp.dot(x_ref[...].astype(jnp.bfloat16), w_ref[...],
                preferred_element_type=jnp.float32)
    y_ref[...] = y.astype(y_ref.dtype)     # OOB rows of a partial last tile are dropped

    def _stats(v):
        return jnp.concatenate([jnp.sum(v, axis=0, keepdims=True),
                                jnp.sum(v * v, axis=0, keepdims=True)], axis=0)[None]

    if m_total % tm == 0:                  # trace-time: no masking needed at all
        st_ref[...] = _stats(y)
    else:
        last = pl.num_programs(0) - 1

        @pl.when(i < last)                 # interior tiles: plain sums, no VPU mask pass
        def _():
            st_ref[...] = _stats(y)

        @pl.when(i == last)                # only the partial tile pays for row masking
        def _():
            rows = i * tm + jax.lax.broadcasted_iota(jnp.int32, (tm, 1), 0)
            st_ref[...] = _stats(jnp.where(rows < m_total, y, 0.0))


def matmul_with_stats(x2d_f32, w_bf16, *, out_dtype=jnp.bfloat16):
    """(M, K) f32 @ (K, C) bf16 -> (y out_dtype (M, C), col_sum (C,), col_sumsq (C,))."""
    M, K = x2d_f32.shape
    C = w_bf16.shape[1]
    tm = _pick_row_tile(M)
    T = pl.cdiv(M, tm)

    y, st = pl.pallas_call(
        functools.partial(_mm_stats_kernel, tm=tm, m_total=M),
        out_shape=(jax.ShapeDtypeStruct((M, C), out_dtype),
                   jax.ShapeDtypeStruct((T, 2, C), jnp.float32)),
        grid=(T,),
        in_specs=[
            pl.BlockSpec((tm, K), lambda i: (i, 0)),
            pl.BlockSpec((K, C), lambda i: (0, 0)),
        ],
        out_specs=[
            pl.BlockSpec((tm, C), lambda i: (i, 0)),
            pl.BlockSpec((1, 2, C), lambda i: (i, 0, 0)),   # per-tile partials -> parallel grid
        ],
        compiler_params=pltpu.CompilerParams(dimension_semantics=("parallel",)),
    )(x2d_f32, w_bf16)
    stats = jnp.sum(st, axis=0)            # tiny XLA reduce of the partials
    return y, stats[0], stats[1]


# ------------------------------------------------------------------ K2: in-kernel 3x3 conv + BN stats

def _conv3x3_stats_kernel(ap_ref, w_ref, y_ref, st_ref, *, H, W, half):
    """One padded image (1, H+2, W+2, half): 9 shifted-window matmuls into an f32 acc."""
    acc = jnp.zeros((H * W, half), jnp.float32)
    for k in range(9):                      # static unrolled
        dy, dx = k // 3, k % 3
        win = ap_ref[0, dy:dy + H, dx:dx + W, :].reshape(H * W, half)
        acc = acc + jnp.dot(win, w_ref[k], preferred_element_type=jnp.float32)
    y_ref[...] = acc.astype(y_ref.dtype)
    st_ref[...] = jnp.concatenate([jnp.sum(acc, axis=0, keepdims=True),
                                   jnp.sum(acc * acc, axis=0, keepdims=True)],
                                  axis=0)[None]


def conv3x3_with_stats(ap_bf16, w2_bf16, *, out_dtype=jnp.bfloat16):
    """ap: (N, H+2, W+2, half) spatially padded NHWC; w2: (9, half, half) in (dy, dx) order."""
    N, Hp, Wp, half = ap_bf16.shape
    H, W = Hp - 2, Wp - 2
    assert (H * W) % 8 == 0, "H*W must be sublane-aligned"

    y2, st = pl.pallas_call(
        functools.partial(_conv3x3_stats_kernel, H=H, W=W, half=half),
        out_shape=(jax.ShapeDtypeStruct((N * H * W, half), out_dtype),
                   jax.ShapeDtypeStruct((N, 2, half), jnp.float32)),
        grid=(N,),
        in_specs=[
            pl.BlockSpec((1, Hp, Wp, half), lambda n: (n, 0, 0, 0)),
            pl.BlockSpec((9, half, half), lambda n: (0, 0, 0)),
        ],
        out_specs=[
            pl.BlockSpec((H * W, half), lambda n: (n, 0)),
            pl.BlockSpec((1, 2, half), lambda n: (n, 0, 0)),
        ],
        compiler_params=pltpu.CompilerParams(dimension_semantics=("parallel",)),
    )(ap_bf16, w2_bf16)
    stats = jnp.sum(st, axis=0)
    return y2, stats[0], stats[1]


# ------------------------------------------------------------------ K3: fused epilogue

def _finalize_kernel(y2_ref, y1_ref, x_ref, s2_ref, b2_ref, sd_ref, bd_ref, o_ref,
                     *, half, pre_sliced):
    """out[:, :half] = BN2(y2) + x[:, :half];  out[:, half:] = relu(BNd(y1_dense))."""
    y1d = y1_ref[...] if pre_sliced else y1_ref[...][:, half:]
    xr = x_ref[...] if pre_sliced else x_ref[...][:, :half]
    r = y2_ref[...].astype(jnp.float32) * s2_ref[...] + b2_ref[...] + xr
    d = jnp.maximum(y1d.astype(jnp.float32) * sd_ref[...] + bd_ref[...], 0.0)
    o_ref[...] = jnp.concatenate([r, d], axis=-1)


def finalize_block(y2_2d, y1_2d, x2d, s2, b2, sd, bd, half):
    M, Cin = x2d.shape
    tm = _pick_row_tile(M)
    T = pl.cdiv(M, tm)

    # DMA only the columns K3 actually uses when `half` is lane-aligned; otherwise fall back
    # to full-width blocks + in-kernel slicing (the tiny test-shape path, half=32).
    pre_sliced = (half % 128 == 0) and (Cin >= half)
    if pre_sliced:
        y1_spec = pl.BlockSpec((tm, half), lambda i: (i, 1))   # dense half only
        x_spec = pl.BlockSpec((tm, half), lambda i: (i, 0))    # first `half` channels only
    else:
        y1_spec = pl.BlockSpec((tm, 2 * half), lambda i: (i, 0))
        x_spec = pl.BlockSpec((tm, Cin), lambda i: (i, 0))

    vec = lambda a: a.reshape(1, half)
    return pl.pallas_call(
        functools.partial(_finalize_kernel, half=half, pre_sliced=pre_sliced),
        out_shape=jax.ShapeDtypeStruct((M, 2 * half), jnp.float32),
        grid=(T,),
        in_specs=[
            pl.BlockSpec((tm, half), lambda i: (i, 0)),
            y1_spec,
            x_spec,
            pl.BlockSpec((1, half), lambda i: (0, 0)),
            pl.BlockSpec((1, half), lambda i: (0, 0)),
            pl.BlockSpec((1, half), lambda i: (0, 0)),
            pl.BlockSpec((1, half), lambda i: (0, 0)),
        ],
        out_specs=pl.BlockSpec((tm, 2 * half), lambda i: (i, 0)),
        compiler_params=pltpu.CompilerParams(dimension_semantics=("parallel",)),
    )(y2_2d, y1_2d, x2d, vec(s2), vec(b2), vec(sd), vec(bd))


# ------------------------------------------------------------------ glue

def _bn_scale_shift(col_sum, col_sumsq, m, gamma, beta, eps=BN_EPS):
    """Training-mode (batch-statistics, biased variance) BN folded to scale/shift.
    The conv bias cancels exactly inside `shift`, so the matmul kernels never add it.
    NOTE: E[x^2]-E[x]^2 in f32 is fine at these magnitudes (|mean| << std); switch to
    per-tile centered partials if the tolerance ever tightens."""
    mean = col_sum / m
    var = jnp.maximum(col_sumsq / m - mean * mean, 0.0)
    scale = gamma * jax.lax.rsqrt(var + eps)
    shift = beta - scale * mean
    return scale, shift


# ------------------------------------------------------------------ parameters

def init_params(key, in_channels, out_channels):
    half = out_channels // 2
    ks = iter(jax.random.split(key, 16))

    def conv_w(co, ci, k):
        return 0.1 * jax.random.normal(next(ks), (co, ci, k, k), jnp.float32)

    def bn(c):
        return (1.0 + 0.1 * jax.random.normal(next(ks), (c,), jnp.float32),
                0.1 * jax.random.normal(next(ks), (c,), jnp.float32))

    def bias(c):
        return 0.1 * jax.random.normal(next(ks), (c,), jnp.float32)

    return {
        "rw1": conv_w(half, in_channels, 1), "rb1": bias(half), "rbn1": bn(half),
        "rw2": conv_w(half, half, 3),        "rb2": bias(half), "rbn2": bn(half),
        "dw1": conv_w(half, in_channels, 1), "db1": bias(half), "dbn1": bn(half),
    }


# ------------------------------------------------------------------ forward

def dpn_block_forward(x_nchw, p):
    half = p["rw1"].shape[0]
    x = jnp.transpose(x_nchw, (0, 2, 3, 1)).astype(jnp.float32)   # -> NHWC
    N, H, W, Cin = x.shape
    assert Cin >= half, "module requires in_channels >= out_channels // 2"
    M = N * H * W
    x2d = x.reshape(M, Cin)

    # ---- K1: fused 1x1 convs of both branches (lane-dense 2*half output) + BN1 partial stats.
    w1 = jnp.concatenate([p["rw1"][:, :, 0, 0].T, p["dw1"][:, :, 0, 0].T],
                         axis=1).astype(jnp.bfloat16)              # (Cin, 2*half)
    y1, s1, q1 = matmul_with_stats(x2d, w1)                        # y1 bf16 (M, 2*half)
    g_cat = jnp.concatenate([p["rbn1"][0], p["dbn1"][0]])
    b_cat = jnp.concatenate([p["rbn1"][1], p["dbn1"][1]])
    scale1, shift1 = _bn_scale_shift(s1, q1, M, g_cat, b_cat)

    # ---- residual branch: BN1 affine + ReLU folded into the single spatial-pad pass
    # (XLA fuses the elementwise producer into the pad) -> (N, H+2, W+2, half) bf16.
    a = jnp.maximum(y1[:, :half].astype(jnp.float32) * scale1[:half] + shift1[:half], 0.0)
    ap = jnp.pad(a.reshape(N, H, W, half),
                 ((0, 0), (1, 1), (1, 1), (0, 0))).astype(jnp.bfloat16)
    # TODO(synk): for very large H*W, tile H with a 1-row halo (manual make_async_copy of
    # shifted rows into VMEM scratch) instead of one whole padded image per grid step.

    # ---- K2: 3x3 conv as nine accumulated window matmuls + per-image BN2 partial stats.
    w2 = jnp.transpose(p["rw2"], (2, 3, 1, 0)).reshape(9, half, half).astype(jnp.bfloat16)
    y2, s2, q2 = conv3x3_with_stats(ap, w2)                        # y2 bf16 (M, half)
    scale2, shift2 = _bn_scale_shift(s2, q2, M, *p["rbn2"])

    # ---- K3: fused finalize -> concat([BN2(res3x3) + x[:, :half], relu(BNd(dense))]).
    out2d = finalize_block(y2, y1, x2d, scale2, shift2,
                           scale1[half:], shift1[half:], half)
    return jnp.transpose(out2d.reshape(N, H, W, 2 * half), (0, 3, 1, 2))   # -> NCHW


# ------------------------------------------------------------------ pure-JAX reference

def reference_forward(x_nchw, p):
    """Reference with matched bf16 matmul operands and f32 conv outputs (biases included;
    they cancel inside batch-statistics BatchNorm, which the Pallas path exploits)."""
    half = p["rw1"].shape[0]
    x = jnp.transpose(x_nchw, (0, 2, 3, 1)).astype(jnp.float32)

    def conv(inp, w_oihw, b, pad):
        w = jnp.transpose(w_oihw, (2, 3, 1, 0)).astype(jnp.bfloat16)
        y = jax.lax.conv_general_dilated(
            inp.astype(jnp.bfloat16), w, (1, 1), [(pad, pad), (pad, pad)],
            dimension_numbers=("NHWC", "HWIO", "NHWC"),
            preferred_element_type=jnp.float32)
        return y + b

    def bn(v, gb, eps=BN_EPS):
        g, b = gb
        m = jnp.mean(v, axis=(0, 1, 2))
        var = jnp.mean((v - m) ** 2, axis=(0, 1, 2))
        return (v - m) * jax.lax.rsqrt(var + eps) * g + b

    r = jnp.maximum(bn(conv(x, p["rw1"], p["rb1"], 0), p["rbn1"]), 0.0)
    r = bn(conv(r, p["rw2"], p["rb2"], 1), p["rbn2"])
    d = jnp.maximum(bn(conv(x, p["dw1"], p["db1"], 0), p["dbn1"]), 0.0)
    out = jnp.concatenate([r + x[..., :half], d], axis=-1)
    return jnp.transpose(out, (0, 3, 1, 2))


# ------------------------------------------------------------------ main

if __name__ == "__main__":
    key = jax.random.PRNGKey(0)
    pkey, xkey = jax.random.split(key)

    N, Cin, H, W = 2, 64, 16, 16      # DPNBlock(in_channels=64, out_channels=64)
    Cout = 64
    params = init_params(pkey, Cin, Cout)
    x = jax.random.normal(xkey, (N, Cin, H, W), jnp.float32)   # NCHW like PyTorch

    fwd = jax.jit(dpn_block_forward)
    y = fwd(x, params)
    jax.block_until_ready(y)

    assert y.shape == (N, Cout, H, W), y.shape
    assert bool(jnp.all(jnp.isfinite(y)))

    y_ref = jax.jit(reference_forward)(x, params)
    err = float(jnp.max(jnp.abs(y - y_ref)))
    # Tolerance accounts for bf16-stored y1/y2 intermediates (deliberate bandwidth
    # optimization); the reference keeps f32 conv outputs.
    assert err < 3e-2, f"max abs err vs reference = {err}"
    print("KERNEL_OK")
</pallas_src>

<mosaic_0001>
module attributes {stable_mosaic.version = 11 : i64} {
  func.func @_mm_stats_kernel(%arg0: i32, %arg1: memref<512x64xf32, #tpu.memory_space<vmem>>, %arg2: memref<64x64xbf16, #tpu.memory_space<vmem>>, %arg3: memref<512x64xbf16, #tpu.memory_space<vmem>>, %arg4: memref<1x2x64xf32, #tpu.memory_space<vmem>>) attributes {dimension_semantics = [#tpu.dimension_semantics<parallel>], iteration_bounds = array<i64: 1>, scalar_prefetch = 0 : i64, scratch_operands = 0 : i64, tpu.core_type = #tpu.core_type<tc>, window_params = [{transform_indices = @transform_0, window_bounds = array<i64: 512, 64>}, {pipeline_mode = #tpu.pipeline_mode<synchronous>, transform_indices = @transform_1, window_bounds = array<i64: 64, 64>}, {transform_indices = @transform_2, window_bounds = array<i64: 512, 64>}, {transform_indices = @transform_3, window_bounds = array<i64: 1, 2, 64>}]} {
    %c0 = arith.constant 0 : index
    %c0_0 = arith.constant 0 : index
    %0 = vector.load %arg1[%c0, %c0_0] : memref<512x64xf32, #tpu.memory_space<vmem>>, vector<512x64xf32>
    %1 = arith.truncf %0 : vector<512x64xf32> to vector<512x64xbf16>
    %c0_1 = arith.constant 0 : index
    %c0_2 = arith.constant 0 : index
    %2 = vector.load %arg2[%c0_1, %c0_2] : memref<64x64xbf16, #tpu.memory_space<vmem>>, vector<64x64xbf16>
    %cst = arith.constant dense<0.000000e+00> : vector<512x64xf32>
    %3 = tpu.matmul %1, %2, %cst {dimension_numbers = #tpu.dot_dimension_numbers<[1], [0], [0], [1], [0, 0, 1, 1], [], []>} : vector<512x64xbf16>, vector<64x64xbf16>, vector<512x64xf32> -> vector<512x64xf32>
    %4 = arith.truncf %3 : vector<512x64xf32> to vector<512x64xbf16>
    %c0_3 = arith.constant 0 : index
    %c0_4 = arith.constant 0 : index
    %5 = vector.load %arg3[%c0_3, %c0_4] : memref<512x64xbf16, #tpu.memory_space<vmem>>, vector<512x64xbf16>
    tpu.vector_store %arg3[%c0_3, %c0_4], %4 {strides = array<i32>} : memref<512x64xbf16, #tpu.memory_space<vmem>>, vector<512x64xbf16>,
    %cst_5 = arith.constant dense<0.000000e+00> : vector<64xf32>
    %6 = vector.multi_reduction <add>, %3, %cst_5 [0] : vector<512x64xf32> to vector<64xf32>
    %7 = vector.shape_cast %6 : vector<64xf32> to vector<1x64xf32>
    %8 = arith.mulf %3, %3 : vector<512x64xf32>
    %cst_6 = arith.constant dense<0.000000e+00> : vector<64xf32>
    %9 = vector.multi_reduction <add>, %8, %cst_6 [0] : vector<512x64xf32> to vector<64xf32>
    %10 = vector.shape_cast %9 : vector<64xf32> to vector<1x64xf32>
    %11 = tpu.concatenate %7, %10 in 0 : vector<1x64xf32>, vector<1x64xf32> -> vector<2x64xf32>
    %12 = vector.shape_cast %11 : vector<2x64xf32> to vector<1x2x64xf32>
    %c0_7 = arith.constant 0 : index
    %c0_8 = arith.constant 0 : index
    %c0_9 = arith.constant 0 : index
    %13 = vector.load %arg4[%c0_7, %c0_8, %c0_9] : memref<1x2x64xf32, #tpu.memory_space<vmem>>, vector<1x2x64xf32>
    tpu.vector_store %arg4[%c0_7, %c0_8, %c0_9], %12 {strides = array<i32>} : memref<1x2x64xf32, #tpu.memory_space<vmem>>, vector<1x2x64xf32>,
    return
  }
  func.func @transform_0(%arg0: i32) -> (i32, i32) {
    %c0_i32 = arith.constant 0 : i32
    %c0_i32_0 = arith.constant 0 : i32
    return %arg0, %c0_i32 : i32, i32
  }
  func.func @transform_1(%arg0: i32) -> (i32, i32) {
    %c0_i32 = arith.constant 0 : i32
    %c0_i32_0 = arith.constant 0 : i32
    %c0_i32_1 = arith.constant 0 : i32
    return %c0_i32, %c0_i32_0 : i32, i32
  }
  func.func @transform_2(%arg0: i32) -> (i32, i32) {
    %c0_i32 = arith.constant 0 : i32
    %c0_i32_0 = arith.constant 0 : i32
    return %arg0, %c0_i32 : i32, i32
  }
  func.func @transform_3(%arg0: i32) -> (i32, i32, i32) {
    %c0_i32 = arith.constant 0 : i32
    %c0_i32_0 = arith.constant 0 : i32
    %c0_i32_1 = arith.constant 0 : i32
    return %arg0, %c0_i32, %c0_i32_0 : i32, i32, i32
  }
}

module attributes {stable_mosaic.version = 11 : i64} {
  func.func @_conv3x3_stats_kernel(%arg0: i32, %arg1: memref<1x18x18x32xbf16, #tpu.memory_space<vmem>>, %arg2: memref<9x32x32xbf16, #tpu.memory_space<vmem>>, %arg3: memref<256x32xbf16, #tpu.memory_space<vmem>>, %arg4: memref<1x2x32xf32, #tpu.memory_space<vmem>>) attributes {dimension_semantics = [#tpu.dimension_semantics<parallel>], iteration_bounds = array<i64: 2>, scalar_prefetch = 0 : i64, scratch_operands = 0 : i64, tpu.core_type = #tpu.core_type<tc>, window_params = [{transform_indices = @transform_0, window_bounds = array<i64: 1, 18, 18, 32>}, {pipeline_mode = #tpu.pipeline_mode<synchronous>, transform_indices = @transform_1, window_bounds = array<i64: 9, 32, 32>}, {transform_indices = @transform_2, window_bounds = array<i64: 256, 32>}, {transform_indices = @transform_3, window_bounds = array<i64: 1, 2, 32>}]} {
    %cst = arith.constant 0.000000e+00 : f32
    %0 = vector.broadcast %cst : f32 to vector<256x32xf32>
    %c0 = arith.constant 0 : index
    %c0_0 = arith.constant 0 : index
    %c0_1 = arith.constant 0 : index
    %c0_2 = arith.constant 0 : index
    %1 = vector.load %arg1[%c0, %c0_0, %c0_1, %c0_2] : memref<1x18x18x32xbf16, #tpu.memory_space<vmem>>, vector<1x16x16x32xbf16>
    %2 = vector.shape_cast %1 : vector<1x16x16x32xbf16> to vector<16x16x32xbf16>
    %3 = vector.shape_cast %2 : vector<16x16x32xbf16> to vector<256x32xbf16>
    %c0_3 = arith.constant 0 : index
    %c0_4 = arith.constant 0 : index
    %c0_5 = arith.constant 0 : index
    %4 = vector.load %arg2[%c0_3, %c0_4, %c0_5] : memref<9x32x32xbf16, #tpu.memory_space<vmem>>, vector<1x32x32xbf16>
    %5 = vector.shape_cast %4 : vector<1x32x32xbf16> to vector<32x32xbf16>
    %cst_6 = arith.constant dense<0.000000e+00> : vector<256x32xf32>
    %6 = tpu.matmul %3, %5, %cst_6 {dimension_numbers = #tpu.dot_dimension_numbers<[1], [0], [0], [1], [0, 0, 1, 1], [], []>} : vector<256x32xbf16>, vector<32x32xbf16>, vector<256x32xf32> -> vector<256x32xf32>
    %7 = arith.addf %0, %6 : vector<256x32xf32>
    %c0_7 = arith.constant 0 : index
    %c0_8 = arith.constant 0 : index
    %c1 = arith.constant 1 : index
    %c0_9 = arith.constant 0 : index
    %8 = vector.load %arg1[%c0_7, %c0_8, %c1, %c0_9] : memref<1x18x18x32xbf16, #tpu.memory_space<vmem>>, vector<1x16x16x32xbf16>
    %9 = vector.shape_cast %8 : vector<1x16x16x32xbf16> to vector<16x16x32xbf16>
    %10 = vector.shape_cast %9 : vector<16x16x32xbf16> to vector<256x32xbf16>
    %c1_10 = arith.constant 1 : index
    %c0_11 = arith.constant 0 : index
    %c0_12 = arith.constant 0 : index
    %11 = vector.load %arg2[%c1_10, %c0_11, %c0_12] : memref<9x32x32xbf16, #tpu.memory_space<vmem>>, vector<1x32x32xbf16>
    %12 = vector.shape_cast %11 : vector<1x32x32xbf16> to vector<32x32xbf16>
    %cst_13 = arith.constant dense<0.000000e+00> : vector<256x32xf32>
    %13 = tpu.matmul %10, %12, %cst_13 {dimension_numbers = #tpu.dot_dimension_numbers<[1], [0], [0], [1], [0, 0, 1, 1], [], []>} : vector<256x32xbf16>, vector<32x32xbf16>, vector<256x32xf32> -> vector<256x32xf32>
    %14 = arith.addf %7, %13 : vector<256x32xf32>
    %c0_14 = arith.constant 0 : index
    %c0_15 = arith.constant 0 : index
    %c2 = arith.constant 2 : index
    %c0_16 = arith.constant 0 : index
    %15 = vector.load %arg1[%c0_14, %c0_15, %c2, %c0_16] : memref<1x18x18x32xbf16, #tpu.memory_space<vmem>>, vector<1x16x16x32xbf16>
    %16 = vector.shape_cast %15 : vector<1x16x16x32xbf16> to vector<16x16x32xbf16>
    %17 = vector.shape_cast %16 : vector<16x16x32xbf16> to vector<256x32xbf16>
    %c2_17 = arith.constant 2 : index
    %c0_18 = arith.constant 0 : index
    %c0_19 = arith.constant 0 : index
    %18 = vector.load %arg2[%c2_17, %c0_18, %c0_19] : memref<9x32x32xbf16, #tpu.memory_space<vmem>>, vector<1x32x32xbf16>
    %19 = vector.shape_cast %18 : vector<1x32x32xbf16> to vector<32x32xbf16>
    %cst_20 = arith.constant dense<0.000000e+00> : vector<256x32xf32>
    %20 = tpu.matmul %17, %19, %cst_20 {dimension_numbers = #tpu.dot_dimension_numbers<[1], [0], [0], [1], [0, 0, 1, 1], [], []>} : vector<256x32xbf16>, vector<32x32xbf16>, vector<256x32xf32> -> vector<256x32xf32>
    %21 = arith.addf %14, %20 : vector<256x32xf32>
    %c0_21 = arith.constant 0 : index
    %c1_22 = arith.constant 1 : index
    %c0_23 = arith.constant 0 : index
    %c0_24 = arith.constant 0 : index
    %22 = vector.load %arg1[%c0_21, %c1_22, %c0_23, %c0_24] : memref<1x18x18x32xbf16, #tpu.memory_space<vmem>>, vector<1x16x16x32xbf16>
    %23 = vector.shape_cast %22 : vector<1x16x16x32xbf16> to vector<16x16x32xbf16>
    %24 = vector.shape_cast %23 : vector<16x16x32xbf16> to vector<256x32xbf16>
    %c3 = arith.constant 3 : index
    %c0_25 = arith.constant 0 : index
    %c0_26 = arith.constant 0 : index
    %25 = vector.load %arg2[%c3, %c0_25, %c0_26] : memref<9x32x32xbf16, #tpu.memory_space<vmem>>, vector<1x32x32xbf16>
    %26 = vector.shape_cast %25 : vector<1x32x32xbf16> to vector<32x32xbf16>
    %cst_27 = arith.constant dense<0.000000e+00> : vector<256x32xf32>
    %27 = tpu.matmul %24, %26, %cst_27 {dimension_numbers = #tpu.dot_dimension_numbers<[1], [0], [0], [1], [0, 0, 1, 1], [], []>} : vector<256x32xbf16>, vector<32x32xbf16>, vector<256x32xf32> -> vector<256x32xf32>
    %28 = arith.addf %21, %27 : vector<256x32xf32>
    %c0_28 = arith.constant 0 : index
    %c1_29 = arith.constant 1 : index
    %c1_30 = arith.constant 1 : index
    %c0_31 = arith.constant 0 : index
    %29 = vector.load %arg1[%c0_28, %c1_29, %c1_30, %c0_31] : memref<1x18x18x32xbf16, #tpu.memory_space<vmem>>, vector<1x16x16x32xbf16>
    %30 = vector.shape_cast %29 : vector<1x16x16x32xbf16> to vector<16x16x32xbf16>
    %31 = vector.shape_cast %30 : vector<16x16x32xbf16> to vector<256x32xbf16>
    %c4 = arith.constant 4 : index
    %c0_32 = arith.constant 0 : index
    %c0_33 = arith.constant 0 : index
    %32 = vector.load %arg2[%c4, %c0_32, %c0_33] : memref<9x32x32xbf16, #tpu.memory_space<vmem>>, vector<1x32x32xbf16>
    %33 = vector.shape_cast %32 : vector<1x32x32xbf16> to vector<32x32xbf16>
    %cst_34 = arith.constant dense<0.000000e+00> : vector<256x32xf32>
    %34 = tpu.matmul %31, %33, %cst_34 {dimension_numbers = #tpu.dot_dimension_numbers<[1], [0], [0], [1], [0, 0, 1, 1], [], []>} : vector<256x32xbf16>, vector<32x32xbf16>, vector<256x32xf32> -> vector<256x32xf32>
    %35 = arith.addf %28, %34 : vector<256x32xf32>
    %c0_35 = arith.constant 0 : index
    %c1_36 = arith.constant 1 : index
    %c2_37 = arith.constant 2 : index
    %c0_38 = arith.constant 0 : index
    %36 = vector.load %arg1[%c0_35, %c1_36, %c2_37, %c0_38] : memref<1x18x18x32xbf16, #tpu.memory_space<vmem>>, vector<1x16x16x32xbf16>
    %37 = vector.shape_cast %36 : vector<1x16x16x32xbf16> to vector<16x16x32xbf16>
    %38 = vector.shape_cast %37 : vector<16x16x32xbf16> to vector<256x32xbf16>
    %c5 = arith.constant 5 : index
    %c0_39 = arith.constant 0 : index
    %c0_40 = arith.constant 0 : index
    %39 = vector.load %arg2[%c5, %c0_39, %c0_40] : memref<9x32x32xbf16, #tpu.memory_space<vmem>>, vector<1x32x32xbf16>
    %40 = vector.shape_cast %39 : vector<1x32x32xbf16> to vector<32x32xbf16>
    %cst_41 = arith.constant dense<0.000000e+00> : vector<256x32xf32>
    %41 = tpu.matmul %38, %40, %cst_41 {dimension_numbers = #tpu.dot_dimension_numbers<[1], [0], [0], [1], [0, 0, 1, 1], [], []>} : vector<256x32xbf16>, vector<32x32xbf16>, vector<256x32xf32> -> vector<256x32xf32>
    %42 = arith.addf %35, %41 : vector<256x32xf32>
    %c0_42 = arith.constant 0 : index
    %c2_43 = arith.constant 2 : index
    %c0_44 = arith.constant 0 : index
    %c0_45 = arith.constant 0 : index
    %43 = vector.load %arg1[%c0_42, %c2_43, %c0_44, %c0_45] : memref<1x18x18x32xbf16, #tpu.memory_space<vmem>>, vector<1x16x16x32xbf16>
    %44 = vector.shape_cast %43 : vector<1x16x16x32xbf16> to vector<16x16x32xbf16>
    %45 = vector.shape_cast %44 : vector<16x16x32xbf16> to vector<256x32xbf16>
    %c6 = arith.constant 6 : index
    %c0_46 = arith.constant 0 : index
    %c0_47 = arith.constant 0 : index
    %46 = vector.load %arg2[%c6, %c0_46, %c0_47] : memref<9x32x32xbf16, #tpu.memory_space<vmem>>, vector<1x32x32xbf16>
    %47 = vector.shape_cast %46 : vector<1x32x32xbf16> to vector<32x32xbf16>
    %cst_48 = arith.constant dense<0.000000e+00> : vector<256x32xf32>
    %48 = tpu.matmul %45, %47, %cst_48 {dimension_numbers = #tpu.dot_dimension_numbers<[1], [0], [0], [1], [0, 0, 1, 1], [], []>} : vector<256x32xbf16>, vector<32x32xbf16>, vector<256x32xf32> -> vector<256x32xf32>
    %49 = arith.addf %42, %48 : vector<256x32xf32>
    %c0_49 = arith.constant 0 : index
    %c2_50 = arith.constant 2 : index
    %c1_51 = arith.constant 1 : index
    %c0_52 = arith.constant 0 : index
    %50 = vector.load %arg1[%c0_49, %c2_50, %c1_51, %c0_52] : memref<1x18x18x32xbf16, #tpu.memory_space<vmem>>, vector<1x16x16x32xbf16>
    %51 = vector.shape_cast %50 : vector<1x16x16x32xbf16> to vector<16x16x32xbf16>
    %52 = vector.shape_cast %51 : vector<16x16x32xbf16> to vector<256x32xbf16>
    %c7 = arith.constant 7 : index
    %c0_53 = arith.constant 0 : index
    %c0_54 = arith.constant 0 : index
    %53 = vector.load %arg2[%c7, %c0_53, %c0_54] : memref<9x32x32xbf16, #tpu.memory_space<vmem>>, vector<1x32x32xbf16>
    %54 = vector.shape_cast %53 : vector<1x32x32xbf16> to vector<32x32xbf16>
    %cst_55 = arith.constant dense<0.000000e+00> : vector<256x32xf32>
    %55 = tpu.matmul %52, %54, %cst_55 {dimension_numbers = #tpu.dot_dimension_numbers<[1], [0], [0], [1], [0, 0, 1, 1], [], []>} : vector<256x32xbf16>, vector<32x32xbf16>, vector<256x32xf32> -> vector<256x32xf32>
    %56 = arith.addf %49, %55 : vector<256x32xf32>
    %c0_56 = arith.constant 0 : index
    %c2_57 = arith.constant 2 : index
    %c2_58 = arith.constant 2 : index
    %c0_59 = arith.constant 0 : index
    %57 = vector.load %arg1[%c0_56, %c2_57, %c2_58, %c0_59] : memref<1x18x18x32xbf16, #tpu.memory_space<vmem>>, vector<1x16x16x32xbf16>
    %58 = vector.shape_cast %57 : vector<1x16x16x32xbf16> to vector<16x16x32xbf16>
    %59 = vector.shape_cast %58 : vector<16x16x32xbf16> to vector<256x32xbf16>
    %c8 = arith.constant 8 : index
    %c0_60 = arith.constant 0 : index
    %c0_61 = arith.constant 0 : index
    %60 = vector.load %arg2[%c8, %c0_60, %c0_61] : memref<9x32x32xbf16, #tpu.memory_space<vmem>>, vector<1x32x32xbf16>
    %61 = vector.shape_cast %60 : vector<1x32x32xbf16> to vector<32x32xbf16>
    %cst_62 = arith.constant dense<0.000000e+00> : vector<256x32xf32>
    %62 = tpu.matmul %59, %61, %cst_62 {dimension_numbers = #tpu.dot_dimension_numbers<[1], [0], [0], [1], [0, 0, 1, 1], [], []>} : vector<256x32xbf16>, vector<32x32xbf16>, vector<256x32xf32> -> vector<256x32xf32>
    %63 = arith.addf %56, %62 : vector<256x32xf32>
    %64 = arith.truncf %63 : vector<256x32xf32> to vector<256x32xbf16>
    %c0_63 = arith.constant 0 : index
    %c0_64 = arith.constant 0 : index
    %65 = vector.load %arg3[%c0_63, %c0_64] : memref<256x32xbf16, #tpu.memory_space<vmem>>, vector<256x32xbf16>
    tpu.vector_store %arg3[%c0_63, %c0_64], %64 {strides = array<i32>} : memref<256x32xbf16, #tpu.memory_space<vmem>>, vector<256x32xbf16>,
    %cst_65 = arith.constant dense<0.000000e+00> : vector<32xf32>
    %66 = vector.multi_reduction <add>, %63, %cst_65 [0] : vector<256x32xf32> to vector<32xf32>
    %67 = vector.shape_cast %66 : vector<32xf32> to vector<1x32xf32>
    %68 = arith.mulf %63, %63 : vector<256x32xf32>
    %cst_66 = arith.constant dense<0.000000e+00> : vector<32xf32>
    %69 = vector.multi_reduction <add>, %68, %cst_66 [0] : vector<256x32xf32> to vector<32xf32>
    %70 = vector.shape_cast %69 : vector<32xf32> to vector<1x32xf32>
    %71 = tpu.concatenate %67, %70 in 0 : vector<1x32xf32>, vector<1x32xf32> -> vector<2x32xf32>
    %72 = vector.shape_cast %71 : vector<2x32xf32> to vector<1x2x32xf32>
    %c0_67 = arith.constant 0 : index
    %c0_68 = arith.constant 0 : index
    %c0_69 = arith.constant 0 : index
    %73 = vector.load %arg4[%c0_67, %c0_68, %c0_69] : memref<1x2x32xf32, #tpu.memory_space<vmem>>, vector<1x2x32xf32>
    tpu.vector_store %arg4[%c0_67, %c0_68, %c0_69], %72 {strides = array<i32>} : memref<1x2x32xf32, #tpu.memory_space<vmem>>, vector<1x2x32xf32>,
    return
  }
  func.func @transform_0(%arg0: i32) -> (i32, i32, i32, i32) {
    %c0_i32 = arith.constant 0 : i32
    %c0_i32_0 = arith.constant 0 : i32
    %c0_i32_1 = arith.constant 0 : i32
    %c0_i32_2 = arith.constant 0 : i32
    return %arg0, %c0_i32, %c0_i32_0, %c0_i32_1 : i32, i32, i32, i32
  }
  func.func @transform_1(%arg0: i32) -> (i32, i32, i32) {
    %c0_i32 = arith.constant 0 : i32
    %c0_i32_0 = arith.constant 0 : i32
    %c0_i32_1 = arith.constant 0 : i32
    %c0_i32_2 = arith.constant 0 : i32
    return %c0_i32, %c0_i32_0, %c0_i32_1 : i32, i32, i32
  }
  func.func @transform_2(%arg0: i32) -> (i32, i32) {
    %c0_i32 = arith.constant 0 : i32
    %c0_i32_0 = arith.constant 0 : i32
    return %arg0, %c0_i32 : i32, i32
  }
  func.func @transform_3(%arg0: i32) -> (i32, i32, i32) {
    %c0_i32 = arith.constant 0 : i32
    %c0_i32_0 = arith.constant 0 : i32
    %c0_i32_1 = arith.constant 0 : i32
    return %arg0, %c0_i32, %c0_i32_0 : i32, i32, i32
  }
}

module attributes {stable_mosaic.version = 11 : i64} {
  func.func @_finalize_kernel(%arg0: i32, %arg1: memref<512x32xbf16, #tpu.memory_space<vmem>>, %arg2: memref<512x64xbf16, #tpu.memory_space<vmem>>, %arg3: memref<512x64xf32, #tpu.memory_space<vmem>>, %arg4: memref<1x32xf32, #tpu.memory_space<vmem>>, %arg5: memref<1x32xf32, #tpu.memory_space<vmem>>, %arg6: memref<1x32xf32, #tpu.memory_space<vmem>>, %arg7: memref<1x32xf32, #tpu.memory_space<vmem>>, %arg8: memref<512x64xf32, #tpu.memory_space<vmem>>) attributes {dimension_semantics = [#tpu.dimension_semantics<parallel>], iteration_bounds = array<i64: 1>, scalar_prefetch = 0 : i64, scratch_operands = 0 : i64, tpu.core_type = #tpu.core_type<tc>, window_params = [{transform_indices = @transform_0, window_bounds = array<i64: 512, 32>}, {transform_indices = @transform_1, window_bounds = array<i64: 512, 64>}, {transform_indices = @transform_2, window_bounds = array<i64: 512, 64>}, {pipeline_mode = #tpu.pipeline_mode<synchronous>, transform_indices = @transform_3, window_bounds = array<i64: 1, 32>}, {pipeline_mode = #tpu.pipeline_mode<synchronous>, transform_indices = @transform_4, window_bounds = array<i64: 1, 32>}, {pipeline_mode = #tpu.pipeline_mode<synchronous>, transform_indices = @transform_5, window_bounds = array<i64: 1, 32>}, {pipeline_mode = #tpu.pipeline_mode<synchronous>, transform_indices = @transform_6, window_bounds = array<i64: 1, 32>}, {transform_indices = @transform_7, window_bounds = array<i64: 512, 64>}]} {
    %c0 = arith.constant 0 : index
    %c0_0 = arith.constant 0 : index
    %0 = vector.load %arg2[%c0, %c0_0] : memref<512x64xbf16, #tpu.memory_space<vmem>>, vector<512x64xbf16>
    %1 = vector.extract_strided_slice %0 {offsets = [0, 32], sizes = [512, 32], strides = [1, 1]} : vector<512x64xbf16> to vector<512x32xbf16>
    %c0_1 = arith.constant 0 : index
    %c0_2 = arith.constant 0 : index
    %2 = vector.load %arg3[%c0_1, %c0_2] : memref<512x64xf32, #tpu.memory_space<vmem>>, vector<512x64xf32>
    %3 = vector.extract_strided_slice %2 {offsets = [0, 0], sizes = [512, 32], strides = [1, 1]} : vector<512x64xf32> to vector<512x32xf32>
    %c0_3 = arith.constant 0 : index
    %c0_4 = arith.constant 0 : index
    %4 = vector.load %arg1[%c0_3, %c0_4] : memref<512x32xbf16, #tpu.memory_space<vmem>>, vector<512x32xbf16>
    %5 = arith.extf %4 : vector<512x32xbf16> to vector<512x32xf32>
    %c0_5 = arith.constant 0 : index
    %c0_6 = arith.constant 0 : index
    %6 = vector.load %arg4[%c0_5, %c0_6] : memref<1x32xf32, #tpu.memory_space<vmem>>, vector<1x32xf32>
    %7 = vector.broadcast %6 : vector<1x32xf32> to vector<512x32xf32>
    %8 = arith.mulf %5, %7 : vector<512x32xf32>
    %c0_7 = arith.constant 0 : index
    %c0_8 = arith.constant 0 : index
    %9 = vector.load %arg5[%c0_7, %c0_8] : memref<1x32xf32, #tpu.memory_space<vmem>>, vector<1x32xf32>
    %10 = vector.broadcast %9 : vector<1x32xf32> to vector<512x32xf32>
    %11 = arith.addf %8, %10 : vector<512x32xf32>
    %12 = arith.addf %11, %3 : vector<512x32xf32>
    %13 = arith.extf %1 : vector<512x32xbf16> to vector<512x32xf32>
    %c0_9 = arith.constant 0 : index
    %c0_10 = arith.constant 0 : index
    %14 = vector.load %arg6[%c0_9, %c0_10] : memref<1x32xf32, #tpu.memory_space<vmem>>, vector<1x32xf32>
    %15 = vector.broadcast %14 : vector<1x32xf32> to vector<512x32xf32>
    %16 = arith.mulf %13, %15 : vector<512x32xf32>
    %c0_11 = arith.constant 0 : index
    %c0_12 = arith.constant 0 : index
    %17 = vector.load %arg7[%c0_11, %c0_12] : memref<1x32xf32, #tpu.memory_space<vmem>>, vector<1x32xf32>
    %18 = vector.broadcast %17 : vector<1x32xf32> to vector<512x32xf32>
    %19 = arith.addf %16, %18 : vector<512x32xf32>
    %cst = arith.constant 0.000000e+00 : f32
    %20 = vector.broadcast %cst : f32 to vector<512x32xf32>
    %21 = arith.maximumf %19, %20 : vector<512x32xf32>
    %22 = tpu.concatenate %12, %21 in 1 : vector<512x32xf32>, vector<512x32xf32> -> vector<512x64xf32>
    %c0_13 = arith.constant 0 : index
    %c0_14 = arith.constant 0 : index
    %23 = vector.load %arg8[%c0_13, %c0_14] : memref<512x64xf32, #tpu.memory_space<vmem>>, vector<512x64xf32>
    tpu.vector_store %arg8[%c0_13, %c0_14], %22 {strides = array<i32>} : memref<512x64xf32, #tpu.memory_space<vmem>>, vector<512x64xf32>,
    return
  }
  func.func @transform_0(%arg0: i32) -> (i32, i32) {
    %c0_i32 = arith.constant 0 : i32
    %c0_i32_0 = arith.constant 0 : i32
    return %arg0, %c0_i32 : i32, i32
  }
  func.func @transform_1(%arg0: i32) -> (i32, i32) {
    %c0_i32 = arith.constant 0 : i32
    %c0_i32_0 = arith.constant 0 : i32
    return %arg0, %c0_i32 : i32, i32
  }
  func.func @transform_2(%arg0: i32) -> (i32, i32) {
    %c0_i32 = arith.constant 0 : i32
    %c0_i32_0 = arith.constant 0 : i32
    return %arg0, %c0_i32 : i32, i32
  }
  func.func @transform_3(%arg0: i32) -> (i32, i32) {
    %c0_i32 = arith.constant 0 : i32
    %c0_i32_0 = arith.constant 0 : i32
    %c0_i32_1 = arith.constant 0 : i32
    return %c0_i32, %c0_i32_0 : i32, i32
  }
  func.func @transform_4(%arg0: i32) -> (i32, i32) {
    %c0_i32 = arith.constant 0 : i32
    %c0_i32_0 = arith.constant 0 : i32
    %c0_i32_1 = arith.constant 0 : i32
    return %c0_i32, %c0_i32_0 : i32, i32
  }
  func.func @transform_5(%arg0: i32) -> (i32, i32) {
    %c0_i32 = arith.constant 0 : i32
    %c0_i32_0 = arith.constant 0 : i32
    %c0_i32_1 = arith.constant 0 : i32
    return %c0_i32, %c0_i32_0 : i32, i32
  }
  func.func @transform_6(%arg0: i32) -> (i32, i32) {
    %c0_i32 = arith.constant 0 : i32
    %c0_i32_0 = arith.constant 0 : i32
    %c0_i32_1 = arith.constant 0 : i32
    return %c0_i32, %c0_i32_0 : i32, i32
  }
  func.func @transform_7(%arg0: i32) -> (i32, i32) {
    %c0_i32 = arith.constant 0 : i32
    %c0_i32_0 = arith.constant 0 : i32
    return %arg0, %c0_i32 : i32, i32
  }
}

</mosaic_0001>

<llo_original>
// kernel: dpn_block_forward.3
$region0: #{dpn_block_forward.3}
  #allocation0 [shape = 'u32[]', space=smem, size = 0x4, offset = 0x4, fixed_abs, tag = 'smem constant byte address 0x4 - core index']
  #allocation1 [shape = 'u32[144,128]{1,0:T(1,128)}', space=vmem, size = 0x12000, scoped, tag = 'internal scratch']
  %s0 = inlined_call_operand.vmem [shape: f32[512,64], index: 0, kind: input, shape index: {}]
  %s1 = inlined_call_operand.vmem [shape: bf16[64,64], index: 1, kind: input, shape index: {}]
  %s2 = inlined_call_operand.vmem [shape: bf16[512,64], index: 2, kind: output, shape index: {0}]
  %s3 = inlined_call_operand.vmem [shape: f32[1,2,64], index: 3, kind: output, shape index: {1}]
  %4 = xla_tuple %s2, %s3
  %s5 = sld [smem:[#allocation0]]
  $region26: #{dpn_block_forward.3} parent=0
    _
  %s7 = ssub.s32 1, %s5
  %s8 = scalar_select 0, %s7, %s5
  // Predicated region
  $region2: #{dpn_block_forward.3} parent=0 // pred_check
    _
  $region3: #{dpn_block_forward.3} parent=0 // pred_check_branch
    %10 = sbr.rel (0) target = $region5
  $region4: #{dpn_block_forward.3} parent=0 // pred_region
    _
  $region5: #{dpn_block_forward.3} parent=0 // pred_fallthru
    _
  // Predicated region
  $region6: #{dpn_block_forward.3} parent=0 // pred_check
    _
  $region7: #{dpn_block_forward.3} parent=0 // pred_check_branch
    %12 = sbr.rel (0) target = $region9
  $region8: #{dpn_block_forward.3} parent=0 // pred_region
    _
  $region9: #{dpn_block_forward.3} parent=0 // pred_fallthru
    _
  %v14 = vld [vmem:[%s0] sm:$0xff]
  %v15 = vld [vmem:[%s0 + $0x8] sm:$0xff]
  %v16 = vld [vmem:[%s0 + $0x10] sm:$0xff]
  %v17 = vld [vmem:[%s0 + $0x18] sm:$0xff]
  %v18 = vld [vmem:[%s0 + $0x20] sm:$0xff]
  %v19 = vld [vmem:[%s0 + $0x28] sm:$0xff]
  %v20 = vld [vmem:[%s0 + $0x30] sm:$0xff]
  %v21 = vld [vmem:[%s0 + $0x38] sm:$0xff]
  %v22 = vld [vmem:[%s0 + $0x40] sm:$0xff]
  %v23 = vld [vmem:[%s0 + $0x48] sm:$0xff]
  %v24 = vld [vmem:[%s0 + $0x50] sm:$0xff]
  %v25 = vld [vmem:[%s0 + $0x58] sm:$0xff]
  %v26 = vld [vmem:[%s0 + $0x60] sm:$0xff]
  %v27 = vld [vmem:[%s0 + $0x68] sm:$0xff]
  %v28 = vld [vmem:[%s0 + $0x70] sm:$0xff]
  %v29 = vld [vmem:[%s0 + $0x78] sm:$0xff]
  %v30 = vld [vmem:[%s0 + $0x80] sm:$0xff]
  %v31 = vld [vmem:[%s0 + $0x88] sm:$0xff]
  %v32 = vld [vmem:[%s0 + $0x90] sm:$0xff]
  %v33 = vld [vmem:[%s0 + $0x98] sm:$0xff]
  %v34 = vld [vmem:[%s0 + $0xa0] sm:$0xff]
  %v35 = vld [vmem:[%s0 + $0xa8] sm:$0xff]
  %v36 = vld [vmem:[%s0 + $0xb0] sm:$0xff]
  %v37 = vld [vmem:[%s0 + $0xb8] sm:$0xff]
  %v38 = vld [vmem:[%s0 + $0xc0] sm:$0xff]
  %v39 = vld [vmem:[%s0 + $0xc8] sm:$0xff]
  %v40 = vld [vmem:[%s0 + $0xd0] sm:$0xff]
  %v41 = vld [vmem:[%s0 + $0xd8] sm:$0xff]
  %v42 = vld [vmem:[%s0 + $0xe0] sm:$0xff]
  %v43 = vld [vmem:[%s0 + $0xe8] sm:$0xff]
  %v44 = vld [vmem:[%s0 + $0xf0] sm:$0xff]
  %v45 = vld [vmem:[%s0 + $0xf8] sm:$0xff]
  %v46 = vld [vmem:[%s0 + $0x100] sm:$0xff]
  %v47 = vld [vmem:[%s0 + $0x108] sm:$0xff]
  %v48 = vld [vmem:[%s0 + $0x110] sm:$0xff]
  %v49 = vld [vmem:[%s0 + $0x118] sm:$0xff]
  %v50 = vld [vmem:[%s0 + $0x120] sm:$0xff]
  %v51 = vld [vmem:[%s0 + $0x128] sm:$0xff]
  %v52 = vld [vmem:[%s0 + $0x130] sm:$0xff]
  %v53 = vld [vmem:[%s0 + $0x138] sm:$0xff]
  %v54 = vld [vmem:[%s0 + $0x140] sm:$0xff]
  %v55 = vld [vmem:[%s0 + $0x148] sm:$0xff]
  %v56 = vld [vmem:[%s0 + $0x150] sm:$0xff]
  %v57 = vld [vmem:[%s0 + $0x158] sm:$0xff]
  %v58 = vld [vmem:[%s0 + $0x160] sm:$0xff]
  %v59 = vld [vmem:[%s0 + $0x168] sm:$0xff]
  %v60 = vld [vmem:[%s0 + $0x170] sm:$0xff]
  %v61 = vld [vmem:[%s0 + $0x178] sm:$0xff]
  %v62 = vld [vmem:[%s0 + $0x180] sm:$0xff]
  %v63 = vld [vmem:[%s0 + $0x188] sm:$0xff]
  %v64 = vld [vmem:[%s0 + $0x190] sm:$0xff]
  %v65 = vld [vmem:[%s0 + $0x198] sm:$0xff]
  %v66 = vld [vmem:[%s0 + $0x1a0] sm:$0xff]
  %v67 = vld [vmem:[%s0 + $0x1a8] sm:$0xff]
  %v68 = vld [vmem:[%s0 + $0x1b0] sm:$0xff]
  %v69 = vld [vmem:[%s0 + $0x1b8] sm:$0xff]
  %v70 = vld [vmem:[%s0 + $0x1c0] sm:$0xff]
  %v71 = vld [vmem:[%s0 + $0x1c8] sm:$0xff]
  %v72 = vld [vmem:[%s0 + $0x1d0] sm:$0xff]
  %v73 = vld [vmem:[%s0 + $0x1d8] sm:$0xff]
  %v74 = vld [vmem:[%s0 + $0x1e0] sm:$0xff]
  %v75 = vld [vmem:[%s0 + $0x1e8] sm:$0xff]
  %v76 = vld [vmem:[%s0 + $0x1f0] sm:$0xff]
  %v77 = vld [vmem:[%s0 + $0x1f8] sm:$0xff]
  %v78 = vpack.c.bf16 %v15, %v14
  %v79 = vpack.c.bf16 %v17, %v16
  %v80 = vpack.c.bf16 %v19, %v18
  %v81 = vpack.c.bf16 %v21, %v20
  %v82 = vpack.c.bf16 %v23, %v22
  %v83 = vpack.c.bf16 %v25, %v24
  %v84 = vpack.c.bf16 %v27, %v26
  %v85 = vpack.c.bf16 %v29, %v28
  %v86 = vpack.c.bf16 %v31, %v30
  %v87 = vpack.c.bf16 %v33, %v32
  %v88 = vpack.c.bf16 %v35, %v34
  %v89 = vpack.c.bf16 %v37, %v36
  %v90 = vpack.c.bf16 %v39, %v38
  %v91 = vpack.c.bf16 %v41, %v40
  %v92 = vpack.c.bf16 %v43, %v42
  %v93 = vpack.c.bf16 %v45, %v44
  %v94 = vpack.c.bf16 %v47, %v46
  %v95 = vpack.c.bf16 %v49, %v48
  %v96 = vpack.c.bf16 %v51, %v50
  %v97 = vpack.c.bf16 %v53, %v52
  %v98 = vpack.c.bf16 %v55, %v54
  %v99 = vpack.c.bf16 %v57, %v56
  %v100 = vpack.c.bf16 %v59, %v58
  %v101 = vpack.c.bf16 %v61, %v60
  %v102 = vpack.c.bf16 %v63, %v62
  %v103 = vpack.c.bf16 %v65, %v64
  %v104 = vpack.c.bf16 %v67, %v66
  %v105 = vpack.c.bf16 %v69, %v68
  %v106 = vpack.c.bf16 %v71, %v70
  %v107 = vpack.c.bf16 %v73, %v72
  %v108 = vpack.c.bf16 %v75, %v74
  %v109 = vpack.c.bf16 %v77, %v76
  %v110 = vld [vmem:[%s1] sm:$0xf]
  %v111 = vld [vmem:[%s1 + $0x4] sm:$0xf]
  %v112 = vld [vmem:[%s1 + $0x8] sm:$0xf]
  %v113 = vld [vmem:[%s1 + $0xc] sm:$0xf]
  %v114 = vld [vmem:[%s1 + $0x10] sm:$0xf]
  %v115 = vld [vmem:[%s1 + $0x14] sm:$0xf]
  %v116 = vld [vmem:[%s1 + $0x18] sm:$0xf]
  %v117 = vld [vmem:[%s1 + $0x1c] sm:$0xf]
  %v126 = vunpack.c.l.b16 %v110
  %v127 = vunpack.c.l.b16 %v111
  %v128 = vunpack.c.l.b16 %v112
  %v129 = vunpack.c.l.b16 %v113
  %v130 = vunpack.c.l.b16 %v114
  %v131 = vunpack.c.l.b16 %v115
  %v132 = vunpack.c.l.b16 %v116
  %v133 = vunpack.c.l.b16 %v117
  %v134 = vpack.c.b16 %v127, %v126
  %v135 = vpack.c.b16 %v129, %v128
  %v136 = vpack.c.b16 %v131, %v130
  %v137 = vpack.c.b16 %v133, %v132
  %vm142 = vcmask 523264
  %v144 = vsel %vm142, %v78, 0
  %v147 = vsel %vm142, %v79, 0
  %v150 = vsel %vm142, %v80, 0
  %v153 = vsel %vm142, %v81, 0
  %v156 = vsel %vm142, %v82, 0
  %v159 = vsel %vm142, %v83, 0
  %v162 = vsel %vm142, %v84, 0
  %v165 = vsel %vm142, %v85, 0
  %v168 = vsel %vm142, %v86, 0
  %v171 = vsel %vm142, %v87, 0
  %v174 = vsel %vm142, %v88, 0
  %v177 = vsel %vm142, %v89, 0
  %v180 = vsel %vm142, %v90, 0
  %v183 = vsel %vm142, %v91, 0
  %v186 = vsel %vm142, %v92, 0
  %v189 = vsel %vm142, %v93, 0
  %v192 = vsel %vm142, %v94, 0
  %v195 = vsel %vm142, %v95, 0
  %v198 = vsel %vm142, %v96, 0
  %v201 = vsel %vm142, %v97, 0
  %v204 = vsel %vm142, %v98, 0
  %v207 = vsel %vm142, %v99, 0
  %v210 = vsel %vm142, %v100, 0
  %v213 = vsel %vm142, %v101, 0
  %v216 = vsel %vm142, %v102, 0
  %v219 = vsel %vm142, %v103, 0
  %v222 = vsel %vm142, %v104, 0
  %v225 = vsel %vm142, %v105, 0
  %v228 = vsel %vm142, %v106, 0
  %v231 = vsel %vm142, %v107, 0
  %v234 = vsel %vm142, %v108, 0
  %v237 = vsel %vm142, %v109, 0
  %239 = vmatprep.subr.bf16.mxu0 0
  %240 = vmatpush1.bf16.msra.mxu0 %v134
  %241 = vmatprep.subr.bf16.mxu0 0
  %242 = vmatpush1.bf16.msra.mxu0 %v135
  %243 = vmatprep.subr.bf16.mxu0 0
  %244 = vmatpush1.bf16.msra.mxu0 %v136
  %245 = vmatprep.subr.bf16.mxu0 0
  %246 = vmatpush1.bf16.msra.mxu0 %v137
  %247 = vmatprep.subr.bf16.mxu0 0
  %248 = vmatpush1.bf16.msra.mxu0 0
  %249 = vmatprep.subr.bf16.mxu0 0
  %250 = vmatpush1.bf16.msra.mxu0 0
  %251 = vmatprep.subr.bf16.mxu0 0
  %252 = vmatpush1.bf16.msra.mxu0 0
  %253 = vmatprep.subr.bf16.mxu0 0
  %254 = vmatpush1.bf16.msra.mxu0 0
  %255 = vmatprep.subr.bf16.mxu0 0
  %256 = vmatpush1.bf16.msra.mxu0 0
  %257 = vmatprep.subr.bf16.mxu0 0
  %258 = vmatpush1.bf16.msra.mxu0 0
  %259 = vmatprep.subr.bf16.mxu0 0
  %260 = vmatpush1.bf16.msra.mxu0 0
  %261 = vmatprep.subr.bf16.mxu0 0
  %262 = vmatpush1.bf16.msra.mxu0 0
  %263 = vmatprep.subr.bf16.mxu0 0
  %264 = vmatpush1.bf16.msra.mxu0 0
  %265 = vmatprep.subr.bf16.mxu0 0
  %266 = vmatpush1.bf16.msra.mxu0 0
  %267 = vmatprep.subr.bf16.mxu0 0
  %268 = vmatpush1.bf16.msra.mxu0 0
  %269 = vmatprep.subr.bf16.mxu0 0
  %270 = vmatpush1.bf16.msra.mxu0 0
  %271 = vmatprep.mubr.bf16.mxu0 0
  %272 = vmatmul.mubr.bf16.gmra.mrb[0].mxu0 %v144
  %v273 = vpop.f32.mrb[0].mxu0
  %v274 = vadd.f32 0.0, %v273
  %v275 = vpop.f32.mrb[0].mxu0
  %v276 = vpop.f32.mrb[0].mxu0
  %v277 = vadd.f32 0.0, %v276
  %v278 = vpop.f32.mrb[0].mxu0
  %279 = vmatprep.mubr.bf16.mxu0 0
  %280 = vmatmul.mubr.bf16.gmra.mrb[0].mxu0 %v147
  %v281 = vpop.f32.mrb[0].mxu0
  %v282 = vadd.f32 0.0, %v281
  %v283 = vpop.f32.mrb[0].mxu0
  %v284 = vpop.f32.mrb[0].mxu0
  %v285 = vadd.f32 0.0, %v284
  %v286 = vpop.f32.mrb[0].mxu0
  %287 = vmatprep.mubr.bf16.mxu0 0
  %288 = vmatmul.mubr.bf16.gmra.mrb[0].mxu0 %v150
  %v289 = vpop.f32.mrb[0].mxu0
  %v290 = vadd.f32 0.0, %v289
  %v291 = vpop.f32.mrb[0].mxu0
  %v292 = vpop.f32.mrb[0].mxu0
  %v293 = vadd.f32 0.0, %v292
  %v294 = vpop.f32.mrb[0].mxu0
  %295 = vmatprep.mubr.bf16.mxu0 0
  %296 = vmatmul.mubr.bf16.gmra.mrb[0].mxu0 %v153
  %v297 = vpop.f32.mrb[0].mxu0
  %v298 = vadd.f32 0.0, %v297
  %v299 = vpop.f32.mrb[0].mxu0
  %v300 = vpop.f32.mrb[0].mxu0
  %v301 = vadd.f32 0.0, %v300
  %v302 = vpop.f32.mrb[0].mxu0
  %303 = vmatprep.mubr.bf16.mxu0 0
  %304 = vmatmul.mubr.bf16.gmra.mrb[0].mxu0 %v156
  %v305 = vpop.f32.mrb[0].mxu0
  %v306 = vadd.f32 0.0, %v305
  %v307 = vpop.f32.mrb[0].mxu0
  %v308 = vpop.f32.mrb[0].mxu0
  %v309 = vadd.f32 0.0, %v308
  %v310 = vpop.f32.mrb[0].mxu0
  %311 = vmatprep.mubr.bf16.mxu0 0
  %312 = vmatmul.mubr.bf16.gmra.mrb[0].mxu0 %v159
  %v313 = vpop.f32.mrb[0].mxu0
  %v314 = vadd.f32 0.0, %v313
  %v315 = vpop.f32.mrb[0].mxu0
  %v316 = vpop.f32.mrb[0].mxu0
  %v317 = vadd.f32 0.0, %v316
  %v318 = vpop.f32.mrb[0].mxu0
  %319 = vmatprep.mubr.bf16.mxu0 0
  %320 = vmatmul.mubr.bf16.gmra.mrb[0].mxu0 %v162
  %v321 = vpop.f32.mrb[0].mxu0
  %v322 = vadd.f32 0.0, %v321
  %v323 = vpop.f32.mrb[0].mxu0
  %v324 = vpop.f32.mrb[0].mxu0
  %v325 = vadd.f32 0.0, %v324
  %v326 = vpop.f32.mrb[0].mxu0
  %327 = vmatprep.mubr.bf16.mxu0 0
  %328 = vmatmul.mubr.bf16.gmra.mrb[0].mxu0 %v165
  %v329 = vpop.f32.mrb[0].mxu0
  %v330 = vadd.f32 0.0, %v329
  %v331 = vpop.f32.mrb[0].mxu0
  %v332 = vpop.f32.mrb[0].mxu0
  %v333 = vadd.f32 0.0, %v332
  %v334 = vpop.f32.mrb[0].mxu0
  %335 = vmatprep.mubr.bf16.mxu0 0
  %336 = vmatmul.mubr.bf16.gmra.mrb[0].mxu0 %v168
  %v337 = vpop.f32.mrb[0].mxu0
  %v338 = vadd.f32 0.0, %v337
  %v339 = vpop.f32.mrb[0].mxu0
  %v340 = vpop.f32.mrb[0].mxu0
  %v341 = vadd.f32 0.0, %v340
  %v342 = vpop.f32.mrb[0].mxu0
  %343 = vmatprep.mubr.bf16.mxu0 0
  %344 = vmatmul.mubr.bf16.gmra.mrb[0].mxu0 %v171
  %v345 = vpop.f32.mrb[0].mxu0
  %v346 = vadd.f32 0.0, %v345
  %v347 = vpop.f32.mrb[0].mxu0
  %v348 = vpop.f32.mrb[0].mxu0
  %v349 = vadd.f32 0.0, %v348
  %v350 = vpop.f32.mrb[0].mxu0
  %351 = vmatprep.mubr.bf16.mxu0 0
  %352 = vmatmul.mubr.bf16.gmra.mrb[0].mxu0 %v174
  %v353 = vpop.f32.mrb[0].mxu0
  %v354 = vadd.f32 0.0, %v353
  %v355 = vpop.f32.mrb[0].mxu0
  %v356 = vpop.f32.mrb[0].mxu0
  %v357 = vadd.f32 0.0, %v356
  %v358 = vpop.f32.mrb[0].mxu0
  %359 = vmatprep.mubr.bf16.mxu0 0
  %360 = vmatmul.mubr.bf16.gmra.mrb[0].mxu0 %v177
  %v361 = vpop.f32.mrb[0].mxu0
  %v362 = vadd.f32 0.0, %v361
  %v363 = vpop.f32.mrb[0].mxu0
  %v364 = vpop.f32.mrb[0].mxu0
  %v365 = vadd.f32 0.0, %v364
  %v366 = vpop.f32.mrb[0].mxu0
  %367 = vmatprep.mubr.bf16.mxu0 0
  %368 = vmatmul.mubr.bf16.gmra.mrb[0].mxu0 %v180
  %v369 = vpop.f32.mrb[0].mxu0
  %v370 = vadd.f32 0.0, %v369
  %v371 = vpop.f32.mrb[0].mxu0
  %v372 = vpop.f32.mrb[0].mxu0
  %v373 = vadd.f32 0.0, %v372
  %v374 = vpop.f32.mrb[0].mxu0
  %375 = vmatprep.mubr.bf16.mxu0 0
  %376 = vmatmul.mubr.bf16.gmra.mrb[0].mxu0 %v183
  %v377 = vpop.f32.mrb[0].mxu0
  %v378 = vadd.f32 0.0, %v377
  %v379 = vpop.f32.mrb[0].mxu0
  %v380 = vpop.f32.mrb[0].mxu0
  %v381 = vadd.f32 0.0, %v380
  %v382 = vpop.f32.mrb[0].mxu0
  %383 = vmatprep.mubr.bf16.mxu0 0
  %384 = vmatmul.mubr.bf16.gmra.mrb[0].mxu0 %v186
  %v385 = vpop.f32.mrb[0].mxu0
  %v386 = vadd.f32 0.0, %v385
  %v387 = vpop.f32.mrb[0].mxu0
  %v388 = vpop.f32.mrb[0].mxu0
  %v389 = vadd.f32 0.0, %v388
  %v390 = vpop.f32.mrb[0].mxu0
  %391 = vmatprep.mubr.bf16.mxu0 0
  %392 = vmatmul.mubr.bf16.gmra.mrb[0].mxu0 %v189
  %v393 = vpop.f32.mrb[0].mxu0
  %v394 = vadd.f32 0.0, %v393
  %v395 = vpop.f32.mrb[0].mxu0
  %v396 = vpop.f32.mrb[0].mxu0
  %v397 = vadd.f32 0.0, %v396
  %v398 = vpop.f32.mrb[0].mxu0
  %399 = vmatprep.mubr.bf16.mxu0 0
  %400 = vmatmul.mubr.bf16.gmra.mrb[0].mxu0 %v192
  %v401 = vpop.f32.mrb[0].mxu0
  %v402 = vadd.f32 0.0, %v401
  %v403 = vpop.f32.mrb[0].mxu0
  %v404 = vpop.f32.mrb[0].mxu0
  %v405 = vadd.f32 0.0, %v404
  %v406 = vpop.f32.mrb[0].mxu0
  %407 = vmatprep.mubr.bf16.mxu0 0
  %408 = vmatmul.mubr.bf16.gmra.mrb[0].mxu0 %v195
  %v409 = vpop.f32.mrb[0].mxu0
  %v410 = vadd.f32 0.0, %v409
  %v411 = vpop.f32.mrb[0].mxu0
  %v412 = vpop.f32.mrb[0].mxu0
  %v413 = vadd.f32 0.0, %v412
  %v414 = vpop.f32.mrb[0].mxu0
  %415 = vmatprep.mubr.bf16.mxu0 0
  %416 = vmatmul.mubr.bf16.gmra.mrb[0].mxu0 %v198
  %v417 = vpop.f32.mrb[0].mxu0
  %v418 = vadd.f32 0.0, %v417
  %v419 = vpop.f32.mrb[0].mxu0
  %v420 = vpop.f32.mrb[0].mxu0
  %v421 = vadd.f32 0.0, %v420
  %v422 = vpop.f32.mrb[0].mxu0
  %423 = vmatprep.mubr.bf16.mxu0 0
  %424 = vmatmul.mubr.bf16.gmra.mrb[0].mxu0 %v201
  %v425 = vpop.f32.mrb[0].mxu0
  %v426 = vadd.f32 0.0, %v425
  %v427 = vpop.f32.mrb[0].mxu0
  %v428 = vpop.f32.mrb[0].mxu0
  %v429 = vadd.f32 0.0, %v428
  %v430 = vpop.f32.mrb[0].mxu0
  %431 = vmatprep.mubr.bf16.mxu0 0
  %432 = vmatmul.mubr.bf16.gmra.mrb[0].mxu0 %v204
  %v433 = vpop.f32.mrb[0].mxu0
  %v434 = vadd.f32 0.0, %v433
  %v435 = vpop.f32.mrb[0].mxu0
  %v436 = vpop.f32.mrb[0].mxu0
  %v437 = vadd.f32 0.0, %v436
  %v438 = vpop.f32.mrb[0].mxu0
  %439 = vmatprep.mubr.bf16.mxu0 0
  %440 = vmatmul.mubr.bf16.gmra.mrb[0].mxu0 %v207
  %v441 = vpop.f32.mrb[0].mxu0
  %v442 = vadd.f32 0.0, %v441
  %v443 = vpop.f32.mrb[0].mxu0
  %v444 = vpop.f32.mrb[0].mxu0
  %v445 = vadd.f32 0.0, %v444
  %v446 = vpop.f32.mrb[0].mxu0
  %447 = vmatprep.mubr.bf16.mxu0 0
  %448 = vmatmul.mubr.bf16.gmra.mrb[0].mxu0 %v210
  %v449 = vpop.f32.mrb[0].mxu0
  %v450 = vadd.f32 0.0, %v449
  %v451 = vpop.f32.mrb[0].mxu0
  %v452 = vpop.f32.mrb[0].mxu0
  %v453 = vadd.f32 0.0, %v452
  %v454 = vpop.f32.mrb[0].mxu0
  %455 = vmatprep.mubr.bf16.mxu0 0
  %456 = vmatmul.mubr.bf16.gmra.mrb[0].mxu0 %v213
  %v457 = vpop.f32.mrb[0].mxu0
  %v458 = vadd.f32 0.0, %v457
  %v459 = vpop.f32.mrb[0].mxu0
  %v460 = vpop.f32.mrb[0].mxu0
  %v461 = vadd.f32 0.0, %v460
  %v462 = vpop.f32.mrb[0].mxu0
  %463 = vmatprep.mubr.bf16.mxu0 0
  %464 = vmatmul.mubr.bf16.gmra.mrb[0].mxu0 %v216
  %v465 = vpop.f32.mrb[0].mxu0
  %v466 = vadd.f32 0.0, %v465
  %v467 = vpop.f32.mrb[0].mxu0
  %v468 = vpop.f32.mrb[0].mxu0
  %v469 = vadd.f32 0.0, %v468
  %v470 = vpop.f32.mrb[0].mxu0
  %471 = vmatprep.mubr.bf16.mxu0 0
  %472 = vmatmul.mubr.bf16.gmra.mrb[0].mxu0 %v219
  %v473 = vpop.f32.mrb[0].mxu0
  %v474 = vadd.f32 0.0, %v473
  %v475 = vpop.f32.mrb[0].mxu0
  %v476 = vpop.f32.mrb[0].mxu0
  %v477 = vadd.f32 0.0, %v476
  %v478 = vpop.f32.mrb[0].mxu0
  %479 = vmatprep.mubr.bf16.mxu0 0
  %480 = vmatmul.mubr.bf16.gmra.mrb[0].mxu0 %v222
  %v481 = vpop.f32.mrb[0].mxu0
  %v482 = vadd.f32 0.0, %v481
  %v483 = vpop.f32.mrb[0].mxu0
  %v484 = vpop.f32.mrb[0].mxu0
  %v485 = vadd.f32 0.0, %v484
  %v486 = vpop.f32.mrb[0].mxu0
  %487 = vmatprep.mubr.bf16.mxu0 0
  %488 = vmatmul.mubr.bf16.gmra.mrb[0].mxu0 %v225
  %v489 = vpop.f32.mrb[0].mxu0
  %v490 = vadd.f32 0.0, %v489
  %v491 = vpop.f32.mrb[0].mxu0
  %v492 = vpop.f32.mrb[0].mxu0
  %v493 = vadd.f32 0.0, %v492
  %v494 = vpop.f32.mrb[0].mxu0
  %495 = vmatprep.mubr.bf16.mxu0 0
  %496 = vmatmul.mubr.bf16.gmra.mrb[0].mxu0 %v228
  %v497 = vpop.f32.mrb[0].mxu0
  %v498 = vadd.f32 0.0, %v497
  %v499 = vpop.f32.mrb[0].mxu0
  %v500 = vpop.f32.mrb[0].mxu0
  %v501 = vadd.f32 0.0, %v500
  %v502 = vpop.f32.mrb[0].mxu0
  %503 = vmatprep.mubr.bf16.mxu0 0
  %504 = vmatmul.mubr.bf16.gmra.mrb[0].mxu0 %v231
  %v505 = vpop.f32.mrb[0].mxu0
  %v506 = vadd.f32 0.0, %v505
  %v507 = vpop.f32.mrb[0].mxu0
  %v508 = vpop.f32.mrb[0].mxu0
  %v509 = vadd.f32 0.0, %v508
  %v510 = vpop.f32.mrb[0].mxu0
  %511 = vmatprep.mubr.bf16.mxu0 0
  %512 = vmatmul.mubr.bf16.gmra.mrb[0].mxu0 %v234
  %v513 = vpop.f32.mrb[0].mxu0
  %v514 = vadd.f32 0.0, %v513
  %v515 = vpop.f32.mrb[0].mxu0
  %v516 = vpop.f32.mrb[0].mxu0
  %v517 = vadd.f32 0.0, %v516
  %v518 = vpop.f32.mrb[0].mxu0
  %519 = vmatprep.mubr.bf16.mxu0 0
  %520 = vmatmul.mubr.bf16.gmra.mrb[0].mxu0 %v237
  %v521 = vpop.f32.mrb[0].mxu0
  %v522 = vadd.f32 0.0, %v521
  %v523 = vpop.f32.mrb[0].mxu0
  %v524 = vpop.f32.mrb[0].mxu0
  %v525 = vadd.f32 0.0, %v524
  %v526 = vpop.f32.mrb[0].mxu0
  %527 = vdwg.mxu0
  %v528 = vpack.c.bf16 %v277, %v274
  %v529 = vpack.c.bf16 %v285, %v282
  %v530 = vpack.c.bf16 %v293, %v290
  %v531 = vpack.c.bf16 %v301, %v298
  %v532 = vpack.c.bf16 %v309, %v306
  %v533 = vpack.c.bf16 %v317, %v314
  %v534 = vpack.c.bf16 %v325, %v322
  %v535 = vpack.c.bf16 %v333, %v330
  %v536 = vpack.c.bf16 %v341, %v338
  %v537 = vpack.c.bf16 %v349, %v346
  %v538 = vpack.c.bf16 %v357, %v354
  %v539 = vpack.c.bf16 %v365, %v362
  %v540 = vpack.c.bf16 %v373, %v370
  %v541 = vpack.c.bf16 %v381, %v378
  %v542 = vpack.c.bf16 %v389, %v386
  %v543 = vpack.c.bf16 %v397, %v394
  %v544 = vpack.c.bf16 %v405, %v402
  %v545 = vpack.c.bf16 %v413, %v410
  %v546 = vpack.c.bf16 %v421, %v418
  %v547 = vpack.c.bf16 %v429, %v426
  %v548 = vpack.c.bf16 %v437, %v434
  %v549 = vpack.c.bf16 %v445, %v442
  %v550 = vpack.c.bf16 %v453, %v450
  %v551 = vpack.c.bf16 %v461, %v458
  %v552 = vpack.c.bf16 %v469, %v466
  %v553 = vpack.c.bf16 %v477, %v474
  %v554 = vpack.c.bf16 %v485, %v482
  %v555 = vpack.c.bf16 %v493, %v490
  %v556 = vpack.c.bf16 %v501, %v498
  %v557 = vpack.c.bf16 %v509, %v506
  %v558 = vpack.c.bf16 %v517, %v514
  %v559 = vpack.c.bf16 %v525, %v522
  %v592 = vunpack.c.l.b16 %v528
  %v593 = vunpack.c.h.b16 %v528
  %v594 = vunpack.c.l.b16 %v529
  %v595 = vunpack.c.h.b16 %v529
  %v596 = vunpack.c.l.b16 %v530
  %v597 = vunpack.c.h.b16 %v530
  %v598 = vunpack.c.l.b16 %v531
  %v599 = vunpack.c.h.b16 %v531
  %v600 = vunpack.c.l.b16 %v532
  %v601 = vunpack.c.h.b16 %v532
  %v602 = vunpack.c.l.b16 %v533
  %v603 = vunpack.c.h.b16 %v533
  %v604 = vunpack.c.l.b16 %v534
  %v605 = vunpack.c.h.b16 %v534
  %v606 = vunpack.c.l.b16 %v535
  %v607 = vunpack.c.h.b16 %v535
  %v608 = vunpack.c.l.b16 %v536
  %v609 = vunpack.c.h.b16 %v536
  %v610 = vunpack.c.l.b16 %v537
  %v611 = vunpack.c.h.b16 %v537
  %v612 = vunpack.c.l.b16 %v538
  %v613 = vunpack.c.h.b16 %v538
  %v614 = vunpack.c.l.b16 %v539
  %v615 = vunpack.c.h.b16 %v539
  %v616 = vunpack.c.l.b16 %v540
  %v617 = vunpack.c.h.b16 %v540
  %v618 = vunpack.c.l.b16 %v541
  %v619 = vunpack.c.h.b16 %v541
  %v620 = vunpack.c.l.b16 %v542
  %v621 = vunpack.c.h.b16 %v542
  %v622 = vunpack.c.l.b16 %v543
  %v623 = vunpack.c.h.b16 %v543
  %v624 = vunpack.c.l.b16 %v544
  %v625 = vunpack.c.h.b16 %v544
  %v626 = vunpack.c.l.b16 %v545
  %v627 = vunpack.c.h.b16 %v545
  %v628 = vunpack.c.l.b16 %v546
  %v629 = vunpack.c.h.b16 %v546
  %v630 = vunpack.c.l.b16 %v547
  %v631 = vunpack.c.h.b16 %v547
  %v632 = vunpack.c.l.b16 %v548
  %v633 = vunpack.c.h.b16 %v548
  %v634 = vunpack.c.l.b16 %v549
  %v635 = vunpack.c.h.b16 %v549
  %v636 = vunpack.c.l.b16 %v550
  %v637 = vunpack.c.h.b16 %v550
  %v638 = vunpack.c.l.b16 %v551
  %v639 = vunpack.c.h.b16 %v551
  %v640 = vunpack.c.l.b16 %v552
  %v641 = vunpack.c.h.b16 %v552
  %v642 = vunpack.c.l.b16 %v553
  %v643 = vunpack.c.h.b16 %v553
  %v644 = vunpack.c.l.b16 %v554
  %v645 = vunpack.c.h.b16 %v554
  %v646 = vunpack.c.l.b16 %v555
  %v647 = vunpack.c.h.b16 %v555
  %v648 = vunpack.c.l.b16 %v556
  %v649 = vunpack.c.h.b16 %v556
  %v650 = vunpack.c.l.b16 %v557
  %v651 = vunpack.c.h.b16 %v557
  %v652 = vunpack.c.l.b16 %v558
  %v653 = vunpack.c.h.b16 %v558
  %v654 = vunpack.c.l.b16 %v559
  %v655 = vunpack.c.h.b16 %v559
  %v656 = vpack.c.b16 %v592, %v592
  %v657 = vpack.c.b16 %v593, %v593
  %v658 = vpack.c.b16 %v594, %v594
  %v659 = vpack.c.b16 %v595, %v595
  %v660 = vpack.c.b16 %v596, %v596
  %v661 = vpack.c.b16 %v597, %v597
  %v662 = vpack.c.b16 %v598, %v598
  %v663 = vpack.c.b16 %v599, %v599
  %v664 = vpack.c.b16 %v600, %v600
  %v665 = vpack.c.b16 %v601, %v601
  %v666 = vpack.c.b16 %v602, %v602
  %v667 = vpack.c.b16 %v603, %v603
  %v668 = vpack.c.b16 %v604, %v604
  %v669 = vpack.c.b16 %v605, %v605
  %v670 = vpack.c.b16 %v606, %v606
  %v671 = vpack.c.b16 %v607, %v607
  %v672 = vpack.c.b16 %v608, %v608
  %v673 = vpack.c.b16 %v609, %v609
  %v674 = vpack.c.b16 %v610, %v610
  %v675 = vpack.c.b16 %v611, %v611
  %v676 = vpack.c.b16 %v612, %v612
  %v677 = vpack.c.b16 %v613, %v613
  %v678 = vpack.c.b16 %v614, %v614
  %v679 = vpack.c.b16 %v615, %v615
  %v680 = vpack.c.b16 %v616, %v616
  %v681 = vpack.c.b16 %v617, %v617
  %v682 = vpack.c.b16 %v618, %v618
  %v683 = vpack.c.b16 %v619, %v619
  %v684 = vpack.c.b16 %v620, %v620
  %v685 = vpack.c.b16 %v621, %v621
  %v686 = vpack.c.b16 %v622, %v622
  %v687 = vpack.c.b16 %v623, %v623
  %v688 = vpack.c.b16 %v624, %v624
  %v689 = vpack.c.b16 %v625, %v625
  %v690 = vpack.c.b16 %v626, %v626
  %v691 = vpack.c.b16 %v627, %v627
  %v692 = vpack.c.b16 %v628, %v628
  %v693 = vpack.c.b16 %v629, %v629
  %v694 = vpack.c.b16 %v630, %v630
  %v695 = vpack.c.b16 %v631, %v631
  %v696 = vpack.c.b16 %v632, %v632
  %v697 = vpack.c.b16 %v633, %v633
  %v698 = vpack.c.b16 %v634, %v634
  %v699 = vpack.c.b16 %v635, %v635
  %v700 = vpack.c.b16 %v636, %v636
  %v701 = vpack.c.b16 %v637, %v637
  %v702 = vpack.c.b16 %v638, %v638
  %v703 = vpack.c.b16 %v639, %v639
  %v704 = vpack.c.b16 %v640, %v640
  %v705 = vpack.c.b16 %v641, %v641
  %v706 = vpack.c.b16 %v642, %v642
  %v707 = vpack.c.b16 %v643, %v643
  %v708 = vpack.c.b16 %v644, %v644
  %v709 = vpack.c.b16 %v645, %v645
  %v710 = vpack.c.b16 %v646, %v646
  %v711 = vpack.c.b16 %v647, %v647
  %v712 = vpack.c.b16 %v648, %v648
  %v713 = vpack.c.b16 %v649, %v649
  %v714 = vpack.c.b16 %v650, %v650
  %v715 = vpack.c.b16 %v651, %v651
  %v716 = vpack.c.b16 %v652, %v652
  %v717 = vpack.c.b16 %v653, %v653
  %v718 = vpack.c.b16 %v654, %v654
  %v719 = vpack.c.b16 %v655, %v655
  %vm784 = vcmask 519168
  %785 = vst.msk [vmem:[%s2] sm:$0xf] %vm784, %v656
  %786 = vst.msk [vmem:[%s2 + $0x4] sm:$0xf] %vm784, %v657
  %787 = vst.msk [vmem:[%s2 + $0x8] sm:$0xf] %vm784, %v658
  %788 = vst.msk [vmem:[%s2 + $0xc] sm:$0xf] %vm784, %v659
  %789 = vst.msk [vmem:[%s2 + $0x10] sm:$0xf] %vm784, %v660
  %790 = vst.msk [vmem:[%s2 + $0x14] sm:$0xf] %vm784, %v661
  %791 = vst.msk [vmem:[%s2 + $0x18] sm:$0xf] %vm784, %v662
  %792 = vst.msk [vmem:[%s2 + $0x1c] sm:$0xf] %vm784, %v663
  %793 = vst.msk [vmem:[%s2 + $0x20] sm:$0xf] %vm784, %v664
  %794 = vst.msk [vmem:[%s2 + $0x24] sm:$0xf] %vm784, %v665
  %795 = vst.msk [vmem:[%s2 + $0x28] sm:$0xf] %vm784, %v666
  %796 = vst.msk [vmem:[%s2 + $0x2c] sm:$0xf] %vm784, %v667
  %797 = vst.msk [vmem:[%s2 + $0x30] sm:$0xf] %vm784, %v668
  %798 = vst.msk [vmem:[%s2 + $0x34] sm:$0xf] %vm784, %v669
  %799 = vst.msk [vmem:[%s2 + $0x38] sm:$0xf] %vm784, %v670
  %800 = vst.msk [vmem:[%s2 + $0x3c] sm:$0xf] %vm784, %v671
  %801 = vst.msk [vmem:[%s2 + $0x40] sm:$0xf] %vm784, %v672
  %802 = vst.msk [vmem:[%s2 + $0x44] sm:$0xf] %vm784, %v673
  %803 = vst.msk [vmem:[%s2 + $0x48] sm:$0xf] %vm784, %v674
  %804 = vst.msk [vmem:[%s2 + $0x4c] sm:$0xf] %vm784, %v675
  %805 = vst.msk [vmem:[%s2 + $0x50] sm:$0xf] %vm784, %v676
  %806 = vst.msk [vmem:[%s2 + $0x54] sm:$0xf] %vm784, %v677
  %807 = vst.msk [vmem:[%s2 + $0x58] sm:$0xf] %vm784, %v678
  %808 = vst.msk [vmem:[%s2 + $0x5c] sm:$0xf] %vm784, %v679
  %809 = vst.msk [vmem:[%s2 + $0x60] sm:$0xf] %vm784, %v680
  %810 = vst.msk [vmem:[%s2 + $0x64] sm:$0xf] %vm784, %v681
  %811 = vst.msk [vmem:[%s2 + $0x68] sm:$0xf] %vm784, %v682
  %812 = vst.msk [vmem:[%s2 + $0x6c] sm:$0xf] %vm784, %v683
  %813 = vst.msk [vmem:[%s2 + $0x70] sm:$0xf] %vm784, %v684
  %814 = vst.msk [vmem:[%s2 + $0x74] sm:$0xf] %vm784, %v685
  %815 = vst.msk [vmem:[%s2 + $0x78] sm:$0xf] %vm784, %v686
  %816 = vst.msk [vmem:[%s2 + $0x7c] sm:$0xf] %vm784, %v687
  %817 = vst.msk [vmem:[%s2 + $0x80] sm:$0xf] %vm784, %v688
  %818 = vst.msk [vmem:[%s2 + $0x84] sm:$0xf] %vm784, %v689
  %819 = vst.msk [vmem:[%s2 + $0x88] sm:$0xf] %vm784, %v690
  %820 = vst.msk [vmem:[%s2 + $0x8c] sm:$0xf] %vm784, %v691
  %821 = vst.msk [vmem:[%s2 + $0x90] sm:$0xf] %vm784, %v692
  %822 = vst.msk [vmem:[%s2 + $0x94] sm:$0xf] %vm784, %v693
  %823 = vst.msk [vmem:[%s2 + $0x98] sm:$0xf] %vm784, %v694
  %824 = vst.msk [vmem:[%s2 + $0x9c] sm:$0xf] %vm784, %v695
  %825 = vst.msk [vmem:[%s2 + $0xa0] sm:$0xf] %vm784, %v696
  %826 = vst.msk [vmem:[%s2 + $0xa4] sm:$0xf] %vm784, %v697
  %827 = vst.msk [vmem:[%s2 + $0xa8] sm:$0xf] %vm784, %v698
  %828 = vst.msk [vmem:[%s2 + $0xac] sm:$0xf] %vm784, %v699
  %829 = vst.msk [vmem:[%s2 + $0xb0] sm:$0xf] %vm784, %v700
  %830 = vst.msk [vmem:[%s2 + $0xb4] sm:$0xf] %vm784, %v701
  %831 = vst.msk [vmem:[%s2 + $0xb8] sm:$0xf] %vm784, %v702
  %832 = vst.msk [vmem:[%s2 + $0xbc] sm:$0xf] %vm784, %v703
  %833 = vst.msk [vmem:[%s2 + $0xc0] sm:$0xf] %vm784, %v704
  %834 = vst.msk [vmem:[%s2 + $0xc4] sm:$0xf] %vm784, %v705
  %835 = vst.msk [vmem:[%s2 + $0xc8] sm:$0xf] %vm784, %v706
  %836 = vst.msk [vmem:[%s2 + $0xcc] sm:$0xf] %vm784, %v707
  %837 = vst.msk [vmem:[%s2 + $0xd0] sm:$0xf] %vm784, %v708
  %838 = vst.msk [vmem:[%s2 + $0xd4] sm:$0xf] %vm784, %v709
  %839 = vst.msk [vmem:[%s2 + $0xd8] sm:$0xf] %vm784, %v710
  %840 = vst.msk [vmem:[%s2 + $0xdc] sm:$0xf] %vm784, %v711
  %841 = vst.msk [vmem:[%s2 + $0xe0] sm:$0xf] %vm784, %v712
  %842 = vst.msk [vmem:[%s2 + $0xe4] sm:$0xf] %vm784, %v713
  %843 = vst.msk [vmem:[%s2 + $0xe8] sm:$0xf] %vm784, %v714
  %844 = vst.msk [vmem:[%s2 + $0xec] sm:$0xf] %vm784, %v715
  %845 = vst.msk [vmem:[%s2 + $0xf0] sm:$0xf] %vm784, %v716
  %846 = vst.msk [vmem:[%s2 + $0xf4] sm:$0xf] %vm784, %v717
  %847 = vst.msk [vmem:[%s2 + $0xf8] sm:$0xf] %vm784, %v718
  %848 = vst.msk [vmem:[%s2 + $0xfc] sm:$0xf] %vm784, %v719
  %v849 = vsel %vm142, %v274, 0.0
  %v850 = vsel %vm142, %v277, 0.0
  %v851 = vadd.f32 %v849, %v850
  %v852 = vsel %vm142, %v282, 0.0
  %v853 = vadd.f32 %v851, %v852
  %v854 = vsel %vm142, %v285, 0.0
  %v855 = vadd.f32 %v853, %v854
  %v856 = vsel %vm142, %v290, 0.0
  %v857 = vadd.f32 %v855, %v856
  %v858 = vsel %vm142, %v293, 0.0
  %v859 = vadd.f32 %v857, %v858
  %v860 = vsel %vm142, %v298, 0.0
  %v861 = vadd.f32 %v859, %v860
  %v862 = vsel %vm142, %v301, 0.0
  %v863 = vadd.f32 %v861, %v862
  %v864 = vsel %vm142, %v306, 0.0
  %v865 = vadd.f32 %v863, %v864
  %v866 = vsel %vm142, %v309, 0.0
  %v867 = vadd.f32 %v865, %v866
  %v868 = vsel %vm142, %v314, 0.0
  %v869 = vadd.f32 %v867, %v868
  %v870 = vsel %vm142, %v317, 0.0
  %v871 = vadd.f32 %v869, %v870
  %v872 = vsel %vm142, %v322, 0.0
  %v873 = vadd.f32 %v871, %v872
  %v874 = vsel %vm142, %v325, 0.0
  %v875 = vadd.f32 %v873, %v874
  %v876 = vsel %vm142, %v330, 0.0
  %v877 = vadd.f32 %v875, %v876
  %v878 = vsel %vm142, %v333, 0.0
  %v879 = vadd.f32 %v877, %v878
  %v880 = vsel %vm142, %v338, 0.0
  %v881 = vadd.f32 %v879, %v880
  %v882 = vsel %vm142, %v341, 0.0
  %v883 = vadd.f32 %v881, %v882
  %v884 = vsel %vm142, %v346, 0.0
  %v885 = vadd.f32 %v883, %v884
  %v886 = vsel %vm142, %v349, 0.0
  %v887 = vadd.f32 %v885, %v886
  %v888 = vsel %vm142, %v354, 0.0
  %v889 = vadd.f32 %v887, %v888
  %v890 = vsel %vm142, %v357, 0.0
  %v891 = vadd.f32 %v889, %v890
  %v892 = vsel %vm142, %v362, 0.0
  %v893 = vadd.f32 %v891, %v892
  %v894 = vsel %vm142, %v365, 0.0
  %v895 = vadd.f32 %v893, %v894
  %v896 = vsel %vm142, %v370, 0.0
  %v897 = vadd.f32 %v895, %v896
  %v898 = vsel %vm142, %v373, 0.0
  %v899 = vadd.f32 %v897, %v898
  %v900 = vsel %vm142, %v378, 0.0
  %v901 = vadd.f32 %v899, %v900
  %v902 = vsel %vm142, %v381, 0.0
  %v903 = vadd.f32 %v901, %v902
  %v904 = vsel %vm142, %v386, 0.0
  %v905 = vadd.f32 %v903, %v904
  %v906 = vsel %vm142, %v389, 0.0
  %v907 = vadd.f32 %v905, %v906
  %v908 = vsel %vm142, %v394, 0.0
  %v909 = vadd.f32 %v907, %v908
  %v910 = vsel %vm142, %v397, 0.0
  %v911 = vadd.f32 %v909, %v910
  %v912 = vsel %vm142, %v402, 0.0
  %v913 = vadd.f32 %v911, %v912
  %v914 = vsel %vm142, %v405, 0.0
  %v915 = vadd.f32 %v913, %v914
  %v916 = vsel %vm142, %v410, 0.0
  %v917 = vadd.f32 %v915, %v916
  %v918 = vsel %vm142, %v413, 0.0
  %v919 = vadd.f32 %v917, %v918
  %v920 = vsel %vm142, %v418, 0.0
  %v921 = vadd.f32 %v919, %v920
  %v922 = vsel %vm142, %v421, 0.0
  %v923 = vadd.f32 %v921, %v922
  %v924 = vsel %vm142, %v426, 0.0
  %v925 = vadd.f32 %v923, %v924
  %v926 = vsel %vm142, %v429, 0.0
  %v927 = vadd.f32 %v925, %v926
  %v928 = vsel %vm142, %v434, 0.0
  %v929 = vadd.f32 %v927, %v928
  %v930 = vsel %vm142, %v437, 0.0
  %v931 = vadd.f32 %v929, %v930
  %v932 = vsel %vm142, %v442, 0.0
  %v933 = vadd.f32 %v931, %v932
  %v934 = vsel %vm142, %v445, 0.0
  %v935 = vadd.f32 %v933, %v934
  %v936 = vsel %vm142, %v450, 0.0
  %v937 = vadd.f32 %v935, %v936
  %v938 = vsel %vm142, %v453, 0.0
  %v939 = vadd.f32 %v937, %v938
  %v940 = vsel %vm142, %v458, 0.0
  %v941 = vadd.f32 %v939, %v940
  %v942 = vsel %vm142, %v461, 0.0
  %v943 = vadd.f32 %v941, %v942
  %v944 = vsel %vm142, %v466, 0.0
  %v945 = vadd.f32 %v943, %v944
  %v946 = vsel %vm142, %v469, 0.0
  %v947 = vadd.f32 %v945, %v946
  %v948 = vsel %vm142, %v474, 0.0
  %v949 = vadd.f32 %v947, %v948
  %v950 = vsel %vm142, %v477, 0.0
  %v951 = vadd.f32 %v949, %v950
  %v952 = vsel %vm142, %v482, 0.0
  %v953 = vadd.f32 %v951, %v952
  %v954 = vsel %vm142, %v485, 0.0
  %v955 = vadd.f32 %v953, %v954
  %v956 = vsel %vm142, %v490, 0.0
  %v957 = vadd.f32 %v955, %v956
  %v958 = vsel %vm142, %v493, 0.0
  %v959 = vadd.f32 %v957, %v958
  %v960 = vsel %vm142, %v498, 0.0
  %v961 = vadd.f32 %v959, %v960
  %v962 = vsel %vm142, %v501, 0.0
  %v963 = vadd.f32 %v961, %v962
  %v964 = vsel %vm142, %v506, 0.0
  %v965 = vadd.f32 %v963, %v964
  %v966 = vsel %vm142, %v509, 0.0
  %v967 = vadd.f32 %v965, %v966
  %v968 = vsel %vm142, %v514, 0.0
  %v969 = vadd.f32 %v967, %v968
  %v970 = vsel %vm142, %v517, 0.0
  %v971 = vadd.f32 %v969, %v970
  %v972 = vsel %vm142, %v522, 0.0
  %v973 = vadd.f32 %v971, %v972
  %v974 = vsel %vm142, %v525, 0.0
  %v975 = vadd.f32 %v973, %v974
  %v976 = vrot.slane %v975, 4
  %v977 = vadd.f32 %v975, %v976
  %v978 = vrot.slane %v977, 2
  %v979 = vadd.f32 %v977, %v978
  %v980 = vrot.slane %v979, 1
  %v981 = vadd.f32 %v979, %v980
  %v982 = vmul.f32 %v274, %v274
  %v983 = vmul.f32 %v277, %v277
  %v984 = vmul.f32 %v282, %v282
  %v985 = vmul.f32 %v285, %v285
  %v986 = vmul.f32 %v290, %v290
  %v987 = vmul.f32 %v293, %v293
  %v988 = vmul.f32 %v298, %v298
  %v989 = vmul.f32 %v301, %v301
  %v990 = vmul.f32 %v306, %v306
  %v991 = vmul.f32 %v309, %v309
  %v992 = vmul.f32 %v314, %v314
  %v993 = vmul.f32 %v317, %v317
  %v994 = vmul.f32 %v322, %v322
  %v995 = vmul.f32 %v325, %v325
  %v996 = vmul.f32 %v330, %v330
  %v997 = vmul.f32 %v333, %v333
  %v998 = vmul.f32 %v338, %v338
  %v999 = vmul.f32 %v341, %v341
  %v1000 = vmul.f32 %v346, %v346
  %v1001 = vmul.f32 %v349, %v349
  %v1002 = vmul.f32 %v354, %v354
  %v1003 = vmul.f32 %v357, %v357
  %v1004 = vmul.f32 %v362, %v362
  %v1005 = vmul.f32 %v365, %v365
  %v1006 = vmul.f32 %v370, %v370
  %v1007 = vmul.f32 %v373, %v373
  %v1008 = vmul.f32 %v378, %v378
  %v1009 = vmul.f32 %v381, %v381
  %v1010 = vmul.f32 %v386, %v386
  %v1011 = vmul.f32 %v389, %v389
  %v1012 = vmul.f32 %v394, %v394
  %v1013 = vmul.f32 %v397, %v397
  %v1014 = vmul.f32 %v402, %v402
  %v1015 = vmul.f32 %v405, %v405
  %v1016 = vmul.f32 %v410, %v410
  %v1017 = vmul.f32 %v413, %v413
  %v1018 = vmul.f32 %v418, %v418
  %v1019 = vmul.f32 %v421, %v421
  %v1020 = vmul.f32 %v426, %v426
  %v1021 = vmul.f32 %v429, %v429
  %v1022 = vmul.f32 %v434, %v434
  %v1023 = vmul.f32 %v437, %v437
  %v1024 = vmul.f32 %v442, %v442
  %v1025 = vmul.f32 %v445, %v445
  %v1026 = vmul.f32 %v450, %v450
  %v1027 = vmul.f32 %v453, %v453
  %v1028 = vmul.f32 %v458, %v458
  %v1029 = vmul.f32 %v461, %v461
  %v1030 = vmul.f32 %v466, %v466
  %v1031 = vmul.f32 %v469, %v469
  %v1032 = vmul.f32 %v474, %v474
  %v1033 = vmul.f32 %v477, %v477
  %v1034 = vmul.f32 %v482, %v482
  %v1035 = vmul.f32 %v485, %v485
  %v1036 = vmul.f32 %v490, %v490
  %v1037 = vmul.f32 %v493, %v493
  %v1038 = vmul.f32 %v498, %v498
  %v1039 = vmul.f32 %v501, %v501
  %v1040 = vmul.f32 %v506, %v506
  %v1041 = vmul.f32 %v509, %v509
  %v1042 = vmul.f32 %v514, %v514
  %v1043 = vmul.f32 %v517, %v517
  %v1044 = vmul.f32 %v522, %v522
  %v1045 = vmul.f32 %v525, %v525
  %v1046 = vsel %vm142, %v982, 0.0
  %v1047 = vsel %vm142, %v983, 0.0
  %v1048 = vadd.f32 %v1046, %v1047
  %v1049 = vsel %vm142, %v984, 0.0
  %v1050 = vadd.f32 %v1048, %v1049
  %v1051 = vsel %vm142, %v985, 0.0
  %v1052 = vadd.f32 %v1050, %v1051
  %v1053 = vsel %vm142, %v986, 0.0
  %v1054 = vadd.f32 %v1052, %v1053
  %v1055 = vsel %vm142, %v987, 0.0
  %v1056 = vadd.f32 %v1054, %v1055
  %v1057 = vsel %vm142, %v988, 0.0
  %v1058 = vadd.f32 %v1056, %v1057
  %v1059 = vsel %vm142, %v989, 0.0
  %v1060 = vadd.f32 %v1058, %v1059
  %v1061 = vsel %vm142, %v990, 0.0
  %v1062 = vadd.f32 %v1060, %v1061
  %v1063 = vsel %vm142, %v991, 0.0
  %v1064 = vadd.f32 %v1062, %v1063
  %v1065 = vsel %vm142, %v992, 0.0
  %v1066 = vadd.f32 %v1064, %v1065
  %v1067 = vsel %vm142, %v993, 0.0
  %v1068 = vadd.f32 %v1066, %v1067
  %v1069 = vsel %vm142, %v994, 0.0
  %v1070 = vadd.f32 %v1068, %v1069
  %v1071 = vsel %vm142, %v995, 0.0
  %v1072 = vadd.f32 %v1070, %v1071
  %v1073 = vsel %vm142, %v996, 0.0
  %v1074 = vadd.f32 %v1072, %v1073
  %v1075 = vsel %vm142, %v997, 0.0
  %v1076 = vadd.f32 %v1074, %v1075
  %v1077 = vsel %vm142, %v998, 0.0
  %v1078 = vadd.f32 %v1076, %v1077
  %v1079 = vsel %vm142, %v999, 0.0
  %v1080 = vadd.f32 %v1078, %v1079
  %v1081 = vsel %vm142, %v1000, 0.0
  %v1082 = vadd.f32 %v1080, %v1081
  %v1083 = vsel %vm142, %v1001, 0.0
  %v1084 = vadd.f32 %v1082, %v1083
  %v1085 = vsel %vm142, %v1002, 0.0
  %v1086 = vadd.f32 %v1084, %v1085
  %v1087 = vsel %vm142, %v1003, 0.0
  %v1088 = vadd.f32 %v1086, %v1087
  %v1089 = vsel %vm142, %v1004, 0.0
  %v1090 = vadd.f32 %v1088, %v1089
  %v1091 = vsel %vm142, %v1005, 0.0
  %v1092 = vadd.f32 %v1090, %v1091
  %v1093 = vsel %vm142, %v1006, 0.0
  %v1094 = vadd.f32 %v1092, %v1093
  %v1095 = vsel %vm142, %v1007, 0.0
  %v1096 = vadd.f32 %v1094, %v1095
  %v1097 = vsel %vm142, %v1008, 0.0
  %v1098 = vadd.f32 %v1096, %v1097
  %v1099 = vsel %vm142, %v1009, 0.0
  %v1100 = vadd.f32 %v1098, %v1099
  %v1101 = vsel %vm142, %v1010, 0.0
  %v1102 = vadd.f32 %v1100, %v1101
  %v1103 = vsel %vm142, %v1011, 0.0
  %v1104 = vadd.f32 %v1102, %v1103
  %v1105 = vsel %vm142, %v1012, 0.0
  %v1106 = vadd.f32 %v1104, %v1105
  %v1107 = vsel %vm142, %v1013, 0.0
  %v1108 = vadd.f32 %v1106, %v1107
  %v1109 = vsel %vm142, %v1014, 0.0
  %v1110 = vadd.f32 %v1108, %v1109
  %v1111 = vsel %vm142, %v1015, 0.0
  %v1112 = vadd.f32 %v1110, %v1111
  %v1113 = vsel %vm142, %v1016, 0.0
  %v1114 = vadd.f32 %v1112, %v1113
  %v1115 = vsel %vm142, %v1017, 0.0
  %v1116 = vadd.f32 %v1114, %v1115
  %v1117 = vsel %vm142, %v1018, 0.0
  %v1118 = vadd.f32 %v1116, %v1117
  %v1119 = vsel %vm142, %v1019, 0.0
  %v1120 = vadd.f32 %v1118, %v1119
  %v1121 = vsel %vm142, %v1020, 0.0
  %v1122 = vadd.f32 %v1120, %v1121
  %v1123 = vsel %vm142, %v1021, 0.0
  %v1124 = vadd.f32 %v1122, %v1123
  %v1125 = vsel %vm142, %v1022, 0.0
  %v1126 = vadd.f32 %v1124, %v1125
  %v1127 = vsel %vm142, %v1023, 0.0
  %v1128 = vadd.f32 %v1126, %v1127
  %v1129 = vsel %vm142, %v1024, 0.0
  %v1130 = vadd.f32 %v1128, %v1129
  %v1131 = vsel %vm142, %v1025, 0.0
  %v1132 = vadd.f32 %v1130, %v1131
  %v1133 = vsel %vm142, %v1026, 0.0
  %v1134 = vadd.f32 %v1132, %v1133
  %v1135 = vsel %vm142, %v1027, 0.0
  %v1136 = vadd.f32 %v1134, %v1135
  %v1137 = vsel %vm142, %v1028, 0.0
  %v1138 = vadd.f32 %v1136, %v1137
  %v1139 = vsel %vm142, %v1029, 0.0
  %v1140 = vadd.f32 %v1138, %v1139
  %v1141 = vsel %vm142, %v1030, 0.0
  %v1142 = vadd.f32 %v1140, %v1141
  %v1143 = vsel %vm142, %v1031, 0.0
  %v1144 = vadd.f32 %v1142, %v1143
  %v1145 = vsel %vm142, %v1032, 0.0
  %v1146 = vadd.f32 %v1144, %v1145
  %v1147 = vsel %vm142, %v1033, 0.0
  %v1148 = vadd.f32 %v1146, %v1147
  %v1149 = vsel %vm142, %v1034, 0.0
  %v1150 = vadd.f32 %v1148, %v1149
  %v1151 = vsel %vm142, %v1035, 0.0
  %v1152 = vadd.f32 %v1150, %v1151
  %v1153 = vsel %vm142, %v1036, 0.0
  %v1154 = vadd.f32 %v1152, %v1153
  %v1155 = vsel %vm142, %v1037, 0.0
  %v1156 = vadd.f32 %v1154, %v1155
  %v1157 = vsel %vm142, %v1038, 0.0
  %v1158 = vadd.f32 %v1156, %v1157
  %v1159 = vsel %vm142, %v1039, 0.0
  %v1160 = vadd.f32 %v1158, %v1159
  %v1161 = vsel %vm142, %v1040, 0.0
  %v1162 = vadd.f32 %v1160, %v1161
  %v1163 = vsel %vm142, %v1041, 0.0
  %v1164 = vadd.f32 %v1162, %v1163
  %v1165 = vsel %vm142, %v1042, 0.0
  %v1166 = vadd.f32 %v1164, %v1165
  %v1167 = vsel %vm142, %v1043, 0.0
  %v1168 = vadd.f32 %v1166, %v1167
  %v1169 = vsel %vm142, %v1044, 0.0
  %v1170 = vadd.f32 %v1168, %v1169
  %v1171 = vsel %vm142, %v1045, 0.0
  %v1172 = vadd.f32 %v1170, %v1171
  %v1173 = vrot.slane %v1172, 4
  %v1174 = vadd.f32 %v1172, %v1173
  %v1175 = vrot.slane %v1174, 2
  %v1176 = vadd.f32 %v1174, %v1175
  %v1177 = vrot.slane %v1176, 1
  %v1178 = vadd.f32 %v1176, %v1177
  %vm1179 = vcmask 1040384
  %v1180 = vsel %vm1179, %v981, %v1178
  %vm1181 = vcmask 517120
  %1182 = vst.msk [vmem:[%s3] sm:$0x3] %vm1181, %v1180
  // Predicated region
  $region10: #{dpn_block_forward.3} parent=0 // pred_check
    _
  $region11: #{dpn_block_forward.3} parent=0 // pred_check_branch
    %1184 = sbr.rel (0) target = $region13
  $region12: #{dpn_block_forward.3} parent=0 // pred_region
    _
  $region13: #{dpn_block_forward.3} parent=0 // pred_fallthru
    _
  // Predicated region
  $region14: #{dpn_block_forward.3} parent=0 // pred_check
    _
  $region15: #{dpn_block_forward.3} parent=0 // pred_check_branch
    %1186 = sbr.rel (0) target = $region17
  $region16: #{dpn_block_forward.3} parent=0 // pred_region
    _
  $region17: #{dpn_block_forward.3} parent=0 // pred_fallthru
    _
  // Predicated region
  $region18: #{dpn_block_forward.3} parent=0 // pred_check
    _
  $region19: #{dpn_block_forward.3} parent=0 // pred_check_branch
    %1188 = sbr.rel (0) target = $region21
  $region20: #{dpn_block_forward.3} parent=0 // pred_region
    _
  $region21: #{dpn_block_forward.3} parent=0 // pred_fallthru
    _
  // Predicated region
  $region22: #{dpn_block_forward.3} parent=0 // pred_check
    _
  $region23: #{dpn_block_forward.3} parent=0 // pred_check_branch
    %1190 = sbr.rel (0) target = $region25
  $region24: #{dpn_block_forward.3} parent=0 // pred_region
    _
  $region25: #{dpn_block_forward.3} parent=0 // pred_fallthru
    _

// kernel: dpn_block_forward.5
$region0: #{dpn_block_forward.5}
  #allocation0 [shape = 'u32[]', space=smem, size = 0x4, offset = 0x4, fixed_abs, tag = 'smem constant byte address 0x4 - core index']
  #allocation1 [shape = 'u32[144,128]{1,0:T(1,128)}', space=vmem, size = 0x12000, scoped, tag = 'internal scratch']
  %s0 = inlined_call_operand.vmem [shape: bf16[512,32], index: 0, kind: input, shape index: {}]
  %s1 = inlined_call_operand.vmem [shape: bf16[512,64], index: 1, kind: input, shape index: {}]
  %s2 = inlined_call_operand.vmem [shape: f32[512,64], index: 2, kind: input, shape index: {}]
  %s3 = inlined_call_operand.vmem [shape: f32[1,32], index: 3, kind: input, shape index: {}]
  %s4 = inlined_call_operand.vmem [shape: f32[1,32], index: 4, kind: input, shape index: {}]
  %s5 = inlined_call_operand.vmem [shape: f32[1,32], index: 5, kind: input, shape index: {}]
  %s6 = inlined_call_operand.vmem [shape: f32[1,32], index: 6, kind: input, shape index: {}]
  %s7 = inlined_call_operand.hbm [shape: f32[512,64], index: 7, kind: output, shape index: {}]
  %s8 = sld [smem:[#allocation0]]
  $region38: #{dpn_block_forward.5} parent=0
    _
  %s10 = ssub.s32 1, %s8
  %s11 = scalar_select 0, %s10, %s8
  $region1: #{dpn_block_forward.5} parent=0
    #allocation2 [shape = 'u8[262144]{0}', space=vmem, size = 0x40000, scoped, tag = 'output window, operand 0, single buffered']
    #allocation3 [shape = 's32[1]{0}', space=sflag, size = 0x4, scoped, tag = 'scoped memory for dpn_block_forward.5']
    %12 = vsyncpa [#allocation3], 0
    // Predicated region
    $region2: #{dpn_block_forward.5} parent=1 // pred_check
      _
    $region3: #{dpn_block_forward.5} parent=1 // pred_check_branch
      %14 = sbr.rel (0) target = $region5
    $region4: #{dpn_block_forward.5} parent=1 // pred_region
      _
    $region5: #{dpn_block_forward.5} parent=1 // pred_fallthru
      _
    // Predicated region
    $region6: #{dpn_block_forward.5} parent=1 // pred_check
      _
    $region7: #{dpn_block_forward.5} parent=1 // pred_check_branch
      %16 = sbr.rel (0) target = $region9
    $region8: #{dpn_block_forward.5} parent=1 // pred_region
      _
    $region9: #{dpn_block_forward.5} parent=1 // pred_fallthru
      _
    // Predicated region
    $region10: #{dpn_block_forward.5} parent=1 // pred_check
      _
    $region11: #{dpn_block_forward.5} parent=1 // pred_check_branch
      %18 = sbr.rel (0) target = $region13
    $region12: #{dpn_block_forward.5} parent=1 // pred_region
      _
    $region13: #{dpn_block_forward.5} parent=1 // pred_fallthru
      _
    // Predicated region
    $region14: #{dpn_block_forward.5} parent=1 // pred_check
      _
    $region15: #{dpn_block_forward.5} parent=1 // pred_check_branch
      %20 = sbr.rel (0) target = $region17
    $region16: #{dpn_block_forward.5} parent=1 // pred_region
      _
    $region17: #{dpn_block_forward.5} parent=1 // pred_fallthru
      _
    // Predicated region
    $region18: #{dpn_block_forward.5} parent=1 // pred_check
      _
    $region19: #{dpn_block_forward.5} parent=1 // pred_check_branch
      %22 = sbr.rel (0) target = $region21
    $region20: #{dpn_block_forward.5} parent=1 // pred_region
      _
    $region21: #{dpn_block_forward.5} parent=1 // pred_fallthru
      _
    // Predicated region
    $region22: #{dpn_block_forward.5} parent=1 // pred_check
      _
    $region23: #{dpn_block_forward.5} parent=1 // pred_check_branch
      %24 = sbr.rel (0) target = $region25
    $region24: #{dpn_block_forward.5} parent=1 // pred_region
      _
    $region25: #{dpn_block_forward.5} parent=1 // pred_fallthru
      _
    // Predicated region
    $region26: #{dpn_block_forward.5} parent=1 // pred_check
      _
    $region27: #{dpn_block_forward.5} parent=1 // pred_check_branch
      %26 = sbr.rel (0) target = $region29
    $region28: #{dpn_block_forward.5} parent=1 // pred_region
      _
    $region29: #{dpn_block_forward.5} parent=1 // pred_fallthru
      _
    %v27 = vld [vmem:[%s1] sm:$0xf]
    %v28 = vld [vmem:[%s1 + $0x4] sm:$0xf]
    %v29 = vld [vmem:[%s1 + $0x8] sm:$0xf]
    %v30 = vld [vmem:[%s1 + $0xc] sm:$0xf]
    %v31 = vld [vmem:[%s1 + $0x10] sm:$0xf]
    %v32 = vld [vmem:[%s1 + $0x14] sm:$0xf]
    %v33 = vld [vmem:[%s1 + $0x18] sm:$0xf]
    %v34 = vld [vmem:[%s1 + $0x1c] sm:$0xf]
    %v35 = vld [vmem:[%s1 + $0x20] sm:$0xf]
    %v36 = vld [vmem:[%s1 + $0x24] sm:$0xf]
    %v37 = vld [vmem:[%s1 + $0x28] sm:$0xf]
    %v38 = vld [vmem:[%s1 + $0x2c] sm:$0xf]
    %v39 = vld [vmem:[%s1 + $0x30] sm:$0xf]
    %v40 = vld [vmem:[%s1 + $0x34] sm:$0xf]
    %v41 = vld [vmem:[%s1 + $0x38] sm:$0xf]
    %v42 = vld [vmem:[%s1 + $0x3c] sm:$0xf]
    %v43 = vld [vmem:[%s1 + $0x40] sm:$0xf]
    %v44 = vld [vmem:[%s1 + $0x44] sm:$0xf]
    %v45 = vld [vmem:[%s1 + $0x48] sm:$0xf]
    %v46 = vld [vmem:[%s1 + $0x4c] sm:$0xf]
    %v47 = vld [vmem:[%s1 + $0x50] sm:$0xf]
    %v48 = vld [vmem:[%s1 + $0x54] sm:$0xf]
    %v49 = vld [vmem:[%s1 + $0x58] sm:$0xf]
    %v50 = vld [vmem:[%s1 + $0x5c] sm:$0xf]
    %v51 = vld [vmem:[%s1 + $0x60] sm:$0xf]
    %v52 = vld [vmem:[%s1 + $0x64] sm:$0xf]
    %v53 = vld [vmem:[%s1 + $0x68] sm:$0xf]
    %v54 = vld [vmem:[%s1 + $0x6c] sm:$0xf]
    %v55 = vld [vmem:[%s1 + $0x70] sm:$0xf]
    %v56 = vld [vmem:[%s1 + $0x74] sm:$0xf]
    %v57 = vld [vmem:[%s1 + $0x78] sm:$0xf]
    %v58 = vld [vmem:[%s1 + $0x7c] sm:$0xf]
    %v59 = vld [vmem:[%s1 + $0x80] sm:$0xf]
    %v60 = vld [vmem:[%s1 + $0x84] sm:$0xf]
    %v61 = vld [vmem:[%s1 + $0x88] sm:$0xf]
    %v62 = vld [vmem:[%s1 + $0x8c] sm:$0xf]
    %v63 = vld [vmem:[%s1 + $0x90] sm:$0xf]
    %v64 = vld [vmem:[%s1 + $0x94] sm:$0xf]
    %v65 = vld [vmem:[%s1 + $0x98] sm:$0xf]
    %v66 = vld [vmem:[%s1 + $0x9c] sm:$0xf]
    %v67 = vld [vmem:[%s1 + $0xa0] sm:$0xf]
    %v68 = vld [vmem:[%s1 + $0xa4] sm:$0xf]
    %v69 = vld [vmem:[%s1 + $0xa8] sm:$0xf]
    %v70 = vld [vmem:[%s1 + $0xac] sm:$0xf]
    %v71 = vld [vmem:[%s1 + $0xb0] sm:$0xf]
    %v72 = vld [vmem:[%s1 + $0xb4] sm:$0xf]
    %v73 = vld [vmem:[%s1 + $0xb8] sm:$0xf]
    %v74 = vld [vmem:[%s1 + $0xbc] sm:$0xf]
    %v75 = vld [vmem:[%s1 + $0xc0] sm:$0xf]
    %v76 = vld [vmem:[%s1 + $0xc4] sm:$0xf]
    %v77 = vld [vmem:[%s1 + $0xc8] sm:$0xf]
    %v78 = vld [vmem:[%s1 + $0xcc] sm:$0xf]
    %v79 = vld [vmem:[%s1 + $0xd0] sm:$0xf]
    %v80 = vld [vmem:[%s1 + $0xd4] sm:$0xf]
    %v81 = vld [vmem:[%s1 + $0xd8] sm:$0xf]
    %v82 = vld [vmem:[%s1 + $0xdc] sm:$0xf]
    %v83 = vld [vmem:[%s1 + $0xe0] sm:$0xf]
    %v84 = vld [vmem:[%s1 + $0xe4] sm:$0xf]
    %v85 = vld [vmem:[%s1 + $0xe8] sm:$0xf]
    %v86 = vld [vmem:[%s1 + $0xec] sm:$0xf]
    %v87 = vld [vmem:[%s1 + $0xf0] sm:$0xf]
    %v88 = vld [vmem:[%s1 + $0xf4] sm:$0xf]
    %v89 = vld [vmem:[%s1 + $0xf8] sm:$0xf]
    %v90 = vld [vmem:[%s1 + $0xfc] sm:$0xf]
    %v91 = vld [vmem:[%s2] sm:$0xff]
    %v92 = vld [vmem:[%s2 + $0x8] sm:$0xff]
    %v93 = vld [vmem:[%s2 + $0x10] sm:$0xff]
    %v94 = vld [vmem:[%s2 + $0x18] sm:$0xff]
    %v95 = vld [vmem:[%s2 + $0x20] sm:$0xff]
    %v96 = vld [vmem:[%s2 + $0x28] sm:$0xff]
    %v97 = vld [vmem:[%s2 + $0x30] sm:$0xff]
    %v98 = vld [vmem:[%s2 + $0x38] sm:$0xff]
    %v99 = vld [vmem:[%s2 + $0x40] sm:$0xff]
    %v100 = vld [vmem:[%s2 + $0x48] sm:$0xff]
    %v101 = vld [vmem:[%s2 + $0x50] sm:$0xff]
    %v102 = vld [vmem:[%s2 + $0x58] sm:$0xff]
    %v103 = vld [vmem:[%s2 + $0x60] sm:$0xff]
    %v104 = vld [vmem:[%s2 + $0x68] sm:$0xff]
    %v105 = vld [vmem:[%s2 + $0x70] sm:$0xff]
    %v106 = vld [vmem:[%s2 + $0x78] sm:$0xff]
    %v107 = vld [vmem:[%s2 + $0x80] sm:$0xff]
    %v108 = vld [vmem:[%s2 + $0x88] sm:$0xff]
    %v109 = vld [vmem:[%s2 + $0x90] sm:$0xff]
    %v110 = vld [vmem:[%s2 + $0x98] sm:$0xff]
    %v111 = vld [vmem:[%s2 + $0xa0] sm:$0xff]
    %v112 = vld [vmem:[%s2 + $0xa8] sm:$0xff]
    %v113 = vld [vmem:[%s2 + $0xb0] sm:$0xff]
    %v114 = vld [vmem:[%s2 + $0xb8] sm:$0xff]
    %v115 = vld [vmem:[%s2 + $0xc0] sm:$0xff]
    %v116 = vld [vmem:[%s2 + $0xc8] sm:$0xff]
    %v117 = vld [vmem:[%s2 + $0xd0] sm:$0xff]
    %v118 = vld [vmem:[%s2 + $0xd8] sm:$0xff]
    %v119 = vld [vmem:[%s2 + $0xe0] sm:$0xff]
    %v120 = vld [vmem:[%s2 + $0xe8] sm:$0xff]
    %v121 = vld [vmem:[%s2 + $0xf0] sm:$0xff]
    %v122 = vld [vmem:[%s2 + $0xf8] sm:$0xff]
    %v123 = vld [vmem:[%s2 + $0x100] sm:$0xff]
    %v124 = vld [vmem:[%s2 + $0x108] sm:$0xff]
    %v125 = vld [vmem:[%s2 + $0x110] sm:$0xff]
    %v126 = vld [vmem:[%s2 + $0x118] sm:$0xff]
    %v127 = vld [vmem:[%s2 + $0x120] sm:$0xff]
    %v128 = vld [vmem:[%s2 + $0x128] sm:$0xff]
    %v129 = vld [vmem:[%s2 + $0x130] sm:$0xff]
    %v130 = vld [vmem:[%s2 + $0x138] sm:$0xff]
    %v131 = vld [vmem:[%s2 + $0x140] sm:$0xff]
    %v132 = vld [vmem:[%s2 + $0x148] sm:$0xff]
    %v133 = vld [vmem:[%s2 + $0x150] sm:$0xff]
    %v134 = vld [vmem:[%s2 + $0x158] sm:$0xff]
    %v135 = vld [vmem:[%s2 + $0x160] sm:$0xff]
    %v136 = vld [vmem:[%s2 + $0x168] sm:$0xff]
    %v137 = vld [vmem:[%s2 + $0x170] sm:$0xff]
    %v138 = vld [vmem:[%s2 + $0x178] sm:$0xff]
    %v139 = vld [vmem:[%s2 + $0x180] sm:$0xff]
    %v140 = vld [vmem:[%s2 + $0x188] sm:$0xff]
    %v141 = vld [vmem:[%s2 + $0x190] sm:$0xff]
    %v142 = vld [vmem:[%s2 + $0x198] sm:$0xff]
    %v143 = vld [vmem:[%s2 + $0x1a0] sm:$0xff]
    %v144 = vld [vmem:[%s2 + $0x1a8] sm:$0xff]
    %v145 = vld [vmem:[%s2 + $0x1b0] sm:$0xff]
    %v146 = vld [vmem:[%s2 + $0x1b8] sm:$0xff]
    %v147 = vld [vmem:[%s2 + $0x1c0] sm:$0xff]
    %v148 = vld [vmem:[%s2 + $0x1c8] sm:$0xff]
    %v149 = vld [vmem:[%s2 + $0x1d0] sm:$0xff]
    %v150 = vld [vmem:[%s2 + $0x1d8] sm:$0xff]
    %v151 = vld [vmem:[%s2 + $0x1e0] sm:$0xff]
    %v152 = vld [vmem:[%s2 + $0x1e8] sm:$0xff]
    %v153 = vld [vmem:[%s2 + $0x1f0] sm:$0xff]
    %v154 = vld [vmem:[%s2 + $0x1f8] sm:$0xff]
    %v155 = vld [vmem:[%s0] sm:$0xf]
    %v156 = vld [vmem:[%s0 + $0x4] sm:$0xf]
    %v157 = vld [vmem:[%s0 + $0x8] sm:$0xf]
    %v158 = vld [vmem:[%s0 + $0xc] sm:$0xf]
    %v159 = vld [vmem:[%s0 + $0x10] sm:$0xf]
    %v160 = vld [vmem:[%s0 + $0x14] sm:$0xf]
    %v161 = vld [vmem:[%s0 + $0x18] sm:$0xf]
    %v162 = vld [vmem:[%s0 + $0x1c] sm:$0xf]
    %v163 = vld [vmem:[%s0 + $0x20] sm:$0xf]
    %v164 = vld [vmem:[%s0 + $0x24] sm:$0xf]
    %v165 = vld [vmem:[%s0 + $0x28] sm:$0xf]
    %v166 = vld [vmem:[%s0 + $0x2c] sm:$0xf]
    %v167 = vld [vmem:[%s0 + $0x30] sm:$0xf]
    %v168 = vld [vmem:[%s0 + $0x34] sm:$0xf]
    %v169 = vld [vmem:[%s0 + $0x38] sm:$0xf]
    %v170 = vld [vmem:[%s0 + $0x3c] sm:$0xf]
    %v171 = vld [vmem:[%s0 + $0x40] sm:$0xf]
    %v172 = vld [vmem:[%s0 + $0x44] sm:$0xf]
    %v173 = vld [vmem:[%s0 + $0x48] sm:$0xf]
    %v174 = vld [vmem:[%s0 + $0x4c] sm:$0xf]
    %v175 = vld [vmem:[%s0 + $0x50] sm:$0xf]
    %v176 = vld [vmem:[%s0 + $0x54] sm:$0xf]
    %v177 = vld [vmem:[%s0 + $0x58] sm:$0xf]
    %v178 = vld [vmem:[%s0 + $0x5c] sm:$0xf]
    %v179 = vld [vmem:[%s0 + $0x60] sm:$0xf]
    %v180 = vld [vmem:[%s0 + $0x64] sm:$0xf]
    %v181 = vld [vmem:[%s0 + $0x68] sm:$0xf]
    %v182 = vld [vmem:[%s0 + $0x6c] sm:$0xf]
    %v183 = vld [vmem:[%s0 + $0x70] sm:$0xf]
    %v184 = vld [vmem:[%s0 + $0x74] sm:$0xf]
    %v185 = vld [vmem:[%s0 + $0x78] sm:$0xf]
    %v186 = vld [vmem:[%s0 + $0x7c] sm:$0xf]
    %v187 = vld [vmem:[%s0 + $0x80] sm:$0xf]
    %v188 = vld [vmem:[%s0 + $0x84] sm:$0xf]
    %v189 = vld [vmem:[%s0 + $0x88] sm:$0xf]
    %v190 = vld [vmem:[%s0 + $0x8c] sm:$0xf]
    %v191 = vld [vmem:[%s0 + $0x90] sm:$0xf]
    %v192 = vld [vmem:[%s0 + $0x94] sm:$0xf]
    %v193 = vld [vmem:[%s0 + $0x98] sm:$0xf]
    %v194 = vld [vmem:[%s0 + $0x9c] sm:$0xf]
    %v195 = vld [vmem:[%s0 + $0xa0] sm:$0xf]
    %v196 = vld [vmem:[%s0 + $0xa4] sm:$0xf]
    %v197 = vld [vmem:[%s0 + $0xa8] sm:$0xf]
    %v198 = vld [vmem:[%s0 + $0xac] sm:$0xf]
    %v199 = vld [vmem:[%s0 + $0xb0] sm:$0xf]
    %v200 = vld [vmem:[%s0 + $0xb4] sm:$0xf]
    %v201 = vld [vmem:[%s0 + $0xb8] sm:$0xf]
    %v202 = vld [vmem:[%s0 + $0xbc] sm:$0xf]
    %v203 = vld [vmem:[%s0 + $0xc0] sm:$0xf]
    %v204 = vld [vmem:[%s0 + $0xc4] sm:$0xf]
    %v205 = vld [vmem:[%s0 + $0xc8] sm:$0xf]
    %v206 = vld [vmem:[%s0 + $0xcc] sm:$0xf]
    %v207 = vld [vmem:[%s0 + $0xd0] sm:$0xf]
    %v208 = vld [vmem:[%s0 + $0xd4] sm:$0xf]
    %v209 = vld [vmem:[%s0 + $0xd8] sm:$0xf]
    %v210 = vld [vmem:[%s0 + $0xdc] sm:$0xf]
    %v211 = vld [vmem:[%s0 + $0xe0] sm:$0xf]
    %v212 = vld [vmem:[%s0 + $0xe4] sm:$0xf]
    %v213 = vld [vmem:[%s0 + $0xe8] sm:$0xf]
    %v214 = vld [vmem:[%s0 + $0xec] sm:$0xf]
    %v215 = vld [vmem:[%s0 + $0xf0] sm:$0xf]
    %v216 = vld [vmem:[%s0 + $0xf4] sm:$0xf]
    %v217 = vld [vmem:[%s0 + $0xf8] sm:$0xf]
    %v218 = vld [vmem:[%s0 + $0xfc] sm:$0xf]
    %v219 = vunpack.c.l.bf16 %v155
    %v220 = vunpack.c.l.bf16 %v156
    %v221 = vunpack.c.l.bf16 %v157
    %v222 = vunpack.c.l.bf16 %v158
    %v223 = vunpack.c.l.bf16 %v159
    %v224 = vunpack.c.l.bf16 %v160
    %v225 = vunpack.c.l.bf16 %v161
    %v226 = vunpack.c.l.bf16 %v162
    %v227 = vunpack.c.l.bf16 %v163
    %v228 = vunpack.c.l.bf16 %v164
    %v229 = vunpack.c.l.bf16 %v165
    %v230 = vunpack.c.l.bf16 %v166
    %v231 = vunpack.c.l.bf16 %v167
    %v232 = vunpack.c.l.bf16 %v168
    %v233 = vunpack.c.l.bf16 %v169
    %v234 = vunpack.c.l.bf16 %v170
    %v235 = vunpack.c.l.bf16 %v171
    %v236 = vunpack.c.l.bf16 %v172
    %v237 = vunpack.c.l.bf16 %v173
    %v238 = vunpack.c.l.bf16 %v174
    %v239 = vunpack.c.l.bf16 %v175
    %v240 = vunpack.c.l.bf16 %v176
    %v241 = vunpack.c.l.bf16 %v177
    %v242 = vunpack.c.l.bf16 %v178
    %v243 = vunpack.c.l.bf16 %v179
    %v244 = vunpack.c.l.bf16 %v180
    %v245 = vunpack.c.l.bf16 %v181
    %v246 = vunpack.c.l.bf16 %v182
    %v247 = vunpack.c.l.bf16 %v183
    %v248 = vunpack.c.l.bf16 %v184
    %v249 = vunpack.c.l.bf16 %v185
    %v250 = vunpack.c.l.bf16 %v186
    %v251 = vunpack.c.l.bf16 %v187
    %v252 = vunpack.c.l.bf16 %v188
    %v253 = vunpack.c.l.bf16 %v189
    %v254 = vunpack.c.l.bf16 %v190
    %v255 = vunpack.c.l.bf16 %v191
    %v256 = vunpack.c.l.bf16 %v192
    %v257 = vunpack.c.l.bf16 %v193
    %v258 = vunpack.c.l.bf16 %v194
    %v259 = vunpack.c.l.bf16 %v195
    %v260 = vunpack.c.l.bf16 %v196
    %v261 = vunpack.c.l.bf16 %v197
    %v262 = vunpack.c.l.bf16 %v198
    %v263 = vunpack.c.l.bf16 %v199
    %v264 = vunpack.c.l.bf16 %v200
    %v265 = vunpack.c.l.bf16 %v201
    %v266 = vunpack.c.l.bf16 %v202
    %v267 = vunpack.c.l.bf16 %v203
    %v268 = vunpack.c.l.bf16 %v204
    %v269 = vunpack.c.l.bf16 %v205
    %v270 = vunpack.c.l.bf16 %v206
    %v271 = vunpack.c.l.bf16 %v207
    %v272 = vunpack.c.l.bf16 %v208
    %v273 = vunpack.c.l.bf16 %v209
    %v274 = vunpack.c.l.bf16 %v210
    %v275 = vunpack.c.l.bf16 %v211
    %v276 = vunpack.c.l.bf16 %v212
    %v277 = vunpack.c.l.bf16 %v213
    %v278 = vunpack.c.l.bf16 %v214
    %v279 = vunpack.c.l.bf16 %v215
    %v280 = vunpack.c.l.bf16 %v216
    %v281 = vunpack.c.l.bf16 %v217
    %v282 = vunpack.c.l.bf16 %v218
    %v283 = vld [vmem:[%s3] sm:$0x1]
    %v285 = vlaneseq
    %v286 = vshrl.u32 %v285, 7
    %v287 = vsub.s32 0, %v286
    %v288 = vrot.slane %v283, %v287
    %v290 = vmul.f32 %v219, %v288
    %v291 = vmul.f32 %v220, %v288
    %v292 = vmul.f32 %v221, %v288
    %v293 = vmul.f32 %v222, %v288
    %v294 = vmul.f32 %v223, %v288
    %v295 = vmul.f32 %v224, %v288
    %v296 = vmul.f32 %v225, %v288
    %v297 = vmul.f32 %v226, %v288
    %v298 = vmul.f32 %v227, %v288
    %v299 = vmul.f32 %v228, %v288
    %v300 = vmul.f32 %v229, %v288
    %v301 = vmul.f32 %v230, %v288
    %v302 = vmul.f32 %v231, %v288
    %v303 = vmul.f32 %v232, %v288
    %v304 = vmul.f32 %v233, %v288
    %v305 = vmul.f32 %v234, %v288
    %v306 = vmul.f32 %v235, %v288
    %v307 = vmul.f32 %v236, %v288
    %v308 = vmul.f32 %v237, %v288
    %v309 = vmul.f32 %v238, %v288
    %v310 = vmul.f32 %v239, %v288
    %v311 = vmul.f32 %v240, %v288
    %v312 = vmul.f32 %v241, %v288
    %v313 = vmul.f32 %v242, %v288
    %v314 = vmul.f32 %v243, %v288
    %v315 = vmul.f32 %v244, %v288
    %v316 = vmul.f32 %v245, %v288
    %v317 = vmul.f32 %v246, %v288
    %v318 = vmul.f32 %v247, %v288
    %v319 = vmul.f32 %v248, %v288
    %v320 = vmul.f32 %v249, %v288
    %v321 = vmul.f32 %v250, %v288
    %v322 = vmul.f32 %v251, %v288
    %v323 = vmul.f32 %v252, %v288
    %v324 = vmul.f32 %v253, %v288
    %v325 = vmul.f32 %v254, %v288
    %v326 = vmul.f32 %v255, %v288
    %v327 = vmul.f32 %v256, %v288
    %v328 = vmul.f32 %v257, %v288
    %v329 = vmul.f32 %v258, %v288
    %v330 = vmul.f32 %v259, %v288
    %v331 = vmul.f32 %v260, %v288
    %v332 = vmul.f32 %v261, %v288
    %v333 = vmul.f32 %v262, %v288
    %v334 = vmul.f32 %v263, %v288
    %v335 = vmul.f32 %v264, %v288
    %v336 = vmul.f32 %v265, %v288
    %v337 = vmul.f32 %v266, %v288
    %v338 = vmul.f32 %v267, %v288
    %v339 = vmul.f32 %v268, %v288
    %v340 = vmul.f32 %v269, %v288
    %v341 = vmul.f32 %v270, %v288
    %v342 = vmul.f32 %v271, %v288
    %v343 = vmul.f32 %v272, %v288
    %v344 = vmul.f32 %v273, %v288
    %v345 = vmul.f32 %v274, %v288
    %v346 = vmul.f32 %v275, %v288
    %v347 = vmul.f32 %v276, %v288
    %v348 = vmul.f32 %v277, %v288
    %v349 = vmul.f32 %v278, %v288
    %v350 = vmul.f32 %v279, %v288
    %v351 = vmul.f32 %v280, %v288
    %v352 = vmul.f32 %v281, %v288
    %v353 = vmul.f32 %v282, %v288
    %v354 = vld [vmem:[%s4] sm:$0x1]
    %v356 = vlaneseq
    %v357 = vshrl.u32 %v356, 7
    %v358 = vsub.s32 0, %v357
    %v359 = vrot.slane %v354, %v358
    %v361 = vadd.f32 %v290, %v359
    %v362 = vadd.f32 %v291, %v359
    %v363 = vadd.f32 %v292, %v359
    %v364 = vadd.f32 %v293, %v359
    %v365 = vadd.f32 %v294, %v359
    %v366 = vadd.f32 %v295, %v359
    %v367 = vadd.f32 %v296, %v359
    %v368 = vadd.f32 %v297, %v359
    %v369 = vadd.f32 %v298, %v359
    %v370 = vadd.f32 %v299, %v359
    %v371 = vadd.f32 %v300, %v359
    %v372 = vadd.f32 %v301, %v359
    %v373 = vadd.f32 %v302, %v359
    %v374 = vadd.f32 %v303, %v359
    %v375 = vadd.f32 %v304, %v359
    %v376 = vadd.f32 %v305, %v359
    %v377 = vadd.f32 %v306, %v359
    %v378 = vadd.f32 %v307, %v359
    %v379 = vadd.f32 %v308, %v359
    %v380 = vadd.f32 %v309, %v359
    %v381 = vadd.f32 %v310, %v359
    %v382 = vadd.f32 %v311, %v359
    %v383 = vadd.f32 %v312, %v359
    %v384 = vadd.f32 %v313, %v359
    %v385 = vadd.f32 %v314, %v359
    %v386 = vadd.f32 %v315, %v359
    %v387 = vadd.f32 %v316, %v359
    %v388 = vadd.f32 %v317, %v359
    %v389 = vadd.f32 %v318, %v359
    %v390 = vadd.f32 %v319, %v359
    %v391 = vadd.f32 %v320, %v359
    %v392 = vadd.f32 %v321, %v359
    %v393 = vadd.f32 %v322, %v359
    %v394 = vadd.f32 %v323, %v359
    %v395 = vadd.f32 %v324, %v359
    %v396 = vadd.f32 %v325, %v359
    %v397 = vadd.f32 %v326, %v359
    %v398 = vadd.f32 %v327, %v359
    %v399 = vadd.f32 %v328, %v359
    %v400 = vadd.f32 %v329, %v359
    %v401 = vadd.f32 %v330, %v359
    %v402 = vadd.f32 %v331, %v359
    %v403 = vadd.f32 %v332, %v359
    %v404 = vadd.f32 %v333, %v359
    %v405 = vadd.f32 %v334, %v359
    %v406 = vadd.f32 %v335, %v359
    %v407 = vadd.f32 %v336, %v359
    %v408 = vadd.f32 %v337, %v359
    %v409 = vadd.f32 %v338, %v359
    %v410 = vadd.f32 %v339, %v359
    %v411 = vadd.f32 %v340, %v359
    %v412 = vadd.f32 %v341, %v359
    %v413 = vadd.f32 %v342, %v359
    %v414 = vadd.f32 %v343, %v359
    %v415 = vadd.f32 %v344, %v359
    %v416 = vadd.f32 %v345, %v359
    %v417 = vadd.f32 %v346, %v359
    %v418 = vadd.f32 %v347, %v359
    %v419 = vadd.f32 %v348, %v359
    %v420 = vadd.f32 %v349, %v359
    %v421 = vadd.f32 %v350, %v359
    %v422 = vadd.f32 %v351, %v359
    %v423 = vadd.f32 %v352, %v359
    %v424 = vadd.f32 %v353, %v359
    %v425 = vadd.f32 %v361, %v91
    %v426 = vadd.f32 %v362, %v92
    %v427 = vadd.f32 %v363, %v93
    %v428 = vadd.f32 %v364, %v94
    %v429 = vadd.f32 %v365, %v95
    %v430 = vadd.f32 %v366, %v96
    %v431 = vadd.f32 %v367, %v97
    %v432 = vadd.f32 %v368, %v98
    %v433 = vadd.f32 %v369, %v99
    %v434 = vadd.f32 %v370, %v100
    %v435 = vadd.f32 %v371, %v101
    %v436 = vadd.f32 %v372, %v102
    %v437 = vadd.f32 %v373, %v103
    %v438 = vadd.f32 %v374, %v104
    %v439 = vadd.f32 %v375, %v105
    %v440 = vadd.f32 %v376, %v106
    %v441 = vadd.f32 %v377, %v107
    %v442 = vadd.f32 %v378, %v108
    %v443 = vadd.f32 %v379, %v109
    %v444 = vadd.f32 %v380, %v110
    %v445 = vadd.f32 %v381, %v111
    %v446 = vadd.f32 %v382, %v112
    %v447 = vadd.f32 %v383, %v113
    %v448 = vadd.f32 %v384, %v114
    %v449 = vadd.f32 %v385, %v115
    %v450 = vadd.f32 %v386, %v116
    %v451 = vadd.f32 %v387, %v117
    %v452 = vadd.f32 %v388, %v118
    %v453 = vadd.f32 %v389, %v119
    %v454 = vadd.f32 %v390, %v120
    %v455 = vadd.f32 %v391, %v121
    %v456 = vadd.f32 %v392, %v122
    %v457 = vadd.f32 %v393, %v123
    %v458 = vadd.f32 %v394, %v124
    %v459 = vadd.f32 %v395, %v125
    %v460 = vadd.f32 %v396, %v126
    %v461 = vadd.f32 %v397, %v127
    %v462 = vadd.f32 %v398, %v128
    %v463 = vadd.f32 %v399, %v129
    %v464 = vadd.f32 %v400, %v130
    %v465 = vadd.f32 %v401, %v131
    %v466 = vadd.f32 %v402, %v132
    %v467 = vadd.f32 %v403, %v133
    %v468 = vadd.f32 %v404, %v134
    %v469 = vadd.f32 %v405, %v135
    %v470 = vadd.f32 %v406, %v136
    %v471 = vadd.f32 %v407, %v137
    %v472 = vadd.f32 %v408, %v138
    %v473 = vadd.f32 %v409, %v139
    %v474 = vadd.f32 %v410, %v140
    %v475 = vadd.f32 %v411, %v141
    %v476 = vadd.f32 %v412, %v142
    %v477 = vadd.f32 %v413, %v143
    %v478 = vadd.f32 %v414, %v144
    %v479 = vadd.f32 %v415, %v145
    %v480 = vadd.f32 %v416, %v146
    %v481 = vadd.f32 %v417, %v147
    %v482 = vadd.f32 %v418, %v148
    %v483 = vadd.f32 %v419, %v149
    %v484 = vadd.f32 %v420, %v150
    %v485 = vadd.f32 %v421, %v151
    %v486 = vadd.f32 %v422, %v152
    %v487 = vadd.f32 %v423, %v153
    %v488 = vadd.f32 %v424, %v154
    %v489 = vunpack.c.l.bf16 %v27
    %v490 = vunpack.c.l.bf16 %v28
    %v491 = vunpack.c.l.bf16 %v29
    %v492 = vunpack.c.l.bf16 %v30
    %v493 = vunpack.c.l.bf16 %v31
    %v494 = vunpack.c.l.bf16 %v32
    %v495 = vunpack.c.l.bf16 %v33
    %v496 = vunpack.c.l.bf16 %v34
    %v497 = vunpack.c.l.bf16 %v35
    %v498 = vunpack.c.l.bf16 %v36
    %v499 = vunpack.c.l.bf16 %v37
    %v500 = vunpack.c.l.bf16 %v38
    %v501 = vunpack.c.l.bf16 %v39
    %v502 = vunpack.c.l.bf16 %v40
    %v503 = vunpack.c.l.bf16 %v41
    %v504 = vunpack.c.l.bf16 %v42
    %v505 = vunpack.c.l.bf16 %v43
    %v506 = vunpack.c.l.bf16 %v44
    %v507 = vunpack.c.l.bf16 %v45
    %v508 = vunpack.c.l.bf16 %v46
    %v509 = vunpack.c.l.bf16 %v47
    %v510 = vunpack.c.l.bf16 %v48
    %v511 = vunpack.c.l.bf16 %v49
    %v512 = vunpack.c.l.bf16 %v50
    %v513 = vunpack.c.l.bf16 %v51
    %v514 = vunpack.c.l.bf16 %v52
    %v515 = vunpack.c.l.bf16 %v53
    %v516 = vunpack.c.l.bf16 %v54
    %v517 = vunpack.c.l.bf16 %v55
    %v518 = vunpack.c.l.bf16 %v56
    %v519 = vunpack.c.l.bf16 %v57
    %v520 = vunpack.c.l.bf16 %v58
    %v521 = vunpack.c.l.bf16 %v59
    %v522 = vunpack.c.l.bf16 %v60
    %v523 = vunpack.c.l.bf16 %v61
    %v524 = vunpack.c.l.bf16 %v62
    %v525 = vunpack.c.l.bf16 %v63
    %v526 = vunpack.c.l.bf16 %v64
    %v527 = vunpack.c.l.bf16 %v65
    %v528 = vunpack.c.l.bf16 %v66
    %v529 = vunpack.c.l.bf16 %v67
    %v530 = vunpack.c.l.bf16 %v68
    %v531 = vunpack.c.l.bf16 %v69
    %v532 = vunpack.c.l.bf16 %v70
    %v533 = vunpack.c.l.bf16 %v71
    %v534 = vunpack.c.l.bf16 %v72
    %v535 = vunpack.c.l.bf16 %v73
    %v536 = vunpack.c.l.bf16 %v74
    %v537 = vunpack.c.l.bf16 %v75
    %v538 = vunpack.c.l.bf16 %v76
    %v539 = vunpack.c.l.bf16 %v77
    %v540 = vunpack.c.l.bf16 %v78
    %v541 = vunpack.c.l.bf16 %v79
    %v542 = vunpack.c.l.bf16 %v80
    %v543 = vunpack.c.l.bf16 %v81
    %v544 = vunpack.c.l.bf16 %v82
    %v545 = vunpack.c.l.bf16 %v83
    %v546 = vunpack.c.l.bf16 %v84
    %v547 = vunpack.c.l.bf16 %v85
    %v548 = vunpack.c.l.bf16 %v86
    %v549 = vunpack.c.l.bf16 %v87
    %v550 = vunpack.c.l.bf16 %v88
    %v551 = vunpack.c.l.bf16 %v89
    %v552 = vunpack.c.l.bf16 %v90
    %v553 = vld [vmem:[%s5] sm:$0x1]
    %v555 = vlaneseq
    %v556 = vshrl.u32 %v555, 7
    %v557 = vsub.s32 0, %v556
    %v558 = vrot.slane %v553, %v557
    %559 = vrot.lane.b32.xlu0 %v558, 32
    %v560 = vpop.permute.xlu0 %559
    %v562 = vmul.f32 %v489, %v560
    %v563 = vmul.f32 %v490, %v560
    %v564 = vmul.f32 %v491, %v560
    %v565 = vmul.f32 %v492, %v560
    %v566 = vmul.f32 %v493, %v560
    %v567 = vmul.f32 %v494, %v560
    %v568 = vmul.f32 %v495, %v560
    %v569 = vmul.f32 %v496, %v560
    %v570 = vmul.f32 %v497, %v560
    %v571 = vmul.f32 %v498, %v560
    %v572 = vmul.f32 %v499, %v560
    %v573 = vmul.f32 %v500, %v560
    %v574 = vmul.f32 %v501, %v560
    %v575 = vmul.f32 %v502, %v560
    %v576 = vmul.f32 %v503, %v560
    %v577 = vmul.f32 %v504, %v560
    %v578 = vmul.f32 %v505, %v560
    %v579 = vmul.f32 %v506, %v560
    %v580 = vmul.f32 %v507, %v560
    %v581 = vmul.f32 %v508, %v560
    %v582 = vmul.f32 %v509, %v560
    %v583 = vmul.f32 %v510, %v560
    %v584 = vmul.f32 %v511, %v560
    %v585 = vmul.f32 %v512, %v560
    %v586 = vmul.f32 %v513, %v560
    %v587 = vmul.f32 %v514, %v560
    %v588 = vmul.f32 %v515, %v560
    %v589 = vmul.f32 %v516, %v560
    %v590 = vmul.f32 %v517, %v560
    %v591 = vmul.f32 %v518, %v560
    %v592 = vmul.f32 %v519, %v560
    %v593 = vmul.f32 %v520, %v560
    %v594 = vmul.f32 %v521, %v560
    %v595 = vmul.f32 %v522, %v560
    %v596 = vmul.f32 %v523, %v560
    %v597 = vmul.f32 %v524, %v560
    %v598 = vmul.f32 %v525, %v560
    %v599 = vmul.f32 %v526, %v560
    %v600 = vmul.f32 %v527, %v560
    %v601 = vmul.f32 %v528, %v560
    %v602 = vmul.f32 %v529, %v560
    %v603 = vmul.f32 %v530, %v560
    %v604 = vmul.f32 %v531, %v560
    %v605 = vmul.f32 %v532, %v560
    %v606 = vmul.f32 %v533, %v560
    %v607 = vmul.f32 %v534, %v560
    %v608 = vmul.f32 %v535, %v560
    %v609 = vmul.f32 %v536, %v560
    %v610 = vmul.f32 %v537, %v560
    %v611 = vmul.f32 %v538, %v560
    %v612 = vmul.f32 %v539, %v560
    %v613 = vmul.f32 %v540, %v560
    %v614 = vmul.f32 %v541, %v560
    %v615 = vmul.f32 %v542, %v560
    %v616 = vmul.f32 %v543, %v560
    %v617 = vmul.f32 %v544, %v560
    %v618 = vmul.f32 %v545, %v560
    %v619 = vmul.f32 %v546, %v560
    %v620 = vmul.f32 %v547, %v560
    %v621 = vmul.f32 %v548, %v560
    %v622 = vmul.f32 %v549, %v560
    %v623 = vmul.f32 %v550, %v560
    %v624 = vmul.f32 %v551, %v560
    %v625 = vmul.f32 %v552, %v560
    %v626 = vld [vmem:[%s6] sm:$0x1]
    %v628 = vlaneseq
    %v629 = vshrl.u32 %v628, 7
    %v630 = vsub.s32 0, %v629
    %v631 = vrot.slane %v626, %v630
    %632 = vrot.lane.b32.xlu0 %v631, 32
    %v633 = vpop.permute.xlu0 %632
    %v635 = vadd.f32 %v562, %v633
    %v636 = vadd.f32 %v563, %v633
    %v637 = vadd.f32 %v564, %v633
    %v638 = vadd.f32 %v565, %v633
    %v639 = vadd.f32 %v566, %v633
    %v640 = vadd.f32 %v567, %v633
    %v641 = vadd.f32 %v568, %v633
    %v642 = vadd.f32 %v569, %v633
    %v643 = vadd.f32 %v570, %v633
    %v644 = vadd.f32 %v571, %v633
    %v645 = vadd.f32 %v572, %v633
    %v646 = vadd.f32 %v573, %v633
    %v647 = vadd.f32 %v574, %v633
    %v648 = vadd.f32 %v575, %v633
    %v649 = vadd.f32 %v576, %v633
    %v650 = vadd.f32 %v577, %v633
    %v651 = vadd.f32 %v578, %v633
    %v652 = vadd.f32 %v579, %v633
    %v653 = vadd.f32 %v580, %v633
    %v654 = vadd.f32 %v581, %v633
    %v655 = vadd.f32 %v582, %v633
    %v656 = vadd.f32 %v583, %v633
    %v657 = vadd.f32 %v584, %v633
    %v658 = vadd.f32 %v585, %v633
    %v659 = vadd.f32 %v586, %v633
    %v660 = vadd.f32 %v587, %v633
    %v661 = vadd.f32 %v588, %v633
    %v662 = vadd.f32 %v589, %v633
    %v663 = vadd.f32 %v590, %v633
    %v664 = vadd.f32 %v591, %v633
    %v665 = vadd.f32 %v592, %v633
    %v666 = vadd.f32 %v593, %v633
    %v667 = vadd.f32 %v594, %v633
    %v668 = vadd.f32 %v595, %v633
    %v669 = vadd.f32 %v596, %v633
    %v670 = vadd.f32 %v597, %v633
    %v671 = vadd.f32 %v598, %v633
    %v672 = vadd.f32 %v599, %v633
    %v673 = vadd.f32 %v600, %v633
    %v674 = vadd.f32 %v601, %v633
    %v675 = vadd.f32 %v602, %v633
    %v676 = vadd.f32 %v603, %v633
    %v677 = vadd.f32 %v604, %v633
    %v678 = vadd.f32 %v605, %v633
    %v679 = vadd.f32 %v606, %v633
    %v680 = vadd.f32 %v607, %v633
    %v681 = vadd.f32 %v608, %v633
    %v682 = vadd.f32 %v609, %v633
    %v683 = vadd.f32 %v610, %v633
    %v684 = vadd.f32 %v611, %v633
    %v685 = vadd.f32 %v612, %v633
    %v686 = vadd.f32 %v613, %v633
    %v687 = vadd.f32 %v614, %v633
    %v688 = vadd.f32 %v615, %v633
    %v689 = vadd.f32 %v616, %v633
    %v690 = vadd.f32 %v617, %v633
    %v691 = vadd.f32 %v618, %v633
    %v692 = vadd.f32 %v619, %v633
    %v693 = vadd.f32 %v620, %v633
    %v694 = vadd.f32 %v621, %v633
    %v695 = vadd.f32 %v622, %v633
    %v696 = vadd.f32 %v623, %v633
    %v697 = vadd.f32 %v624, %v633
    %v698 = vadd.f32 %v625, %v633
    %v699 = vmax.f32 %v635, 0.0
    %v700 = vmax.f32 %v636, 0.0
    %v701 = vmax.f32 %v637, 0.0
    %v702 = vmax.f32 %v638, 0.0
    %v703 = vmax.f32 %v639, 0.0
    %v704 = vmax.f32 %v640, 0.0
    %v705 = vmax.f32 %v641, 0.0
    %v706 = vmax.f32 %v642, 0.0
    %v707 = vmax.f32 %v643, 0.0
    %v708 = vmax.f32 %v644, 0.0
    %v709 = vmax.f32 %v645, 0.0
    %v710 = vmax.f32 %v646, 0.0
    %v711 = vmax.f32 %v647, 0.0
    %v712 = vmax.f32 %v648, 0.0
    %v713 = vmax.f32 %v649, 0.0
    %v714 = vmax.f32 %v650, 0.0
    %v715 = vmax.f32 %v651, 0.0
    %v716 = vmax.f32 %v652, 0.0
    %v717 = vmax.f32 %v653, 0.0
    %v718 = vmax.f32 %v654, 0.0
    %v719 = vmax.f32 %v655, 0.0
    %v720 = vmax.f32 %v656, 0.0
    %v721 = vmax.f32 %v657, 0.0
    %v722 = vmax.f32 %v658, 0.0
    %v723 = vmax.f32 %v659, 0.0
    %v724 = vmax.f32 %v660, 0.0
    %v725 = vmax.f32 %v661, 0.0
    %v726 = vmax.f32 %v662, 0.0
    %v727 = vmax.f32 %v663, 0.0
    %v728 = vmax.f32 %v664, 0.0
    %v729 = vmax.f32 %v665, 0.0
    %v730 = vmax.f32 %v666, 0.0
    %v731 = vmax.f32 %v667, 0.0
    %v732 = vmax.f32 %v668, 0.0
    %v733 = vmax.f32 %v669, 0.0
    %v734 = vmax.f32 %v670, 0.0
    %v735 = vmax.f32 %v671, 0.0
    %v736 = vmax.f32 %v672, 0.0
    %v737 = vmax.f32 %v673, 0.0
    %v738 = vmax.f32 %v674, 0.0
    %v739 = vmax.f32 %v675, 0.0
    %v740 = vmax.f32 %v676, 0.0
    %v741 = vmax.f32 %v677, 0.0
    %v742 = vmax.f32 %v678, 0.0
    %v743 = vmax.f32 %v679, 0.0
    %v744 = vmax.f32 %v680, 0.0
    %v745 = vmax.f32 %v681, 0.0
    %v746 = vmax.f32 %v682, 0.0
    %v747 = vmax.f32 %v683, 0.0
    %v748 = vmax.f32 %v684, 0.0
    %v749 = vmax.f32 %v685, 0.0
    %v750 = vmax.f32 %v686, 0.0
    %v751 = vmax.f32 %v687, 0.0
    %v752 = vmax.f32 %v688, 0.0
    %v753 = vmax.f32 %v689, 0.0
    %v754 = vmax.f32 %v690, 0.0
    %v755 = vmax.f32 %v691, 0.0
    %v756 = vmax.f32 %v692, 0.0
    %v757 = vmax.f32 %v693, 0.0
    %v758 = vmax.f32 %v694, 0.0
    %v759 = vmax.f32 %v695, 0.0
    %v760 = vmax.f32 %v696, 0.0
    %v761 = vmax.f32 %v697, 0.0
    %v762 = vmax.f32 %v698, 0.0
    %vm763 = vcmask 261120
    %v764 = vsel %vm763, %v425, %v699
    %v765 = vsel %vm763, %v426, %v700
    %v766 = vsel %vm763, %v427, %v701
    %v767 = vsel %vm763, %v428, %v702
    %v768 = vsel %vm763, %v429, %v703
    %v769 = vsel %vm763, %v430, %v704
    %v770 = vsel %vm763, %v431, %v705
    %v771 = vsel %vm763, %v432, %v706
    %v772 = vsel %vm763, %v433, %v707
    %v773 = vsel %vm763, %v434, %v708
    %v774 = vsel %vm763, %v435, %v709
    %v775 = vsel %vm763, %v436, %v710
    %v776 = vsel %vm763, %v437, %v711
    %v777 = vsel %vm763, %v438, %v712
    %v778 = vsel %vm763, %v439, %v713
    %v779 = vsel %vm763, %v440, %v714
    %v780 = vsel %vm763, %v441, %v715
    %v781 = vsel %vm763, %v442, %v716
    %v782 = vsel %vm763, %v443, %v717
    %v783 = vsel %vm763, %v444, %v718
    %v784 = vsel %vm763, %v445, %v719
    %v785 = vsel %vm763, %v446, %v720
    %v786 = vsel %vm763, %v447, %v721
    %v787 = vsel %vm763, %v448, %v722
    %v788 = vsel %vm763, %v449, %v723
    %v789 = vsel %vm763, %v450, %v724
    %v790 = vsel %vm763, %v451, %v725
    %v791 = vsel %vm763, %v452, %v726
    %v792 = vsel %vm763, %v453, %v727
    %v793 = vsel %vm763, %v454, %v728
    %v794 = vsel %vm763, %v455, %v729
    %v795 = vsel %vm763, %v456, %v730
    %v796 = vsel %vm763, %v457, %v731
    %v797 = vsel %vm763, %v458, %v732
    %v798 = vsel %vm763, %v459, %v733
    %v799 = vsel %vm763, %v460, %v734
    %v800 = vsel %vm763, %v461, %v735
    %v801 = vsel %vm763, %v462, %v736
    %v802 = vsel %vm763, %v463, %v737
    %v803 = vsel %vm763, %v464, %v738
    %v804 = vsel %vm763, %v465, %v739
    %v805 = vsel %vm763, %v466, %v740
    %v806 = vsel %vm763, %v467, %v741
    %v807 = vsel %vm763, %v468, %v742
    %v808 = vsel %vm763, %v469, %v743
    %v809 = vsel %vm763, %v470, %v744
    %v810 = vsel %vm763, %v471, %v745
    %v811 = vsel %vm763, %v472, %v746
    %v812 = vsel %vm763, %v473, %v747
    %v813 = vsel %vm763, %v474, %v748
    %v814 = vsel %vm763, %v475, %v749
    %v815 = vsel %vm763, %v476, %v750
    %v816 = vsel %vm763, %v477, %v751
    %v817 = vsel %vm763, %v478, %v752
    %v818 = vsel %vm763, %v479, %v753
    %v819 = vsel %vm763, %v480, %v754
    %v820 = vsel %vm763, %v481, %v755
    %v821 = vsel %vm763, %v482, %v756
    %v822 = vsel %vm763, %v483, %v757
    %v823 = vsel %vm763, %v484, %v758
    %v824 = vsel %vm763, %v485, %v759
    %v825 = vsel %vm763, %v486, %v760
    %v826 = vsel %vm763, %v487, %v761
    %v827 = vsel %vm763, %v488, %v762
    %vm828 = vcmask 523264
    %829 = vst.msk [vmem:[#allocation2] sm:$0xff] %vm828, %v764
    %830 = vst.msk [vmem:[#allocation2 + $0x8] sm:$0xff] %vm828, %v765
    %831 = vst.msk [vmem:[#allocation2 + $0x10] sm:$0xff] %vm828, %v766
    %832 = vst.msk [vmem:[#allocation2 + $0x18] sm:$0xff] %vm828, %v767
    %833 = vst.msk [vmem:[#allocation2 + $0x20] sm:$0xff] %vm828, %v768
    %834 = vst.msk [vmem:[#allocation2 + $0x28] sm:$0xff] %vm828, %v769
    %835 = vst.msk [vmem:[#allocation2 + $0x30] sm:$0xff] %vm828, %v770
    %836 = vst.msk [vmem:[#allocation2 + $0x38] sm:$0xff] %vm828, %v771
    %837 = vst.msk [vmem:[#allocation2 + $0x40] sm:$0xff] %vm828, %v772
    %838 = vst.msk [vmem:[#allocation2 + $0x48] sm:$0xff] %vm828, %v773
    %839 = vst.msk [vmem:[#allocation2 + $0x50] sm:$0xff] %vm828, %v774
    %840 = vst.msk [vmem:[#allocation2 + $0x58] sm:$0xff] %vm828, %v775
    %841 = vst.msk [vmem:[#allocation2 + $0x60] sm:$0xff] %vm828, %v776
    %842 = vst.msk [vmem:[#allocation2 + $0x68] sm:$0xff] %vm828, %v777
    %843 = vst.msk [vmem:[#allocation2 + $0x70] sm:$0xff] %vm828, %v778
    %844 = vst.msk [vmem:[#allocation2 + $0x78] sm:$0xff] %vm828, %v779
    %845 = vst.msk [vmem:[#allocation2 + $0x80] sm:$0xff] %vm828, %v780
    %846 = vst.msk [vmem:[#allocation2 + $0x88] sm:$0xff] %vm828, %v781
    %847 = vst.msk [vmem:[#allocation2 + $0x90] sm:$0xff] %vm828, %v782
    %848 = vst.msk [vmem:[#allocation2 + $0x98] sm:$0xff] %vm828, %v783
    %849 = vst.msk [vmem:[#allocation2 + $0xa0] sm:$0xff] %vm828, %v784
    %850 = vst.msk [vmem:[#allocation2 + $0xa8] sm:$0xff] %vm828, %v785
    %851 = vst.msk [vmem:[#allocation2 + $0xb0] sm:$0xff] %vm828, %v786
    %852 = vst.msk [vmem:[#allocation2 + $0xb8] sm:$0xff] %vm828, %v787
    %853 = vst.msk [vmem:[#allocation2 + $0xc0] sm:$0xff] %vm828, %v788
    %854 = vst.msk [vmem:[#allocation2 + $0xc8] sm:$0xff] %vm828, %v789
    %855 = vst.msk [vmem:[#allocation2 + $0xd0] sm:$0xff] %vm828, %v790
    %856 = vst.msk [vmem:[#allocation2 + $0xd8] sm:$0xff] %vm828, %v791
    %857 = vst.msk [vmem:[#allocation2 + $0xe0] sm:$0xff] %vm828, %v792
    %858 = vst.msk [vmem:[#allocation2 + $0xe8] sm:$0xff] %vm828, %v793
    %859 = vst.msk [vmem:[#allocation2 + $0xf0] sm:$0xff] %vm828, %v794
    %860 = vst.msk [vmem:[#allocation2 + $0xf8] sm:$0xff] %vm828, %v795
    %861 = vst.msk [vmem:[#allocation2 + $0x100] sm:$0xff] %vm828, %v796
    %862 = vst.msk [vmem:[#allocation2 + $0x108] sm:$0xff] %vm828, %v797
    %863 = vst.msk [vmem:[#allocation2 + $0x110] sm:$0xff] %vm828, %v798
    %864 = vst.msk [vmem:[#allocation2 + $0x118] sm:$0xff] %vm828, %v799
    %865 = vst.msk [vmem:[#allocation2 + $0x120] sm:$0xff] %vm828, %v800
    %866 = vst.msk [vmem:[#allocation2 + $0x128] sm:$0xff] %vm828, %v801
    %867 = vst.msk [vmem:[#allocation2 + $0x130] sm:$0xff] %vm828, %v802
    %868 = vst.msk [vmem:[#allocation2 + $0x138] sm:$0xff] %vm828, %v803
    %869 = vst.msk [vmem:[#allocation2 + $0x140] sm:$0xff] %vm828, %v804
    %870 = vst.msk [vmem:[#allocation2 + $0x148] sm:$0xff] %vm828, %v805
    %871 = vst.msk [vmem:[#allocation2 + $0x150] sm:$0xff] %vm828, %v806
    %872 = vst.msk [vmem:[#allocation2 + $0x158] sm:$0xff] %vm828, %v807
    %873 = vst.msk [vmem:[#allocation2 + $0x160] sm:$0xff] %vm828, %v808
    %874 = vst.msk [vmem:[#allocation2 + $0x168] sm:$0xff] %vm828, %v809
    %875 = vst.msk [vmem:[#allocation2 + $0x170] sm:$0xff] %vm828, %v810
    %876 = vst.msk [vmem:[#allocation2 + $0x178] sm:$0xff] %vm828, %v811
    %877 = vst.msk [vmem:[#allocation2 + $0x180] sm:$0xff] %vm828, %v812
    %878 = vst.msk [vmem:[#allocation2 + $0x188] sm:$0xff] %vm828, %v813
    %879 = vst.msk [vmem:[#allocation2 + $0x190] sm:$0xff] %vm828, %v814
    %880 = vst.msk [vmem:[#allocation2 + $0x198] sm:$0xff] %vm828, %v815
    %881 = vst.msk [vmem:[#allocation2 + $0x1a0] sm:$0xff] %vm828, %v816
    %882 = vst.msk [vmem:[#allocation2 + $0x1a8] sm:$0xff] %vm828, %v817
    %883 = vst.msk [vmem:[#allocation2 + $0x1b0] sm:$0xff] %vm828, %v818
    %884 = vst.msk [vmem:[#allocation2 + $0x1b8] sm:$0xff] %vm828, %v819
    %885 = vst.msk [vmem:[#allocation2 + $0x1c0] sm:$0xff] %vm828, %v820
    %886 = vst.msk [vmem:[#allocation2 + $0x1c8] sm:$0xff] %vm828, %v821
    %887 = vst.msk [vmem:[#allocation2 + $0x1d0] sm:$0xff] %vm828, %v822
    %888 = vst.msk [vmem:[#allocation2 + $0x1d8] sm:$0xff] %vm828, %v823
    %889 = vst.msk [vmem:[#allocation2 + $0x1e0] sm:$0xff] %vm828, %v824
    %890 = vst.msk [vmem:[#allocation2 + $0x1e8] sm:$0xff] %vm828, %v825
    %891 = vst.msk [vmem:[#allocation2 + $0x1f0] sm:$0xff] %vm828, %v826
    %892 = vst.msk [vmem:[#allocation2 + $0x1f8] sm:$0xff] %vm828, %v827
    // Predicated region
    $region30: #{dpn_block_forward.5} parent=1 // pred_check
      _
    $region31: #{dpn_block_forward.5} parent=1 // pred_check_branch
      %894 = sbr.rel (0) target = $region33
    $region32: #{dpn_block_forward.5} parent=1 // pred_region
      %s896 = ssub.s32 8192, 8192
      %897 = vsyncadd [#allocation3], %s896
      %s898 = sshll.u32 [#allocation2], 4
      %s899 = int_to_ptr.vmem [resolvable:$true] %s898
      %904 = dma.vmem_to_hbm [thread:$0]  %s899, 8192, %s7, [#allocation3], 128, 128, 8
    $region33: #{dpn_block_forward.5} parent=1 // pred_fallthru
      _
    // Predicated region
    $region34: #{dpn_block_forward.5} parent=1 // pred_check
      _
    $region35: #{dpn_block_forward.5} parent=1 // pred_check_branch
      %906 = sbr.rel (0) target = $region37
    $region36: #{dpn_block_forward.5} parent=1 // pred_region
      %907 = dma.done [#allocation3], 8192
    $region37: #{dpn_block_forward.5} parent=1 // pred_fallthru
      _
    %908 = vsyncpa [#allocation3], 1

// kernel: dpn_block_forward.4
$region0: #{dpn_block_forward.4}
  #allocation0 [shape = 'u32[]', space=smem, size = 0x4, offset = 0x4, fixed_abs, tag = 'smem constant byte address 0x4 - core index']
  #allocation1 [shape = 'u32[144,128]{1,0:T(1,128)}', space=vmem, size = 0x12000, scoped, tag = 'internal scratch']
  %s0 = inlined_call_operand.vmem [shape: bf16[2,18,18,32], index: 0, kind: input, shape index: {}]
  %s1 = inlined_call_operand.vmem [shape: bf16[9,32,32], index: 1, kind: input, shape index: {}]
  %s2 = inlined_call_operand.vmem [shape: bf16[512,32], index: 2, kind: output, shape index: {0}]
  %s3 = inlined_call_operand.vmem [shape: f32[2,2,32], index: 3, kind: output, shape index: {1}]
  %4 = xla_tuple %s2, %s3
  %s5 = sld [smem:[#allocation0]]
  $region49: #{dpn_block_forward.4} parent=0
    _
  %s7 = ssub.s32 1, %s5
  %s8 = scalar_select 0, %s7, %s5
  loop: start=0, step=1, limit=4
  $region2: #{dpn_block_forward.4} parent=0 // loop_pre_header
    _
  $region3: #{dpn_block_forward.4} parent=0 // loop_header
    %s10 = sphi 0, %s14
    %p11 = scmp.ge.s32.totalorder %s10, 4
    %s20 = sphi 0, %s22
    %s23 = sphi 0, %s20
    %s24 = sphi 0, %s23
    %s40 = sphi 0, %s24
    %s44 = sphi 0, %s44
    %s46 = sphi 0, %s44
    %s47 = sphi 0, %s46
    %s61 = sphi 0, %s47
    %s67 = sphi 0, %s69
    %s70 = sphi 0, %s67
    %s71 = sphi 0, %s70
    %s87 = sphi 0, %s71
    %s93 = sphi 0, %s95
    %s96 = sphi 0, %s93
    %s97 = sphi 0, %s96
    %s113 = sphi 0, %s97
  $region4: #{dpn_block_forward.4} parent=0 // loop_header_branch
    %13 = sbr.rel (%p11) target = $region8
  $region5: #{dpn_block_forward.4} parent=0 // loop_body
    %s15 = ssub.s32 %s10, 1
    %s16 = ssub.s32 %s10, 2
    %s17 = sadd.s32 %s10, 1
    %s18 = ssub.s32 %s10, %s17
    %p19 = scmp.eq.s32.totalorder %s18, 0
    %s21 = sadd.s32 %s20, 1
    %s22 = scalar_select %p19, %s20, %s21
    %p25 = pneg %p19
    %p26 = scmp.eq.s32.totalorder %s10, 1
    %p27 = por %p25, %p26
    %p28 = scmp.ne.s32.totalorder %s20, %s23
    %p29 = scmp.eq.s32.totalorder %s10, 0
    %p30 = por %p28, %p29
    %p31 = scmp.ne.s32.totalorder %s20, %s23
    %p32 = scmp.eq.s32.totalorder %s15, 1
    %p33 = por %p31, %p32
    %p34 = scmp.ne.s32.totalorder %s23, %s24
    %p35 = scmp.eq.s32.totalorder %s15, 0
    %p36 = por %p34, %p35
    %p37 = scmp.ne.s32.totalorder %s23, %s24
    %p38 = scmp.eq.s32.totalorder %s16, 1
    %p39 = por %p37, %p38
    %p41 = scmp.ne.s32.totalorder %s24, %s40
    %p42 = scmp.eq.s32.totalorder %s16, 0
    %p43 = por %p41, %p42
    %s45 = sadd.s32 %s44, 1
    %p48 = scmp.eq.s32.totalorder %s10, 1
    %p49 = scmp.ne.s32.totalorder %s44, %s46
    %p50 = scmp.eq.s32.totalorder %s10, 0
    %p51 = por %p49, %p50
    %p52 = scmp.ne.s32.totalorder %s44, %s46
    %p53 = scmp.eq.s32.totalorder %s15, 1
    %p54 = por %p52, %p53
    %p55 = scmp.ne.s32.totalorder %s46, %s47
    %p56 = scmp.eq.s32.totalorder %s15, 0
    %p57 = por %p55, %p56
    %p58 = scmp.ne.s32.totalorder %s46, %s47
    %p59 = scmp.eq.s32.totalorder %s16, 1
    %p60 = por %p58, %p59
    %p62 = scmp.ne.s32.totalorder %s47, %s61
    %p63 = scmp.eq.s32.totalorder %s16, 0
    %p64 = por %p62, %p63
    %s65 = ssub.s32 %s10, %s17
    %p66 = scmp.eq.s32.totalorder %s65, 0
    %s68 = sadd.s32 %s67, 1
    %s69 = scalar_select %p66, %s67, %s68
    %p72 = pneg %p66
    %p73 = scmp.eq.s32.totalorder %s10, 1
    %p74 = por %p72, %p73
    %p75 = scmp.ne.s32.totalorder %s67, %s70
    %p76 = scmp.eq.s32.totalorder %s10, 0
    %p77 = por %p75, %p76
    %p78 = scmp.ne.s32.totalorder %s67, %s70
    %p79 = scmp.eq.s32.totalorder %s15, 1
    %p80 = por %p78, %p79
    %p81 = scmp.ne.s32.totalorder %s70, %s71
    %p82 = scmp.eq.s32.totalorder %s15, 0
    %p83 = por %p81, %p82
    %p84 = scmp.ne.s32.totalorder %s70, %s71
    %p85 = scmp.eq.s32.totalorder %s16, 1
    %p86 = por %p84, %p85
    %p88 = scmp.ne.s32.totalorder %s71, %s87
    %p89 = scmp.eq.s32.totalorder %s16, 0
    %p90 = por %p88, %p89
    %s91 = ssub.s32 %s10, %s17
    %p92 = scmp.eq.s32.totalorder %s91, 0
    %s94 = sadd.s32 %s93, 1
    %s95 = scalar_select %p92, %s93, %s94
    %p98 = pneg %p92
    %p99 = scmp.eq.s32.totalorder %s10, 1
    %p100 = por %p98, %p99
    %p101 = scmp.ne.s32.totalorder %s93, %s96
    %p102 = scmp.eq.s32.totalorder %s10, 0
    %p103 = por %p101, %p102
    %p104 = scmp.ne.s32.totalorder %s93, %s96
    %p105 = scmp.eq.s32.totalorder %s15, 1
    %p106 = por %p104, %p105
    %p107 = scmp.ne.s32.totalorder %s96, %s97
    %p108 = scmp.eq.s32.totalorder %s15, 0
    %p109 = por %p107, %p108
    %p110 = scmp.ne.s32.totalorder %s96, %s97
    %p111 = scmp.eq.s32.totalorder %s16, 1
    %p112 = por %p110, %p111
    %p114 = scmp.ne.s32.totalorder %s97, %s113
    %p115 = scmp.eq.s32.totalorder %s16, 0
    %p116 = por %p114, %p115
    %p117 = scmp.le.s32.totalorder 1, %s10
    %p118 = scmp.lt.s32.totalorder %s10, 3
    %p119 = pnand %p117, %p118
    %p120 = pneg %p119
    // Predicated region
    $region9: #{dpn_block_forward.4} parent=5 // pred_check
      _
    $region10: #{dpn_block_forward.4} parent=5 // pred_check_branch
      %122 = sbr.rel (%p119) target = $region12
    $region11: #{dpn_block_forward.4} parent=5 // pred_region
      %s123 = ssub.s32 %s10, 1
      // Predicated region
      $region13: #{dpn_block_forward.4} parent=11 // pred_check
        %p124 = pneg %p57
      $region14: #{dpn_block_forward.4} parent=11 // pred_check_branch
        %126 = sbr.rel (%p124) target = $region16
      $region15: #{dpn_block_forward.4} parent=11 // pred_region
        _
      $region16: #{dpn_block_forward.4} parent=11 // pred_fallthru
        _
    $region12: #{dpn_block_forward.4} parent=5 // pred_fallthru
      _
    %p127 = scmp.lt.s32.totalorder %s10, 2
    // Predicated region
    $region17: #{dpn_block_forward.4} parent=5 // pred_check
      %p128 = pneg %p127
    $region18: #{dpn_block_forward.4} parent=5 // pred_check_branch
      %130 = sbr.rel (%p128) target = $region20
    $region19: #{dpn_block_forward.4} parent=5 // pred_region
      // Predicated region
      $region21: #{dpn_block_forward.4} parent=19 // pred_check
        %p131 = pneg %p30
      $region22: #{dpn_block_forward.4} parent=19 // pred_check_branch
        %133 = sbr.rel (%p131) target = $region24
      $region23: #{dpn_block_forward.4} parent=19 // pred_region
        %p134 = scmp.lt.s32.totalorder %s10, 1
        %s135 = scalar_select %p134, %s10, 1
        %s136 = smul.addr %s135, 54
        %s137 = smul.addr %s136, 4
        %s138 = scalar_lea.vmem %s0, %s137
      $region24: #{dpn_block_forward.4} parent=19 // pred_fallthru
        _
    $region20: #{dpn_block_forward.4} parent=5 // pred_fallthru
      _
    %p139 = scmp.le.s32.totalorder 1, %s10
    %p140 = scmp.lt.s32.totalorder %s10, 3
    %p141 = pnand %p139, %p140
    %p142 = pneg %p141
    // Predicated region
    $region25: #{dpn_block_forward.4} parent=5 // pred_check
      _
    $region26: #{dpn_block_forward.4} parent=5 // pred_check_branch
      %144 = sbr.rel (%p141) target = $region28
    $region27: #{dpn_block_forward.4} parent=5 // pred_region
      %s145 = ssub.s32 %s10, 1
      %p146 = scmp.lt.s32.totalorder %s15, 1
      %s147 = scalar_select %p146, %s15, 1
      %s148 = smul.addr %s147, 54
      %s149 = smul.addr %s148, 4
      %s150 = scalar_lea.vmem %s0, %s149
      %p151 = pneg %p36
      %p152 = pneg %p33
      %p153 = pneg %p57
      %p154 = pneg %p54
      %p155 = pneg %p83
      %p156 = pneg %p80
      %s157 = smul.u32 32, %s15
      %p158 = scmp.lt.s32.totalorder %s157, 63
      %s159 = scalar_select %p158, %s157, 63
      %s160 = smul.addr %s159, 4
      %s161 = scalar_lea.vmem %s2, %s160
      %p162 = pneg %p109
      %p163 = pneg %p106
      %p164 = scmp.lt.s32.totalorder %s15, 1
      %s165 = scalar_select %p164, %s15, 1
      %s166 = smul.addr %s165, 2
      %s167 = scalar_lea.vmem %s3, %s166
      %p168 = scmp.lt.s32.totalorder %s15, 1
      %s169 = scalar_select %p168, %s15, 1
      %s170 = smul.addr %s169, 54
      %s171 = smul.addr %s170, 4
      %s172 = scalar_lea.vmem %s0, %s171
      %s173 = smul.u32 32, %s15
      %p174 = scmp.lt.s32.totalorder %s173, 63
      %s175 = scalar_select %p174, %s173, 63
      %s176 = smul.addr %s175, 4
      %s177 = scalar_lea.vmem %s2, %s176
      %s178 = smul.u32 32, %s15
      %p179 = scmp.lt.s32.totalorder %s15, 1
      %s180 = scalar_select %p179, %s15, 1
      %s181 = smul.addr %s180, 2
      %s182 = scalar_lea.vmem %s3, %s181
      %v184 = vld [vmem:[%s172] sm:$0xf]
      %v185 = vld [vmem:[%s172 + $0x4] sm:$0xf]
      %v186 = vld [vmem:[%s172 + $0xc] sm:$0xf]
      %v187 = vld [vmem:[%s172 + $0x10] sm:$0xf]
      %v188 = vld [vmem:[%s172 + $0x18] sm:$0xf]
      %v189 = vld [vmem:[%s172 + $0x1c] sm:$0xf]
      %v190 = vld [vmem:[%s172 + $0x24] sm:$0xf]
      %v191 = vld [vmem:[%s172 + $0x28] sm:$0xf]
      %v192 = vld [vmem:[%s172 + $0x30] sm:$0xf]
      %v193 = vld [vmem:[%s172 + $0x34] sm:$0xf]
      %v194 = vld [vmem:[%s172 + $0x3c] sm:$0xf]
      %v195 = vld [vmem:[%s172 + $0x40] sm:$0xf]
      %v196 = vld [vmem:[%s172 + $0x48] sm:$0xf]
      %v197 = vld [vmem:[%s172 + $0x4c] sm:$0xf]
      %v198 = vld [vmem:[%s172 + $0x54] sm:$0xf]
      %v199 = vld [vmem:[%s172 + $0x58] sm:$0xf]
      %v200 = vld [vmem:[%s172 + $0x60] sm:$0xf]
      %v201 = vld [vmem:[%s172 + $0x64] sm:$0xf]
      %v202 = vld [vmem:[%s172 + $0x6c] sm:$0xf]
      %v203 = vld [vmem:[%s172 + $0x70] sm:$0xf]
      %v204 = vld [vmem:[%s172 + $0x78] sm:$0xf]
      %v205 = vld [vmem:[%s172 + $0x7c] sm:$0xf]
      %v206 = vld [vmem:[%s172 + $0x84] sm:$0xf]
      %v207 = vld [vmem:[%s172 + $0x88] sm:$0xf]
      %v208 = vld [vmem:[%s172 + $0x90] sm:$0xf]
      %v209 = vld [vmem:[%s172 + $0x94] sm:$0xf]
      %v210 = vld [vmem:[%s172 + $0x9c] sm:$0xf]
      %v211 = vld [vmem:[%s172 + $0xa0] sm:$0xf]
      %v212 = vld [vmem:[%s172 + $0xa8] sm:$0xf]
      %v213 = vld [vmem:[%s172 + $0xac] sm:$0xf]
      %v214 = vld [vmem:[%s172 + $0xb4] sm:$0xf]
      %v215 = vld [vmem:[%s172 + $0xb8] sm:$0xf]
      %v216 = vld [vmem:[%s1] sm:$0xf]
      %v217 = vld [vmem:[%s1 + $0x4] sm:$0xf]
      %v218 = vld [vmem:[%s1 + $0x8] sm:$0xf]
      %v219 = vld [vmem:[%s1 + $0xc] sm:$0xf]
      %v220 = vld [vmem:[%s172 + $0x8] sm:$0x1]
      %v221 = vld [vmem:[%s172 + $0x14] sm:$0x1]
      %v222 = vld [vmem:[%s172 + $0x20] sm:$0x1]
      %v223 = vld [vmem:[%s172 + $0x2c] sm:$0x1]
      %v224 = vld [vmem:[%s172 + $0x38] sm:$0x1]
      %v225 = vld [vmem:[%s172 + $0x44] sm:$0x1]
      %v226 = vld [vmem:[%s172 + $0x50] sm:$0x1]
      %v227 = vld [vmem:[%s172 + $0x5c] sm:$0x1]
      %v228 = vld [vmem:[%s172 + $0x68] sm:$0x1]
      %v229 = vld [vmem:[%s172 + $0x74] sm:$0x1]
      %v230 = vld [vmem:[%s172 + $0x80] sm:$0x1]
      %v231 = vld [vmem:[%s172 + $0x8c] sm:$0x1]
      %v232 = vld [vmem:[%s172 + $0x98] sm:$0x1]
      %v233 = vld [vmem:[%s172 + $0xa4] sm:$0x1]
      %v234 = vld [vmem:[%s172 + $0xb0] sm:$0x1]
      %v235 = vld [vmem:[%s172 + $0xbc] sm:$0x1]
      %vm236 = vsmask.f32 3328
      %vm237 = vsmask.f32 7440
      %vm238 = vmor %vm236, %vm237
      %v240 = vshrl.u32 %v184, 16
      %v242 = vrot.slane %v240, 4
      %v243 = vshll.u32 %v184, 16
      %v245 = vrot.slane %v243, 5
      %v246 = vor.u32 %v242, %v245
      %v247 = vrot.slane %v246, 4
      %v249 = vshll.u32 %v185, 16
      %v251 = vrot.slane %v249, 5
      %v252 = vsel %vm238, %v247, %v251
      %v253 = vshrl.u32 %v185, 16
      %v255 = vrot.slane %v253, 4
      %v256 = vor.u32 %v255, %v251
      %v257 = vrot.slane %v256, 4
      %v259 = vshll.u32 %v220, 16
      %v261 = vrot.slane %v259, 5
      %v262 = vsel %vm238, %v257, %v261
      %v264 = vshrl.u32 %v186, 16
      %v266 = vrot.slane %v264, 4
      %v267 = vshll.u32 %v186, 16
      %v269 = vrot.slane %v267, 5
      %v270 = vor.u32 %v266, %v269
      %v271 = vrot.slane %v270, 4
      %v273 = vshll.u32 %v187, 16
      %v275 = vrot.slane %v273, 5
      %v276 = vsel %vm238, %v271, %v275
      %v277 = vshrl.u32 %v187, 16
      %v279 = vrot.slane %v277, 4
      %v280 = vor.u32 %v279, %v275
      %v281 = vrot.slane %v280, 4
      %v283 = vshll.u32 %v221, 16
      %v285 = vrot.slane %v283, 5
      %v286 = vsel %vm238, %v281, %v285
      %v288 = vshrl.u32 %v188, 16
      %v290 = vrot.slane %v288, 4
      %v291 = vshll.u32 %v188, 16
      %v293 = vrot.slane %v291, 5
      %v294 = vor.u32 %v290, %v293
      %v295 = vrot.slane %v294, 4
      %v297 = vshll.u32 %v189, 16
      %v299 = vrot.slane %v297, 5
      %v300 = vsel %vm238, %v295, %v299
      %v301 = vshrl.u32 %v189, 16
      %v303 = vrot.slane %v301, 4
      %v304 = vor.u32 %v303, %v299
      %v305 = vrot.slane %v304, 4
      %v307 = vshll.u32 %v222, 16
      %v309 = vrot.slane %v307, 5
      %v310 = vsel %vm238, %v305, %v309
      %v312 = vshrl.u32 %v190, 16
      %v314 = vrot.slane %v312, 4
      %v315 = vshll.u32 %v190, 16
      %v317 = vrot.slane %v315, 5
      %v318 = vor.u32 %v314, %v317
      %v319 = vrot.slane %v318, 4
      %v321 = vshll.u32 %v191, 16
      %v323 = vrot.slane %v321, 5
      %v324 = vsel %vm238, %v319, %v323
      %v325 = vshrl.u32 %v191, 16
      %v327 = vrot.slane %v325, 4
      %v328 = vor.u32 %v327, %v323
      %v329 = vrot.slane %v328, 4
      %v331 = vshll.u32 %v223, 16
      %v333 = vrot.slane %v331, 5
      %v334 = vsel %vm238, %v329, %v333
      %v336 = vshrl.u32 %v192, 16
      %v338 = vrot.slane %v336, 4
      %v339 = vshll.u32 %v192, 16
      %v341 = vrot.slane %v339, 5
      %v342 = vor.u32 %v338, %v341
      %v343 = vrot.slane %v342, 4
      %v345 = vshll.u32 %v193, 16
      %v347 = vrot.slane %v345, 5
      %v348 = vsel %vm238, %v343, %v347
      %v349 = vshrl.u32 %v193, 16
      %v351 = vrot.slane %v349, 4
      %v352 = vor.u32 %v351, %v347
      %v353 = vrot.slane %v352, 4
      %v355 = vshll.u32 %v224, 16
      %v357 = vrot.slane %v355, 5
      %v358 = vsel %vm238, %v353, %v357
      %v360 = vshrl.u32 %v194, 16
      %v362 = vrot.slane %v360, 4
      %v363 = vshll.u32 %v194, 16
      %v365 = vrot.slane %v363, 5
      %v366 = vor.u32 %v362, %v365
      %v367 = vrot.slane %v366, 4
      %v369 = vshll.u32 %v195, 16
      %v371 = vrot.slane %v369, 5
      %v372 = vsel %vm238, %v367, %v371
      %v373 = vshrl.u32 %v195, 16
      %v375 = vrot.slane %v373, 4
      %v376 = vor.u32 %v375, %v371
      %v377 = vrot.slane %v376, 4
      %v379 = vshll.u32 %v225, 16
      %v381 = vrot.slane %v379, 5
      %v382 = vsel %vm238, %v377, %v381
      %v384 = vshrl.u32 %v196, 16
      %v386 = vrot.slane %v384, 4
      %v387 = vshll.u32 %v196, 16
      %v389 = vrot.slane %v387, 5
      %v390 = vor.u32 %v386, %v389
      %v391 = vrot.slane %v390, 4
      %v393 = vshll.u32 %v197, 16
      %v395 = vrot.slane %v393, 5
      %v396 = vsel %vm238, %v391, %v395
      %v397 = vshrl.u32 %v197, 16
      %v399 = vrot.slane %v397, 4
      %v400 = vor.u32 %v399, %v395
      %v401 = vrot.slane %v400, 4
      %v403 = vshll.u32 %v226, 16
      %v405 = vrot.slane %v403, 5
      %v406 = vsel %vm238, %v401, %v405
      %v408 = vshrl.u32 %v198, 16
      %v410 = vrot.slane %v408, 4
      %v411 = vshll.u32 %v198, 16
      %v413 = vrot.slane %v411, 5
      %v414 = vor.u32 %v410, %v413
      %v415 = vrot.slane %v414, 4
      %v417 = vshll.u32 %v199, 16
      %v419 = vrot.slane %v417, 5
      %v420 = vsel %vm238, %v415, %v419
      %v421 = vshrl.u32 %v199, 16
      %v423 = vrot.slane %v421, 4
      %v424 = vor.u32 %v423, %v419
      %v425 = vrot.slane %v424, 4
      %v427 = vshll.u32 %v227, 16
      %v429 = vrot.slane %v427, 5
      %v430 = vsel %vm238, %v425, %v429
      %v432 = vshrl.u32 %v200, 16
      %v434 = vrot.slane %v432, 4
      %v435 = vshll.u32 %v200, 16
      %v437 = vrot.slane %v435, 5
      %v438 = vor.u32 %v434, %v437
      %v439 = vrot.slane %v438, 4
      %v441 = vshll.u32 %v201, 16
      %v443 = vrot.slane %v441, 5
      %v444 = vsel %vm238, %v439, %v443
      %v445 = vshrl.u32 %v201, 16
      %v447 = vrot.slane %v445, 4
      %v448 = vor.u32 %v447, %v443
      %v449 = vrot.slane %v448, 4
      %v451 = vshll.u32 %v228, 16
      %v453 = vrot.slane %v451, 5
      %v454 = vsel %vm238, %v449, %v453
      %v456 = vshrl.u32 %v202, 16
      %v458 = vrot.slane %v456, 4
      %v459 = vshll.u32 %v202, 16
      %v461 = vrot.slane %v459, 5
      %v462 = vor.u32 %v458, %v461
      %v463 = vrot.slane %v462, 4
      %v465 = vshll.u32 %v203, 16
      %v467 = vrot.slane %v465, 5
      %v468 = vsel %vm238, %v463, %v467
      %v469 = vshrl.u32 %v203, 16
      %v471 = vrot.slane %v469, 4
      %v472 = vor.u32 %v471, %v467
      %v473 = vrot.slane %v472, 4
      %v475 = vshll.u32 %v229, 16
      %v477 = vrot.slane %v475, 5
      %v478 = vsel %vm238, %v473, %v477
      %v480 = vshrl.u32 %v204, 16
      %v482 = vrot.slane %v480, 4
      %v483 = vshll.u32 %v204, 16
      %v485 = vrot.slane %v483, 5
      %v486 = vor.u32 %v482, %v485
      %v487 = vrot.slane %v486, 4
      %v489 = vshll.u32 %v205, 16
      %v491 = vrot.slane %v489, 5
      %v492 = vsel %vm238, %v487, %v491
      %v493 = vshrl.u32 %v205, 16
      %v495 = vrot.slane %v493, 4
      %v496 = vor.u32 %v495, %v491
      %v497 = vrot.slane %v496, 4
      %v499 = vshll.u32 %v230, 16
      %v501 = vrot.slane %v499, 5
      %v502 = vsel %vm238, %v497, %v501
      %v504 = vshrl.u32 %v206, 16
      %v506 = vrot.slane %v504, 4
      %v507 = vshll.u32 %v206, 16
      %v509 = vrot.slane %v507, 5
      %v510 = vor.u32 %v506, %v509
      %v511 = vrot.slane %v510, 4
      %v513 = vshll.u32 %v207, 16
      %v515 = vrot.slane %v513, 5
      %v516 = vsel %vm238, %v511, %v515
      %v517 = vshrl.u32 %v207, 16
      %v519 = vrot.slane %v517, 4
      %v520 = vor.u32 %v519, %v515
      %v521 = vrot.slane %v520, 4
      %v523 = vshll.u32 %v231, 16
      %v525 = vrot.slane %v523, 5
      %v526 = vsel %vm238, %v521, %v525
      %v528 = vshrl.u32 %v208, 16
      %v530 = vrot.slane %v528, 4
      %v531 = vshll.u32 %v208, 16
      %v533 = vrot.slane %v531, 5
      %v534 = vor.u32 %v530, %v533
      %v535 = vrot.slane %v534, 4
      %v537 = vshll.u32 %v209, 16
      %v539 = vrot.slane %v537, 5
      %v540 = vsel %vm238, %v535, %v539
      %v541 = vshrl.u32 %v209, 16
      %v543 = vrot.slane %v541, 4
      %v544 = vor.u32 %v543, %v539
      %v545 = vrot.slane %v544, 4
      %v547 = vshll.u32 %v232, 16
      %v549 = vrot.slane %v547, 5
      %v550 = vsel %vm238, %v545, %v549
      %v552 = vshrl.u32 %v210, 16
      %v554 = vrot.slane %v552, 4
      %v555 = vshll.u32 %v210, 16
      %v557 = vrot.slane %v555, 5
      %v558 = vor.u32 %v554, %v557
      %v559 = vrot.slane %v558, 4
      %v561 = vshll.u32 %v211, 16
      %v563 = vrot.slane %v561, 5
      %v564 = vsel %vm238, %v559, %v563
      %v565 = vshrl.u32 %v211, 16
      %v567 = vrot.slane %v565, 4
      %v568 = vor.u32 %v567, %v563
      %v569 = vrot.slane %v568, 4
      %v571 = vshll.u32 %v233, 16
      %v573 = vrot.slane %v571, 5
      %v574 = vsel %vm238, %v569, %v573
      %v576 = vshrl.u32 %v212, 16
      %v578 = vrot.slane %v576, 4
      %v579 = vshll.u32 %v212, 16
      %v581 = vrot.slane %v579, 5
      %v582 = vor.u32 %v578, %v581
      %v583 = vrot.slane %v582, 4
      %v585 = vshll.u32 %v213, 16
      %v587 = vrot.slane %v585, 5
      %v588 = vsel %vm238, %v583, %v587
      %v589 = vshrl.u32 %v213, 16
      %v591 = vrot.slane %v589, 4
      %v592 = vor.u32 %v591, %v587
      %v593 = vrot.slane %v592, 4
      %v595 = vshll.u32 %v234, 16
      %v597 = vrot.slane %v595, 5
      %v598 = vsel %vm238, %v593, %v597
      %v600 = vshrl.u32 %v214, 16
      %v602 = vrot.slane %v600, 4
      %v603 = vshll.u32 %v214, 16
      %v605 = vrot.slane %v603, 5
      %v606 = vor.u32 %v602, %v605
      %v607 = vrot.slane %v606, 4
      %v609 = vshll.u32 %v215, 16
      %v611 = vrot.slane %v609, 5
      %v612 = vsel %vm238, %v607, %v611
      %v613 = vshrl.u32 %v215, 16
      %v615 = vrot.slane %v613, 4
      %v616 = vor.u32 %v615, %v611
      %v617 = vrot.slane %v616, 4
      %v619 = vshll.u32 %v235, 16
      %v621 = vrot.slane %v619, 5
      %v622 = vsel %vm238, %v617, %v621
      %s623 = scalar_lea.vmem %s1, 16
      %v624 = vld [vmem:[%s623] sm:$0xf]
      %v625 = vld [vmem:[%s623 + $0x4] sm:$0xf]
      %v626 = vld [vmem:[%s623 + $0x8] sm:$0xf]
      %v627 = vld [vmem:[%s623 + $0xc] sm:$0xf]
      %v628 = vunpack.c.l.b16 %v252
      %v629 = vunpack.c.l.b16 %v262
      %v630 = vunpack.c.l.b16 %v276
      %v631 = vunpack.c.l.b16 %v286
      %v632 = vunpack.c.l.b16 %v300
      %v633 = vunpack.c.l.b16 %v310
      %v634 = vunpack.c.l.b16 %v324
      %v635 = vunpack.c.l.b16 %v334
      %v636 = vunpack.c.l.b16 %v348
      %v637 = vunpack.c.l.b16 %v358
      %v638 = vunpack.c.l.b16 %v372
      %v639 = vunpack.c.l.b16 %v382
      %v640 = vunpack.c.l.b16 %v396
      %v641 = vunpack.c.l.b16 %v406
      %v642 = vunpack.c.l.b16 %v420
      %v643 = vunpack.c.l.b16 %v430
      %v644 = vunpack.c.l.b16 %v444
      %v645 = vunpack.c.l.b16 %v454
      %v646 = vunpack.c.l.b16 %v468
      %v647 = vunpack.c.l.b16 %v478
      %v648 = vunpack.c.l.b16 %v492
      %v649 = vunpack.c.l.b16 %v502
      %v650 = vunpack.c.l.b16 %v516
      %v651 = vunpack.c.l.b16 %v526
      %v652 = vunpack.c.l.b16 %v540
      %v653 = vunpack.c.l.b16 %v550
      %v654 = vunpack.c.l.b16 %v564
      %v655 = vunpack.c.l.b16 %v574
      %v656 = vunpack.c.l.b16 %v588
      %v657 = vunpack.c.l.b16 %v598
      %v658 = vunpack.c.l.b16 %v612
      %v659 = vunpack.c.l.b16 %v622
      %v660 = vpack.c.b16 %v629, %v628
      %v661 = vpack.c.b16 %v631, %v630
      %v662 = vpack.c.b16 %v633, %v632
      %v663 = vpack.c.b16 %v635, %v634
      %v664 = vpack.c.b16 %v637, %v636
      %v665 = vpack.c.b16 %v639, %v638
      %v666 = vpack.c.b16 %v641, %v640
      %v667 = vpack.c.b16 %v643, %v642
      %v668 = vpack.c.b16 %v645, %v644
      %v669 = vpack.c.b16 %v647, %v646
      %v670 = vpack.c.b16 %v649, %v648
      %v671 = vpack.c.b16 %v651, %v650
      %v672 = vpack.c.b16 %v653, %v652
      %v673 = vpack.c.b16 %v655, %v654
      %v674 = vpack.c.b16 %v657, %v656
      %v675 = vpack.c.b16 %v659, %v658
      %v680 = vunpack.c.l.b16 %v624
      %v681 = vunpack.c.l.b16 %v625
      %v682 = vunpack.c.l.b16 %v626
      %v683 = vunpack.c.l.b16 %v627
      %v684 = vpack.c.b16 %v681, %v680
      %v685 = vpack.c.b16 %v683, %v682
      %vm688 = vcmask 261120
      %v690 = vsel %vm688, %v660, 0
      %v693 = vsel %vm688, %v661, 0
      %v696 = vsel %vm688, %v662, 0
      %v699 = vsel %vm688, %v663, 0
      %v702 = vsel %vm688, %v664, 0
      %v705 = vsel %vm688, %v665, 0
      %v708 = vsel %vm688, %v666, 0
      %v711 = vsel %vm688, %v667, 0
      %v714 = vsel %vm688, %v668, 0
      %v717 = vsel %vm688, %v669, 0
      %v720 = vsel %vm688, %v670, 0
      %v723 = vsel %vm688, %v671, 0
      %v726 = vsel %vm688, %v672, 0
      %v729 = vsel %vm688, %v673, 0
      %v732 = vsel %vm688, %v674, 0
      %v735 = vsel %vm688, %v675, 0
      %737 = vmatprep.subr.bf16.mxu0 0
      %738 = vmatpush1.bf16.msra.mxu0 %v684
      %739 = vmatprep.subr.bf16.mxu0 0
      %740 = vmatpush1.bf16.msra.mxu0 %v685
      %741 = vmatprep.subr.bf16.mxu0 0
      %742 = vmatpush1.bf16.msra.mxu0 0
      %743 = vmatprep.subr.bf16.mxu0 0
      %744 = vmatpush1.bf16.msra.mxu0 0
      %745 = vmatprep.subr.bf16.mxu0 0
      %746 = vmatpush1.bf16.msra.mxu0 0
      %747 = vmatprep.subr.bf16.mxu0 0
      %748 = vmatpush1.bf16.msra.mxu0 0
      %749 = vmatprep.subr.bf16.mxu0 0
      %750 = vmatpush1.bf16.msra.mxu0 0
      %751 = vmatprep.subr.bf16.mxu0 0
      %752 = vmatpush1.bf16.msra.mxu0 0
      %753 = vmatprep.subr.bf16.mxu0 0
      %754 = vmatpush1.bf16.msra.mxu0 0
      %755 = vmatprep.subr.bf16.mxu0 0
      %756 = vmatpush1.bf16.msra.mxu0 0
      %757 = vmatprep.subr.bf16.mxu0 0
      %758 = vmatpush1.bf16.msra.mxu0 0
      %759 = vmatprep.subr.bf16.mxu0 0
      %760 = vmatpush1.bf16.msra.mxu0 0
      %761 = vmatprep.subr.bf16.mxu0 0
      %762 = vmatpush1.bf16.msra.mxu0 0
      %763 = vmatprep.subr.bf16.mxu0 0
      %764 = vmatpush1.bf16.msra.mxu0 0
      %765 = vmatprep.subr.bf16.mxu0 0
      %766 = vmatpush1.bf16.msra.mxu0 0
      %767 = vmatprep.subr.bf16.mxu0 0
      %768 = vmatpush1.bf16.msra.mxu0 0
      %769 = vmatprep.mubr.bf16.mxu0 0
      %770 = vmatmul.mubr.bf16.gmra.mrb[0].mxu0 %v690
      %v771 = vpop.f32.mrb[0].mxu0
      %v772 = vadd.f32 0.0, %v771
      %v773 = vpop.f32.mrb[0].mxu0
      %v774 = vpop.f32.mrb[0].mxu0
      %v775 = vadd.f32 0.0, %v774
      %v776 = vpop.f32.mrb[0].mxu0
      %777 = vmatprep.mubr.bf16.mxu0 0
      %778 = vmatmul.mubr.bf16.gmra.mrb[0].mxu0 %v693
      %v779 = vpop.f32.mrb[0].mxu0
      %v780 = vadd.f32 0.0, %v779
      %v781 = vpop.f32.mrb[0].mxu0
      %v782 = vpop.f32.mrb[0].mxu0
      %v783 = vadd.f32 0.0, %v782
      %v784 = vpop.f32.mrb[0].mxu0
      %785 = vmatprep.mubr.bf16.mxu0 0
      %786 = vmatmul.mubr.bf16.gmra.mrb[0].mxu0 %v696
      %v787 = vpop.f32.mrb[0].mxu0
      %v788 = vadd.f32 0.0, %v787
      %v789 = vpop.f32.mrb[0].mxu0
      %v790 = vpop.f32.mrb[0].mxu0
      %v791 = vadd.f32 0.0, %v790
      %v792 = vpop.f32.mrb[0].mxu0
      %793 = vmatprep.mubr.bf16.mxu0 0
      %794 = vmatmul.mubr.bf16.gmra.mrb[0].mxu0 %v699
      %v795 = vpop.f32.mrb[0].mxu0
      %v796 = vadd.f32 0.0, %v795
      %v797 = vpop.f32.mrb[0].mxu0
      %v798 = vpop.f32.mrb[0].mxu0
      %v799 = vadd.f32 0.0, %v798
      %v800 = vpop.f32.mrb[0].mxu0
      %801 = vmatprep.mubr.bf16.mxu0 0
      %802 = vmatmul.mubr.bf16.gmra.mrb[0].mxu0 %v702
      %v803 = vpop.f32.mrb[0].mxu0
      %v804 = vadd.f32 0.0, %v803
      %v805 = vpop.f32.mrb[0].mxu0
      %v806 = vpop.f32.mrb[0].mxu0
      %v807 = vadd.f32 0.0, %v806
      %v808 = vpop.f32.mrb[0].mxu0
      %809 = vmatprep.mubr.bf16.mxu0 0
      %810 = vmatmul.mubr.bf16.gmra.mrb[0].mxu0 %v705
      %v811 = vpop.f32.mrb[0].mxu0
      %v812 = vadd.f32 0.0, %v811
      %v813 = vpop.f32.mrb[0].mxu0
      %v814 = vpop.f32.mrb[0].mxu0
      %v815 = vadd.f32 0.0, %v814
      %v816 = vpop.f32.mrb[0].mxu0
      %817 = vmatprep.mubr.bf16.mxu0 0
      %818 = vmatmul.mubr.bf16.gmra.mrb[0].mxu0 %v708
      %v819 = vpop.f32.mrb[0].mxu0
      %v820 = vadd.f32 0.0, %v819
      %v821 = vpop.f32.mrb[0].mxu0
      %v822 = vpop.f32.mrb[0].mxu0
      %v823 = vadd.f32 0.0, %v822
      %v824 = vpop.f32.mrb[0].mxu0
      %825 = vmatprep.mubr.bf16.mxu0 0
      %826 = vmatmul.mubr.bf16.gmra.mrb[0].mxu0 %v711
      %v827 = vpop.f32.mrb[0].mxu0
      %v828 = vadd.f32 0.0, %v827
      %v829 = vpop.f32.mrb[0].mxu0
      %v830 = vpop.f32.mrb[0].mxu0
      %v831 = vadd.f32 0.0, %v830
      %v832 = vpop.f32.mrb[0].mxu0
      %833 = vmatprep.mubr.bf16.mxu0 0
      %834 = vmatmul.mubr.bf16.gmra.mrb[0].mxu0 %v714
      %v835 = vpop.f32.mrb[0].mxu0
      %v836 = vadd.f32 0.0, %v835
      %v837 = vpop.f32.mrb[0].mxu0
      %v838 = vpop.f32.mrb[0].mxu0
      %v839 = vadd.f32 0.0, %v838
      %v840 = vpop.f32.mrb[0].mxu0
      %841 = vmatprep.mubr.bf16.mxu0 0
      %842 = vmatmul.mubr.bf16.gmra.mrb[0].mxu0 %v717
      %v843 = vpop.f32.mrb[0].mxu0
      %v844 = vadd.f32 0.0, %v843
      %v845 = vpop.f32.mrb[0].mxu0
      %v846 = vpop.f32.mrb[0].mxu0
      %v847 = vadd.f32 0.0, %v846
      %v848 = vpop.f32.mrb[0].mxu0
      %849 = vmatprep.mubr.bf16.mxu0 0
      %850 = vmatmul.mubr.bf16.gmra.mrb[0].mxu0 %v720
      %v851 = vpop.f32.mrb[0].mxu0
      %v852 = vadd.f32 0.0, %v851
      %v853 = vpop.f32.mrb[0].mxu0
      %v854 = vpop.f32.mrb[0].mxu0
      %v855 = vadd.f32 0.0, %v854
      %v856 = vpop.f32.mrb[0].mxu0
      %857 = vmatprep.mubr.bf16.mxu0 0
      %858 = vmatmul.mubr.bf16.gmra.mrb[0].mxu0 %v723
      %v859 = vpop.f32.mrb[0].mxu0
      %v860 = vadd.f32 0.0, %v859
      %v861 = vpop.f32.mrb[0].mxu0
      %v862 = vpop.f32.mrb[0].mxu0
      %v863 = vadd.f32 0.0, %v862
      %v864 = vpop.f32.mrb[0].mxu0
      %865 = vmatprep.mubr.bf16.mxu0 0
      %866 = vmatmul.mubr.bf16.gmra.mrb[0].mxu0 %v726
      %v867 = vpop.f32.mrb[0].mxu0
      %v868 = vadd.f32 0.0, %v867
      %v869 = vpop.f32.mrb[0].mxu0
      %v870 = vpop.f32.mrb[0].mxu0
      %v871 = vadd.f32 0.0, %v870
      %v872 = vpop.f32.mrb[0].mxu0
      %873 = vmatprep.mubr.bf16.mxu0 0
      %874 = vmatmul.mubr.bf16.gmra.mrb[0].mxu0 %v729
      %v875 = vpop.f32.mrb[0].mxu0
      %v876 = vadd.f32 0.0, %v875
      %v877 = vpop.f32.mrb[0].mxu0
      %v878 = vpop.f32.mrb[0].mxu0
      %v879 = vadd.f32 0.0, %v878
      %v880 = vpop.f32.mrb[0].mxu0
      %881 = vmatprep.mubr.bf16.mxu0 0
      %882 = vmatmul.mubr.bf16.gmra.mrb[0].mxu0 %v732
      %v883 = vpop.f32.mrb[0].mxu0
      %v884 = vadd.f32 0.0, %v883
      %v885 = vpop.f32.mrb[0].mxu0
      %v886 = vpop.f32.mrb[0].mxu0
      %v887 = vadd.f32 0.0, %v886
      %v888 = vpop.f32.mrb[0].mxu0
      %889 = vmatprep.mubr.bf16.mxu0 0
      %890 = vmatmul.mubr.bf16.gmra.mrb[0].mxu0 %v735
      %v891 = vpop.f32.mrb[0].mxu0
      %v892 = vadd.f32 0.0, %v891
      %v893 = vpop.f32.mrb[0].mxu0
      %v894 = vpop.f32.mrb[0].mxu0
      %v895 = vadd.f32 0.0, %v894
      %v896 = vpop.f32.mrb[0].mxu0
      %897 = vdwg.mxu0
      %v930 = vunpack.c.l.b16 %v184
      %v931 = vunpack.c.l.b16 %v185
      %v932 = vunpack.c.l.b16 %v186
      %v933 = vunpack.c.l.b16 %v187
      %v934 = vunpack.c.l.b16 %v188
      %v935 = vunpack.c.l.b16 %v189
      %v936 = vunpack.c.l.b16 %v190
      %v937 = vunpack.c.l.b16 %v191
      %v938 = vunpack.c.l.b16 %v192
      %v939 = vunpack.c.l.b16 %v193
      %v940 = vunpack.c.l.b16 %v194
      %v941 = vunpack.c.l.b16 %v195
      %v942 = vunpack.c.l.b16 %v196
      %v943 = vunpack.c.l.b16 %v197
      %v944 = vunpack.c.l.b16 %v198
      %v945 = vunpack.c.l.b16 %v199
      %v946 = vunpack.c.l.b16 %v200
      %v947 = vunpack.c.l.b16 %v201
      %v948 = vunpack.c.l.b16 %v202
      %v949 = vunpack.c.l.b16 %v203
      %v950 = vunpack.c.l.b16 %v204
      %v951 = vunpack.c.l.b16 %v205
      %v952 = vunpack.c.l.b16 %v206
      %v953 = vunpack.c.l.b16 %v207
      %v954 = vunpack.c.l.b16 %v208
      %v955 = vunpack.c.l.b16 %v209
      %v956 = vunpack.c.l.b16 %v210
      %v957 = vunpack.c.l.b16 %v211
      %v958 = vunpack.c.l.b16 %v212
      %v959 = vunpack.c.l.b16 %v213
      %v960 = vunpack.c.l.b16 %v214
      %v961 = vunpack.c.l.b16 %v215
      %v962 = vpack.c.b16 %v931, %v930
      %v963 = vpack.c.b16 %v933, %v932
      %v964 = vpack.c.b16 %v935, %v934
      %v965 = vpack.c.b16 %v937, %v936
      %v966 = vpack.c.b16 %v939, %v938
      %v967 = vpack.c.b16 %v941, %v940
      %v968 = vpack.c.b16 %v943, %v942
      %v969 = vpack.c.b16 %v945, %v944
      %v970 = vpack.c.b16 %v947, %v946
      %v971 = vpack.c.b16 %v949, %v948
      %v972 = vpack.c.b16 %v951, %v950
      %v973 = vpack.c.b16 %v953, %v952
      %v974 = vpack.c.b16 %v955, %v954
      %v975 = vpack.c.b16 %v957, %v956
      %v976 = vpack.c.b16 %v959, %v958
      %v977 = vpack.c.b16 %v961, %v960
      %v982 = vunpack.c.l.b16 %v216
      %v983 = vunpack.c.l.b16 %v217
      %v984 = vunpack.c.l.b16 %v218
      %v985 = vunpack.c.l.b16 %v219
      %v986 = vpack.c.b16 %v983, %v982
      %v987 = vpack.c.b16 %v985, %v984
      %v991 = vsel %vm688, %v962, 0
      %v994 = vsel %vm688, %v963, 0
      %v997 = vsel %vm688, %v964, 0
      %v1000 = vsel %vm688, %v965, 0
      %v1003 = vsel %vm688, %v966, 0
      %v1006 = vsel %vm688, %v967, 0
      %v1009 = vsel %vm688, %v968, 0
      %v1012 = vsel %vm688, %v969, 0
      %v1015 = vsel %vm688, %v970, 0
      %v1018 = vsel %vm688, %v971, 0
      %v1021 = vsel %vm688, %v972, 0
      %v1024 = vsel %vm688, %v973, 0
      %v1027 = vsel %vm688, %v974, 0
      %v1030 = vsel %vm688, %v975, 0
      %v1033 = vsel %vm688, %v976, 0
      %v1036 = vsel %vm688, %v977, 0
      %1038 = vmatprep.subr.bf16.mxu0 0
      %1039 = vmatpush1.bf16.msra.mxu0 %v986
      %1040 = vmatprep.subr.bf16.mxu0 0
      %1041 = vmatpush1.bf16.msra.mxu0 %v987
      %1042 = vmatprep.subr.bf16.mxu0 0
      %1043 = vmatpush1.bf16.msra.mxu0 0
      %1044 = vmatprep.subr.bf16.mxu0 0
      %1045 = vmatpush1.bf16.msra.mxu0 0
      %1046 = vmatprep.subr.bf16.mxu0 0
      %1047 = vmatpush1.bf16.msra.mxu0 0
      %1048 = vmatprep.subr.bf16.mxu0 0
      %1049 = vmatpush1.bf16.msra.mxu0 0
      %1050 = vmatprep.subr.bf16.mxu0 0
      %1051 = vmatpush1.bf16.msra.mxu0 0
      %1052 = vmatprep.subr.bf16.mxu0 0
      %1053 = vmatpush1.bf16.msra.mxu0 0
      %1054 = vmatprep.subr.bf16.mxu0 0
      %1055 = vmatpush1.bf16.msra.mxu0 0
      %1056 = vmatprep.subr.bf16.mxu0 0
      %1057 = vmatpush1.bf16.msra.mxu0 0
      %1058 = vmatprep.subr.bf16.mxu0 0
      %1059 = vmatpush1.bf16.msra.mxu0 0
      %1060 = vmatprep.subr.bf16.mxu0 0
      %1061 = vmatpush1.bf16.msra.mxu0 0
      %1062 = vmatprep.subr.bf16.mxu0 0
      %1063 = vmatpush1.bf16.msra.mxu0 0
      %1064 = vmatprep.subr.bf16.mxu0 0
      %1065 = vmatpush1.bf16.msra.mxu0 0
      %1066 = vmatprep.subr.bf16.mxu0 0
      %1067 = vmatpush1.bf16.msra.mxu0 0
      %1068 = vmatprep.subr.bf16.mxu0 0
      %1069 = vmatpush1.bf16.msra.mxu0 0
      %1070 = vmatprep.mubr.bf16.mxu0 0
      %1071 = vmatmul.mubr.bf16.gmra.mrb[0].mxu0 %v991
      %v1072 = vpop.f32.mrb[0].mxu0
      %v1073 = vadd.f32 %v772, %v1072
      %v1074 = vpop.f32.mrb[0].mxu0
      %v1075 = vpop.f32.mrb[0].mxu0
      %v1076 = vadd.f32 %v775, %v1075
      %v1077 = vpop.f32.mrb[0].mxu0
      %1078 = vmatprep.mubr.bf16.mxu0 0
      %1079 = vmatmul.mubr.bf16.gmra.mrb[0].mxu0 %v994
      %v1080 = vpop.f32.mrb[0].mxu0
      %v1081 = vadd.f32 %v780, %v1080
      %v1082 = vpop.f32.mrb[0].mxu0
      %v1083 = vpop.f32.mrb[0].mxu0
      %v1084 = vadd.f32 %v783, %v1083
      %v1085 = vpop.f32.mrb[0].mxu0
      %1086 = vmatprep.mubr.bf16.mxu0 0
      %1087 = vmatmul.mubr.bf16.gmra.mrb[0].mxu0 %v997
      %v1088 = vpop.f32.mrb[0].mxu0
      %v1089 = vadd.f32 %v788, %v1088
      %v1090 = vpop.f32.mrb[0].mxu0
      %v1091 = vpop.f32.mrb[0].mxu0
      %v1092 = vadd.f32 %v791, %v1091
      %v1093 = vpop.f32.mrb[0].mxu0
      %1094 = vmatprep.mubr.bf16.mxu0 0
      %1095 = vmatmul.mubr.bf16.gmra.mrb[0].mxu0 %v1000
      %v1096 = vpop.f32.mrb[0].mxu0
      %v1097 = vadd.f32 %v796, %v1096
      %v1098 = vpop.f32.mrb[0].mxu0
      %v1099 = vpop.f32.mrb[0].mxu0
      %v1100 = vadd.f32 %v799, %v1099
      %v1101 = vpop.f32.mrb[0].mxu0
      %1102 = vmatprep.mubr.bf16.mxu0 0
      %1103 = vmatmul.mubr.bf16.gmra.mrb[0].mxu0 %v1003
      %v1104 = vpop.f32.mrb[0].mxu0
      %v1105 = vadd.f32 %v804, %v1104
      %v1106 = vpop.f32.mrb[0].mxu0
      %v1107 = vpop.f32.mrb[0].mxu0
      %v1108 = vadd.f32 %v807, %v1107
      %v1109 = vpop.f32.mrb[0].mxu0
      %1110 = vmatprep.mubr.bf16.mxu0 0
      %1111 = vmatmul.mubr.bf16.gmra.mrb[0].mxu0 %v1006
      %v1112 = vpop.f32.mrb[0].mxu0
      %v1113 = vadd.f32 %v812, %v1112
      %v1114 = vpop.f32.mrb[0].mxu0
      %v1115 = vpop.f32.mrb[0].mxu0
      %v1116 = vadd.f32 %v815, %v1115
      %v1117 = vpop.f32.mrb[0].mxu0
      %1118 = vmatprep.mubr.bf16.mxu0 0
      %1119 = vmatmul.mubr.bf16.gmra.mrb[0].mxu0 %v1009
      %v1120 = vpop.f32.mrb[0].mxu0
      %v1121 = vadd.f32 %v820, %v1120
      %v1122 = vpop.f32.mrb[0].mxu0
      %v1123 = vpop.f32.mrb[0].mxu0
      %v1124 = vadd.f32 %v823, %v1123
      %v1125 = vpop.f32.mrb[0].mxu0
      %1126 = vmatprep.mubr.bf16.mxu0 0
      %1127 = vmatmul.mubr.bf16.gmra.mrb[0].mxu0 %v1012
      %v1128 = vpop.f32.mrb[0].mxu0
      %v1129 = vadd.f32 %v828, %v1128
      %v1130 = vpop.f32.mrb[0].mxu0
      %v1131 = vpop.f32.mrb[0].mxu0
      %v1132 = vadd.f32 %v831, %v1131
      %v1133 = vpop.f32.mrb[0].mxu0
      %1134 = vmatprep.mubr.bf16.mxu0 0
      %1135 = vmatmul.mubr.bf16.gmra.mrb[0].mxu0 %v1015
      %v1136 = vpop.f32.mrb[0].mxu0
      %v1137 = vadd.f32 %v836, %v1136
      %v1138 = vpop.f32.mrb[0].mxu0
      %v1139 = vpop.f32.mrb[0].mxu0
      %v1140 = vadd.f32 %v839, %v1139
      %v1141 = vpop.f32.mrb[0].mxu0
      %1142 = vmatprep.mubr.bf16.mxu0 0
      %1143 = vmatmul.mubr.bf16.gmra.mrb[0].mxu0 %v1018
      %v1144 = vpop.f32.mrb[0].mxu0
      %v1145 = vadd.f32 %v844, %v1144
      %v1146 = vpop.f32.mrb[0].mxu0
      %v1147 = vpop.f32.mrb[0].mxu0
      %v1148 = vadd.f32 %v847, %v1147
      %v1149 = vpop.f32.mrb[0].mxu0
      %1150 = vmatprep.mubr.bf16.mxu0 0
      %1151 = vmatmul.mubr.bf16.gmra.mrb[0].mxu0 %v1021
      %v1152 = vpop.f32.mrb[0].mxu0
      %v1153 = vadd.f32 %v852, %v1152
      %v1154 = vpop.f32.mrb[0].mxu0
      %v1155 = vpop.f32.mrb[0].mxu0
      %v1156 = vadd.f32 %v855, %v1155
      %v1157 = vpop.f32.mrb[0].mxu0
      %1158 = vmatprep.mubr.bf16.mxu0 0
      %1159 = vmatmul.mubr.bf16.gmra.mrb[0].mxu0 %v1024
      %v1160 = vpop.f32.mrb[0].mxu0
      %v1161 = vadd.f32 %v860, %v1160
      %v1162 = vpop.f32.mrb[0].mxu0
      %v1163 = vpop.f32.mrb[0].mxu0
      %v1164 = vadd.f32 %v863, %v1163
      %v1165 = vpop.f32.mrb[0].mxu0
      %1166 = vmatprep.mubr.bf16.mxu0 0
      %1167 = vmatmul.mubr.bf16.gmra.mrb[0].mxu0 %v1027
      %v1168 = vpop.f32.mrb[0].mxu0
      %v1169 = vadd.f32 %v868, %v1168
      %v1170 = vpop.f32.mrb[0].mxu0
      %v1171 = vpop.f32.mrb[0].mxu0
      %v1172 = vadd.f32 %v871, %v1171
      %v1173 = vpop.f32.mrb[0].mxu0
      %1174 = vmatprep.mubr.bf16.mxu0 0
      %1175 = vmatmul.mubr.bf16.gmra.mrb[0].mxu0 %v1030
      %v1176 = vpop.f32.mrb[0].mxu0
      %v1177 = vadd.f32 %v876, %v1176
      %v1178 = vpop.f32.mrb[0].mxu0
      %v1179 = vpop.f32.mrb[0].mxu0
      %v1180 = vadd.f32 %v879, %v1179
      %v1181 = vpop.f32.mrb[0].mxu0
      %1182 = vmatprep.mubr.bf16.mxu0 0
      %1183 = vmatmul.mubr.bf16.gmra.mrb[0].mxu0 %v1033
      %v1184 = vpop.f32.mrb[0].mxu0
      %v1185 = vadd.f32 %v884, %v1184
      %v1186 = vpop.f32.mrb[0].mxu0
      %v1187 = vpop.f32.mrb[0].mxu0
      %v1188 = vadd.f32 %v887, %v1187
      %v1189 = vpop.f32.mrb[0].mxu0
      %1190 = vmatprep.mubr.bf16.mxu0 0
      %1191 = vmatmul.mubr.bf16.gmra.mrb[0].mxu0 %v1036
      %v1192 = vpop.f32.mrb[0].mxu0
      %v1193 = vadd.f32 %v892, %v1192
      %v1194 = vpop.f32.mrb[0].mxu0
      %v1195 = vpop.f32.mrb[0].mxu0
      %v1196 = vadd.f32 %v895, %v1195
      %v1197 = vpop.f32.mrb[0].mxu0
      %1198 = vdwg.mxu0
      %v1199 = vld [vmem:[%s172] sm:$0xe]
      %v1200 = vld [vmem:[%s172 + $0xc] sm:$0xe]
      %v1201 = vld [vmem:[%s172 + $0x18] sm:$0xe]
      %v1202 = vld [vmem:[%s172 + $0x24] sm:$0xe]
      %v1203 = vld [vmem:[%s172 + $0x30] sm:$0xe]
      %v1204 = vld [vmem:[%s172 + $0x3c] sm:$0xe]
      %v1205 = vld [vmem:[%s172 + $0x48] sm:$0xe]
      %v1206 = vld [vmem:[%s172 + $0x54] sm:$0xe]
      %v1207 = vld [vmem:[%s172 + $0x60] sm:$0xe]
      %v1208 = vld [vmem:[%s172 + $0x6c] sm:$0xe]
      %v1209 = vld [vmem:[%s172 + $0x78] sm:$0xe]
      %v1210 = vld [vmem:[%s172 + $0x84] sm:$0xe]
      %v1211 = vld [vmem:[%s172 + $0x90] sm:$0xe]
      %v1212 = vld [vmem:[%s172 + $0x9c] sm:$0xe]
      %v1213 = vld [vmem:[%s172 + $0xa8] sm:$0xe]
      %v1214 = vld [vmem:[%s172 + $0xb4] sm:$0xe]
      %vm1247 = vcmask 1042432
      %vm1248 = vcmask 1046532
      %vm1249 = vmor %vm1247, %vm1248
      %v1250 = vrot.slane %v1199, 5
      %v1251 = vrot.slane %v1250, 4
      %v1252 = vrot.slane %v185, 5
      %v1253 = vsel %vm1249, %v1251, %v1252
      %v1254 = vrot.slane %v1252, 4
      %v1255 = vrot.slane %v220, 5
      %v1256 = vsel %vm1249, %v1254, %v1255
      %v1257 = vrot.slane %v1200, 5
      %v1258 = vrot.slane %v1257, 4
      %v1259 = vrot.slane %v187, 5
      %v1260 = vsel %vm1249, %v1258, %v1259
      %v1261 = vrot.slane %v1259, 4
      %v1262 = vrot.slane %v221, 5
      %v1263 = vsel %vm1249, %v1261, %v1262
      %v1264 = vrot.slane %v1201, 5
      %v1265 = vrot.slane %v1264, 4
      %v1266 = vrot.slane %v189, 5
      %v1267 = vsel %vm1249, %v1265, %v1266
      %v1268 = vrot.slane %v1266, 4
      %v1269 = vrot.slane %v222, 5
      %v1270 = vsel %vm1249, %v1268, %v1269
      %v1271 = vrot.slane %v1202, 5
      %v1272 = vrot.slane %v1271, 4
      %v1273 = vrot.slane %v191, 5
      %v1274 = vsel %vm1249, %v1272, %v1273
      %v1275 = vrot.slane %v1273, 4
      %v1276 = vrot.slane %v223, 5
      %v1277 = vsel %vm1249, %v1275, %v1276
      %v1278 = vrot.slane %v1203, 5
      %v1279 = vrot.slane %v1278, 4
      %v1280 = vrot.slane %v193, 5
      %v1281 = vsel %vm1249, %v1279, %v1280
      %v1282 = vrot.slane %v1280, 4
      %v1283 = vrot.slane %v224, 5
      %v1284 = vsel %vm1249, %v1282, %v1283
      %v1285 = vrot.slane %v1204, 5
      %v1286 = vrot.slane %v1285, 4
      %v1287 = vrot.slane %v195, 5
      %v1288 = vsel %vm1249, %v1286, %v1287
      %v1289 = vrot.slane %v1287, 4
      %v1290 = vrot.slane %v225, 5
      %v1291 = vsel %vm1249, %v1289, %v1290
      %v1292 = vrot.slane %v1205, 5
      %v1293 = vrot.slane %v1292, 4
      %v1294 = vrot.slane %v197, 5
      %v1295 = vsel %vm1249, %v1293, %v1294
      %v1296 = vrot.slane %v1294, 4
      %v1297 = vrot.slane %v226, 5
      %v1298 = vsel %vm1249, %v1296, %v1297
      %v1299 = vrot.slane %v1206, 5
      %v1300 = vrot.slane %v1299, 4
      %v1301 = vrot.slane %v199, 5
      %v1302 = vsel %vm1249, %v1300, %v1301
      %v1303 = vrot.slane %v1301, 4
      %v1304 = vrot.slane %v227, 5
      %v1305 = vsel %vm1249, %v1303, %v1304
      %v1306 = vrot.slane %v1207, 5
      %v1307 = vrot.slane %v1306, 4
      %v1308 = vrot.slane %v201, 5
      %v1309 = vsel %vm1249, %v1307, %v1308
      %v1310 = vrot.slane %v1308, 4
      %v1311 = vrot.slane %v228, 5
      %v1312 = vsel %vm1249, %v1310, %v1311
      %v1313 = vrot.slane %v1208, 5
      %v1314 = vrot.slane %v1313, 4
      %v1315 = vrot.slane %v203, 5
      %v1316 = vsel %vm1249, %v1314, %v1315
      %v1317 = vrot.slane %v1315, 4
      %v1318 = vrot.slane %v229, 5
      %v1319 = vsel %vm1249, %v1317, %v1318
      %v1320 = vrot.slane %v1209, 5
      %v1321 = vrot.slane %v1320, 4
      %v1322 = vrot.slane %v205, 5
      %v1323 = vsel %vm1249, %v1321, %v1322
      %v1324 = vrot.slane %v1322, 4
      %v1325 = vrot.slane %v230, 5
      %v1326 = vsel %vm1249, %v1324, %v1325
      %v1327 = vrot.slane %v1210, 5
      %v1328 = vrot.slane %v1327, 4
      %v1329 = vrot.slane %v207, 5
      %v1330 = vsel %vm1249, %v1328, %v1329
      %v1331 = vrot.slane %v1329, 4
      %v1332 = vrot.slane %v231, 5
      %v1333 = vsel %vm1249, %v1331, %v1332
      %v1334 = vrot.slane %v1211, 5
      %v1335 = vrot.slane %v1334, 4
      %v1336 = vrot.slane %v209, 5
      %v1337 = vsel %vm1249, %v1335, %v1336
      %v1338 = vrot.slane %v1336, 4
      %v1339 = vrot.slane %v232, 5
      %v1340 = vsel %vm1249, %v1338, %v1339
      %v1341 = vrot.slane %v1212, 5
      %v1342 = vrot.slane %v1341, 4
      %v1343 = vrot.slane %v211, 5
      %v1344 = vsel %vm1249, %v1342, %v1343
      %v1345 = vrot.slane %v1343, 4
      %v1346 = vrot.slane %v233, 5
      %v1347 = vsel %vm1249, %v1345, %v1346
      %v1348 = vrot.slane %v1213, 5
      %v1349 = vrot.slane %v1348, 4
      %v1350 = vrot.slane %v213, 5
      %v1351 = vsel %vm1249, %v1349, %v1350
      %v1352 = vrot.slane %v1350, 4
      %v1353 = vrot.slane %v234, 5
      %v1354 = vsel %vm1249, %v1352, %v1353
      %v1355 = vrot.slane %v1214, 5
      %v1356 = vrot.slane %v1355, 4
      %v1357 = vrot.slane %v215, 5
      %v1358 = vsel %vm1249, %v1356, %v1357
      %v1359 = vrot.slane %v1357, 4
      %v1360 = vrot.slane %v235, 5
      %v1361 = vsel %vm1249, %v1359, %v1360
      %s1362 = scalar_lea.vmem %s1, 32
      %v1363 = vld [vmem:[%s1362] sm:$0xf]
      %v1364 = vld [vmem:[%s1362 + $0x4] sm:$0xf]
      %v1365 = vld [vmem:[%s1362 + $0x8] sm:$0xf]
      %v1366 = vld [vmem:[%s1362 + $0xc] sm:$0xf]
      %v1367 = vunpack.c.l.b16 %v1253
      %v1368 = vunpack.c.l.b16 %v1256
      %v1369 = vunpack.c.l.b16 %v1260
      %v1370 = vunpack.c.l.b16 %v1263
      %v1371 = vunpack.c.l.b16 %v1267
      %v1372 = vunpack.c.l.b16 %v1270
      %v1373 = vunpack.c.l.b16 %v1274
      %v1374 = vunpack.c.l.b16 %v1277
      %v1375 = vunpack.c.l.b16 %v1281
      %v1376 = vunpack.c.l.b16 %v1284
      %v1377 = vunpack.c.l.b16 %v1288
      %v1378 = vunpack.c.l.b16 %v1291
      %v1379 = vunpack.c.l.b16 %v1295
      %v1380 = vunpack.c.l.b16 %v1298
      %v1381 = vunpack.c.l.b16 %v1302
      %v1382 = vunpack.c.l.b16 %v1305
      %v1383 = vunpack.c.l.b16 %v1309
      %v1384 = vunpack.c.l.b16 %v1312
      %v1385 = vunpack.c.l.b16 %v1316
      %v1386 = vunpack.c.l.b16 %v1319
      %v1387 = vunpack.c.l.b16 %v1323
      %v1388 = vunpack.c.l.b16 %v1326
      %v1389 = vunpack.c.l.b16 %v1330
      %v1390 = vunpack.c.l.b16 %v1333
      %v1391 = vunpack.c.l.b16 %v1337
      %v1392 = vunpack.c.l.b16 %v1340
      %v1393 = vunpack.c.l.b16 %v1344
      %v1394 = vunpack.c.l.b16 %v1347
      %v1395 = vunpack.c.l.b16 %v1351
      %v1396 = vunpack.c.l.b16 %v1354
      %v1397 = vunpack.c.l.b16 %v1358
      %v1398 = vunpack.c.l.b16 %v1361
      %v1399 = vpack.c.b16 %v1368, %v1367
      %v1400 = vpack.c.b16 %v1370, %v1369
      %v1401 = vpack.c.b16 %v1372, %v1371
      %v1402 = vpack.c.b16 %v1374, %v1373
      %v1403 = vpack.c.b16 %v1376, %v1375
      %v1404 = vpack.c.b16 %v1378, %v1377
      %v1405 = vpack.c.b16 %v1380, %v1379
      %v1406 = vpack.c.b16 %v1382, %v1381
      %v1407 = vpack.c.b16 %v1384, %v1383
      %v1408 = vpack.c.b16 %v1386, %v1385
      %v1409 = vpack.c.b16 %v1388, %v1387
      %v1410 = vpack.c.b16 %v1390, %v1389
      %v1411 = vpack.c.b16 %v1392, %v1391
      %v1412 = vpack.c.b16 %v1394, %v1393
      %v1413 = vpack.c.b16 %v1396, %v1395
      %v1414 = vpack.c.b16 %v1398, %v1397
      %v1419 = vunpack.c.l.b16 %v1363
      %v1420 = vunpack.c.l.b16 %v1364
      %v1421 = vunpack.c.l.b16 %v1365
      %v1422 = vunpack.c.l.b16 %v1366
      %v1423 = vpack.c.b16 %v1420, %v1419
      %v1424 = vpack.c.b16 %v1422, %v1421
      %v1428 = vsel %vm688, %v1399, 0
      %v1431 = vsel %vm688, %v1400, 0
      %v1434 = vsel %vm688, %v1401, 0
      %v1437 = vsel %vm688, %v1402, 0
      %v1440 = vsel %vm688, %v1403, 0
      %v1443 = vsel %vm688, %v1404, 0
      %v1446 = vsel %vm688, %v1405, 0
      %v1449 = vsel %vm688, %v1406, 0
      %v1452 = vsel %vm688, %v1407, 0
      %v1455 = vsel %vm688, %v1408, 0
      %v1458 = vsel %vm688, %v1409, 0
      %v1461 = vsel %vm688, %v1410, 0
      %v1464 = vsel %vm688, %v1411, 0
      %v1467 = vsel %vm688, %v1412, 0
      %v1470 = vsel %vm688, %v1413, 0
      %v1473 = vsel %vm688, %v1414, 0
      %1475 = vmatprep.subr.bf16.mxu0 0
      %1476 = vmatpush1.bf16.msra.mxu0 %v1423
      %1477 = vmatprep.subr.bf16.mxu0 0
      %1478 = vmatpush1.bf16.msra.mxu0 %v1424
      %1479 = vmatprep.subr.bf16.mxu0 0
      %1480 = vmatpush1.bf16.msra.mxu0 0
      %1481 = vmatprep.subr.bf16.mxu0 0
      %1482 = vmatpush1.bf16.msra.mxu0 0
      %1483 = vmatprep.subr.bf16.mxu0 0
      %1484 = vmatpush1.bf16.msra.mxu0 0
      %1485 = vmatprep.subr.bf16.mxu0 0
      %1486 = vmatpush1.bf16.msra.mxu0 0
      %1487 = vmatprep.subr.bf16.mxu0 0
      %1488 = vmatpush1.bf16.msra.mxu0 0
      %1489 = vmatprep.subr.bf16.mxu0 0
      %1490 = vmatpush1.bf16.msra.mxu0 0
      %1491 = vmatprep.subr.bf16.mxu0 0
      %1492 = vmatpush1.bf16.msra.mxu0 0
      %1493 = vmatprep.subr.bf16.mxu0 0
      %1494 = vmatpush1.bf16.msra.mxu0 0
      %1495 = vmatprep.subr.bf16.mxu0 0
      %1496 = vmatpush1.bf16.msra.mxu0 0
      %1497 = vmatprep.subr.bf16.mxu0 0
      %1498 = vmatpush1.bf16.msra.mxu0 0
      %1499 = vmatprep.subr.bf16.mxu0 0
      %1500 = vmatpush1.bf16.msra.mxu0 0
      %1501 = vmatprep.subr.bf16.mxu0 0
      %1502 = vmatpush1.bf16.msra.mxu0 0
      %1503 = vmatprep.subr.bf16.mxu0 0
      %1504 = vmatpush1.bf16.msra.mxu0 0
      %1505 = vmatprep.subr.bf16.mxu0 0
      %1506 = vmatpush1.bf16.msra.mxu0 0
      %1507 = vmatprep.mubr.bf16.mxu0 0
      %1508 = vmatmul.mubr.bf16.gmra.mrb[0].mxu0 %v1428
      %v1509 = vpop.f32.mrb[0].mxu0
      %v1510 = vadd.f32 0.0, %v1509
      %v1511 = vpop.f32.mrb[0].mxu0
      %v1512 = vpop.f32.mrb[0].mxu0
      %v1513 = vadd.f32 0.0, %v1512
      %v1514 = vpop.f32.mrb[0].mxu0
      %1515 = vmatprep.mubr.bf16.mxu0 0
      %1516 = vmatmul.mubr.bf16.gmra.mrb[0].mxu0 %v1431
      %v1517 = vpop.f32.mrb[0].mxu0
      %v1518 = vadd.f32 0.0, %v1517
      %v1519 = vpop.f32.mrb[0].mxu0
      %v1520 = vpop.f32.mrb[0].mxu0
      %v1521 = vadd.f32 0.0, %v1520
      %v1522 = vpop.f32.mrb[0].mxu0
      %1523 = vmatprep.mubr.bf16.mxu0 0
      %1524 = vmatmul.mubr.bf16.gmra.mrb[0].mxu0 %v1434
      %v1525 = vpop.f32.mrb[0].mxu0
      %v1526 = vadd.f32 0.0, %v1525
      %v1527 = vpop.f32.mrb[0].mxu0
      %v1528 = vpop.f32.mrb[0].mxu0
      %v1529 = vadd.f32 0.0, %v1528
      %v1530 = vpop.f32.mrb[0].mxu0
      %1531 = vmatprep.mubr.bf16.mxu0 0
      %1532 = vmatmul.mubr.bf16.gmra.mrb[0].mxu0 %v1437
      %v1533 = vpop.f32.mrb[0].mxu0
      %v1534 = vadd.f32 0.0, %v1533
      %v1535 = vpop.f32.mrb[0].mxu0
      %v1536 = vpop.f32.mrb[0].mxu0
      %v1537 = vadd.f32 0.0, %v1536
      %v1538 = vpop.f32.mrb[0].mxu0
      %1539 = vmatprep.mubr.bf16.mxu0 0
      %1540 = vmatmul.mubr.bf16.gmra.mrb[0].mxu0 %v1440
      %v1541 = vpop.f32.mrb[0].mxu0
      %v1542 = vadd.f32 0.0, %v1541
      %v1543 = vpop.f32.mrb[0].mxu0
      %v1544 = vpop.f32.mrb[0].mxu0
      %v1545 = vadd.f32 0.0, %v1544
      %v1546 = vpop.f32.mrb[0].mxu0
      %1547 = vmatprep.mubr.bf16.mxu0 0
      %1548 = vmatmul.mubr.bf16.gmra.mrb[0].mxu0 %v1443
      %v1549 = vpop.f32.mrb[0].mxu0
      %v1550 = vadd.f32 0.0, %v1549
      %v1551 = vpop.f32.mrb[0].mxu0
      %v1552 = vpop.f32.mrb[0].mxu0
      %v1553 = vadd.f32 0.0, %v1552
      %v1554 = vpop.f32.mrb[0].mxu0
      %1555 = vmatprep.mubr.bf16.mxu0 0
      %1556 = vmatmul.mubr.bf16.gmra.mrb[0].mxu0 %v1446
      %v1557 = vpop.f32.mrb[0].mxu0
      %v1558 = vadd.f32 0.0, %v1557
      %v1559 = vpop.f32.mrb[0].mxu0
      %v1560 = vpop.f32.mrb[0].mxu0
      %v1561 = vadd.f32 0.0, %v1560
      %v1562 = vpop.f32.mrb[0].mxu0
      %1563 = vmatprep.mubr.bf16.mxu0 0
      %1564 = vmatmul.mubr.bf16.gmra.mrb[0].mxu0 %v1449
      %v1565 = vpop.f32.mrb[0].mxu0
      %v1566 = vadd.f32 0.0, %v1565
      %v1567 = vpop.f32.mrb[0].mxu0
      %v1568 = vpop.f32.mrb[0].mxu0
      %v1569 = vadd.f32 0.0, %v1568
      %v1570 = vpop.f32.mrb[0].mxu0
      %1571 = vmatprep.mubr.bf16.mxu0 0
      %1572 = vmatmul.mubr.bf16.gmra.mrb[0].mxu0 %v1452
      %v1573 = vpop.f32.mrb[0].mxu0
      %v1574 = vadd.f32 0.0, %v1573
      %v1575 = vpop.f32.mrb[0].mxu0
      %v1576 = vpop.f32.mrb[0].mxu0
      %v1577 = vadd.f32 0.0, %v1576
      %v1578 = vpop.f32.mrb[0].mxu0
      %1579 = vmatprep.mubr.bf16.mxu0 0
      %1580 = vmatmul.mubr.bf16.gmra.mrb[0].mxu0 %v1455
      %v1581 = vpop.f32.mrb[0].mxu0
      %v1582 = vadd.f32 0.0, %v1581
      %v1583 = vpop.f32.mrb[0].mxu0
      %v1584 = vpop.f32.mrb[0].mxu0
      %v1585 = vadd.f32 0.0, %v1584
      %v1586 = vpop.f32.mrb[0].mxu0
      %1587 = vmatprep.mubr.bf16.mxu0 0
      %1588 = vmatmul.mubr.bf16.gmra.mrb[0].mxu0 %v1458
      %v1589 = vpop.f32.mrb[0].mxu0
      %v1590 = vadd.f32 0.0, %v1589
      %v1591 = vpop.f32.mrb[0].mxu0
      %v1592 = vpop.f32.mrb[0].mxu0
      %v1593 = vadd.f32 0.0, %v1592
      %v1594 = vpop.f32.mrb[0].mxu0
      %1595 = vmatprep.mubr.bf16.mxu0 0
      %1596 = vmatmul.mubr.bf16.gmra.mrb[0].mxu0 %v1461
      %v1597 = vpop.f32.mrb[0].mxu0
      %v1598 = vadd.f32 0.0, %v1597
      %v1599 = vpop.f32.mrb[0].mxu0
      %v1600 = vpop.f32.mrb[0].mxu0
      %v1601 = vadd.f32 0.0, %v1600
      %v1602 = vpop.f32.mrb[0].mxu0
      %1603 = vmatprep.mubr.bf16.mxu0 0
      %1604 = vmatmul.mubr.bf16.gmra.mrb[0].mxu0 %v1464
      %v1605 = vpop.f32.mrb[0].mxu0
      %v1606 = vadd.f32 0.0, %v1605
      %v1607 = vpop.f32.mrb[0].mxu0
      %v1608 = vpop.f32.mrb[0].mxu0
      %v1609 = vadd.f32 0.0, %v1608
      %v1610 = vpop.f32.mrb[0].mxu0
      %1611 = vmatprep.mubr.bf16.mxu0 0
      %1612 = vmatmul.mubr.bf16.gmra.mrb[0].mxu0 %v1467
      %v1613 = vpop.f32.mrb[0].mxu0
      %v1614 = vadd.f32 0.0, %v1613
      %v1615 = vpop.f32.mrb[0].mxu0
      %v1616 = vpop.f32.mrb[0].mxu0
      %v1617 = vadd.f32 0.0, %v1616
      %v1618 = vpop.f32.mrb[0].mxu0
      %1619 = vmatprep.mubr.bf16.mxu0 0
      %1620 = vmatmul.mubr.bf16.gmra.mrb[0].mxu0 %v1470
      %v1621 = vpop.f32.mrb[0].mxu0
      %v1622 = vadd.f32 0.0, %v1621
      %v1623 = vpop.f32.mrb[0].mxu0
      %v1624 = vpop.f32.mrb[0].mxu0
      %v1625 = vadd.f32 0.0, %v1624
      %v1626 = vpop.f32.mrb[0].mxu0
      %1627 = vmatprep.mubr.bf16.mxu0 0
      %1628 = vmatmul.mubr.bf16.gmra.mrb[0].mxu0 %v1473
      %v1629 = vpop.f32.mrb[0].mxu0
      %v1630 = vadd.f32 0.0, %v1629
      %v1631 = vpop.f32.mrb[0].mxu0
      %v1632 = vpop.f32.mrb[0].mxu0
      %v1633 = vadd.f32 0.0, %v1632
      %v1634 = vpop.f32.mrb[0].mxu0
      %1635 = vdwg.mxu0
      %v1636 = vadd.f32 %v1073, %v1510
      %v1637 = vadd.f32 %v1076, %v1513
      %v1638 = vadd.f32 %v1081, %v1518
      %v1639 = vadd.f32 %v1084, %v1521
      %v1640 = vadd.f32 %v1089, %v1526
      %v1641 = vadd.f32 %v1092, %v1529
      %v1642 = vadd.f32 %v1097, %v1534
      %v1643 = vadd.f32 %v1100, %v1537
      %v1644 = vadd.f32 %v1105, %v1542
      %v1645 = vadd.f32 %v1108, %v1545
      %v1646 = vadd.f32 %v1113, %v1550
      %v1647 = vadd.f32 %v1116, %v1553
      %v1648 = vadd.f32 %v1121, %v1558
      %v1649 = vadd.f32 %v1124, %v1561
      %v1650 = vadd.f32 %v1129, %v1566
      %v1651 = vadd.f32 %v1132, %v1569
      %v1652 = vadd.f32 %v1137, %v1574
      %v1653 = vadd.f32 %v1140, %v1577
      %v1654 = vadd.f32 %v1145, %v1582
      %v1655 = vadd.f32 %v1148, %v1585
      %v1656 = vadd.f32 %v1153, %v1590
      %v1657 = vadd.f32 %v1156, %v1593
      %v1658 = vadd.f32 %v1161, %v1598
      %v1659 = vadd.f32 %v1164, %v1601
      %v1660 = vadd.f32 %v1169, %v1606
      %v1661 = vadd.f32 %v1172, %v1609
      %v1662 = vadd.f32 %v1177, %v1614
      %v1663 = vadd.f32 %v1180, %v1617
      %v1664 = vadd.f32 %v1185, %v1622
      %v1665 = vadd.f32 %v1188, %v1625
      %v1666 = vadd.f32 %v1193, %v1630
      %v1667 = vadd.f32 %v1196, %v1633
      %s1668 = scalar_lea.vmem %s172, 12
      %v1669 = vld [vmem:[%s1668] sm:$0xf]
      %v1670 = vld [vmem:[%s1668 + $0x4] sm:$0xf]
      %v1671 = vld [vmem:[%s1668 + $0xc] sm:$0xf]
      %v1672 = vld [vmem:[%s1668 + $0x10] sm:$0xf]
      %v1673 = vld [vmem:[%s1668 + $0x18] sm:$0xf]
      %v1674 = vld [vmem:[%s1668 + $0x1c] sm:$0xf]
      %v1675 = vld [vmem:[%s1668 + $0x24] sm:$0xf]
      %v1676 = vld [vmem:[%s1668 + $0x28] sm:$0xf]
      %v1677 = vld [vmem:[%s1668 + $0x30] sm:$0xf]
      %v1678 = vld [vmem:[%s1668 + $0x34] sm:$0xf]
      %v1679 = vld [vmem:[%s1668 + $0x3c] sm:$0xf]
      %v1680 = vld [vmem:[%s1668 + $0x40] sm:$0xf]
      %v1681 = vld [vmem:[%s1668 + $0x48] sm:$0xf]
      %v1682 = vld [vmem:[%s1668 + $0x4c] sm:$0xf]
      %v1683 = vld [vmem:[%s1668 + $0x54] sm:$0xf]
      %v1684 = vld [vmem:[%s1668 + $0x58] sm:$0xf]
      %v1685 = vld [vmem:[%s1668 + $0x60] sm:$0xf]
      %v1686 = vld [vmem:[%s1668 + $0x64] sm:$0xf]
      %v1687 = vld [vmem:[%s1668 + $0x6c] sm:$0xf]
      %v1688 = vld [vmem:[%s1668 + $0x70] sm:$0xf]
      %v1689 = vld [vmem:[%s1668 + $0x78] sm:$0xf]
      %v1690 = vld [vmem:[%s1668 + $0x7c] sm:$0xf]
      %v1691 = vld [vmem:[%s1668 + $0x84] sm:$0xf]
      %v1692 = vld [vmem:[%s1668 + $0x88] sm:$0xf]
      %v1693 = vld [vmem:[%s1668 + $0x90] sm:$0xf]
      %v1694 = vld [vmem:[%s1668 + $0x94] sm:$0xf]
      %v1695 = vld [vmem:[%s1668 + $0x9c] sm:$0xf]
      %v1696 = vld [vmem:[%s1668 + $0xa0] sm:$0xf]
      %v1697 = vld [vmem:[%s1668 + $0xa8] sm:$0xf]
      %v1698 = vld [vmem:[%s1668 + $0xac] sm:$0xf]
      %v1699 = vld [vmem:[%s1668 + $0xb4] sm:$0xf]
      %v1700 = vld [vmem:[%s1668 + $0xb8] sm:$0xf]
      %s1701 = scalar_lea.vmem %s1, 48
      %v1702 = vld [vmem:[%s1701] sm:$0xf]
      %v1703 = vld [vmem:[%s1701 + $0x4] sm:$0xf]
      %v1704 = vld [vmem:[%s1701 + $0x8] sm:$0xf]
      %v1705 = vld [vmem:[%s1701 + $0xc] sm:$0xf]
      %v1738 = vunpack.c.l.b16 %v1669
      %v1739 = vunpack.c.l.b16 %v1670
      %v1740 = vunpack.c.l.b16 %v1671
      %v1741 = vunpack.c.l.b16 %v1672
      %v1742 = vunpack.c.l.b16 %v1673
      %v1743 = vunpack.c.l.b16 %v1674
      %v1744 = vunpack.c.l.b16 %v1675
      %v1745 = vunpack.c.l.b16 %v1676
      %v1746 = vunpack.c.l.b16 %v1677
      %v1747 = vunpack.c.l.b16 %v1678
      %v1748 = vunpack.c.l.b16 %v1679
      %v1749 = vunpack.c.l.b16 %v1680
      %v1750 = vunpack.c.l.b16 %v1681
      %v1751 = vunpack.c.l.b16 %v1682
      %v1752 = vunpack.c.l.b16 %v1683
      %v1753 = vunpack.c.l.b16 %v1684
      %v1754 = vunpack.c.l.b16 %v1685
      %v1755 = vunpack.c.l.b16 %v1686
      %v1756 = vunpack.c.l.b16 %v1687
      %v1757 = vunpack.c.l.b16 %v1688
      %v1758 = vunpack.c.l.b16 %v1689
      %v1759 = vunpack.c.l.b16 %v1690
      %v1760 = vunpack.c.l.b16 %v1691
      %v1761 = vunpack.c.l.b16 %v1692
      %v1762 = vunpack.c.l.b16 %v1693
      %v1763 = vunpack.c.l.b16 %v1694
      %v1764 = vunpack.c.l.b16 %v1695
      %v1765 = vunpack.c.l.b16 %v1696
      %v1766 = vunpack.c.l.b16 %v1697
      %v1767 = vunpack.c.l.b16 %v1698
      %v1768 = vunpack.c.l.b16 %v1699
      %v1769 = vunpack.c.l.b16 %v1700
      %v1770 = vpack.c.b16 %v1739, %v1738
      %v1771 = vpack.c.b16 %v1741, %v1740
      %v1772 = vpack.c.b16 %v1743, %v1742
      %v1773 = vpack.c.b16 %v1745, %v1744
      %v1774 = vpack.c.b16 %v1747, %v1746
      %v1775 = vpack.c.b16 %v1749, %v1748
      %v1776 = vpack.c.b16 %v1751, %v1750
      %v1777 = vpack.c.b16 %v1753, %v1752
      %v1778 = vpack.c.b16 %v1755, %v1754
      %v1779 = vpack.c.b16 %v1757, %v1756
      %v1780 = vpack.c.b16 %v1759, %v1758
      %v1781 = vpack.c.b16 %v1761, %v1760
      %v1782 = vpack.c.b16 %v1763, %v1762
      %v1783 = vpack.c.b16 %v1765, %v1764
      %v1784 = vpack.c.b16 %v1767, %v1766
      %v1785 = vpack.c.b16 %v1769, %v1768
      %v1790 = vunpack.c.l.b16 %v1702
      %v1791 = vunpack.c.l.b16 %v1703
      %v1792 = vunpack.c.l.b16 %v1704
      %v1793 = vunpack.c.l.b16 %v1705
      %v1794 = vpack.c.b16 %v1791, %v1790
      %v1795 = vpack.c.b16 %v1793, %v1792
      %v1799 = vsel %vm688, %v1770, 0
      %v1802 = vsel %vm688, %v1771, 0
      %v1805 = vsel %vm688, %v1772, 0
      %v1808 = vsel %vm688, %v1773, 0
      %v1811 = vsel %vm688, %v1774, 0
      %v1814 = vsel %vm688, %v1775, 0
      %v1817 = vsel %vm688, %v1776, 0
      %v1820 = vsel %vm688, %v1777, 0
      %v1823 = vsel %vm688, %v1778, 0
      %v1826 = vsel %vm688, %v1779, 0
      %v1829 = vsel %vm688, %v1780, 0
      %v1832 = vsel %vm688, %v1781, 0
      %v1835 = vsel %vm688, %v1782, 0
      %v1838 = vsel %vm688, %v1783, 0
      %v1841 = vsel %vm688, %v1784, 0
      %v1844 = vsel %vm688, %v1785, 0
      %1846 = vmatprep.subr.bf16.mxu0 0
      %1847 = vmatpush1.bf16.msra.mxu0 %v1794
      %1848 = vmatprep.subr.bf16.mxu0 0
      %1849 = vmatpush1.bf16.msra.mxu0 %v1795
      %1850 = vmatprep.subr.bf16.mxu0 0
      %1851 = vmatpush1.bf16.msra.mxu0 0
      %1852 = vmatprep.subr.bf16.mxu0 0
      %1853 = vmatpush1.bf16.msra.mxu0 0
      %1854 = vmatprep.subr.bf16.mxu0 0
      %1855 = vmatpush1.bf16.msra.mxu0 0
      %1856 = vmatprep.subr.bf16.mxu0 0
      %1857 = vmatpush1.bf16.msra.mxu0 0
      %1858 = vmatprep.subr.bf16.mxu0 0
      %1859 = vmatpush1.bf16.msra.mxu0 0
      %1860 = vmatprep.subr.bf16.mxu0 0
      %1861 = vmatpush1.bf16.msra.mxu0 0
      %1862 = vmatprep.subr.bf16.mxu0 0
      %1863 = vmatpush1.bf16.msra.mxu0 0
      %1864 = vmatprep.subr.bf16.mxu0 0
      %1865 = vmatpush1.bf16.msra.mxu0 0
      %1866 = vmatprep.subr.bf16.mxu0 0
      %1867 = vmatpush1.bf16.msra.mxu0 0
      %1868 = vmatprep.subr.bf16.mxu0 0
      %1869 = vmatpush1.bf16.msra.mxu0 0
      %1870 = vmatprep.subr.bf16.mxu0 0
      %1871 = vmatpush1.bf16.msra.mxu0 0
      %1872 = vmatprep.subr.bf16.mxu0 0
      %1873 = vmatpush1.bf16.msra.mxu0 0
      %1874 = vmatprep.subr.bf16.mxu0 0
      %1875 = vmatpush1.bf16.msra.mxu0 0
      %1876 = vmatprep.subr.bf16.mxu0 0
      %1877 = vmatpush1.bf16.msra.mxu0 0
      %1878 = vmatprep.mubr.bf16.mxu0 0
      %1879 = vmatmul.mubr.bf16.gmra.mrb[0].mxu0 %v1799
      %v1880 = vpop.f32.mrb[0].mxu0
      %v1881 = vadd.f32 0.0, %v1880
      %v1882 = vpop.f32.mrb[0].mxu0
      %v1883 = vpop.f32.mrb[0].mxu0
      %v1884 = vadd.f32 0.0, %v1883
      %v1885 = vpop.f32.mrb[0].mxu0
      %1886 = vmatprep.mubr.bf16.mxu0 0
      %1887 = vmatmul.mubr.bf16.gmra.mrb[0].mxu0 %v1802
      %v1888 = vpop.f32.mrb[0].mxu0
      %v1889 = vadd.f32 0.0, %v1888
      %v1890 = vpop.f32.mrb[0].mxu0
      %v1891 = vpop.f32.mrb[0].mxu0
      %v1892 = vadd.f32 0.0, %v1891
      %v1893 = vpop.f32.mrb[0].mxu0
      %1894 = vmatprep.mubr.bf16.mxu0 0
      %1895 = vmatmul.mubr.bf16.gmra.mrb[0].mxu0 %v1805
      %v1896 = vpop.f32.mrb[0].mxu0
      %v1897 = vadd.f32 0.0, %v1896
      %v1898 = vpop.f32.mrb[0].mxu0
      %v1899 = vpop.f32.mrb[0].mxu0
      %v1900 = vadd.f32 0.0, %v1899
      %v1901 = vpop.f32.mrb[0].mxu0
      %1902 = vmatprep.mubr.bf16.mxu0 0
      %1903 = vmatmul.mubr.bf16.gmra.mrb[0].mxu0 %v1808
      %v1904 = vpop.f32.mrb[0].mxu0
      %v1905 = vadd.f32 0.0, %v1904
      %v1906 = vpop.f32.mrb[0].mxu0
      %v1907 = vpop.f32.mrb[0].mxu0
      %v1908 = vadd.f32 0.0, %v1907
      %v1909 = vpop.f32.mrb[0].mxu0
      %1910 = vmatprep.mubr.bf16.mxu0 0
      %1911 = vmatmul.mubr.bf16.gmra.mrb[0].mxu0 %v1811
      %v1912 = vpop.f32.mrb[0].mxu0
      %v1913 = vadd.f32 0.0, %v1912
      %v1914 = vpop.f32.mrb[0].mxu0
      %v1915 = vpop.f32.mrb[0].mxu0
      %v1916 = vadd.f32 0.0, %v1915
      %v1917 = vpop.f32.mrb[0].mxu0
      %1918 = vmatprep.mubr.bf16.mxu0 0
      %1919 = vmatmul.mubr.bf16.gmra.mrb[0].mxu0 %v1814
      %v1920 = vpop.f32.mrb[0].mxu0
      %v1921 = vadd.f32 0.0, %v1920
      %v1922 = vpop.f32.mrb[0].mxu0
      %v1923 = vpop.f32.mrb[0].mxu0
      %v1924 = vadd.f32 0.0, %v1923
      %v1925 = vpop.f32.mrb[0].mxu0
      %1926 = vmatprep.mubr.bf16.mxu0 0
      %1927 = vmatmul.mubr.bf16.gmra.mrb[0].mxu0 %v1817
      %v1928 = vpop.f32.mrb[0].mxu0
      %v1929 = vadd.f32 0.0, %v1928
      %v1930 = vpop.f32.mrb[0].mxu0
      %v1931 = vpop.f32.mrb[0].mxu0
      %v1932 = vadd.f32 0.0, %v1931
      %v1933 = vpop.f32.mrb[0].mxu0
      %1934 = vmatprep.mubr.bf16.mxu0 0
      %1935 = vmatmul.mubr.bf16.gmra.mrb[0].mxu0 %v1820
      %v1936 = vpop.f32.mrb[0].mxu0
      %v1937 = vadd.f32 0.0, %v1936
      %v1938 = vpop.f32.mrb[0].mxu0
      %v1939 = vpop.f32.mrb[0].mxu0
      %v1940 = vadd.f32 0.0, %v1939
      %v1941 = vpop.f32.mrb[0].mxu0
      %1942 = vmatprep.mubr.bf16.mxu0 0
      %1943 = vmatmul.mubr.bf16.gmra.mrb[0].mxu0 %v1823
      %v1944 = vpop.f32.mrb[0].mxu0
      %v1945 = vadd.f32 0.0, %v1944
      %v1946 = vpop.f32.mrb[0].mxu0
      %v1947 = vpop.f32.mrb[0].mxu0
      %v1948 = vadd.f32 0.0, %v1947
      %v1949 = vpop.f32.mrb[0].mxu0
      %1950 = vmatprep.mubr.bf16.mxu0 0
      %1951 = vmatmul.mubr.bf16.gmra.mrb[0].mxu0 %v1826
      %v1952 = vpop.f32.mrb[0].mxu0
      %v1953 = vadd.f32 0.0, %v1952
      %v1954 = vpop.f32.mrb[0].mxu0
      %v1955 = vpop.f32.mrb[0].mxu0
      %v1956 = vadd.f32 0.0, %v1955
      %v1957 = vpop.f32.mrb[0].mxu0
      %1958 = vmatprep.mubr.bf16.mxu0 0
      %1959 = vmatmul.mubr.bf16.gmra.mrb[0].mxu0 %v1829
      %v1960 = vpop.f32.mrb[0].mxu0
      %v1961 = vadd.f32 0.0, %v1960
      %v1962 = vpop.f32.mrb[0].mxu0
      %v1963 = vpop.f32.mrb[0].mxu0
      %v1964 = vadd.f32 0.0, %v1963
      %v1965 = vpop.f32.mrb[0].mxu0
      %1966 = vmatprep.mubr.bf16.mxu0 0
      %1967 = vmatmul.mubr.bf16.gmra.mrb[0].mxu0 %v1832
      %v1968 = vpop.f32.mrb[0].mxu0
      %v1969 = vadd.f32 0.0, %v1968
      %v1970 = vpop.f32.mrb[0].mxu0
      %v1971 = vpop.f32.mrb[0].mxu0
      %v1972 = vadd.f32 0.0, %v1971
      %v1973 = vpop.f32.mrb[0].mxu0
      %1974 = vmatprep.mubr.bf16.mxu0 0
      %1975 = vmatmul.mubr.bf16.gmra.mrb[0].mxu0 %v1835
      %v1976 = vpop.f32.mrb[0].mxu0
      %v1977 = vadd.f32 0.0, %v1976
      %v1978 = vpop.f32.mrb[0].mxu0
      %v1979 = vpop.f32.mrb[0].mxu0
      %v1980 = vadd.f32 0.0, %v1979
      %v1981 = vpop.f32.mrb[0].mxu0
      %1982 = vmatprep.mubr.bf16.mxu0 0
      %1983 = vmatmul.mubr.bf16.gmra.mrb[0].mxu0 %v1838
      %v1984 = vpop.f32.mrb[0].mxu0
      %v1985 = vadd.f32 0.0, %v1984
      %v1986 = vpop.f32.mrb[0].mxu0
      %v1987 = vpop.f32.mrb[0].mxu0
      %v1988 = vadd.f32 0.0, %v1987
      %v1989 = vpop.f32.mrb[0].mxu0
      %1990 = vmatprep.mubr.bf16.mxu0 0
      %1991 = vmatmul.mubr.bf16.gmra.mrb[0].mxu0 %v1841
      %v1992 = vpop.f32.mrb[0].mxu0
      %v1993 = vadd.f32 0.0, %v1992
      %v1994 = vpop.f32.mrb[0].mxu0
      %v1995 = vpop.f32.mrb[0].mxu0
      %v1996 = vadd.f32 0.0, %v1995
      %v1997 = vpop.f32.mrb[0].mxu0
      %1998 = vmatprep.mubr.bf16.mxu0 0
      %1999 = vmatmul.mubr.bf16.gmra.mrb[0].mxu0 %v1844
      %v2000 = vpop.f32.mrb[0].mxu0
      %v2001 = vadd.f32 0.0, %v2000
      %v2002 = vpop.f32.mrb[0].mxu0
      %v2003 = vpop.f32.mrb[0].mxu0
      %v2004 = vadd.f32 0.0, %v2003
      %v2005 = vpop.f32.mrb[0].mxu0
      %2006 = vdwg.mxu0
      %v2007 = vadd.f32 %v1636, %v1881
      %v2008 = vadd.f32 %v1637, %v1884
      %v2009 = vadd.f32 %v1638, %v1889
      %v2010 = vadd.f32 %v1639, %v1892
      %v2011 = vadd.f32 %v1640, %v1897
      %v2012 = vadd.f32 %v1641, %v1900
      %v2013 = vadd.f32 %v1642, %v1905
      %v2014 = vadd.f32 %v1643, %v1908
      %v2015 = vadd.f32 %v1644, %v1913
      %v2016 = vadd.f32 %v1645, %v1916
      %v2017 = vadd.f32 %v1646, %v1921
      %v2018 = vadd.f32 %v1647, %v1924
      %v2019 = vadd.f32 %v1648, %v1929
      %v2020 = vadd.f32 %v1649, %v1932
      %v2021 = vadd.f32 %v1650, %v1937
      %v2022 = vadd.f32 %v1651, %v1940
      %v2023 = vadd.f32 %v1652, %v1945
      %v2024 = vadd.f32 %v1653, %v1948
      %v2025 = vadd.f32 %v1654, %v1953
      %v2026 = vadd.f32 %v1655, %v1956
      %v2027 = vadd.f32 %v1656, %v1961
      %v2028 = vadd.f32 %v1657, %v1964
      %v2029 = vadd.f32 %v1658, %v1969
      %v2030 = vadd.f32 %v1659, %v1972
      %v2031 = vadd.f32 %v1660, %v1977
      %v2032 = vadd.f32 %v1661, %v1980
      %v2033 = vadd.f32 %v1662, %v1985
      %v2034 = vadd.f32 %v1663, %v1988
      %v2035 = vadd.f32 %v1664, %v1993
      %v2036 = vadd.f32 %v1665, %v1996
      %v2037 = vadd.f32 %v1666, %v2001
      %v2038 = vadd.f32 %v1667, %v2004
      %v2039 = vld [vmem:[%s1668] sm:$0xf]
      %v2040 = vld [vmem:[%s1668 + $0x4] sm:$0xf]
      %v2041 = vld [vmem:[%s1668 + $0x8] sm:$0x1]
      %v2042 = vld [vmem:[%s1668 + $0xc] sm:$0xf]
      %v2043 = vld [vmem:[%s1668 + $0x10] sm:$0xf]
      %v2044 = vld [vmem:[%s1668 + $0x14] sm:$0x1]
      %v2045 = vld [vmem:[%s1668 + $0x18] sm:$0xf]
      %v2046 = vld [vmem:[%s1668 + $0x1c] sm:$0xf]
      %v2047 = vld [vmem:[%s1668 + $0x20] sm:$0x1]
      %v2048 = vld [vmem:[%s1668 + $0x24] sm:$0xf]
      %v2049 = vld [vmem:[%s1668 + $0x28] sm:$0xf]
      %v2050 = vld [vmem:[%s1668 + $0x2c] sm:$0x1]
      %v2051 = vld [vmem:[%s1668 + $0x30] sm:$0xf]
      %v2052 = vld [vmem:[%s1668 + $0x34] sm:$0xf]
      %v2053 = vld [vmem:[%s1668 + $0x38] sm:$0x1]
      %v2054 = vld [vmem:[%s1668 + $0x3c] sm:$0xf]
      %v2055 = vld [vmem:[%s1668 + $0x40] sm:$0xf]
      %v2056 = vld [vmem:[%s1668 + $0x44] sm:$0x1]
      %v2057 = vld [vmem:[%s1668 + $0x48] sm:$0xf]
      %v2058 = vld [vmem:[%s1668 + $0x4c] sm:$0xf]
      %v2059 = vld [vmem:[%s1668 + $0x50] sm:$0x1]
      %v2060 = vld [vmem:[%s1668 + $0x54] sm:$0xf]
      %v2061 = vld [vmem:[%s1668 + $0x58] sm:$0xf]
      %v2062 = vld [vmem:[%s1668 + $0x5c] sm:$0x1]
      %v2063 = vld [vmem:[%s1668 + $0x60] sm:$0xf]
      %v2064 = vld [vmem:[%s1668 + $0x64] sm:$0xf]
      %v2065 = vld [vmem:[%s1668 + $0x68] sm:$0x1]
      %v2066 = vld [vmem:[%s1668 + $0x6c] sm:$0xf]
      %v2067 = vld [vmem:[%s1668 + $0x70] sm:$0xf]
      %v2068 = vld [vmem:[%s1668 + $0x74] sm:$0x1]
      %v2069 = vld [vmem:[%s1668 + $0x78] sm:$0xf]
      %v2070 = vld [vmem:[%s1668 + $0x7c] sm:$0xf]
      %v2071 = vld [vmem:[%s1668 + $0x80] sm:$0x1]
      %v2072 = vld [vmem:[%s1668 + $0x84] sm:$0xf]
      %v2073 = vld [vmem:[%s1668 + $0x88] sm:$0xf]
      %v2074 = vld [vmem:[%s1668 + $0x8c] sm:$0x1]
      %v2075 = vld [vmem:[%s1668 + $0x90] sm:$0xf]
      %v2076 = vld [vmem:[%s1668 + $0x94] sm:$0xf]
      %v2077 = vld [vmem:[%s1668 + $0x98] sm:$0x1]
      %v2078 = vld [vmem:[%s1668 + $0x9c] sm:$0xf]
      %v2079 = vld [vmem:[%s1668 + $0xa0] sm:$0xf]
      %v2080 = vld [vmem:[%s1668 + $0xa4] sm:$0x1]
      %v2081 = vld [vmem:[%s1668 + $0xa8] sm:$0xf]
      %v2082 = vld [vmem:[%s1668 + $0xac] sm:$0xf]
      %v2083 = vld [vmem:[%s1668 + $0xb0] sm:$0x1]
      %v2084 = vld [vmem:[%s1668 + $0xb4] sm:$0xf]
      %v2085 = vld [vmem:[%s1668 + $0xb8] sm:$0xf]
      %v2086 = vld [vmem:[%s1668 + $0xbc] sm:$0x1]
      %v2088 = vshrl.u32 %v2039, 16
      %v2090 = vrot.slane %v2088, 4
      %v2091 = vshll.u32 %v2039, 16
      %v2093 = vrot.slane %v2091, 5
      %v2094 = vor.u32 %v2090, %v2093
      %v2095 = vrot.slane %v2094, 4
      %v2097 = vshll.u32 %v2040, 16
      %v2099 = vrot.slane %v2097, 5
      %v2100 = vsel %vm238, %v2095, %v2099
      %v2101 = vshrl.u32 %v2040, 16
      %v2103 = vrot.slane %v2101, 4
      %v2104 = vor.u32 %v2103, %v2099
      %v2105 = vrot.slane %v2104, 4
      %v2107 = vshll.u32 %v2041, 16
      %v2109 = vrot.slane %v2107, 5
      %v2110 = vsel %vm238, %v2105, %v2109
      %v2112 = vshrl.u32 %v2042, 16
      %v2114 = vrot.slane %v2112, 4
      %v2115 = vshll.u32 %v2042, 16
      %v2117 = vrot.slane %v2115, 5
      %v2118 = vor.u32 %v2114, %v2117
      %v2119 = vrot.slane %v2118, 4
      %v2121 = vshll.u32 %v2043, 16
      %v2123 = vrot.slane %v2121, 5
      %v2124 = vsel %vm238, %v2119, %v2123
      %v2125 = vshrl.u32 %v2043, 16
      %v2127 = vrot.slane %v2125, 4
      %v2128 = vor.u32 %v2127, %v2123
      %v2129 = vrot.slane %v2128, 4
      %v2131 = vshll.u32 %v2044, 16
      %v2133 = vrot.slane %v2131, 5
      %v2134 = vsel %vm238, %v2129, %v2133
      %v2136 = vshrl.u32 %v2045, 16
      %v2138 = vrot.slane %v2136, 4
      %v2139 = vshll.u32 %v2045, 16
      %v2141 = vrot.slane %v2139, 5
      %v2142 = vor.u32 %v2138, %v2141
      %v2143 = vrot.slane %v2142, 4
      %v2145 = vshll.u32 %v2046, 16
      %v2147 = vrot.slane %v2145, 5
      %v2148 = vsel %vm238, %v2143, %v2147
      %v2149 = vshrl.u32 %v2046, 16
      %v2151 = vrot.slane %v2149, 4
      %v2152 = vor.u32 %v2151, %v2147
      %v2153 = vrot.slane %v2152, 4
      %v2155 = vshll.u32 %v2047, 16
      %v2157 = vrot.slane %v2155, 5
      %v2158 = vsel %vm238, %v2153, %v2157
      %v2160 = vshrl.u32 %v2048, 16
      %v2162 = vrot.slane %v2160, 4
      %v2163 = vshll.u32 %v2048, 16
      %v2165 = vrot.slane %v2163, 5
      %v2166 = vor.u32 %v2162, %v2165
      %v2167 = vrot.slane %v2166, 4
      %v2169 = vshll.u32 %v2049, 16
      %v2171 = vrot.slane %v2169, 5
      %v2172 = vsel %vm238, %v2167, %v2171
      %v2173 = vshrl.u32 %v2049, 16
      %v2175 = vrot.slane %v2173, 4
      %v2176 = vor.u32 %v2175, %v2171
      %v2177 = vrot.slane %v2176, 4
      %v2179 = vshll.u32 %v2050, 16
      %v2181 = vrot.slane %v2179, 5
      %v2182 = vsel %vm238, %v2177, %v2181
      %v2184 = vshrl.u32 %v2051, 16
      %v2186 = vrot.slane %v2184, 4
      %v2187 = vshll.u32 %v2051, 16
      %v2189 = vrot.slane %v2187, 5
      %v2190 = vor.u32 %v2186, %v2189
      %v2191 = vrot.slane %v2190, 4
      %v2193 = vshll.u32 %v2052, 16
      %v2195 = vrot.slane %v2193, 5
      %v2196 = vsel %vm238, %v2191, %v2195
      %v2197 = vshrl.u32 %v2052, 16
      %v2199 = vrot.slane %v2197, 4
      %v2200 = vor.u32 %v2199, %v2195
      %v2201 = vrot.slane %v2200, 4
      %v2203 = vshll.u32 %v2053, 16
      %v2205 = vrot.slane %v2203, 5
      %v2206 = vsel %vm238, %v2201, %v2205
      %v2208 = vshrl.u32 %v2054, 16
      %v2210 = vrot.slane %v2208, 4
      %v2211 = vshll.u32 %v2054, 16
      %v2213 = vrot.slane %v2211, 5
      %v2214 = vor.u32 %v2210, %v2213
      %v2215 = vrot.slane %v2214, 4
      %v2217 = vshll.u32 %v2055, 16
      %v2219 = vrot.slane %v2217, 5
      %v2220 = vsel %vm238, %v2215, %v2219
      %v2221 = vshrl.u32 %v2055, 16
      %v2223 = vrot.slane %v2221, 4
      %v2224 = vor.u32 %v2223, %v2219
      %v2225 = vrot.slane %v2224, 4
      %v2227 = vshll.u32 %v2056, 16
      %v2229 = vrot.slane %v2227, 5
      %v2230 = vsel %vm238, %v2225, %v2229
      %v2232 = vshrl.u32 %v2057, 16
      %v2234 = vrot.slane %v2232, 4
      %v2235 = vshll.u32 %v2057, 16
      %v2237 = vrot.slane %v2235, 5
      %v2238 = vor.u32 %v2234, %v2237
      %v2239 = vrot.slane %v2238, 4
      %v2241 = vshll.u32 %v2058, 16
      %v2243 = vrot.slane %v2241, 5
      %v2244 = vsel %vm238, %v2239, %v2243
      %v2245 = vshrl.u32 %v2058, 16
      %v2247 = vrot.slane %v2245, 4
      %v2248 = vor.u32 %v2247, %v2243
      %v2249 = vrot.slane %v2248, 4
      %v2251 = vshll.u32 %v2059, 16
      %v2253 = vrot.slane %v2251, 5
      %v2254 = vsel %vm238, %v2249, %v2253
      %v2256 = vshrl.u32 %v2060, 16
      %v2258 = vrot.slane %v2256, 4
      %v2259 = vshll.u32 %v2060, 16
      %v2261 = vrot.slane %v2259, 5
      %v2262 = vor.u32 %v2258, %v2261
      %v2263 = vrot.slane %v2262, 4
      %v2265 = vshll.u32 %v2061, 16
      %v2267 = vrot.slane %v2265, 5
      %v2268 = vsel %vm238, %v2263, %v2267
      %v2269 = vshrl.u32 %v2061, 16
      %v2271 = vrot.slane %v2269, 4
      %v2272 = vor.u32 %v2271, %v2267
      %v2273 = vrot.slane %v2272, 4
      %v2275 = vshll.u32 %v2062, 16
      %v2277 = vrot.slane %v2275, 5
      %v2278 = vsel %vm238, %v2273, %v2277
      %v2280 = vshrl.u32 %v2063, 16
      %v2282 = vrot.slane %v2280, 4
      %v2283 = vshll.u32 %v2063, 16
      %v2285 = vrot.slane %v2283, 5
      %v2286 = vor.u32 %v2282, %v2285
      %v2287 = vrot.slane %v2286, 4
      %v2289 = vshll.u32 %v2064, 16
      %v2291 = vrot.slane %v2289, 5
      %v2292 = vsel %vm238, %v2287, %v2291
      %v2293 = vshrl.u32 %v2064, 16
      %v2295 = vrot.slane %v2293, 4
      %v2296 = vor.u32 %v2295, %v2291
      %v2297 = vrot.slane %v2296, 4
      %v2299 = vshll.u32 %v2065, 16
      %v2301 = vrot.slane %v2299, 5
      %v2302 = vsel %vm238, %v2297, %v2301
      %v2304 = vshrl.u32 %v2066, 16
      %v2306 = vrot.slane %v2304, 4
      %v2307 = vshll.u32 %v2066, 16
      %v2309 = vrot.slane %v2307, 5
      %v2310 = vor.u32 %v2306, %v2309
      %v2311 = vrot.slane %v2310, 4
      %v2313 = vshll.u32 %v2067, 16
      %v2315 = vrot.slane %v2313, 5
      %v2316 = vsel %vm238, %v2311, %v2315
      %v2317 = vshrl.u32 %v2067, 16
      %v2319 = vrot.slane %v2317, 4
      %v2320 = vor.u32 %v2319, %v2315
      %v2321 = vrot.slane %v2320, 4
      %v2323 = vshll.u32 %v2068, 16
      %v2325 = vrot.slane %v2323, 5
      %v2326 = vsel %vm238, %v2321, %v2325
      %v2328 = vshrl.u32 %v2069, 16
      %v2330 = vrot.slane %v2328, 4
      %v2331 = vshll.u32 %v2069, 16
      %v2333 = vrot.slane %v2331, 5
      %v2334 = vor.u32 %v2330, %v2333
      %v2335 = vrot.slane %v2334, 4
      %v2337 = vshll.u32 %v2070, 16
      %v2339 = vrot.slane %v2337, 5
      %v2340 = vsel %vm238, %v2335, %v2339
      %v2341 = vshrl.u32 %v2070, 16
      %v2343 = vrot.slane %v2341, 4
      %v2344 = vor.u32 %v2343, %v2339
      %v2345 = vrot.slane %v2344, 4
      %v2347 = vshll.u32 %v2071, 16
      %v2349 = vrot.slane %v2347, 5
      %v2350 = vsel %vm238, %v2345, %v2349
      %v2352 = vshrl.u32 %v2072, 16
      %v2354 = vrot.slane %v2352, 4
      %v2355 = vshll.u32 %v2072, 16
      %v2357 = vrot.slane %v2355, 5
      %v2358 = vor.u32 %v2354, %v2357
      %v2359 = vrot.slane %v2358, 4
      %v2361 = vshll.u32 %v2073, 16
      %v2363 = vrot.slane %v2361, 5
      %v2364 = vsel %vm238, %v2359, %v2363
      %v2365 = vshrl.u32 %v2073, 16
      %v2367 = vrot.slane %v2365, 4
      %v2368 = vor.u32 %v2367, %v2363
      %v2369 = vrot.slane %v2368, 4
      %v2371 = vshll.u32 %v2074, 16
      %v2373 = vrot.slane %v2371, 5
      %v2374 = vsel %vm238, %v2369, %v2373
      %v2376 = vshrl.u32 %v2075, 16
      %v2378 = vrot.slane %v2376, 4
      %v2379 = vshll.u32 %v2075, 16
      %v2381 = vrot.slane %v2379, 5
      %v2382 = vor.u32 %v2378, %v2381
      %v2383 = vrot.slane %v2382, 4
      %v2385 = vshll.u32 %v2076, 16
      %v2387 = vrot.slane %v2385, 5
      %v2388 = vsel %vm238, %v2383, %v2387
      %v2389 = vshrl.u32 %v2076, 16
      %v2391 = vrot.slane %v2389, 4
      %v2392 = vor.u32 %v2391, %v2387
      %v2393 = vrot.slane %v2392, 4
      %v2395 = vshll.u32 %v2077, 16
      %v2397 = vrot.slane %v2395, 5
      %v2398 = vsel %vm238, %v2393, %v2397
      %v2400 = vshrl.u32 %v2078, 16
      %v2402 = vrot.slane %v2400, 4
      %v2403 = vshll.u32 %v2078, 16
      %v2405 = vrot.slane %v2403, 5
      %v2406 = vor.u32 %v2402, %v2405
      %v2407 = vrot.slane %v2406, 4
      %v2409 = vshll.u32 %v2079, 16
      %v2411 = vrot.slane %v2409, 5
      %v2412 = vsel %vm238, %v2407, %v2411
      %v2413 = vshrl.u32 %v2079, 16
      %v2415 = vrot.slane %v2413, 4
      %v2416 = vor.u32 %v2415, %v2411
      %v2417 = vrot.slane %v2416, 4
      %v2419 = vshll.u32 %v2080, 16
      %v2421 = vrot.slane %v2419, 5
      %v2422 = vsel %vm238, %v2417, %v2421
      %v2424 = vshrl.u32 %v2081, 16
      %v2426 = vrot.slane %v2424, 4
      %v2427 = vshll.u32 %v2081, 16
      %v2429 = vrot.slane %v2427, 5
      %v2430 = vor.u32 %v2426, %v2429
      %v2431 = vrot.slane %v2430, 4
      %v2433 = vshll.u32 %v2082, 16
      %v2435 = vrot.slane %v2433, 5
      %v2436 = vsel %vm238, %v2431, %v2435
      %v2437 = vshrl.u32 %v2082, 16
      %v2439 = vrot.slane %v2437, 4
      %v2440 = vor.u32 %v2439, %v2435
      %v2441 = vrot.slane %v2440, 4
      %v2443 = vshll.u32 %v2083, 16
      %v2445 = vrot.slane %v2443, 5
      %v2446 = vsel %vm238, %v2441, %v2445
      %v2448 = vshrl.u32 %v2084, 16
      %v2450 = vrot.slane %v2448, 4
      %v2451 = vshll.u32 %v2084, 16
      %v2453 = vrot.slane %v2451, 5
      %v2454 = vor.u32 %v2450, %v2453
      %v2455 = vrot.slane %v2454, 4
      %v2457 = vshll.u32 %v2085, 16
      %v2459 = vrot.slane %v2457, 5
      %v2460 = vsel %vm238, %v2455, %v2459
      %v2461 = vshrl.u32 %v2085, 16
      %v2463 = vrot.slane %v2461, 4
      %v2464 = vor.u32 %v2463, %v2459
      %v2465 = vrot.slane %v2464, 4
      %v2467 = vshll.u32 %v2086, 16
      %v2469 = vrot.slane %v2467, 5
      %v2470 = vsel %vm238, %v2465, %v2469
      %s2471 = scalar_lea.vmem %s1, 64
      %v2472 = vld [vmem:[%s2471] sm:$0xf]
      %v2473 = vld [vmem:[%s2471 + $0x4] sm:$0xf]
      %v2474 = vld [vmem:[%s2471 + $0x8] sm:$0xf]
      %v2475 = vld [vmem:[%s2471 + $0xc] sm:$0xf]
      %v2476 = vunpack.c.l.b16 %v2100
      %v2477 = vunpack.c.l.b16 %v2110
      %v2478 = vunpack.c.l.b16 %v2124
      %v2479 = vunpack.c.l.b16 %v2134
      %v2480 = vunpack.c.l.b16 %v2148
      %v2481 = vunpack.c.l.b16 %v2158
      %v2482 = vunpack.c.l.b16 %v2172
      %v2483 = vunpack.c.l.b16 %v2182
      %v2484 = vunpack.c.l.b16 %v2196
      %v2485 = vunpack.c.l.b16 %v2206
      %v2486 = vunpack.c.l.b16 %v2220
      %v2487 = vunpack.c.l.b16 %v2230
      %v2488 = vunpack.c.l.b16 %v2244
      %v2489 = vunpack.c.l.b16 %v2254
      %v2490 = vunpack.c.l.b16 %v2268
      %v2491 = vunpack.c.l.b16 %v2278
      %v2492 = vunpack.c.l.b16 %v2292
      %v2493 = vunpack.c.l.b16 %v2302
      %v2494 = vunpack.c.l.b16 %v2316
      %v2495 = vunpack.c.l.b16 %v2326
      %v2496 = vunpack.c.l.b16 %v2340
      %v2497 = vunpack.c.l.b16 %v2350
      %v2498 = vunpack.c.l.b16 %v2364
      %v2499 = vunpack.c.l.b16 %v2374
      %v2500 = vunpack.c.l.b16 %v2388
      %v2501 = vunpack.c.l.b16 %v2398
      %v2502 = vunpack.c.l.b16 %v2412
      %v2503 = vunpack.c.l.b16 %v2422
      %v2504 = vunpack.c.l.b16 %v2436
      %v2505 = vunpack.c.l.b16 %v2446
      %v2506 = vunpack.c.l.b16 %v2460
      %v2507 = vunpack.c.l.b16 %v2470
      %v2508 = vpack.c.b16 %v2477, %v2476
      %v2509 = vpack.c.b16 %v2479, %v2478
      %v2510 = vpack.c.b16 %v2481, %v2480
      %v2511 = vpack.c.b16 %v2483, %v2482
      %v2512 = vpack.c.b16 %v2485, %v2484
      %v2513 = vpack.c.b16 %v2487, %v2486
      %v2514 = vpack.c.b16 %v2489, %v2488
      %v2515 = vpack.c.b16 %v2491, %v2490
      %v2516 = vpack.c.b16 %v2493, %v2492
      %v2517 = vpack.c.b16 %v2495, %v2494
      %v2518 = vpack.c.b16 %v2497, %v2496
      %v2519 = vpack.c.b16 %v2499, %v2498
      %v2520 = vpack.c.b16 %v2501, %v2500
      %v2521 = vpack.c.b16 %v2503, %v2502
      %v2522 = vpack.c.b16 %v2505, %v2504
      %v2523 = vpack.c.b16 %v2507, %v2506
      %v2528 = vunpack.c.l.b16 %v2472
      %v2529 = vunpack.c.l.b16 %v2473
      %v2530 = vunpack.c.l.b16 %v2474
      %v2531 = vunpack.c.l.b16 %v2475
      %v2532 = vpack.c.b16 %v2529, %v2528
      %v2533 = vpack.c.b16 %v2531, %v2530
      %v2537 = vsel %vm688, %v2508, 0
      %v2540 = vsel %vm688, %v2509, 0
      %v2543 = vsel %vm688, %v2510, 0
      %v2546 = vsel %vm688, %v2511, 0
      %v2549 = vsel %vm688, %v2512, 0
      %v2552 = vsel %vm688, %v2513, 0
      %v2555 = vsel %vm688, %v2514, 0
      %v2558 = vsel %vm688, %v2515, 0
      %v2561 = vsel %vm688, %v2516, 0
      %v2564 = vsel %vm688, %v2517, 0
      %v2567 = vsel %vm688, %v2518, 0
      %v2570 = vsel %vm688, %v2519, 0
      %v2573 = vsel %vm688, %v2520, 0
      %v2576 = vsel %vm688, %v2521, 0
      %v2579 = vsel %vm688, %v2522, 0
      %v2582 = vsel %vm688, %v2523, 0
      %2584 = vmatprep.subr.bf16.mxu0 0
      %2585 = vmatpush1.bf16.msra.mxu0 %v2532
      %2586 = vmatprep.subr.bf16.mxu0 0
      %2587 = vmatpush1.bf16.msra.mxu0 %v2533
      %2588 = vmatprep.subr.bf16.mxu0 0
      %2589 = vmatpush1.bf16.msra.mxu0 0
      %2590 = vmatprep.subr.bf16.mxu0 0
      %2591 = vmatpush1.bf16.msra.mxu0 0
      %2592 = vmatprep.subr.bf16.mxu0 0
      %2593 = vmatpush1.bf16.msra.mxu0 0
      %2594 = vmatprep.subr.bf16.mxu0 0
      %2595 = vmatpush1.bf16.msra.mxu0 0
      %2596 = vmatprep.subr.bf16.mxu0 0
      %2597 = vmatpush1.bf16.msra.mxu0 0
      %2598 = vmatprep.subr.bf16.mxu0 0
      %2599 = vmatpush1.bf16.msra.mxu0 0
      %2600 = vmatprep.subr.bf16.mxu0 0
      %2601 = vmatpush1.bf16.msra.mxu0 0
      %2602 = vmatprep.subr.bf16.mxu0 0
      %2603 = vmatpush1.bf16.msra.mxu0 0
      %2604 = vmatprep.subr.bf16.mxu0 0
      %2605 = vmatpush1.bf16.msra.mxu0 0
      %2606 = vmatprep.subr.bf16.mxu0 0
      %2607 = vmatpush1.bf16.msra.mxu0 0
      %2608 = vmatprep.subr.bf16.mxu0 0
      %2609 = vmatpush1.bf16.msra.mxu0 0
      %2610 = vmatprep.subr.bf16.mxu0 0
      %2611 = vmatpush1.bf16.msra.mxu0 0
      %2612 = vmatprep.subr.bf16.mxu0 0
      %2613 = vmatpush1.bf16.msra.mxu0 0
      %2614 = vmatprep.subr.bf16.mxu0 0
      %2615 = vmatpush1.bf16.msra.mxu0 0
      %2616 = vmatprep.mubr.bf16.mxu0 0
      %2617 = vmatmul.mubr.bf16.gmra.mrb[0].mxu0 %v2537
      %v2618 = vpop.f32.mrb[0].mxu0
      %v2619 = vadd.f32 0.0, %v2618
      %v2620 = vpop.f32.mrb[0].mxu0
      %v2621 = vpop.f32.mrb[0].mxu0
      %v2622 = vadd.f32 0.0, %v2621
      %v2623 = vpop.f32.mrb[0].mxu0
      %2624 = vmatprep.mubr.bf16.mxu0 0
      %2625 = vmatmul.mubr.bf16.gmra.mrb[0].mxu0 %v2540
      %v2626 = vpop.f32.mrb[0].mxu0
      %v2627 = vadd.f32 0.0, %v2626
      %v2628 = vpop.f32.mrb[0].mxu0
      %v2629 = vpop.f32.mrb[0].mxu0
      %v2630 = vadd.f32 0.0, %v2629
      %v2631 = vpop.f32.mrb[0].mxu0
      %2632 = vmatprep.mubr.bf16.mxu0 0
      %2633 = vmatmul.mubr.bf16.gmra.mrb[0].mxu0 %v2543
      %v2634 = vpop.f32.mrb[0].mxu0
      %v2635 = vadd.f32 0.0, %v2634
      %v2636 = vpop.f32.mrb[0].mxu0
      %v2637 = vpop.f32.mrb[0].mxu0
      %v2638 = vadd.f32 0.0, %v2637
      %v2639 = vpop.f32.mrb[0].mxu0
      %2640 = vmatprep.mubr.bf16.mxu0 0
      %2641 = vmatmul.mubr.bf16.gmra.mrb[0].mxu0 %v2546
      %v2642 = vpop.f32.mrb[0].mxu0
      %v2643 = vadd.f32 0.0, %v2642
      %v2644 = vpop.f32.mrb[0].mxu0
      %v2645 = vpop.f32.mrb[0].mxu0
      %v2646 = vadd.f32 0.0, %v2645
      %v2647 = vpop.f32.mrb[0].mxu0
      %2648 = vmatprep.mubr.bf16.mxu0 0
      %2649 = vmatmul.mubr.bf16.gmra.mrb[0].mxu0 %v2549
      %v2650 = vpop.f32.mrb[0].mxu0
      %v2651 = vadd.f32 0.0, %v2650
      %v2652 = vpop.f32.mrb[0].mxu0
      %v2653 = vpop.f32.mrb[0].mxu0
      %v2654 = vadd.f32 0.0, %v2653
      %v2655 = vpop.f32.mrb[0].mxu0
      %2656 = vmatprep.mubr.bf16.mxu0 0
      %2657 = vmatmul.mubr.bf16.gmra.mrb[0].mxu0 %v2552
      %v2658 = vpop.f32.mrb[0].mxu0
      %v2659 = vadd.f32 0.0, %v2658
      %v2660 = vpop.f32.mrb[0].mxu0
      %v2661 = vpop.f32.mrb[0].mxu0
      %v2662 = vadd.f32 0.0, %v2661
      %v2663 = vpop.f32.mrb[0].mxu0
      %2664 = vmatprep.mubr.bf16.mxu0 0
      %2665 = vmatmul.mubr.bf16.gmra.mrb[0].mxu0 %v2555
      %v2666 = vpop.f32.mrb[0].mxu0
      %v2667 = vadd.f32 0.0, %v2666
      %v2668 = vpop.f32.mrb[0].mxu0
      %v2669 = vpop.f32.mrb[0].mxu0
      %v2670 = vadd.f32 0.0, %v2669
      %v2671 = vpop.f32.mrb[0].mxu0
      %2672 = vmatprep.mubr.bf16.mxu0 0
      %2673 = vmatmul.mubr.bf16.gmra.mrb[0].mxu0 %v2558
      %v2674 = vpop.f32.mrb[0].mxu0
      %v2675 = vadd.f32 0.0, %v2674
      %v2676 = vpop.f32.mrb[0].mxu0
      %v2677 = vpop.f32.mrb[0].mxu0
      %v2678 = vadd.f32 0.0, %v2677
      %v2679 = vpop.f32.mrb[0].mxu0
      %2680 = vmatprep.mubr.bf16.mxu0 0
      %2681 = vmatmul.mubr.bf16.gmra.mrb[0].mxu0 %v2561
      %v2682 = vpop.f32.mrb[0].mxu0
      %v2683 = vadd.f32 0.0, %v2682
      %v2684 = vpop.f32.mrb[0].mxu0
      %v2685 = vpop.f32.mrb[0].mxu0
      %v2686 = vadd.f32 0.0, %v2685
      %v2687 = vpop.f32.mrb[0].mxu0
      %2688 = vmatprep.mubr.bf16.mxu0 0
      %2689 = vmatmul.mubr.bf16.gmra.mrb[0].mxu0 %v2564
      %v2690 = vpop.f32.mrb[0].mxu0
      %v2691 = vadd.f32 0.0, %v2690
      %v2692 = vpop.f32.mrb[0].mxu0
      %v2693 = vpop.f32.mrb[0].mxu0
      %v2694 = vadd.f32 0.0, %v2693
      %v2695 = vpop.f32.mrb[0].mxu0
      %2696 = vmatprep.mubr.bf16.mxu0 0
      %2697 = vmatmul.mubr.bf16.gmra.mrb[0].mxu0 %v2567
      %v2698 = vpop.f32.mrb[0].mxu0
      %v2699 = vadd.f32 0.0, %v2698
      %v2700 = vpop.f32.mrb[0].mxu0
      %v2701 = vpop.f32.mrb[0].mxu0
      %v2702 = vadd.f32 0.0, %v2701
      %v2703 = vpop.f32.mrb[0].mxu0
      %2704 = vmatprep.mubr.bf16.mxu0 0
      %2705 = vmatmul.mubr.bf16.gmra.mrb[0].mxu0 %v2570
      %v2706 = vpop.f32.mrb[0].mxu0
      %v2707 = vadd.f32 0.0, %v2706
      %v2708 = vpop.f32.mrb[0].mxu0
      %v2709 = vpop.f32.mrb[0].mxu0
      %v2710 = vadd.f32 0.0, %v2709
      %v2711 = vpop.f32.mrb[0].mxu0
      %2712 = vmatprep.mubr.bf16.mxu0 0
      %2713 = vmatmul.mubr.bf16.gmra.mrb[0].mxu0 %v2573
      %v2714 = vpop.f32.mrb[0].mxu0
      %v2715 = vadd.f32 0.0, %v2714
      %v2716 = vpop.f32.mrb[0].mxu0
      %v2717 = vpop.f32.mrb[0].mxu0
      %v2718 = vadd.f32 0.0, %v2717
      %v2719 = vpop.f32.mrb[0].mxu0
      %2720 = vmatprep.mubr.bf16.mxu0 0
      %2721 = vmatmul.mubr.bf16.gmra.mrb[0].mxu0 %v2576
      %v2722 = vpop.f32.mrb[0].mxu0
      %v2723 = vadd.f32 0.0, %v2722
      %v2724 = vpop.f32.mrb[0].mxu0
      %v2725 = vpop.f32.mrb[0].mxu0
      %v2726 = vadd.f32 0.0, %v2725
      %v2727 = vpop.f32.mrb[0].mxu0
      %2728 = vmatprep.mubr.bf16.mxu0 0
      %2729 = vmatmul.mubr.bf16.gmra.mrb[0].mxu0 %v2579
      %v2730 = vpop.f32.mrb[0].mxu0
      %v2731 = vadd.f32 0.0, %v2730
      %v2732 = vpop.f32.mrb[0].mxu0
      %v2733 = vpop.f32.mrb[0].mxu0
      %v2734 = vadd.f32 0.0, %v2733
      %v2735 = vpop.f32.mrb[0].mxu0
      %2736 = vmatprep.mubr.bf16.mxu0 0
      %2737 = vmatmul.mubr.bf16.gmra.mrb[0].mxu0 %v2582
      %v2738 = vpop.f32.mrb[0].mxu0
      %v2739 = vadd.f32 0.0, %v2738
      %v2740 = vpop.f32.mrb[0].mxu0
      %v2741 = vpop.f32.mrb[0].mxu0
      %v2742 = vadd.f32 0.0, %v2741
      %v2743 = vpop.f32.mrb[0].mxu0
      %2744 = vdwg.mxu0
      %v2745 = vadd.f32 %v2007, %v2619
      %v2746 = vadd.f32 %v2008, %v2622
      %v2747 = vadd.f32 %v2009, %v2627
      %v2748 = vadd.f32 %v2010, %v2630
      %v2749 = vadd.f32 %v2011, %v2635
      %v2750 = vadd.f32 %v2012, %v2638
      %v2751 = vadd.f32 %v2013, %v2643
      %v2752 = vadd.f32 %v2014, %v2646
      %v2753 = vadd.f32 %v2015, %v2651
      %v2754 = vadd.f32 %v2016, %v2654
      %v2755 = vadd.f32 %v2017, %v2659
      %v2756 = vadd.f32 %v2018, %v2662
      %v2757 = vadd.f32 %v2019, %v2667
      %v2758 = vadd.f32 %v2020, %v2670
      %v2759 = vadd.f32 %v2021, %v2675
      %v2760 = vadd.f32 %v2022, %v2678
      %v2761 = vadd.f32 %v2023, %v2683
      %v2762 = vadd.f32 %v2024, %v2686
      %v2763 = vadd.f32 %v2025, %v2691
      %v2764 = vadd.f32 %v2026, %v2694
      %v2765 = vadd.f32 %v2027, %v2699
      %v2766 = vadd.f32 %v2028, %v2702
      %v2767 = vadd.f32 %v2029, %v2707
      %v2768 = vadd.f32 %v2030, %v2710
      %v2769 = vadd.f32 %v2031, %v2715
      %v2770 = vadd.f32 %v2032, %v2718
      %v2771 = vadd.f32 %v2033, %v2723
      %v2772 = vadd.f32 %v2034, %v2726
      %v2773 = vadd.f32 %v2035, %v2731
      %v2774 = vadd.f32 %v2036, %v2734
      %v2775 = vadd.f32 %v2037, %v2739
      %v2776 = vadd.f32 %v2038, %v2742
      %v2777 = vld [vmem:[%s1668] sm:$0xe]
      %v2778 = vld [vmem:[%s1668 + $0xc] sm:$0xe]
      %v2779 = vld [vmem:[%s1668 + $0x18] sm:$0xe]
      %v2780 = vld [vmem:[%s1668 + $0x24] sm:$0xe]
      %v2781 = vld [vmem:[%s1668 + $0x30] sm:$0xe]
      %v2782 = vld [vmem:[%s1668 + $0x3c] sm:$0xe]
      %v2783 = vld [vmem:[%s1668 + $0x48] sm:$0xe]
      %v2784 = vld [vmem:[%s1668 + $0x54] sm:$0xe]
      %v2785 = vld [vmem:[%s1668 + $0x60] sm:$0xe]
      %v2786 = vld [vmem:[%s1668 + $0x6c] sm:$0xe]
      %v2787 = vld [vmem:[%s1668 + $0x78] sm:$0xe]
      %v2788 = vld [vmem:[%s1668 + $0x84] sm:$0xe]
      %v2789 = vld [vmem:[%s1668 + $0x90] sm:$0xe]
      %v2790 = vld [vmem:[%s1668 + $0x9c] sm:$0xe]
      %v2791 = vld [vmem:[%s1668 + $0xa8] sm:$0xe]
      %v2792 = vld [vmem:[%s1668 + $0xb4] sm:$0xe]
      %v2841 = vrot.slane %v2777, 5
      %v2842 = vrot.slane %v2841, 4
      %v2843 = vrot.slane %v2040, 5
      %v2844 = vsel %vm1249, %v2842, %v2843
      %v2845 = vrot.slane %v2843, 4
      %v2846 = vrot.slane %v2041, 5
      %v2847 = vsel %vm1249, %v2845, %v2846
      %v2848 = vrot.slane %v2778, 5
      %v2849 = vrot.slane %v2848, 4
      %v2850 = vrot.slane %v2043, 5
      %v2851 = vsel %vm1249, %v2849, %v2850
      %v2852 = vrot.slane %v2850, 4
      %v2853 = vrot.slane %v2044, 5
      %v2854 = vsel %vm1249, %v2852, %v2853
      %v2855 = vrot.slane %v2779, 5
      %v2856 = vrot.slane %v2855, 4
      %v2857 = vrot.slane %v2046, 5
      %v2858 = vsel %vm1249, %v2856, %v2857
      %v2859 = vrot.slane %v2857, 4
      %v2860 = vrot.slane %v2047, 5
      %v2861 = vsel %vm1249, %v2859, %v2860
      %v2862 = vrot.slane %v2780, 5
      %v2863 = vrot.slane %v2862, 4
      %v2864 = vrot.slane %v2049, 5
      %v2865 = vsel %vm1249, %v2863, %v2864
      %v2866 = vrot.slane %v2864, 4
      %v2867 = vrot.slane %v2050, 5
      %v2868 = vsel %vm1249, %v2866, %v2867
      %v2869 = vrot.slane %v2781, 5
      %v2870 = vrot.slane %v2869, 4
      %v2871 = vrot.slane %v2052, 5
      %v2872 = vsel %vm1249, %v2870, %v2871
      %v2873 = vrot.slane %v2871, 4
      %v2874 = vrot.slane %v2053, 5
      %v2875 = vsel %vm1249, %v2873, %v2874
      %v2876 = vrot.slane %v2782, 5
      %v2877 = vrot.slane %v2876, 4
      %v2878 = vrot.slane %v2055, 5
      %v2879 = vsel %vm1249, %v2877, %v2878
      %v2880 = vrot.slane %v2878, 4
      %v2881 = vrot.slane %v2056, 5
      %v2882 = vsel %vm1249, %v2880, %v2881
      %v2883 = vrot.slane %v2783, 5
      %v2884 = vrot.slane %v2883, 4
      %v2885 = vrot.slane %v2058, 5
      %v2886 = vsel %vm1249, %v2884, %v2885
      %v2887 = vrot.slane %v2885, 4
      %v2888 = vrot.slane %v2059, 5
      %v2889 = vsel %vm1249, %v2887, %v2888
      %v2890 = vrot.slane %v2784, 5
      %v2891 = vrot.slane %v2890, 4
      %v2892 = vrot.slane %v2061, 5
      %v2893 = vsel %vm1249, %v2891, %v2892
      %v2894 = vrot.slane %v2892, 4
      %v2895 = vrot.slane %v2062, 5
      %v2896 = vsel %vm1249, %v2894, %v2895
      %v2897 = vrot.slane %v2785, 5
      %v2898 = vrot.slane %v2897, 4
      %v2899 = vrot.slane %v2064, 5
      %v2900 = vsel %vm1249, %v2898, %v2899
      %v2901 = vrot.slane %v2899, 4
      %v2902 = vrot.slane %v2065, 5
      %v2903 = vsel %vm1249, %v2901, %v2902
      %v2904 = vrot.slane %v2786, 5
      %v2905 = vrot.slane %v2904, 4
      %v2906 = vrot.slane %v2067, 5
      %v2907 = vsel %vm1249, %v2905, %v2906
      %v2908 = vrot.slane %v2906, 4
      %v2909 = vrot.slane %v2068, 5
      %v2910 = vsel %vm1249, %v2908, %v2909
      %v2911 = vrot.slane %v2787, 5
      %v2912 = vrot.slane %v2911, 4
      %v2913 = vrot.slane %v2070, 5
      %v2914 = vsel %vm1249, %v2912, %v2913
      %v2915 = vrot.slane %v2913, 4
      %v2916 = vrot.slane %v2071, 5
      %v2917 = vsel %vm1249, %v2915, %v2916
      %v2918 = vrot.slane %v2788, 5
      %v2919 = vrot.slane %v2918, 4
      %v2920 = vrot.slane %v2073, 5
      %v2921 = vsel %vm1249, %v2919, %v2920
      %v2922 = vrot.slane %v2920, 4
      %v2923 = vrot.slane %v2074, 5
      %v2924 = vsel %vm1249, %v2922, %v2923
      %v2925 = vrot.slane %v2789, 5
      %v2926 = vrot.slane %v2925, 4
      %v2927 = vrot.slane %v2076, 5
      %v2928 = vsel %vm1249, %v2926, %v2927
      %v2929 = vrot.slane %v2927, 4
      %v2930 = vrot.slane %v2077, 5
      %v2931 = vsel %vm1249, %v2929, %v2930
      %v2932 = vrot.slane %v2790, 5
      %v2933 = vrot.slane %v2932, 4
      %v2934 = vrot.slane %v2079, 5
      %v2935 = vsel %vm1249, %v2933, %v2934
      %v2936 = vrot.slane %v2934, 4
      %v2937 = vrot.slane %v2080, 5
      %v2938 = vsel %vm1249, %v2936, %v2937
      %v2939 = vrot.slane %v2791, 5
      %v2940 = vrot.slane %v2939, 4
      %v2941 = vrot.slane %v2082, 5
      %v2942 = vsel %vm1249, %v2940, %v2941
      %v2943 = vrot.slane %v2941, 4
      %v2944 = vrot.slane %v2083, 5
      %v2945 = vsel %vm1249, %v2943, %v2944
      %v2946 = vrot.slane %v2792, 5
      %v2947 = vrot.slane %v2946, 4
      %v2948 = vrot.slane %v2085, 5
      %v2949 = vsel %vm1249, %v2947, %v2948
      %v2950 = vrot.slane %v2948, 4
      %v2951 = vrot.slane %v2086, 5
      %v2952 = vsel %vm1249, %v2950, %v2951
      %s2953 = scalar_lea.vmem %s1, 80
      %v2954 = vld [vmem:[%s2953] sm:$0xf]
      %v2955 = vld [vmem:[%s2953 + $0x4] sm:$0xf]
      %v2956 = vld [vmem:[%s2953 + $0x8] sm:$0xf]
      %v2957 = vld [vmem:[%s2953 + $0xc] sm:$0xf]
      %v2958 = vunpack.c.l.b16 %v2844
      %v2959 = vunpack.c.l.b16 %v2847
      %v2960 = vunpack.c.l.b16 %v2851
      %v2961 = vunpack.c.l.b16 %v2854
      %v2962 = vunpack.c.l.b16 %v2858
      %v2963 = vunpack.c.l.b16 %v2861
      %v2964 = vunpack.c.l.b16 %v2865
      %v2965 = vunpack.c.l.b16 %v2868
      %v2966 = vunpack.c.l.b16 %v2872
      %v2967 = vunpack.c.l.b16 %v2875
      %v2968 = vunpack.c.l.b16 %v2879
      %v2969 = vunpack.c.l.b16 %v2882
      %v2970 = vunpack.c.l.b16 %v2886
      %v2971 = vunpack.c.l.b16 %v2889
      %v2972 = vunpack.c.l.b16 %v2893
      %v2973 = vunpack.c.l.b16 %v2896
      %v2974 = vunpack.c.l.b16 %v2900
      %v2975 = vunpack.c.l.b16 %v2903
      %v2976 = vunpack.c.l.b16 %v2907
      %v2977 = vunpack.c.l.b16 %v2910
      %v2978 = vunpack.c.l.b16 %v2914
      %v2979 = vunpack.c.l.b16 %v2917
      %v2980 = vunpack.c.l.b16 %v2921
      %v2981 = vunpack.c.l.b16 %v2924
      %v2982 = vunpack.c.l.b16 %v2928
      %v2983 = vunpack.c.l.b16 %v2931
      %v2984 = vunpack.c.l.b16 %v2935
      %v2985 = vunpack.c.l.b16 %v2938
      %v2986 = vunpack.c.l.b16 %v2942
      %v2987 = vunpack.c.l.b16 %v2945
      %v2988 = vunpack.c.l.b16 %v2949
      %v2989 = vunpack.c.l.b16 %v2952
      %v2990 = vpack.c.b16 %v2959, %v2958
      %v2991 = vpack.c.b16 %v2961, %v2960
      %v2992 = vpack.c.b16 %v2963, %v2962
      %v2993 = vpack.c.b16 %v2965, %v2964
      %v2994 = vpack.c.b16 %v2967, %v2966
      %v2995 = vpack.c.b16 %v2969, %v2968
      %v2996 = vpack.c.b16 %v2971, %v2970
      %v2997 = vpack.c.b16 %v2973, %v2972
      %v2998 = vpack.c.b16 %v2975, %v2974
      %v2999 = vpack.c.b16 %v2977, %v2976
      %v3000 = vpack.c.b16 %v2979, %v2978
      %v3001 = vpack.c.b16 %v2981, %v2980
      %v3002 = vpack.c.b16 %v2983, %v2982
      %v3003 = vpack.c.b16 %v2985, %v2984
      %v3004 = vpack.c.b16 %v2987, %v2986
      %v3005 = vpack.c.b16 %v2989, %v2988
      %v3010 = vunpack.c.l.b16 %v2954
      %v3011 = vunpack.c.l.b16 %v2955
      %v3012 = vunpack.c.l.b16 %v2956
      %v3013 = vunpack.c.l.b16 %v2957
      %v3014 = vpack.c.b16 %v3011, %v3010
      %v3015 = vpack.c.b16 %v3013, %v3012
      %v3019 = vsel %vm688, %v2990, 0
      %v3022 = vsel %vm688, %v2991, 0
      %v3025 = vsel %vm688, %v2992, 0
      %v3028 = vsel %vm688, %v2993, 0
      %v3031 = vsel %vm688, %v2994, 0
      %v3034 = vsel %vm688, %v2995, 0
      %v3037 = vsel %vm688, %v2996, 0
      %v3040 = vsel %vm688, %v2997, 0
      %v3043 = vsel %vm688, %v2998, 0
      %v3046 = vsel %vm688, %v2999, 0
      %v3049 = vsel %vm688, %v3000, 0
      %v3052 = vsel %vm688, %v3001, 0
      %v3055 = vsel %vm688, %v3002, 0
      %v3058 = vsel %vm688, %v3003, 0
      %v3061 = vsel %vm688, %v3004, 0
      %v3064 = vsel %vm688, %v3005, 0
      %3066 = vmatprep.subr.bf16.mxu0 0
      %3067 = vmatpush1.bf16.msra.mxu0 %v3014
      %3068 = vmatprep.subr.bf16.mxu0 0
      %3069 = vmatpush1.bf16.msra.mxu0 %v3015
      %3070 = vmatprep.subr.bf16.mxu0 0
      %3071 = vmatpush1.bf16.msra.mxu0 0
      %3072 = vmatprep.subr.bf16.mxu0 0
      %3073 = vmatpush1.bf16.msra.mxu0 0
      %3074 = vmatprep.subr.bf16.mxu0 0
      %3075 = vmatpush1.bf16.msra.mxu0 0
      %3076 = vmatprep.subr.bf16.mxu0 0
      %3077 = vmatpush1.bf16.msra.mxu0 0
      %3078 = vmatprep.subr.bf16.mxu0 0
      %3079 = vmatpush1.bf16.msra.mxu0 0
      %3080 = vmatprep.subr.bf16.mxu0 0
      %3081 = vmatpush1.bf16.msra.mxu0 0
      %3082 = vmatprep.subr.bf16.mxu0 0
      %3083 = vmatpush1.bf16.msra.mxu0 0
      %3084 = vmatprep.subr.bf16.mxu0 0
      %3085 = vmatpush1.bf16.msra.mxu0 0
      %3086 = vmatprep.subr.bf16.mxu0 0
      %3087 = vmatpush1.bf16.msra.mxu0 0
      %3088 = vmatprep.subr.bf16.mxu0 0
      %3089 = vmatpush1.bf16.msra.mxu0 0
      %3090 = vmatprep.subr.bf16.mxu0 0
      %3091 = vmatpush1.bf16.msra.mxu0 0
      %3092 = vmatprep.subr.bf16.mxu0 0
      %3093 = vmatpush1.bf16.msra.mxu0 0
      %3094 = vmatprep.subr.bf16.mxu0 0
      %3095 = vmatpush1.bf16.msra.mxu0 0
      %3096 = vmatprep.subr.bf16.mxu0 0
      %3097 = vmatpush1.bf16.msra.mxu0 0
      %3098 = vmatprep.mubr.bf16.mxu0 0
      %3099 = vmatmul.mubr.bf16.gmra.mrb[0].mxu0 %v3019
      %v3100 = vpop.f32.mrb[0].mxu0
      %v3101 = vadd.f32 0.0, %v3100
      %v3102 = vpop.f32.mrb[0].mxu0
      %v3103 = vpop.f32.mrb[0].mxu0
      %v3104 = vadd.f32 0.0, %v3103
      %v3105 = vpop.f32.mrb[0].mxu0
      %3106 = vmatprep.mubr.bf16.mxu0 0
      %3107 = vmatmul.mubr.bf16.gmra.mrb[0].mxu0 %v3022
      %v3108 = vpop.f32.mrb[0].mxu0
      %v3109 = vadd.f32 0.0, %v3108
      %v3110 = vpop.f32.mrb[0].mxu0
      %v3111 = vpop.f32.mrb[0].mxu0
      %v3112 = vadd.f32 0.0, %v3111
      %v3113 = vpop.f32.mrb[0].mxu0
      %3114 = vmatprep.mubr.bf16.mxu0 0
      %3115 = vmatmul.mubr.bf16.gmra.mrb[0].mxu0 %v3025
      %v3116 = vpop.f32.mrb[0].mxu0
      %v3117 = vadd.f32 0.0, %v3116
      %v3118 = vpop.f32.mrb[0].mxu0
      %v3119 = vpop.f32.mrb[0].mxu0
      %v3120 = vadd.f32 0.0, %v3119
      %v3121 = vpop.f32.mrb[0].mxu0
      %3122 = vmatprep.mubr.bf16.mxu0 0
      %3123 = vmatmul.mubr.bf16.gmra.mrb[0].mxu0 %v3028
      %v3124 = vpop.f32.mrb[0].mxu0
      %v3125 = vadd.f32 0.0, %v3124
      %v3126 = vpop.f32.mrb[0].mxu0
      %v3127 = vpop.f32.mrb[0].mxu0
      %v3128 = vadd.f32 0.0, %v3127
      %v3129 = vpop.f32.mrb[0].mxu0
      %3130 = vmatprep.mubr.bf16.mxu0 0
      %3131 = vmatmul.mubr.bf16.gmra.mrb[0].mxu0 %v3031
      %v3132 = vpop.f32.mrb[0].mxu0
      %v3133 = vadd.f32 0.0, %v3132
      %v3134 = vpop.f32.mrb[0].mxu0
      %v3135 = vpop.f32.mrb[0].mxu0
      %v3136 = vadd.f32 0.0, %v3135
      %v3137 = vpop.f32.mrb[0].mxu0
      %3138 = vmatprep.mubr.bf16.mxu0 0
      %3139 = vmatmul.mubr.bf16.gmra.mrb[0].mxu0 %v3034
      %v3140 = vpop.f32.mrb[0].mxu0
      %v3141 = vadd.f32 0.0, %v3140
      %v3142 = vpop.f32.mrb[0].mxu0
      %v3143 = vpop.f32.mrb[0].mxu0
      %v3144 = vadd.f32 0.0, %v3143
      %v3145 = vpop.f32.mrb[0].mxu0
      %3146 = vmatprep.mubr.bf16.mxu0 0
      %3147 = vmatmul.mubr.bf16.gmra.mrb[0].mxu0 %v3037
      %v3148 = vpop.f32.mrb[0].mxu0
      %v3149 = vadd.f32 0.0, %v3148
      %v3150 = vpop.f32.mrb[0].mxu0
      %v3151 = vpop.f32.mrb[0].mxu0
      %v3152 = vadd.f32 0.0, %v3151
      %v3153 = vpop.f32.mrb[0].mxu0
      %3154 = vmatprep.mubr.bf16.mxu0 0
      %3155 = vmatmul.mubr.bf16.gmra.mrb[0].mxu0 %v3040
      %v3156 = vpop.f32.mrb[0].mxu0
      %v3157 = vadd.f32 0.0, %v3156
      %v3158 = vpop.f32.mrb[0].mxu0
      %v3159 = vpop.f32.mrb[0].mxu0
      %v3160 = vadd.f32 0.0, %v3159
      %v3161 = vpop.f32.mrb[0].mxu0
      %3162 = vmatprep.mubr.bf16.mxu0 0
      %3163 = vmatmul.mubr.bf16.gmra.mrb[0].mxu0 %v3043
      %v3164 = vpop.f32.mrb[0].mxu0
      %v3165 = vadd.f32 0.0, %v3164
      %v3166 = vpop.f32.mrb[0].mxu0
      %v3167 = vpop.f32.mrb[0].mxu0
      %v3168 = vadd.f32 0.0, %v3167
      %v3169 = vpop.f32.mrb[0].mxu0
      %3170 = vmatprep.mubr.bf16.mxu0 0
      %3171 = vmatmul.mubr.bf16.gmra.mrb[0].mxu0 %v3046
      %v3172 = vpop.f32.mrb[0].mxu0
      %v3173 = vadd.f32 0.0, %v3172
      %v3174 = vpop.f32.mrb[0].mxu0
      %v3175 = vpop.f32.mrb[0].mxu0
      %v3176 = vadd.f32 0.0, %v3175
      %v3177 = vpop.f32.mrb[0].mxu0
      %3178 = vmatprep.mubr.bf16.mxu0 0
      %3179 = vmatmul.mubr.bf16.gmra.mrb[0].mxu0 %v3049
      %v3180 = vpop.f32.mrb[0].mxu0
      %v3181 = vadd.f32 0.0, %v3180
      %v3182 = vpop.f32.mrb[0].mxu0
      %v3183 = vpop.f32.mrb[0].mxu0
      %v3184 = vadd.f32 0.0, %v3183
      %v3185 = vpop.f32.mrb[0].mxu0
      %3186 = vmatprep.mubr.bf16.mxu0 0
      %3187 = vmatmul.mubr.bf16.gmra.mrb[0].mxu0 %v3052
      %v3188 = vpop.f32.mrb[0].mxu0
      %v3189 = vadd.f32 0.0, %v3188
      %v3190 = vpop.f32.mrb[0].mxu0
      %v3191 = vpop.f32.mrb[0].mxu0
      %v3192 = vadd.f32 0.0, %v3191
      %v3193 = vpop.f32.mrb[0].mxu0
      %3194 = vmatprep.mubr.bf16.mxu0 0
      %3195 = vmatmul.mubr.bf16.gmra.mrb[0].mxu0 %v3055
      %v3196 = vpop.f32.mrb[0].mxu0
      %v3197 = vadd.f32 0.0, %v3196
      %v3198 = vpop.f32.mrb[0].mxu0
      %v3199 = vpop.f32.mrb[0].mxu0
      %v3200 = vadd.f32 0.0, %v3199
      %v3201 = vpop.f32.mrb[0].mxu0
      %3202 = vmatprep.mubr.bf16.mxu0 0
      %3203 = vmatmul.mubr.bf16.gmra.mrb[0].mxu0 %v3058
      %v3204 = vpop.f32.mrb[0].mxu0
      %v3205 = vadd.f32 0.0, %v3204
      %v3206 = vpop.f32.mrb[0].mxu0
      %v3207 = vpop.f32.mrb[0].mxu0
      %v3208 = vadd.f32 0.0, %v3207
      %v3209 = vpop.f32.mrb[0].mxu0
      %3210 = vmatprep.mubr.bf16.mxu0 0
      %3211 = vmatmul.mubr.bf16.gmra.mrb[0].mxu0 %v3061
      %v3212 = vpop.f32.mrb[0].mxu0
      %v3213 = vadd.f32 0.0, %v3212
      %v3214 = vpop.f32.mrb[0].mxu0
      %v3215 = vpop.f32.mrb[0].mxu0
      %v3216 = vadd.f32 0.0, %v3215
      %v3217 = vpop.f32.mrb[0].mxu0
      %3218 = vmatprep.mubr.bf16.mxu0 0
      %3219 = vmatmul.mubr.bf16.gmra.mrb[0].mxu0 %v3064
      %v3220 = vpop.f32.mrb[0].mxu0
      %v3221 = vadd.f32 0.0, %v3220
      %v3222 = vpop.f32.mrb[0].mxu0
      %v3223 = vpop.f32.mrb[0].mxu0
      %v3224 = vadd.f32 0.0, %v3223
      %v3225 = vpop.f32.mrb[0].mxu0
      %3226 = vdwg.mxu0
      %v3227 = vadd.f32 %v2745, %v3101
      %v3228 = vadd.f32 %v2746, %v3104
      %v3229 = vadd.f32 %v2747, %v3109
      %v3230 = vadd.f32 %v2748, %v3112
      %v3231 = vadd.f32 %v2749, %v3117
      %v3232 = vadd.f32 %v2750, %v3120
      %v3233 = vadd.f32 %v2751, %v3125
      %v3234 = vadd.f32 %v2752, %v3128
      %v3235 = vadd.f32 %v2753, %v3133
      %v3236 = vadd.f32 %v2754, %v3136
      %v3237 = vadd.f32 %v2755, %v3141
      %v3238 = vadd.f32 %v2756, %v3144
      %v3239 = vadd.f32 %v2757, %v3149
      %v3240 = vadd.f32 %v2758, %v3152
      %v3241 = vadd.f32 %v2759, %v3157
      %v3242 = vadd.f32 %v2760, %v3160
      %v3243 = vadd.f32 %v2761, %v3165
      %v3244 = vadd.f32 %v2762, %v3168
      %v3245 = vadd.f32 %v2763, %v3173
      %v3246 = vadd.f32 %v2764, %v3176
      %v3247 = vadd.f32 %v2765, %v3181
      %v3248 = vadd.f32 %v2766, %v3184
      %v3249 = vadd.f32 %v2767, %v3189
      %v3250 = vadd.f32 %v2768, %v3192
      %v3251 = vadd.f32 %v2769, %v3197
      %v3252 = vadd.f32 %v2770, %v3200
      %v3253 = vadd.f32 %v2771, %v3205
      %v3254 = vadd.f32 %v2772, %v3208
      %v3255 = vadd.f32 %v2773, %v3213
      %v3256 = vadd.f32 %v2774, %v3216
      %v3257 = vadd.f32 %v2775, %v3221
      %v3258 = vadd.f32 %v2776, %v3224
      %s3259 = scalar_lea.vmem %s172, 24
      %v3260 = vld [vmem:[%s3259] sm:$0xf]
      %v3261 = vld [vmem:[%s3259 + $0x4] sm:$0xf]
      %v3262 = vld [vmem:[%s3259 + $0xc] sm:$0xf]
      %v3263 = vld [vmem:[%s3259 + $0x10] sm:$0xf]
      %v3264 = vld [vmem:[%s3259 + $0x18] sm:$0xf]
      %v3265 = vld [vmem:[%s3259 + $0x1c] sm:$0xf]
      %v3266 = vld [vmem:[%s3259 + $0x24] sm:$0xf]
      %v3267 = vld [vmem:[%s3259 + $0x28] sm:$0xf]
      %v3268 = vld [vmem:[%s3259 + $0x30] sm:$0xf]
      %v3269 = vld [vmem:[%s3259 + $0x34] sm:$0xf]
      %v3270 = vld [vmem:[%s3259 + $0x3c] sm:$0xf]
      %v3271 = vld [vmem:[%s3259 + $0x40] sm:$0xf]
      %v3272 = vld [vmem:[%s3259 + $0x48] sm:$0xf]
      %v3273 = vld [vmem:[%s3259 + $0x4c] sm:$0xf]
      %v3274 = vld [vmem:[%s3259 + $0x54] sm:$0xf]
      %v3275 = vld [vmem:[%s3259 + $0x58] sm:$0xf]
      %v3276 = vld [vmem:[%s3259 + $0x60] sm:$0xf]
      %v3277 = vld [vmem:[%s3259 + $0x64] sm:$0xf]
      %v3278 = vld [vmem:[%s3259 + $0x6c] sm:$0xf]
      %v3279 = vld [vmem:[%s3259 + $0x70] sm:$0xf]
      %v3280 = vld [vmem:[%s3259 + $0x78] sm:$0xf]
      %v3281 = vld [vmem:[%s3259 + $0x7c] sm:$0xf]
      %v3282 = vld [vmem:[%s3259 + $0x84] sm:$0xf]
      %v3283 = vld [vmem:[%s3259 + $0x88] sm:$0xf]
      %v3284 = vld [vmem:[%s3259 + $0x90] sm:$0xf]
      %v3285 = vld [vmem:[%s3259 + $0x94] sm:$0xf]
      %v3286 = vld [vmem:[%s3259 + $0x9c] sm:$0xf]
      %v3287 = vld [vmem:[%s3259 + $0xa0] sm:$0xf]
      %v3288 = vld [vmem:[%s3259 + $0xa8] sm:$0xf]
      %v3289 = vld [vmem:[%s3259 + $0xac] sm:$0xf]
      %v3290 = vld [vmem:[%s3259 + $0xb4] sm:$0xf]
      %v3291 = vld [vmem:[%s3259 + $0xb8] sm:$0xf]
      %s3292 = scalar_lea.vmem %s1, 96
      %v3293 = vld [vmem:[%s3292] sm:$0xf]
      %v3294 = vld [vmem:[%s3292 + $0x4] sm:$0xf]
      %v3295 = vld [vmem:[%s3292 + $0x8] sm:$0xf]
      %v3296 = vld [vmem:[%s3292 + $0xc] sm:$0xf]
      %v3329 = vunpack.c.l.b16 %v3260
      %v3330 = vunpack.c.l.b16 %v3261
      %v3331 = vunpack.c.l.b16 %v3262
      %v3332 = vunpack.c.l.b16 %v3263
      %v3333 = vunpack.c.l.b16 %v3264
      %v3334 = vunpack.c.l.b16 %v3265
      %v3335 = vunpack.c.l.b16 %v3266
      %v3336 = vunpack.c.l.b16 %v3267
      %v3337 = vunpack.c.l.b16 %v3268
      %v3338 = vunpack.c.l.b16 %v3269
      %v3339 = vunpack.c.l.b16 %v3270
      %v3340 = vunpack.c.l.b16 %v3271
      %v3341 = vunpack.c.l.b16 %v3272
      %v3342 = vunpack.c.l.b16 %v3273
      %v3343 = vunpack.c.l.b16 %v3274
      %v3344 = vunpack.c.l.b16 %v3275
      %v3345 = vunpack.c.l.b16 %v3276
      %v3346 = vunpack.c.l.b16 %v3277
      %v3347 = vunpack.c.l.b16 %v3278
      %v3348 = vunpack.c.l.b16 %v3279
      %v3349 = vunpack.c.l.b16 %v3280
      %v3350 = vunpack.c.l.b16 %v3281
      %v3351 = vunpack.c.l.b16 %v3282
      %v3352 = vunpack.c.l.b16 %v3283
      %v3353 = vunpack.c.l.b16 %v3284
      %v3354 = vunpack.c.l.b16 %v3285
      %v3355 = vunpack.c.l.b16 %v3286
      %v3356 = vunpack.c.l.b16 %v3287
      %v3357 = vunpack.c.l.b16 %v3288
      %v3358 = vunpack.c.l.b16 %v3289
      %v3359 = vunpack.c.l.b16 %v3290
      %v3360 = vunpack.c.l.b16 %v3291
      %v3361 = vpack.c.b16 %v3330, %v3329
      %v3362 = vpack.c.b16 %v3332, %v3331
      %v3363 = vpack.c.b16 %v3334, %v3333
      %v3364 = vpack.c.b16 %v3336, %v3335
      %v3365 = vpack.c.b16 %v3338, %v3337
      %v3366 = vpack.c.b16 %v3340, %v3339
      %v3367 = vpack.c.b16 %v3342, %v3341
      %v3368 = vpack.c.b16 %v3344, %v3343
      %v3369 = vpack.c.b16 %v3346, %v3345
      %v3370 = vpack.c.b16 %v3348, %v3347
      %v3371 = vpack.c.b16 %v3350, %v3349
      %v3372 = vpack.c.b16 %v3352, %v3351
      %v3373 = vpack.c.b16 %v3354, %v3353
      %v3374 = vpack.c.b16 %v3356, %v3355
      %v3375 = vpack.c.b16 %v3358, %v3357
      %v3376 = vpack.c.b16 %v3360, %v3359
      %v3381 = vunpack.c.l.b16 %v3293
      %v3382 = vunpack.c.l.b16 %v3294
      %v3383 = vunpack.c.l.b16 %v3295
      %v3384 = vunpack.c.l.b16 %v3296
      %v3385 = vpack.c.b16 %v3382, %v3381
      %v3386 = vpack.c.b16 %v3384, %v3383
      %v3390 = vsel %vm688, %v3361, 0
      %v3393 = vsel %vm688, %v3362, 0
      %v3396 = vsel %vm688, %v3363, 0
      %v3399 = vsel %vm688, %v3364, 0
      %v3402 = vsel %vm688, %v3365, 0
      %v3405 = vsel %vm688, %v3366, 0
      %v3408 = vsel %vm688, %v3367, 0
      %v3411 = vsel %vm688, %v3368, 0
      %v3414 = vsel %vm688, %v3369, 0
      %v3417 = vsel %vm688, %v3370, 0
      %v3420 = vsel %vm688, %v3371, 0
      %v3423 = vsel %vm688, %v3372, 0
      %v3426 = vsel %vm688, %v3373, 0
      %v3429 = vsel %vm688, %v3374, 0
      %v3432 = vsel %vm688, %v3375, 0
      %v3435 = vsel %vm688, %v3376, 0
      %3437 = vmatprep.subr.bf16.mxu0 0
      %3438 = vmatpush1.bf16.msra.mxu0 %v3385
      %3439 = vmatprep.subr.bf16.mxu0 0
      %3440 = vmatpush1.bf16.msra.mxu0 %v3386
      %3441 = vmatprep.subr.bf16.mxu0 0
      %3442 = vmatpush1.bf16.msra.mxu0 0
      %3443 = vmatprep.subr.bf16.mxu0 0
      %3444 = vmatpush1.bf16.msra.mxu0 0
      %3445 = vmatprep.subr.bf16.mxu0 0
      %3446 = vmatpush1.bf16.msra.mxu0 0
      %3447 = vmatprep.subr.bf16.mxu0 0
      %3448 = vmatpush1.bf16.msra.mxu0 0
      %3449 = vmatprep.subr.bf16.mxu0 0
      %3450 = vmatpush1.bf16.msra.mxu0 0
      %3451 = vmatprep.subr.bf16.mxu0 0
      %3452 = vmatpush1.bf16.msra.mxu0 0
      %3453 = vmatprep.subr.bf16.mxu0 0
      %3454 = vmatpush1.bf16.msra.mxu0 0
      %3455 = vmatprep.subr.bf16.mxu0 0
      %3456 = vmatpush1.bf16.msra.mxu0 0
      %3457 = vmatprep.subr.bf16.mxu0 0
      %3458 = vmatpush1.bf16.msra.mxu0 0
      %3459 = vmatprep.subr.bf16.mxu0 0
      %3460 = vmatpush1.bf16.msra.mxu0 0
      %3461 = vmatprep.subr.bf16.mxu0 0
      %3462 = vmatpush1.bf16.msra.mxu0 0
      %3463 = vmatprep.subr.bf16.mxu0 0
      %3464 = vmatpush1.bf16.msra.mxu0 0
      %3465 = vmatprep.subr.bf16.mxu0 0
      %3466 = vmatpush1.bf16.msra.mxu0 0
      %3467 = vmatprep.subr.bf16.mxu0 0
      %3468 = vmatpush1.bf16.msra.mxu0 0
      %3469 = vmatprep.mubr.bf16.mxu0 0
      %3470 = vmatmul.mubr.bf16.gmra.mrb[0].mxu0 %v3390
      %v3471 = vpop.f32.mrb[0].mxu0
      %v3472 = vadd.f32 0.0, %v3471
      %v3473 = vpop.f32.mrb[0].mxu0
      %v3474 = vpop.f32.mrb[0].mxu0
      %v3475 = vadd.f32 0.0, %v3474
      %v3476 = vpop.f32.mrb[0].mxu0
      %3477 = vmatprep.mubr.bf16.mxu0 0
      %3478 = vmatmul.mubr.bf16.gmra.mrb[0].mxu0 %v3393
      %v3479 = vpop.f32.mrb[0].mxu0
      %v3480 = vadd.f32 0.0, %v3479
      %v3481 = vpop.f32.mrb[0].mxu0
      %v3482 = vpop.f32.mrb[0].mxu0
      %v3483 = vadd.f32 0.0, %v3482
      %v3484 = vpop.f32.mrb[0].mxu0
      %3485 = vmatprep.mubr.bf16.mxu0 0
      %3486 = vmatmul.mubr.bf16.gmra.mrb[0].mxu0 %v3396
      %v3487 = vpop.f32.mrb[0].mxu0
      %v3488 = vadd.f32 0.0, %v3487
      %v3489 = vpop.f32.mrb[0].mxu0
      %v3490 = vpop.f32.mrb[0].mxu0
      %v3491 = vadd.f32 0.0, %v3490
      %v3492 = vpop.f32.mrb[0].mxu0
      %3493 = vmatprep.mubr.bf16.mxu0 0
      %3494 = vmatmul.mubr.bf16.gmra.mrb[0].mxu0 %v3399
      %v3495 = vpop.f32.mrb[0].mxu0
      %v3496 = vadd.f32 0.0, %v3495
      %v3497 = vpop.f32.mrb[0].mxu0
      %v3498 = vpop.f32.mrb[0].mxu0
      %v3499 = vadd.f32 0.0, %v3498
      %v3500 = vpop.f32.mrb[0].mxu0
      %3501 = vmatprep.mubr.bf16.mxu0 0
      %3502 = vmatmul.mubr.bf16.gmra.mrb[0].mxu0 %v3402
      %v3503 = vpop.f32.mrb[0].mxu0
      %v3504 = vadd.f32 0.0, %v3503
      %v3505 = vpop.f32.mrb[0].mxu0
      %v3506 = vpop.f32.mrb[0].mxu0
      %v3507 = vadd.f32 0.0, %v3506
      %v3508 = vpop.f32.mrb[0].mxu0
      %3509 = vmatprep.mubr.bf16.mxu0 0
      %3510 = vmatmul.mubr.bf16.gmra.mrb[0].mxu0 %v3405
      %v3511 = vpop.f32.mrb[0].mxu0
      %v3512 = vadd.f32 0.0, %v3511
      %v3513 = vpop.f32.mrb[0].mxu0
      %v3514 = vpop.f32.mrb[0].mxu0
      %v3515 = vadd.f32 0.0, %v3514
      %v3516 = vpop.f32.mrb[0].mxu0
      %3517 = vmatprep.mubr.bf16.mxu0 0
      %3518 = vmatmul.mubr.bf16.gmra.mrb[0].mxu0 %v3408
      %v3519 = vpop.f32.mrb[0].mxu0
      %v3520 = vadd.f32 0.0, %v3519
      %v3521 = vpop.f32.mrb[0].mxu0
      %v3522 = vpop.f32.mrb[0].mxu0
      %v3523 = vadd.f32 0.0, %v3522
      %v3524 = vpop.f32.mrb[0].mxu0
      %3525 = vmatprep.mubr.bf16.mxu0 0
      %3526 = vmatmul.mubr.bf16.gmra.mrb[0].mxu0 %v3411
      %v3527 = vpop.f32.mrb[0].mxu0
      %v3528 = vadd.f32 0.0, %v3527
      %v3529 = vpop.f32.mrb[0].mxu0
      %v3530 = vpop.f32.mrb[0].mxu0
      %v3531 = vadd.f32 0.0, %v3530
      %v3532 = vpop.f32.mrb[0].mxu0
      %3533 = vmatprep.mubr.bf16.mxu0 0
      %3534 = vmatmul.mubr.bf16.gmra.mrb[0].mxu0 %v3414
      %v3535 = vpop.f32.mrb[0].mxu0
      %v3536 = vadd.f32 0.0, %v3535
      %v3537 = vpop.f32.mrb[0].mxu0
      %v3538 = vpop.f32.mrb[0].mxu0
      %v3539 = vadd.f32 0.0, %v3538
      %v3540 = vpop.f32.mrb[0].mxu0
      %3541 = vmatprep.mubr.bf16.mxu0 0
      %3542 = vmatmul.mubr.bf16.gmra.mrb[0].mxu0 %v3417
      %v3543 = vpop.f32.mrb[0].mxu0
      %v3544 = vadd.f32 0.0, %v3543
      %v3545 = vpop.f32.mrb[0].mxu0
      %v3546 = vpop.f32.mrb[0].mxu0
      %v3547 = vadd.f32 0.0, %v3546
      %v3548 = vpop.f32.mrb[0].mxu0
      %3549 = vmatprep.mubr.bf16.mxu0 0
      %3550 = vmatmul.mubr.bf16.gmra.mrb[0].mxu0 %v3420
      %v3551 = vpop.f32.mrb[0].mxu0
      %v3552 = vadd.f32 0.0, %v3551
      %v3553 = vpop.f32.mrb[0].mxu0
      %v3554 = vpop.f32.mrb[0].mxu0
      %v3555 = vadd.f32 0.0, %v3554
      %v3556 = vpop.f32.mrb[0].mxu0
      %3557 = vmatprep.mubr.bf16.mxu0 0
      %3558 = vmatmul.mubr.bf16.gmra.mrb[0].mxu0 %v3423
      %v3559 = vpop.f32.mrb[0].mxu0
      %v3560 = vadd.f32 0.0, %v3559
      %v3561 = vpop.f32.mrb[0].mxu0
      %v3562 = vpop.f32.mrb[0].mxu0
      %v3563 = vadd.f32 0.0, %v3562
      %v3564 = vpop.f32.mrb[0].mxu0
      %3565 = vmatprep.mubr.bf16.mxu0 0
      %3566 = vmatmul.mubr.bf16.gmra.mrb[0].mxu0 %v3426
      %v3567 = vpop.f32.mrb[0].mxu0
      %v3568 = vadd.f32 0.0, %v3567
      %v3569 = vpop.f32.mrb[0].mxu0
      %v3570 = vpop.f32.mrb[0].mxu0
      %v3571 = vadd.f32 0.0, %v3570
      %v3572 = vpop.f32.mrb[0].mxu0
      %3573 = vmatprep.mubr.bf16.mxu0 0
      %3574 = vmatmul.mubr.bf16.gmra.mrb[0].mxu0 %v3429
      %v3575 = vpop.f32.mrb[0].mxu0
      %v3576 = vadd.f32 0.0, %v3575
      %v3577 = vpop.f32.mrb[0].mxu0
      %v3578 = vpop.f32.mrb[0].mxu0
      %v3579 = vadd.f32 0.0, %v3578
      %v3580 = vpop.f32.mrb[0].mxu0
      %3581 = vmatprep.mubr.bf16.mxu0 0
      %3582 = vmatmul.mubr.bf16.gmra.mrb[0].mxu0 %v3432
      %v3583 = vpop.f32.mrb[0].mxu0
      %v3584 = vadd.f32 0.0, %v3583
      %v3585 = vpop.f32.mrb[0].mxu0
      %v3586 = vpop.f32.mrb[0].mxu0
      %v3587 = vadd.f32 0.0, %v3586
      %v3588 = vpop.f32.mrb[0].mxu0
      %3589 = vmatprep.mubr.bf16.mxu0 0
      %3590 = vmatmul.mubr.bf16.gmra.mrb[0].mxu0 %v3435
      %v3591 = vpop.f32.mrb[0].mxu0
      %v3592 = vadd.f32 0.0, %v3591
      %v3593 = vpop.f32.mrb[0].mxu0
      %v3594 = vpop.f32.mrb[0].mxu0
      %v3595 = vadd.f32 0.0, %v3594
      %v3596 = vpop.f32.mrb[0].mxu0
      %3597 = vdwg.mxu0
      %v3598 = vadd.f32 %v3227, %v3472
      %v3599 = vadd.f32 %v3228, %v3475
      %v3600 = vadd.f32 %v3229, %v3480
      %v3601 = vadd.f32 %v3230, %v3483
      %v3602 = vadd.f32 %v3231, %v3488
      %v3603 = vadd.f32 %v3232, %v3491
      %v3604 = vadd.f32 %v3233, %v3496
      %v3605 = vadd.f32 %v3234, %v3499
      %v3606 = vadd.f32 %v3235, %v3504
      %v3607 = vadd.f32 %v3236, %v3507
      %v3608 = vadd.f32 %v3237, %v3512
      %v3609 = vadd.f32 %v3238, %v3515
      %v3610 = vadd.f32 %v3239, %v3520
      %v3611 = vadd.f32 %v3240, %v3523
      %v3612 = vadd.f32 %v3241, %v3528
      %v3613 = vadd.f32 %v3242, %v3531
      %v3614 = vadd.f32 %v3243, %v3536
      %v3615 = vadd.f32 %v3244, %v3539
      %v3616 = vadd.f32 %v3245, %v3544
      %v3617 = vadd.f32 %v3246, %v3547
      %v3618 = vadd.f32 %v3247, %v3552
      %v3619 = vadd.f32 %v3248, %v3555
      %v3620 = vadd.f32 %v3249, %v3560
      %v3621 = vadd.f32 %v3250, %v3563
      %v3622 = vadd.f32 %v3251, %v3568
      %v3623 = vadd.f32 %v3252, %v3571
      %v3624 = vadd.f32 %v3253, %v3576
      %v3625 = vadd.f32 %v3254, %v3579
      %v3626 = vadd.f32 %v3255, %v3584
      %v3627 = vadd.f32 %v3256, %v3587
      %v3628 = vadd.f32 %v3257, %v3592
      %v3629 = vadd.f32 %v3258, %v3595
      %v3630 = vld [vmem:[%s3259] sm:$0xf]
      %v3631 = vld [vmem:[%s3259 + $0x4] sm:$0xf]
      %v3632 = vld [vmem:[%s3259 + $0x8] sm:$0x1]
      %v3633 = vld [vmem:[%s3259 + $0xc] sm:$0xf]
      %v3634 = vld [vmem:[%s3259 + $0x10] sm:$0xf]
      %v3635 = vld [vmem:[%s3259 + $0x14] sm:$0x1]
      %v3636 = vld [vmem:[%s3259 + $0x18] sm:$0xf]
      %v3637 = vld [vmem:[%s3259 + $0x1c] sm:$0xf]
      %v3638 = vld [vmem:[%s3259 + $0x20] sm:$0x1]
      %v3639 = vld [vmem:[%s3259 + $0x24] sm:$0xf]
      %v3640 = vld [vmem:[%s3259 + $0x28] sm:$0xf]
      %v3641 = vld [vmem:[%s3259 + $0x2c] sm:$0x1]
      %v3642 = vld [vmem:[%s3259 + $0x30] sm:$0xf]
      %v3643 = vld [vmem:[%s3259 + $0x34] sm:$0xf]
      %v3644 = vld [vmem:[%s3259 + $0x38] sm:$0x1]
      %v3645 = vld [vmem:[%s3259 + $0x3c] sm:$0xf]
      %v3646 = vld [vmem:[%s3259 + $0x40] sm:$0xf]
      %v3647 = vld [vmem:[%s3259 + $0x44] sm:$0x1]
      %v3648 = vld [vmem:[%s3259 + $0x48] sm:$0xf]
      %v3649 = vld [vmem:[%s3259 + $0x4c] sm:$0xf]
      %v3650 = vld [vmem:[%s3259 + $0x50] sm:$0x1]
      %v3651 = vld [vmem:[%s3259 + $0x54] sm:$0xf]
      %v3652 = vld [vmem:[%s3259 + $0x58] sm:$0xf]
      %v3653 = vld [vmem:[%s3259 + $0x5c] sm:$0x1]
      %v3654 = vld [vmem:[%s3259 + $0x60] sm:$0xf]
      %v3655 = vld [vmem:[%s3259 + $0x64] sm:$0xf]
      %v3656 = vld [vmem:[%s3259 + $0x68] sm:$0x1]
      %v3657 = vld [vmem:[%s3259 + $0x6c] sm:$0xf]
      %v3658 = vld [vmem:[%s3259 + $0x70] sm:$0xf]
      %v3659 = vld [vmem:[%s3259 + $0x74] sm:$0x1]
      %v3660 = vld [vmem:[%s3259 + $0x78] sm:$0xf]
      %v3661 = vld [vmem:[%s3259 + $0x7c] sm:$0xf]
      %v3662 = vld [vmem:[%s3259 + $0x80] sm:$0x1]
      %v3663 = vld [vmem:[%s3259 + $0x84] sm:$0xf]
      %v3664 = vld [vmem:[%s3259 + $0x88] sm:$0xf]
      %v3665 = vld [vmem:[%s3259 + $0x8c] sm:$0x1]
      %v3666 = vld [vmem:[%s3259 + $0x90] sm:$0xf]
      %v3667 = vld [vmem:[%s3259 + $0x94] sm:$0xf]
      %v3668 = vld [vmem:[%s3259 + $0x98] sm:$0x1]
      %v3669 = vld [vmem:[%s3259 + $0x9c] sm:$0xf]
      %v3670 = vld [vmem:[%s3259 + $0xa0] sm:$0xf]
      %v3671 = vld [vmem:[%s3259 + $0xa4] sm:$0x1]
      %v3672 = vld [vmem:[%s3259 + $0xa8] sm:$0xf]
      %v3673 = vld [vmem:[%s3259 + $0xac] sm:$0xf]
      %v3674 = vld [vmem:[%s3259 + $0xb0] sm:$0x1]
      %v3675 = vld [vmem:[%s3259 + $0xb4] sm:$0xf]
      %v3676 = vld [vmem:[%s3259 + $0xb8] sm:$0xf]
      %v3677 = vld [vmem:[%s3259 + $0xbc] sm:$0x1]
      %v3679 = vshrl.u32 %v3630, 16
      %v3681 = vrot.slane %v3679, 4
      %v3682 = vshll.u32 %v3630, 16
      %v3684 = vrot.slane %v3682, 5
      %v3685 = vor.u32 %v3681, %v3684
      %v3686 = vrot.slane %v3685, 4
      %v3688 = vshll.u32 %v3631, 16
      %v3690 = vrot.slane %v3688, 5
      %v3691 = vsel %vm238, %v3686, %v3690
      %v3692 = vshrl.u32 %v3631, 16
      %v3694 = vrot.slane %v3692, 4
      %v3695 = vor.u32 %v3694, %v3690
      %v3696 = vrot.slane %v3695, 4
      %v3698 = vshll.u32 %v3632, 16
      %v3700 = vrot.slane %v3698, 5
      %v3701 = vsel %vm238, %v3696, %v3700
      %v3703 = vshrl.u32 %v3633, 16
      %v3705 = vrot.slane %v3703, 4
      %v3706 = vshll.u32 %v3633, 16
      %v3708 = vrot.slane %v3706, 5
      %v3709 = vor.u32 %v3705, %v3708
      %v3710 = vrot.slane %v3709, 4
      %v3712 = vshll.u32 %v3634, 16
      %v3714 = vrot.slane %v3712, 5
      %v3715 = vsel %vm238, %v3710, %v3714
      %v3716 = vshrl.u32 %v3634, 16
      %v3718 = vrot.slane %v3716, 4
      %v3719 = vor.u32 %v3718, %v3714
      %v3720 = vrot.slane %v3719, 4
      %v3722 = vshll.u32 %v3635, 16
      %v3724 = vrot.slane %v3722, 5
      %v3725 = vsel %vm238, %v3720, %v3724
      %v3727 = vshrl.u32 %v3636, 16
      %v3729 = vrot.slane %v3727, 4
      %v3730 = vshll.u32 %v3636, 16
      %v3732 = vrot.slane %v3730, 5
      %v3733 = vor.u32 %v3729, %v3732
      %v3734 = vrot.slane %v3733, 4
      %v3736 = vshll.u32 %v3637, 16
      %v3738 = vrot.slane %v3736, 5
      %v3739 = vsel %vm238, %v3734, %v3738
      %v3740 = vshrl.u32 %v3637, 16
      %v3742 = vrot.slane %v3740, 4
      %v3743 = vor.u32 %v3742, %v3738
      %v3744 = vrot.slane %v3743, 4
      %v3746 = vshll.u32 %v3638, 16
      %v3748 = vrot.slane %v3746, 5
      %v3749 = vsel %vm238, %v3744, %v3748
      %v3751 = vshrl.u32 %v3639, 16
      %v3753 = vrot.slane %v3751, 4
      %v3754 = vshll.u32 %v3639, 16
      %v3756 = vrot.slane %v3754, 5
      %v3757 = vor.u32 %v3753, %v3756
      %v3758 = vrot.slane %v3757, 4
      %v3760 = vshll.u32 %v3640, 16
      %v3762 = vrot.slane %v3760, 5
      %v3763 = vsel %vm238, %v3758, %v3762
      %v3764 = vshrl.u32 %v3640, 16
      %v3766 = vrot.slane %v3764, 4
      %v3767 = vor.u32 %v3766, %v3762
      %v3768 = vrot.slane %v3767, 4
      %v3770 = vshll.u32 %v3641, 16
      %v3772 = vrot.slane %v3770, 5
      %v3773 = vsel %vm238, %v3768, %v3772
      %v3775 = vshrl.u32 %v3642, 16
      %v3777 = vrot.slane %v3775, 4
      %v3778 = vshll.u32 %v3642, 16
      %v3780 = vrot.slane %v3778, 5
      %v3781 = vor.u32 %v3777, %v3780
      %v3782 = vrot.slane %v3781, 4
      %v3784 = vshll.u32 %v3643, 16
      %v3786 = vrot.slane %v3784, 5
      %v3787 = vsel %vm238, %v3782, %v3786
      %v3788 = vshrl.u32 %v3643, 16
      %v3790 = vrot.slane %v3788, 4
      %v3791 = vor.u32 %v3790, %v3786
      %v3792 = vrot.slane %v3791, 4
      %v3794 = vshll.u32 %v3644, 16
      %v3796 = vrot.slane %v3794, 5
      %v3797 = vsel %vm238, %v3792, %v3796
      %v3799 = vshrl.u32 %v3645, 16
      %v3801 = vrot.slane %v3799, 4
      %v3802 = vshll.u32 %v3645, 16
      %v3804 = vrot.slane %v3802, 5
      %v3805 = vor.u32 %v3801, %v3804
      %v3806 = vrot.slane %v3805, 4
      %v3808 = vshll.u32 %v3646, 16
      %v3810 = vrot.slane %v3808, 5
      %v3811 = vsel %vm238, %v3806, %v3810
      %v3812 = vshrl.u32 %v3646, 16
      %v3814 = vrot.slane %v3812, 4
      %v3815 = vor.u32 %v3814, %v3810
      %v3816 = vrot.slane %v3815, 4
      %v3818 = vshll.u32 %v3647, 16
      %v3820 = vrot.slane %v3818, 5
      %v3821 = vsel %vm238, %v3816, %v3820
      %v3823 = vshrl.u32 %v3648, 16
      %v3825 = vrot.slane %v3823, 4
      %v3826 = vshll.u32 %v3648, 16
      %v3828 = vrot.slane %v3826, 5
      %v3829 = vor.u32 %v3825, %v3828
      %v3830 = vrot.slane %v3829, 4
      %v3832 = vshll.u32 %v3649, 16
      %v3834 = vrot.slane %v3832, 5
      %v3835 = vsel %vm238, %v3830, %v3834
      %v3836 = vshrl.u32 %v3649, 16
      %v3838 = vrot.slane %v3836, 4
      %v3839 = vor.u32 %v3838, %v3834
      %v3840 = vrot.slane %v3839, 4
      %v3842 = vshll.u32 %v3650, 16
      %v3844 = vrot.slane %v3842, 5
      %v3845 = vsel %vm238, %v3840, %v3844
      %v3847 = vshrl.u32 %v3651, 16
      %v3849 = vrot.slane %v3847, 4
      %v3850 = vshll.u32 %v3651, 16
      %v3852 = vrot.slane %v3850, 5
      %v3853 = vor.u32 %v3849, %v3852
      %v3854 = vrot.slane %v3853, 4
      %v3856 = vshll.u32 %v3652, 16
      %v3858 = vrot.slane %v3856, 5
      %v3859 = vsel %vm238, %v3854, %v3858
      %v3860 = vshrl.u32 %v3652, 16
      %v3862 = vrot.slane %v3860, 4
      %v3863 = vor.u32 %v3862, %v3858
      %v3864 = vrot.slane %v3863, 4
      %v3866 = vshll.u32 %v3653, 16
      %v3868 = vrot.slane %v3866, 5
      %v3869 = vsel %vm238, %v3864, %v3868
      %v3871 = vshrl.u32 %v3654, 16
      %v3873 = vrot.slane %v3871, 4
      %v3874 = vshll.u32 %v3654, 16
      %v3876 = vrot.slane %v3874, 5
      %v3877 = vor.u32 %v3873, %v3876
      %v3878 = vrot.slane %v3877, 4
      %v3880 = vshll.u32 %v3655, 16
      %v3882 = vrot.slane %v3880, 5
      %v3883 = vsel %vm238, %v3878, %v3882
      %v3884 = vshrl.u32 %v3655, 16
      %v3886 = vrot.slane %v3884, 4
      %v3887 = vor.u32 %v3886, %v3882
      %v3888 = vrot.slane %v3887, 4
      %v3890 = vshll.u32 %v3656, 16
      %v3892 = vrot.slane %v3890, 5
      %v3893 = vsel %vm238, %v3888, %v3892
      %v3895 = vshrl.u32 %v3657, 16
      %v3897 = vrot.slane %v3895, 4
      %v3898 = vshll.u32 %v3657, 16
      %v3900 = vrot.slane %v3898, 5
      %v3901 = vor.u32 %v3897, %v3900
      %v3902 = vrot.slane %v3901, 4
      %v3904 = vshll.u32 %v3658, 16
      %v3906 = vrot.slane %v3904, 5
      %v3907 = vsel %vm238, %v3902, %v3906
      %v3908 = vshrl.u32 %v3658, 16
      %v3910 = vrot.slane %v3908, 4
      %v3911 = vor.u32 %v3910, %v3906
      %v3912 = vrot.slane %v3911, 4
      %v3914 = vshll.u32 %v3659, 16
      %v3916 = vrot.slane %v3914, 5
      %v3917 = vsel %vm238, %v3912, %v3916
      %v3919 = vshrl.u32 %v3660, 16
      %v3921 = vrot.slane %v3919, 4
      %v3922 = vshll.u32 %v3660, 16
      %v3924 = vrot.slane %v3922, 5
      %v3925 = vor.u32 %v3921, %v3924
      %v3926 = vrot.slane %v3925, 4
      %v3928 = vshll.u32 %v3661, 16
      %v3930 = vrot.slane %v3928, 5
      %v3931 = vsel %vm238, %v3926, %v3930
      %v3932 = vshrl.u32 %v3661, 16
      %v3934 = vrot.slane %v3932, 4
      %v3935 = vor.u32 %v3934, %v3930
      %v3936 = vrot.slane %v3935, 4
      %v3938 = vshll.u32 %v3662, 16
      %v3940 = vrot.slane %v3938, 5
      %v3941 = vsel %vm238, %v3936, %v3940
      %v3943 = vshrl.u32 %v3663, 16
      %v3945 = vrot.slane %v3943, 4
      %v3946 = vshll.u32 %v3663, 16
      %v3948 = vrot.slane %v3946, 5
      %v3949 = vor.u32 %v3945, %v3948
      %v3950 = vrot.slane %v3949, 4
      %v3952 = vshll.u32 %v3664, 16
      %v3954 = vrot.slane %v3952, 5
      %v3955 = vsel %vm238, %v3950, %v3954
      %v3956 = vshrl.u32 %v3664, 16
      %v3958 = vrot.slane %v3956, 4
      %v3959 = vor.u32 %v3958, %v3954
      %v3960 = vrot.slane %v3959, 4
      %v3962 = vshll.u32 %v3665, 16
      %v3964 = vrot.slane %v3962, 5
      %v3965 = vsel %vm238, %v3960, %v3964
      %v3967 = vshrl.u32 %v3666, 16
      %v3969 = vrot.slane %v3967, 4
      %v3970 = vshll.u32 %v3666, 16
      %v3972 = vrot.slane %v3970, 5
      %v3973 = vor.u32 %v3969, %v3972
      %v3974 = vrot.slane %v3973, 4
      %v3976 = vshll.u32 %v3667, 16
      %v3978 = vrot.slane %v3976, 5
      %v3979 = vsel %vm238, %v3974, %v3978
      %v3980 = vshrl.u32 %v3667, 16
      %v3982 = vrot.slane %v3980, 4
      %v3983 = vor.u32 %v3982, %v3978
      %v3984 = vrot.slane %v3983, 4
      %v3986 = vshll.u32 %v3668, 16
      %v3988 = vrot.slane %v3986, 5
      %v3989 = vsel %vm238, %v3984, %v3988
      %v3991 = vshrl.u32 %v3669, 16
      %v3993 = vrot.slane %v3991, 4
      %v3994 = vshll.u32 %v3669, 16
      %v3996 = vrot.slane %v3994, 5
      %v3997 = vor.u32 %v3993, %v3996
      %v3998 = vrot.slane %v3997, 4
      %v4000 = vshll.u32 %v3670, 16
      %v4002 = vrot.slane %v4000, 5
      %v4003 = vsel %vm238, %v3998, %v4002
      %v4004 = vshrl.u32 %v3670, 16
      %v4006 = vrot.slane %v4004, 4
      %v4007 = vor.u32 %v4006, %v4002
      %v4008 = vrot.slane %v4007, 4
      %v4010 = vshll.u32 %v3671, 16
      %v4012 = vrot.slane %v4010, 5
      %v4013 = vsel %vm238, %v4008, %v4012
      %v4015 = vshrl.u32 %v3672, 16
      %v4017 = vrot.slane %v4015, 4
      %v4018 = vshll.u32 %v3672, 16
      %v4020 = vrot.slane %v4018, 5
      %v4021 = vor.u32 %v4017, %v4020
      %v4022 = vrot.slane %v4021, 4
      %v4024 = vshll.u32 %v3673, 16
      %v4026 = vrot.slane %v4024, 5
      %v4027 = vsel %vm238, %v4022, %v4026
      %v4028 = vshrl.u32 %v3673, 16
      %v4030 = vrot.slane %v4028, 4
      %v4031 = vor.u32 %v4030, %v4026
      %v4032 = vrot.slane %v4031, 4
      %v4034 = vshll.u32 %v3674, 16
      %v4036 = vrot.slane %v4034, 5
      %v4037 = vsel %vm238, %v4032, %v4036
      %v4039 = vshrl.u32 %v3675, 16
      %v4041 = vrot.slane %v4039, 4
      %v4042 = vshll.u32 %v3675, 16
      %v4044 = vrot.slane %v4042, 5
      %v4045 = vor.u32 %v4041, %v4044
      %v4046 = vrot.slane %v4045, 4
      %v4048 = vshll.u32 %v3676, 16
      %v4050 = vrot.slane %v4048, 5
      %v4051 = vsel %vm238, %v4046, %v4050
      %v4052 = vshrl.u32 %v3676, 16
      %v4054 = vrot.slane %v4052, 4
      %v4055 = vor.u32 %v4054, %v4050
      %v4056 = vrot.slane %v4055, 4
      %v4058 = vshll.u32 %v3677, 16
      %v4060 = vrot.slane %v4058, 5
      %v4061 = vsel %vm238, %v4056, %v4060
      %s4062 = scalar_lea.vmem %s1, 112
      %v4063 = vld [vmem:[%s4062] sm:$0xf]
      %v4064 = vld [vmem:[%s4062 + $0x4] sm:$0xf]
      %v4065 = vld [vmem:[%s4062 + $0x8] sm:$0xf]
      %v4066 = vld [vmem:[%s4062 + $0xc] sm:$0xf]
      %v4067 = vunpack.c.l.b16 %v3691
      %v4068 = vunpack.c.l.b16 %v3701
      %v4069 = vunpack.c.l.b16 %v3715
      %v4070 = vunpack.c.l.b16 %v3725
      %v4071 = vunpack.c.l.b16 %v3739
      %v4072 = vunpack.c.l.b16 %v3749
      %v4073 = vunpack.c.l.b16 %v3763
      %v4074 = vunpack.c.l.b16 %v3773
      %v4075 = vunpack.c.l.b16 %v3787
      %v4076 = vunpack.c.l.b16 %v3797
      %v4077 = vunpack.c.l.b16 %v3811
      %v4078 = vunpack.c.l.b16 %v3821
      %v4079 = vunpack.c.l.b16 %v3835
      %v4080 = vunpack.c.l.b16 %v3845
      %v4081 = vunpack.c.l.b16 %v3859
      %v4082 = vunpack.c.l.b16 %v3869
      %v4083 = vunpack.c.l.b16 %v3883
      %v4084 = vunpack.c.l.b16 %v3893
      %v4085 = vunpack.c.l.b16 %v3907
      %v4086 = vunpack.c.l.b16 %v3917
      %v4087 = vunpack.c.l.b16 %v3931
      %v4088 = vunpack.c.l.b16 %v3941
      %v4089 = vunpack.c.l.b16 %v3955
      %v4090 = vunpack.c.l.b16 %v3965
      %v4091 = vunpack.c.l.b16 %v3979
      %v4092 = vunpack.c.l.b16 %v3989
      %v4093 = vunpack.c.l.b16 %v4003
      %v4094 = vunpack.c.l.b16 %v4013
      %v4095 = vunpack.c.l.b16 %v4027
      %v4096 = vunpack.c.l.b16 %v4037
      %v4097 = vunpack.c.l.b16 %v4051
      %v4098 = vunpack.c.l.b16 %v4061
      %v4099 = vpack.c.b16 %v4068, %v4067
      %v4100 = vpack.c.b16 %v4070, %v4069
      %v4101 = vpack.c.b16 %v4072, %v4071
      %v4102 = vpack.c.b16 %v4074, %v4073
      %v4103 = vpack.c.b16 %v4076, %v4075
      %v4104 = vpack.c.b16 %v4078, %v4077
      %v4105 = vpack.c.b16 %v4080, %v4079
      %v4106 = vpack.c.b16 %v4082, %v4081
      %v4107 = vpack.c.b16 %v4084, %v4083
      %v4108 = vpack.c.b16 %v4086, %v4085
      %v4109 = vpack.c.b16 %v4088, %v4087
      %v4110 = vpack.c.b16 %v4090, %v4089
      %v4111 = vpack.c.b16 %v4092, %v4091
      %v4112 = vpack.c.b16 %v4094, %v4093
      %v4113 = vpack.c.b16 %v4096, %v4095
      %v4114 = vpack.c.b16 %v4098, %v4097
      %v4119 = vunpack.c.l.b16 %v4063
      %v4120 = vunpack.c.l.b16 %v4064
      %v4121 = vunpack.c.l.b16 %v4065
      %v4122 = vunpack.c.l.b16 %v4066
      %v4123 = vpack.c.b16 %v4120, %v4119
      %v4124 = vpack.c.b16 %v4122, %v4121
      %v4128 = vsel %vm688, %v4099, 0
      %v4131 = vsel %vm688, %v4100, 0
      %v4134 = vsel %vm688, %v4101, 0
      %v4137 = vsel %vm688, %v4102, 0
      %v4140 = vsel %vm688, %v4103, 0
      %v4143 = vsel %vm688, %v4104, 0
      %v4146 = vsel %vm688, %v4105, 0
      %v4149 = vsel %vm688, %v4106, 0
      %v4152 = vsel %vm688, %v4107, 0
      %v4155 = vsel %vm688, %v4108, 0
      %v4158 = vsel %vm688, %v4109, 0
      %v4161 = vsel %vm688, %v4110, 0
      %v4164 = vsel %vm688, %v4111, 0
      %v4167 = vsel %vm688, %v4112, 0
      %v4170 = vsel %vm688, %v4113, 0
      %v4173 = vsel %vm688, %v4114, 0
      %4175 = vmatprep.subr.bf16.mxu0 0
      %4176 = vmatpush1.bf16.msra.mxu0 %v4123
      %4177 = vmatprep.subr.bf16.mxu0 0
      %4178 = vmatpush1.bf16.msra.mxu0 %v4124
      %4179 = vmatprep.subr.bf16.mxu0 0
      %4180 = vmatpush1.bf16.msra.mxu0 0
      %4181 = vmatprep.subr.bf16.mxu0 0
      %4182 = vmatpush1.bf16.msra.mxu0 0
      %4183 = vmatprep.subr.bf16.mxu0 0
      %4184 = vmatpush1.bf16.msra.mxu0 0
      %4185 = vmatprep.subr.bf16.mxu0 0
      %4186 = vmatpush1.bf16.msra.mxu0 0
      %4187 = vmatprep.subr.bf16.mxu0 0
      %4188 = vmatpush1.bf16.msra.mxu0 0
      %4189 = vmatprep.subr.bf16.mxu0 0
      %4190 = vmatpush1.bf16.msra.mxu0 0
      %4191 = vmatprep.subr.bf16.mxu0 0
      %4192 = vmatpush1.bf16.msra.mxu0 0
      %4193 = vmatprep.subr.bf16.mxu0 0
      %4194 = vmatpush1.bf16.msra.mxu0 0
      %4195 = vmatprep.subr.bf16.mxu0 0
      %4196 = vmatpush1.bf16.msra.mxu0 0
      %4197 = vmatprep.subr.bf16.mxu0 0
      %4198 = vmatpush1.bf16.msra.mxu0 0
      %4199 = vmatprep.subr.bf16.mxu0 0
      %4200 = vmatpush1.bf16.msra.mxu0 0
      %4201 = vmatprep.subr.bf16.mxu0 0
      %4202 = vmatpush1.bf16.msra.mxu0 0
      %4203 = vmatprep.subr.bf16.mxu0 0
      %4204 = vmatpush1.bf16.msra.mxu0 0
      %4205 = vmatprep.subr.bf16.mxu0 0
      %4206 = vmatpush1.bf16.msra.mxu0 0
      %4207 = vmatprep.mubr.bf16.mxu0 0
      %4208 = vmatmul.mubr.bf16.gmra.mrb[0].mxu0 %v4128
      %v4209 = vpop.f32.mrb[0].mxu0
      %v4210 = vadd.f32 0.0, %v4209
      %v4211 = vpop.f32.mrb[0].mxu0
      %v4212 = vpop.f32.mrb[0].mxu0
      %v4213 = vadd.f32 0.0, %v4212
      %v4214 = vpop.f32.mrb[0].mxu0
      %4215 = vmatprep.mubr.bf16.mxu0 0
      %4216 = vmatmul.mubr.bf16.gmra.mrb[0].mxu0 %v4131
      %v4217 = vpop.f32.mrb[0].mxu0
      %v4218 = vadd.f32 0.0, %v4217
      %v4219 = vpop.f32.mrb[0].mxu0
      %v4220 = vpop.f32.mrb[0].mxu0
      %v4221 = vadd.f32 0.0, %v4220
      %v4222 = vpop.f32.mrb[0].mxu0
      %4223 = vmatprep.mubr.bf16.mxu0 0
      %4224 = vmatmul.mubr.bf16.gmra.mrb[0].mxu0 %v4134
      %v4225 = vpop.f32.mrb[0].mxu0
      %v4226 = vadd.f32 0.0, %v4225
      %v4227 = vpop.f32.mrb[0].mxu0
      %v4228 = vpop.f32.mrb[0].mxu0
      %v4229 = vadd.f32 0.0, %v4228
      %v4230 = vpop.f32.mrb[0].mxu0
      %4231 = vmatprep.mubr.bf16.mxu0 0
      %4232 = vmatmul.mubr.bf16.gmra.mrb[0].mxu0 %v4137
      %v4233 = vpop.f32.mrb[0].mxu0
      %v4234 = vadd.f32 0.0, %v4233
      %v4235 = vpop.f32.mrb[0].mxu0
      %v4236 = vpop.f32.mrb[0].mxu0
      %v4237 = vadd.f32 0.0, %v4236
      %v4238 = vpop.f32.mrb[0].mxu0
      %4239 = vmatprep.mubr.bf16.mxu0 0
      %4240 = vmatmul.mubr.bf16.gmra.mrb[0].mxu0 %v4140
      %v4241 = vpop.f32.mrb[0].mxu0
      %v4242 = vadd.f32 0.0, %v4241
      %v4243 = vpop.f32.mrb[0].mxu0
      %v4244 = vpop.f32.mrb[0].mxu0
      %v4245 = vadd.f32 0.0, %v4244
      %v4246 = vpop.f32.mrb[0].mxu0
      %4247 = vmatprep.mubr.bf16.mxu0 0
      %4248 = vmatmul.mubr.bf16.gmra.mrb[0].mxu0 %v4143
      %v4249 = vpop.f32.mrb[0].mxu0
      %v4250 = vadd.f32 0.0, %v4249
      %v4251 = vpop.f32.mrb[0].mxu0
      %v4252 = vpop.f32.mrb[0].mxu0
      %v4253 = vadd.f32 0.0, %v4252
      %v4254 = vpop.f32.mrb[0].mxu0
      %4255 = vmatprep.mubr.bf16.mxu0 0
      %4256 = vmatmul.mubr.bf16.gmra.mrb[0].mxu0 %v4146
      %v4257 = vpop.f32.mrb[0].mxu0
      %v4258 = vadd.f32 0.0, %v4257
      %v4259 = vpop.f32.mrb[0].mxu0
      %v4260 = vpop.f32.mrb[0].mxu0
      %v4261 = vadd.f32 0.0, %v4260
      %v4262 = vpop.f32.mrb[0].mxu0
      %4263 = vmatprep.mubr.bf16.mxu0 0
      %4264 = vmatmul.mubr.bf16.gmra.mrb[0].mxu0 %v4149
      %v4265 = vpop.f32.mrb[0].mxu0
      %v4266 = vadd.f32 0.0, %v4265
      %v4267 = vpop.f32.mrb[0].mxu0
      %v4268 = vpop.f32.mrb[0].mxu0
      %v4269 = vadd.f32 0.0, %v4268
      %v4270 = vpop.f32.mrb[0].mxu0
      %4271 = vmatprep.mubr.bf16.mxu0 0
      %4272 = vmatmul.mubr.bf16.gmra.mrb[0].mxu0 %v4152
      %v4273 = vpop.f32.mrb[0].mxu0
      %v4274 = vadd.f32 0.0, %v4273
      %v4275 = vpop.f32.mrb[0].mxu0
      %v4276 = vpop.f32.mrb[0].mxu0
      %v4277 = vadd.f32 0.0, %v4276
      %v4278 = vpop.f32.mrb[0].mxu0
      %4279 = vmatprep.mubr.bf16.mxu0 0
      %4280 = vmatmul.mubr.bf16.gmra.mrb[0].mxu0 %v4155
      %v4281 = vpop.f32.mrb[0].mxu0
      %v4282 = vadd.f32 0.0, %v4281
      %v4283 = vpop.f32.mrb[0].mxu0
      %v4284 = vpop.f32.mrb[0].mxu0
      %v4285 = vadd.f32 0.0, %v4284
      %v4286 = vpop.f32.mrb[0].mxu0
      %4287 = vmatprep.mubr.bf16.mxu0 0
      %4288 = vmatmul.mubr.bf16.gmra.mrb[0].mxu0 %v4158
      %v4289 = vpop.f32.mrb[0].mxu0
      %v4290 = vadd.f32 0.0, %v4289
      %v4291 = vpop.f32.mrb[0].mxu0
      %v4292 = vpop.f32.mrb[0].mxu0
      %v4293 = vadd.f32 0.0, %v4292
      %v4294 = vpop.f32.mrb[0].mxu0
      %4295 = vmatprep.mubr.bf16.mxu0 0
      %4296 = vmatmul.mubr.bf16.gmra.mrb[0].mxu0 %v4161
      %v4297 = vpop.f32.mrb[0].mxu0
      %v4298 = vadd.f32 0.0, %v4297
      %v4299 = vpop.f32.mrb[0].mxu0
      %v4300 = vpop.f32.mrb[0].mxu0
      %v4301 = vadd.f32 0.0, %v4300
      %v4302 = vpop.f32.mrb[0].mxu0
      %4303 = vmatprep.mubr.bf16.mxu0 0
      %4304 = vmatmul.mubr.bf16.gmra.mrb[0].mxu0 %v4164
      %v4305 = vpop.f32.mrb[0].mxu0
      %v4306 = vadd.f32 0.0, %v4305
      %v4307 = vpop.f32.mrb[0].mxu0
      %v4308 = vpop.f32.mrb[0].mxu0
      %v4309 = vadd.f32 0.0, %v4308
      %v4310 = vpop.f32.mrb[0].mxu0
      %4311 = vmatprep.mubr.bf16.mxu0 0
      %4312 = vmatmul.mubr.bf16.gmra.mrb[0].mxu0 %v4167
      %v4313 = vpop.f32.mrb[0].mxu0
      %v4314 = vadd.f32 0.0, %v4313
      %v4315 = vpop.f32.mrb[0].mxu0
      %v4316 = vpop.f32.mrb[0].mxu0
      %v4317 = vadd.f32 0.0, %v4316
      %v4318 = vpop.f32.mrb[0].mxu0
      %4319 = vmatprep.mubr.bf16.mxu0 0
      %4320 = vmatmul.mubr.bf16.gmra.mrb[0].mxu0 %v4170
      %v4321 = vpop.f32.mrb[0].mxu0
      %v4322 = vadd.f32 0.0, %v4321
      %v4323 = vpop.f32.mrb[0].mxu0
      %v4324 = vpop.f32.mrb[0].mxu0
      %v4325 = vadd.f32 0.0, %v4324
      %v4326 = vpop.f32.mrb[0].mxu0
      %4327 = vmatprep.mubr.bf16.mxu0 0
      %4328 = vmatmul.mubr.bf16.gmra.mrb[0].mxu0 %v4173
      %v4329 = vpop.f32.mrb[0].mxu0
      %v4330 = vadd.f32 0.0, %v4329
      %v4331 = vpop.f32.mrb[0].mxu0
      %v4332 = vpop.f32.mrb[0].mxu0
      %v4333 = vadd.f32 0.0, %v4332
      %v4334 = vpop.f32.mrb[0].mxu0
      %4335 = vdwg.mxu0
      %v4336 = vadd.f32 %v3598, %v4210
      %v4337 = vadd.f32 %v3599, %v4213
      %v4338 = vadd.f32 %v3600, %v4218
      %v4339 = vadd.f32 %v3601, %v4221
      %v4340 = vadd.f32 %v3602, %v4226
      %v4341 = vadd.f32 %v3603, %v4229
      %v4342 = vadd.f32 %v3604, %v4234
      %v4343 = vadd.f32 %v3605, %v4237
      %v4344 = vadd.f32 %v3606, %v4242
      %v4345 = vadd.f32 %v3607, %v4245
      %v4346 = vadd.f32 %v3608, %v4250
      %v4347 = vadd.f32 %v3609, %v4253
      %v4348 = vadd.f32 %v3610, %v4258
      %v4349 = vadd.f32 %v3611, %v4261
      %v4350 = vadd.f32 %v3612, %v4266
      %v4351 = vadd.f32 %v3613, %v4269
      %v4352 = vadd.f32 %v3614, %v4274
      %v4353 = vadd.f32 %v3615, %v4277
      %v4354 = vadd.f32 %v3616, %v4282
      %v4355 = vadd.f32 %v3617, %v4285
      %v4356 = vadd.f32 %v3618, %v4290
      %v4357 = vadd.f32 %v3619, %v4293
      %v4358 = vadd.f32 %v3620, %v4298
      %v4359 = vadd.f32 %v3621, %v4301
      %v4360 = vadd.f32 %v3622, %v4306
      %v4361 = vadd.f32 %v3623, %v4309
      %v4362 = vadd.f32 %v3624, %v4314
      %v4363 = vadd.f32 %v3625, %v4317
      %v4364 = vadd.f32 %v3626, %v4322
      %v4365 = vadd.f32 %v3627, %v4325
      %v4366 = vadd.f32 %v3628, %v4330
      %v4367 = vadd.f32 %v3629, %v4333
      %v4368 = vld [vmem:[%s3259] sm:$0xe]
      %v4369 = vld [vmem:[%s3259 + $0xc] sm:$0xe]
      %v4370 = vld [vmem:[%s3259 + $0x18] sm:$0xe]
      %v4371 = vld [vmem:[%s3259 + $0x24] sm:$0xe]
      %v4372 = vld [vmem:[%s3259 + $0x30] sm:$0xe]
      %v4373 = vld [vmem:[%s3259 + $0x3c] sm:$0xe]
      %v4374 = vld [vmem:[%s3259 + $0x48] sm:$0xe]
      %v4375 = vld [vmem:[%s3259 + $0x54] sm:$0xe]
      %v4376 = vld [vmem:[%s3259 + $0x60] sm:$0xe]
      %v4377 = vld [vmem:[%s3259 + $0x6c] sm:$0xe]
      %v4378 = vld [vmem:[%s3259 + $0x78] sm:$0xe]
      %v4379 = vld [vmem:[%s3259 + $0x84] sm:$0xe]
      %v4380 = vld [vmem:[%s3259 + $0x90] sm:$0xe]
      %v4381 = vld [vmem:[%s3259 + $0x9c] sm:$0xe]
      %v4382 = vld [vmem:[%s3259 + $0xa8] sm:$0xe]
      %v4383 = vld [vmem:[%s3259 + $0xb4] sm:$0xe]
      %v4432 = vrot.slane %v4368, 5
      %v4433 = vrot.slane %v4432, 4
      %v4434 = vrot.slane %v3631, 5
      %v4435 = vsel %vm1249, %v4433, %v4434
      %v4436 = vrot.slane %v4434, 4
      %v4437 = vrot.slane %v3632, 5
      %v4438 = vsel %vm1249, %v4436, %v4437
      %v4439 = vrot.slane %v4369, 5
      %v4440 = vrot.slane %v4439, 4
      %v4441 = vrot.slane %v3634, 5
      %v4442 = vsel %vm1249, %v4440, %v4441
      %v4443 = vrot.slane %v4441, 4
      %v4444 = vrot.slane %v3635, 5
      %v4445 = vsel %vm1249, %v4443, %v4444
      %v4446 = vrot.slane %v4370, 5
      %v4447 = vrot.slane %v4446, 4
      %v4448 = vrot.slane %v3637, 5
      %v4449 = vsel %vm1249, %v4447, %v4448
      %v4450 = vrot.slane %v4448, 4
      %v4451 = vrot.slane %v3638, 5
      %v4452 = vsel %vm1249, %v4450, %v4451
      %v4453 = vrot.slane %v4371, 5
      %v4454 = vrot.slane %v4453, 4
      %v4455 = vrot.slane %v3640, 5
      %v4456 = vsel %vm1249, %v4454, %v4455
      %v4457 = vrot.slane %v4455, 4
      %v4458 = vrot.slane %v3641, 5
      %v4459 = vsel %vm1249, %v4457, %v4458
      %v4460 = vrot.slane %v4372, 5
      %v4461 = vrot.slane %v4460, 4
      %v4462 = vrot.slane %v3643, 5
      %v4463 = vsel %vm1249, %v4461, %v4462
      %v4464 = vrot.slane %v4462, 4
      %v4465 = vrot.slane %v3644, 5
      %v4466 = vsel %vm1249, %v4464, %v4465
      %v4467 = vrot.slane %v4373, 5
      %v4468 = vrot.slane %v4467, 4
      %v4469 = vrot.slane %v3646, 5
      %v4470 = vsel %vm1249, %v4468, %v4469
      %v4471 = vrot.slane %v4469, 4
      %v4472 = vrot.slane %v3647, 5
      %v4473 = vsel %vm1249, %v4471, %v4472
      %v4474 = vrot.slane %v4374, 5
      %v4475 = vrot.slane %v4474, 4
      %v4476 = vrot.slane %v3649, 5
      %v4477 = vsel %vm1249, %v4475, %v4476
      %v4478 = vrot.slane %v4476, 4
      %v4479 = vrot.slane %v3650, 5
      %v4480 = vsel %vm1249, %v4478, %v4479
      %v4481 = vrot.slane %v4375, 5
      %v4482 = vrot.slane %v4481, 4
      %v4483 = vrot.slane %v3652, 5
      %v4484 = vsel %vm1249, %v4482, %v4483
      %v4485 = vrot.slane %v4483, 4
      %v4486 = vrot.slane %v3653, 5
      %v4487 = vsel %vm1249, %v4485, %v4486
      %v4488 = vrot.slane %v4376, 5
      %v4489 = vrot.slane %v4488, 4
      %v4490 = vrot.slane %v3655, 5
      %v4491 = vsel %vm1249, %v4489, %v4490
      %v4492 = vrot.slane %v4490, 4
      %v4493 = vrot.slane %v3656, 5
      %v4494 = vsel %vm1249, %v4492, %v4493
      %v4495 = vrot.slane %v4377, 5
      %v4496 = vrot.slane %v4495, 4
      %v4497 = vrot.slane %v3658, 5
      %v4498 = vsel %vm1249, %v4496, %v4497
      %v4499 = vrot.slane %v4497, 4
      %v4500 = vrot.slane %v3659, 5
      %v4501 = vsel %vm1249, %v4499, %v4500
      %v4502 = vrot.slane %v4378, 5
      %v4503 = vrot.slane %v4502, 4
      %v4504 = vrot.slane %v3661, 5
      %v4505 = vsel %vm1249, %v4503, %v4504
      %v4506 = vrot.slane %v4504, 4
      %v4507 = vrot.slane %v3662, 5
      %v4508 = vsel %vm1249, %v4506, %v4507
      %v4509 = vrot.slane %v4379, 5
      %v4510 = vrot.slane %v4509, 4
      %v4511 = vrot.slane %v3664, 5
      %v4512 = vsel %vm1249, %v4510, %v4511
      %v4513 = vrot.slane %v4511, 4
      %v4514 = vrot.slane %v3665, 5
      %v4515 = vsel %vm1249, %v4513, %v4514
      %v4516 = vrot.slane %v4380, 5
      %v4517 = vrot.slane %v4516, 4
      %v4518 = vrot.slane %v3667, 5
      %v4519 = vsel %vm1249, %v4517, %v4518
      %v4520 = vrot.slane %v4518, 4
      %v4521 = vrot.slane %v3668, 5
      %v4522 = vsel %vm1249, %v4520, %v4521
      %v4523 = vrot.slane %v4381, 5
      %v4524 = vrot.slane %v4523, 4
      %v4525 = vrot.slane %v3670, 5
      %v4526 = vsel %vm1249, %v4524, %v4525
      %v4527 = vrot.slane %v4525, 4
      %v4528 = vrot.slane %v3671, 5
      %v4529 = vsel %vm1249, %v4527, %v4528
      %v4530 = vrot.slane %v4382, 5
      %v4531 = vrot.slane %v4530, 4
      %v4532 = vrot.slane %v3673, 5
      %v4533 = vsel %vm1249, %v4531, %v4532
      %v4534 = vrot.slane %v4532, 4
      %v4535 = vrot.slane %v3674, 5
      %v4536 = vsel %vm1249, %v4534, %v4535
      %v4537 = vrot.slane %v4383, 5
      %v4538 = vrot.slane %v4537, 4
      %v4539 = vrot.slane %v3676, 5
      %v4540 = vsel %vm1249, %v4538, %v4539
      %v4541 = vrot.slane %v4539, 4
      %v4542 = vrot.slane %v3677, 5
      %v4543 = vsel %vm1249, %v4541, %v4542
      %s4544 = scalar_lea.vmem %s1, 128
      %v4545 = vld [vmem:[%s4544] sm:$0xf]
      %v4546 = vld [vmem:[%s4544 + $0x4] sm:$0xf]
      %v4547 = vld [vmem:[%s4544 + $0x8] sm:$0xf]
      %v4548 = vld [vmem:[%s4544 + $0xc] sm:$0xf]
      %v4549 = vunpack.c.l.b16 %v4435
      %v4550 = vunpack.c.l.b16 %v4438
      %v4551 = vunpack.c.l.b16 %v4442
      %v4552 = vunpack.c.l.b16 %v4445
      %v4553 = vunpack.c.l.b16 %v4449
      %v4554 = vunpack.c.l.b16 %v4452
      %v4555 = vunpack.c.l.b16 %v4456
      %v4556 = vunpack.c.l.b16 %v4459
      %v4557 = vunpack.c.l.b16 %v4463
      %v4558 = vunpack.c.l.b16 %v4466
      %v4559 = vunpack.c.l.b16 %v4470
      %v4560 = vunpack.c.l.b16 %v4473
      %v4561 = vunpack.c.l.b16 %v4477
      %v4562 = vunpack.c.l.b16 %v4480
      %v4563 = vunpack.c.l.b16 %v4484
      %v4564 = vunpack.c.l.b16 %v4487
      %v4565 = vunpack.c.l.b16 %v4491
      %v4566 = vunpack.c.l.b16 %v4494
      %v4567 = vunpack.c.l.b16 %v4498
      %v4568 = vunpack.c.l.b16 %v4501
      %v4569 = vunpack.c.l.b16 %v4505
      %v4570 = vunpack.c.l.b16 %v4508
      %v4571 = vunpack.c.l.b16 %v4512
      %v4572 = vunpack.c.l.b16 %v4515
      %v4573 = vunpack.c.l.b16 %v4519
      %v4574 = vunpack.c.l.b16 %v4522
      %v4575 = vunpack.c.l.b16 %v4526
      %v4576 = vunpack.c.l.b16 %v4529
      %v4577 = vunpack.c.l.b16 %v4533
      %v4578 = vunpack.c.l.b16 %v4536
      %v4579 = vunpack.c.l.b16 %v4540
      %v4580 = vunpack.c.l.b16 %v4543
      %v4581 = vpack.c.b16 %v4550, %v4549
      %v4582 = vpack.c.b16 %v4552, %v4551
      %v4583 = vpack.c.b16 %v4554, %v4553
      %v4584 = vpack.c.b16 %v4556, %v4555
      %v4585 = vpack.c.b16 %v4558, %v4557
      %v4586 = vpack.c.b16 %v4560, %v4559
      %v4587 = vpack.c.b16 %v4562, %v4561
      %v4588 = vpack.c.b16 %v4564, %v4563
      %v4589 = vpack.c.b16 %v4566, %v4565
      %v4590 = vpack.c.b16 %v4568, %v4567
      %v4591 = vpack.c.b16 %v4570, %v4569
      %v4592 = vpack.c.b16 %v4572, %v4571
      %v4593 = vpack.c.b16 %v4574, %v4573
      %v4594 = vpack.c.b16 %v4576, %v4575
      %v4595 = vpack.c.b16 %v4578, %v4577
      %v4596 = vpack.c.b16 %v4580, %v4579
      %v4601 = vunpack.c.l.b16 %v4545
      %v4602 = vunpack.c.l.b16 %v4546
      %v4603 = vunpack.c.l.b16 %v4547
      %v4604 = vunpack.c.l.b16 %v4548
      %v4605 = vpack.c.b16 %v4602, %v4601
      %v4606 = vpack.c.b16 %v4604, %v4603
      %v4610 = vsel %vm688, %v4581, 0
      %v4613 = vsel %vm688, %v4582, 0
      %v4616 = vsel %vm688, %v4583, 0
      %v4619 = vsel %vm688, %v4584, 0
      %v4622 = vsel %vm688, %v4585, 0
      %v4625 = vsel %vm688, %v4586, 0
      %v4628 = vsel %vm688, %v4587, 0
      %v4631 = vsel %vm688, %v4588, 0
      %v4634 = vsel %vm688, %v4589, 0
      %v4637 = vsel %vm688, %v4590, 0
      %v4640 = vsel %vm688, %v4591, 0
      %v4643 = vsel %vm688, %v4592, 0
      %v4646 = vsel %vm688, %v4593, 0
      %v4649 = vsel %vm688, %v4594, 0
      %v4652 = vsel %vm688, %v4595, 0
      %v4655 = vsel %vm688, %v4596, 0
      %4657 = vmatprep.subr.bf16.mxu0 0
      %4658 = vmatpush1.bf16.msra.mxu0 %v4605
      %4659 = vmatprep.subr.bf16.mxu0 0
      %4660 = vmatpush1.bf16.msra.mxu0 %v4606
      %4661 = vmatprep.subr.bf16.mxu0 0
      %4662 = vmatpush1.bf16.msra.mxu0 0
      %4663 = vmatprep.subr.bf16.mxu0 0
      %4664 = vmatpush1.bf16.msra.mxu0 0
      %4665 = vmatprep.subr.bf16.mxu0 0
      %4666 = vmatpush1.bf16.msra.mxu0 0
      %4667 = vmatprep.subr.bf16.mxu0 0
      %4668 = vmatpush1.bf16.msra.mxu0 0
      %4669 = vmatprep.subr.bf16.mxu0 0
      %4670 = vmatpush1.bf16.msra.mxu0 0
      %4671 = vmatprep.subr.bf16.mxu0 0
      %4672 = vmatpush1.bf16.msra.mxu0 0
      %4673 = vmatprep.subr.bf16.mxu0 0
      %4674 = vmatpush1.bf16.msra.mxu0 0
      %4675 = vmatprep.subr.bf16.mxu0 0
      %4676 = vmatpush1.bf16.msra.mxu0 0
      %4677 = vmatprep.subr.bf16.mxu0 0
      %4678 = vmatpush1.bf16.msra.mxu0 0
      %4679 = vmatprep.subr.bf16.mxu0 0
      %4680 = vmatpush1.bf16.msra.mxu0 0
      %4681 = vmatprep.subr.bf16.mxu0 0
      %4682 = vmatpush1.bf16.msra.mxu0 0
      %4683 = vmatprep.subr.bf16.mxu0 0
      %4684 = vmatpush1.bf16.msra.mxu0 0
      %4685 = vmatprep.subr.bf16.mxu0 0
      %4686 = vmatpush1.bf16.msra.mxu0 0
      %4687 = vmatprep.subr.bf16.mxu0 0
      %4688 = vmatpush1.bf16.msra.mxu0 0
      %4689 = vmatprep.mubr.bf16.mxu0 0
      %4690 = vmatmul.mubr.bf16.gmra.mrb[0].mxu0 %v4610
      %v4691 = vpop.f32.mrb[0].mxu0
      %v4692 = vadd.f32 0.0, %v4691
      %v4693 = vpop.f32.mrb[0].mxu0
      %v4694 = vpop.f32.mrb[0].mxu0
      %v4695 = vadd.f32 0.0, %v4694
      %v4696 = vpop.f32.mrb[0].mxu0
      %4697 = vmatprep.mubr.bf16.mxu0 0
      %4698 = vmatmul.mubr.bf16.gmra.mrb[0].mxu0 %v4613
      %v4699 = vpop.f32.mrb[0].mxu0
      %v4700 = vadd.f32 0.0, %v4699
      %v4701 = vpop.f32.mrb[0].mxu0
      %v4702 = vpop.f32.mrb[0].mxu0
      %v4703 = vadd.f32 0.0, %v4702
      %v4704 = vpop.f32.mrb[0].mxu0
      %4705 = vmatprep.mubr.bf16.mxu0 0
      %4706 = vmatmul.mubr.bf16.gmra.mrb[0].mxu0 %v4616
      %v4707 = vpop.f32.mrb[0].mxu0
      %v4708 = vadd.f32 0.0, %v4707
      %v4709 = vpop.f32.mrb[0].mxu0
      %v4710 = vpop.f32.mrb[0].mxu0
      %v4711 = vadd.f32 0.0, %v4710
      %v4712 = vpop.f32.mrb[0].mxu0
      %4713 = vmatprep.mubr.bf16.mxu0 0
      %4714 = vmatmul.mubr.bf16.gmra.mrb[0].mxu0 %v4619
      %v4715 = vpop.f32.mrb[0].mxu0
      %v4716 = vadd.f32 0.0, %v4715
      %v4717 = vpop.f32.mrb[0].mxu0
      %v4718 = vpop.f32.mrb[0].mxu0
      %v4719 = vadd.f32 0.0, %v4718
      %v4720 = vpop.f32.mrb[0].mxu0
      %4721 = vmatprep.mubr.bf16.mxu0 0
      %4722 = vmatmul.mubr.bf16.gmra.mrb[0].mxu0 %v4622
      %v4723 = vpop.f32.mrb[0].mxu0
      %v4724 = vadd.f32 0.0, %v4723
      %v4725 = vpop.f32.mrb[0].mxu0
      %v4726 = vpop.f32.mrb[0].mxu0
      %v4727 = vadd.f32 0.0, %v4726
      %v4728 = vpop.f32.mrb[0].mxu0
      %4729 = vmatprep.mubr.bf16.mxu0 0
      %4730 = vmatmul.mubr.bf16.gmra.mrb[0].mxu0 %v4625
      %v4731 = vpop.f32.mrb[0].mxu0
      %v4732 = vadd.f32 0.0, %v4731
      %v4733 = vpop.f32.mrb[0].mxu0
      %v4734 = vpop.f32.mrb[0].mxu0
      %v4735 = vadd.f32 0.0, %v4734
      %v4736 = vpop.f32.mrb[0].mxu0
      %4737 = vmatprep.mubr.bf16.mxu0 0
      %4738 = vmatmul.mubr.bf16.gmra.mrb[0].mxu0 %v4628
      %v4739 = vpop.f32.mrb[0].mxu0
      %v4740 = vadd.f32 0.0, %v4739
      %v4741 = vpop.f32.mrb[0].mxu0
      %v4742 = vpop.f32.mrb[0].mxu0
      %v4743 = vadd.f32 0.0, %v4742
      %v4744 = vpop.f32.mrb[0].mxu0
      %4745 = vmatprep.mubr.bf16.mxu0 0
      %4746 = vmatmul.mubr.bf16.gmra.mrb[0].mxu0 %v4631
      %v4747 = vpop.f32.mrb[0].mxu0
      %v4748 = vadd.f32 0.0, %v4747
      %v4749 = vpop.f32.mrb[0].mxu0
      %v4750 = vpop.f32.mrb[0].mxu0
      %v4751 = vadd.f32 0.0, %v4750
      %v4752 = vpop.f32.mrb[0].mxu0
      %4753 = vmatprep.mubr.bf16.mxu0 0
      %4754 = vmatmul.mubr.bf16.gmra.mrb[0].mxu0 %v4634
      %v4755 = vpop.f32.mrb[0].mxu0
      %v4756 = vadd.f32 0.0, %v4755
      %v4757 = vpop.f32.mrb[0].mxu0
      %v4758 = vpop.f32.mrb[0].mxu0
      %v4759 = vadd.f32 0.0, %v4758
      %v4760 = vpop.f32.mrb[0].mxu0
      %4761 = vmatprep.mubr.bf16.mxu0 0
      %4762 = vmatmul.mubr.bf16.gmra.mrb[0].mxu0 %v4637
      %v4763 = vpop.f32.mrb[0].mxu0
      %v4764 = vadd.f32 0.0, %v4763
      %v4765 = vpop.f32.mrb[0].mxu0
      %v4766 = vpop.f32.mrb[0].mxu0
      %v4767 = vadd.f32 0.0, %v4766
      %v4768 = vpop.f32.mrb[0].mxu0
      %4769 = vmatprep.mubr.bf16.mxu0 0
      %4770 = vmatmul.mubr.bf16.gmra.mrb[0].mxu0 %v4640
      %v4771 = vpop.f32.mrb[0].mxu0
      %v4772 = vadd.f32 0.0, %v4771
      %v4773 = vpop.f32.mrb[0].mxu0
      %v4774 = vpop.f32.mrb[0].mxu0
      %v4775 = vadd.f32 0.0, %v4774
      %v4776 = vpop.f32.mrb[0].mxu0
      %4777 = vmatprep.mubr.bf16.mxu0 0
      %4778 = vmatmul.mubr.bf16.gmra.mrb[0].mxu0 %v4643
      %v4779 = vpop.f32.mrb[0].mxu0
      %v4780 = vadd.f32 0.0, %v4779
      %v4781 = vpop.f32.mrb[0].mxu0
      %v4782 = vpop.f32.mrb[0].mxu0
      %v4783 = vadd.f32 0.0, %v4782
      %v4784 = vpop.f32.mrb[0].mxu0
      %4785 = vmatprep.mubr.bf16.mxu0 0
      %4786 = vmatmul.mubr.bf16.gmra.mrb[0].mxu0 %v4646
      %v4787 = vpop.f32.mrb[0].mxu0
      %v4788 = vadd.f32 0.0, %v4787
      %v4789 = vpop.f32.mrb[0].mxu0
      %v4790 = vpop.f32.mrb[0].mxu0
      %v4791 = vadd.f32 0.0, %v4790
      %v4792 = vpop.f32.mrb[0].mxu0
      %4793 = vmatprep.mubr.bf16.mxu0 0
      %4794 = vmatmul.mubr.bf16.gmra.mrb[0].mxu0 %v4649
      %v4795 = vpop.f32.mrb[0].mxu0
      %v4796 = vadd.f32 0.0, %v4795
      %v4797 = vpop.f32.mrb[0].mxu0
      %v4798 = vpop.f32.mrb[0].mxu0
      %v4799 = vadd.f32 0.0, %v4798
      %v4800 = vpop.f32.mrb[0].mxu0
      %4801 = vmatprep.mubr.bf16.mxu0 0
      %4802 = vmatmul.mubr.bf16.gmra.mrb[0].mxu0 %v4652
      %v4803 = vpop.f32.mrb[0].mxu0
      %v4804 = vadd.f32 0.0, %v4803
      %v4805 = vpop.f32.mrb[0].mxu0
      %v4806 = vpop.f32.mrb[0].mxu0
      %v4807 = vadd.f32 0.0, %v4806
      %v4808 = vpop.f32.mrb[0].mxu0
      %4809 = vmatprep.mubr.bf16.mxu0 0
      %4810 = vmatmul.mubr.bf16.gmra.mrb[0].mxu0 %v4655
      %v4811 = vpop.f32.mrb[0].mxu0
      %v4812 = vadd.f32 0.0, %v4811
      %v4813 = vpop.f32.mrb[0].mxu0
      %v4814 = vpop.f32.mrb[0].mxu0
      %v4815 = vadd.f32 0.0, %v4814
      %v4816 = vpop.f32.mrb[0].mxu0
      %4817 = vdwg.mxu0
      %v4818 = vadd.f32 %v4336, %v4692
      %v4819 = vadd.f32 %v4337, %v4695
      %v4820 = vadd.f32 %v4338, %v4700
      %v4821 = vadd.f32 %v4339, %v4703
      %v4822 = vadd.f32 %v4340, %v4708
      %v4823 = vadd.f32 %v4341, %v4711
      %v4824 = vadd.f32 %v4342, %v4716
      %v4825 = vadd.f32 %v4343, %v4719
      %v4826 = vadd.f32 %v4344, %v4724
      %v4827 = vadd.f32 %v4345, %v4727
      %v4828 = vadd.f32 %v4346, %v4732
      %v4829 = vadd.f32 %v4347, %v4735
      %v4830 = vadd.f32 %v4348, %v4740
      %v4831 = vadd.f32 %v4349, %v4743
      %v4832 = vadd.f32 %v4350, %v4748
      %v4833 = vadd.f32 %v4351, %v4751
      %v4834 = vadd.f32 %v4352, %v4756
      %v4835 = vadd.f32 %v4353, %v4759
      %v4836 = vadd.f32 %v4354, %v4764
      %v4837 = vadd.f32 %v4355, %v4767
      %v4838 = vadd.f32 %v4356, %v4772
      %v4839 = vadd.f32 %v4357, %v4775
      %v4840 = vadd.f32 %v4358, %v4780
      %v4841 = vadd.f32 %v4359, %v4783
      %v4842 = vadd.f32 %v4360, %v4788
      %v4843 = vadd.f32 %v4361, %v4791
      %v4844 = vadd.f32 %v4362, %v4796
      %v4845 = vadd.f32 %v4363, %v4799
      %v4846 = vadd.f32 %v4364, %v4804
      %v4847 = vadd.f32 %v4365, %v4807
      %v4848 = vadd.f32 %v4366, %v4812
      %v4849 = vadd.f32 %v4367, %v4815
      %v4850 = vpack.c.bf16 %v4819, %v4818
      %v4851 = vpack.c.bf16 %v4821, %v4820
      %v4852 = vpack.c.bf16 %v4823, %v4822
      %v4853 = vpack.c.bf16 %v4825, %v4824
      %v4854 = vpack.c.bf16 %v4827, %v4826
      %v4855 = vpack.c.bf16 %v4829, %v4828
      %v4856 = vpack.c.bf16 %v4831, %v4830
      %v4857 = vpack.c.bf16 %v4833, %v4832
      %v4858 = vpack.c.bf16 %v4835, %v4834
      %v4859 = vpack.c.bf16 %v4837, %v4836
      %v4860 = vpack.c.bf16 %v4839, %v4838
      %v4861 = vpack.c.bf16 %v4841, %v4840
      %v4862 = vpack.c.bf16 %v4843, %v4842
      %v4863 = vpack.c.bf16 %v4845, %v4844
      %v4864 = vpack.c.bf16 %v4847, %v4846
      %v4865 = vpack.c.bf16 %v4849, %v4848
      %v4882 = vunpack.c.l.b16 %v4850
      %v4883 = vunpack.c.h.b16 %v4850
      %v4884 = vunpack.c.l.b16 %v4851
      %v4885 = vunpack.c.h.b16 %v4851
      %v4886 = vunpack.c.l.b16 %v4852
      %v4887 = vunpack.c.h.b16 %v4852
      %v4888 = vunpack.c.l.b16 %v4853
      %v4889 = vunpack.c.h.b16 %v4853
      %v4890 = vunpack.c.l.b16 %v4854
      %v4891 = vunpack.c.h.b16 %v4854
      %v4892 = vunpack.c.l.b16 %v4855
      %v4893 = vunpack.c.h.b16 %v4855
      %v4894 = vunpack.c.l.b16 %v4856
      %v4895 = vunpack.c.h.b16 %v4856
      %v4896 = vunpack.c.l.b16 %v4857
      %v4897 = vunpack.c.h.b16 %v4857
      %v4898 = vunpack.c.l.b16 %v4858
      %v4899 = vunpack.c.h.b16 %v4858
      %v4900 = vunpack.c.l.b16 %v4859
      %v4901 = vunpack.c.h.b16 %v4859
      %v4902 = vunpack.c.l.b16 %v4860
      %v4903 = vunpack.c.h.b16 %v4860
      %v4904 = vunpack.c.l.b16 %v4861
      %v4905 = vunpack.c.h.b16 %v4861
      %v4906 = vunpack.c.l.b16 %v4862
      %v4907 = vunpack.c.h.b16 %v4862
      %v4908 = vunpack.c.l.b16 %v4863
      %v4909 = vunpack.c.h.b16 %v4863
      %v4910 = vunpack.c.l.b16 %v4864
      %v4911 = vunpack.c.h.b16 %v4864
      %v4912 = vunpack.c.l.b16 %v4865
      %v4913 = vunpack.c.h.b16 %v4865
      %v4914 = vpack.c.b16 %v4882, %v4882
      %v4915 = vpack.c.b16 %v4883, %v4883
      %v4916 = vpack.c.b16 %v4884, %v4884
      %v4917 = vpack.c.b16 %v4885, %v4885
      %v4918 = vpack.c.b16 %v4886, %v4886
      %v4919 = vpack.c.b16 %v4887, %v4887
      %v4920 = vpack.c.b16 %v4888, %v4888
      %v4921 = vpack.c.b16 %v4889, %v4889
      %v4922 = vpack.c.b16 %v4890, %v4890
      %v4923 = vpack.c.b16 %v4891, %v4891
      %v4924 = vpack.c.b16 %v4892, %v4892
      %v4925 = vpack.c.b16 %v4893, %v4893
      %v4926 = vpack.c.b16 %v4894, %v4894
      %v4927 = vpack.c.b16 %v4895, %v4895
      %v4928 = vpack.c.b16 %v4896, %v4896
      %v4929 = vpack.c.b16 %v4897, %v4897
      %v4930 = vpack.c.b16 %v4898, %v4898
      %v4931 = vpack.c.b16 %v4899, %v4899
      %v4932 = vpack.c.b16 %v4900, %v4900
      %v4933 = vpack.c.b16 %v4901, %v4901
      %v4934 = vpack.c.b16 %v4902, %v4902
      %v4935 = vpack.c.b16 %v4903, %v4903
      %v4936 = vpack.c.b16 %v4904, %v4904
      %v4937 = vpack.c.b16 %v4905, %v4905
      %v4938 = vpack.c.b16 %v4906, %v4906
      %v4939 = vpack.c.b16 %v4907, %v4907
      %v4940 = vpack.c.b16 %v4908, %v4908
      %v4941 = vpack.c.b16 %v4909, %v4909
      %v4942 = vpack.c.b16 %v4910, %v4910
      %v4943 = vpack.c.b16 %v4911, %v4911
      %v4944 = vpack.c.b16 %v4912, %v4912
      %v4945 = vpack.c.b16 %v4913, %v4913
      %vm4978 = vcmask 257024
      %4979 = vst.msk [vmem:[%s177] sm:$0xf] %vm4978, %v4914
      %4980 = vst.msk [vmem:[%s177 + $0x4] sm:$0xf] %vm4978, %v4915
      %4981 = vst.msk [vmem:[%s177 + $0x8] sm:$0xf] %vm4978, %v4916
      %4982 = vst.msk [vmem:[%s177 + $0xc] sm:$0xf] %vm4978, %v4917
      %4983 = vst.msk [vmem:[%s177 + $0x10] sm:$0xf] %vm4978, %v4918
      %4984 = vst.msk [vmem:[%s177 + $0x14] sm:$0xf] %vm4978, %v4919
      %4985 = vst.msk [vmem:[%s177 + $0x18] sm:$0xf] %vm4978, %v4920
      %4986 = vst.msk [vmem:[%s177 + $0x1c] sm:$0xf] %vm4978, %v4921
      %4987 = vst.msk [vmem:[%s177 + $0x20] sm:$0xf] %vm4978, %v4922
      %4988 = vst.msk [vmem:[%s177 + $0x24] sm:$0xf] %vm4978, %v4923
      %4989 = vst.msk [vmem:[%s177 + $0x28] sm:$0xf] %vm4978, %v4924
      %4990 = vst.msk [vmem:[%s177 + $0x2c] sm:$0xf] %vm4978, %v4925
      %4991 = vst.msk [vmem:[%s177 + $0x30] sm:$0xf] %vm4978, %v4926
      %4992 = vst.msk [vmem:[%s177 + $0x34] sm:$0xf] %vm4978, %v4927
      %4993 = vst.msk [vmem:[%s177 + $0x38] sm:$0xf] %vm4978, %v4928
      %4994 = vst.msk [vmem:[%s177 + $0x3c] sm:$0xf] %vm4978, %v4929
      %4995 = vst.msk [vmem:[%s177 + $0x40] sm:$0xf] %vm4978, %v4930
      %4996 = vst.msk [vmem:[%s177 + $0x44] sm:$0xf] %vm4978, %v4931
      %4997 = vst.msk [vmem:[%s177 + $0x48] sm:$0xf] %vm4978, %v4932
      %4998 = vst.msk [vmem:[%s177 + $0x4c] sm:$0xf] %vm4978, %v4933
      %4999 = vst.msk [vmem:[%s177 + $0x50] sm:$0xf] %vm4978, %v4934
      %5000 = vst.msk [vmem:[%s177 + $0x54] sm:$0xf] %vm4978, %v4935
      %5001 = vst.msk [vmem:[%s177 + $0x58] sm:$0xf] %vm4978, %v4936
      %5002 = vst.msk [vmem:[%s177 + $0x5c] sm:$0xf] %vm4978, %v4937
      %5003 = vst.msk [vmem:[%s177 + $0x60] sm:$0xf] %vm4978, %v4938
      %5004 = vst.msk [vmem:[%s177 + $0x64] sm:$0xf] %vm4978, %v4939
      %5005 = vst.msk [vmem:[%s177 + $0x68] sm:$0xf] %vm4978, %v4940
      %5006 = vst.msk [vmem:[%s177 + $0x6c] sm:$0xf] %vm4978, %v4941
      %5007 = vst.msk [vmem:[%s177 + $0x70] sm:$0xf] %vm4978, %v4942
      %5008 = vst.msk [vmem:[%s177 + $0x74] sm:$0xf] %vm4978, %v4943
      %5009 = vst.msk [vmem:[%s177 + $0x78] sm:$0xf] %vm4978, %v4944
      %5010 = vst.msk [vmem:[%s177 + $0x7c] sm:$0xf] %vm4978, %v4945
      %v5011 = vsel %vm688, %v4818, 0.0
      %v5012 = vsel %vm688, %v4819, 0.0
      %v5013 = vadd.f32 %v5011, %v5012
      %v5014 = vsel %vm688, %v4820, 0.0
      %v5015 = vadd.f32 %v5013, %v5014
      %v5016 = vsel %vm688, %v4821, 0.0
      %v5017 = vadd.f32 %v5015, %v5016
      %v5018 = vsel %vm688, %v4822, 0.0
      %v5019 = vadd.f32 %v5017, %v5018
      %v5020 = vsel %vm688, %v4823, 0.0
      %v5021 = vadd.f32 %v5019, %v5020
      %v5022 = vsel %vm688, %v4824, 0.0
      %v5023 = vadd.f32 %v5021, %v5022
      %v5024 = vsel %vm688, %v4825, 0.0
      %v5025 = vadd.f32 %v5023, %v5024
      %v5026 = vsel %vm688, %v4826, 0.0
      %v5027 = vadd.f32 %v5025, %v5026
      %v5028 = vsel %vm688, %v4827, 0.0
      %v5029 = vadd.f32 %v5027, %v5028
      %v5030 = vsel %vm688, %v4828, 0.0
      %v5031 = vadd.f32 %v5029, %v5030
      %v5032 = vsel %vm688, %v4829, 0.0
      %v5033 = vadd.f32 %v5031, %v5032
      %v5034 = vsel %vm688, %v4830, 0.0
      %v5035 = vadd.f32 %v5033, %v5034
      %v5036 = vsel %vm688, %v4831, 0.0
      %v5037 = vadd.f32 %v5035, %v5036
      %v5038 = vsel %vm688, %v4832, 0.0
      %v5039 = vadd.f32 %v5037, %v5038
      %v5040 = vsel %vm688, %v4833, 0.0
      %v5041 = vadd.f32 %v5039, %v5040
      %v5042 = vsel %vm688, %v4834, 0.0
      %v5043 = vadd.f32 %v5041, %v5042
      %v5044 = vsel %vm688, %v4835, 0.0
      %v5045 = vadd.f32 %v5043, %v5044
      %v5046 = vsel %vm688, %v4836, 0.0
      %v5047 = vadd.f32 %v5045, %v5046
      %v5048 = vsel %vm688, %v4837, 0.0
      %v5049 = vadd.f32 %v5047, %v5048
      %v5050 = vsel %vm688, %v4838, 0.0
      %v5051 = vadd.f32 %v5049, %v5050
      %v5052 = vsel %vm688, %v4839, 0.0
      %v5053 = vadd.f32 %v5051, %v5052
      %v5054 = vsel %vm688, %v4840, 0.0
      %v5055 = vadd.f32 %v5053, %v5054
      %v5056 = vsel %vm688, %v4841, 0.0
      %v5057 = vadd.f32 %v5055, %v5056
      %v5058 = vsel %vm688, %v4842, 0.0
      %v5059 = vadd.f32 %v5057, %v5058
      %v5060 = vsel %vm688, %v4843, 0.0
      %v5061 = vadd.f32 %v5059, %v5060
      %v5062 = vsel %vm688, %v4844, 0.0
      %v5063 = vadd.f32 %v5061, %v5062
      %v5064 = vsel %vm688, %v4845, 0.0
      %v5065 = vadd.f32 %v5063, %v5064
      %v5066 = vsel %vm688, %v4846, 0.0
      %v5067 = vadd.f32 %v5065, %v5066
      %v5068 = vsel %vm688, %v4847, 0.0
      %v5069 = vadd.f32 %v5067, %v5068
      %v5070 = vsel %vm688, %v4848, 0.0
      %v5071 = vadd.f32 %v5069, %v5070
      %v5072 = vsel %vm688, %v4849, 0.0
      %v5073 = vadd.f32 %v5071, %v5072
      %v5074 = vrot.slane %v5073, 4
      %v5075 = vadd.f32 %v5073, %v5074
      %v5076 = vrot.slane %v5075, 2
      %v5077 = vadd.f32 %v5075, %v5076
      %v5078 = vrot.slane %v5077, 1
      %v5079 = vadd.f32 %v5077, %v5078
      %v5080 = vmul.f32 %v4818, %v4818
      %v5081 = vmul.f32 %v4819, %v4819
      %v5082 = vmul.f32 %v4820, %v4820
      %v5083 = vmul.f32 %v4821, %v4821
      %v5084 = vmul.f32 %v4822, %v4822
      %v5085 = vmul.f32 %v4823, %v4823
      %v5086 = vmul.f32 %v4824, %v4824
      %v5087 = vmul.f32 %v4825, %v4825
      %v5088 = vmul.f32 %v4826, %v4826
      %v5089 = vmul.f32 %v4827, %v4827
      %v5090 = vmul.f32 %v4828, %v4828
      %v5091 = vmul.f32 %v4829, %v4829
      %v5092 = vmul.f32 %v4830, %v4830
      %v5093 = vmul.f32 %v4831, %v4831
      %v5094 = vmul.f32 %v4832, %v4832
      %v5095 = vmul.f32 %v4833, %v4833
      %v5096 = vmul.f32 %v4834, %v4834
      %v5097 = vmul.f32 %v4835, %v4835
      %v5098 = vmul.f32 %v4836, %v4836
      %v5099 = vmul.f32 %v4837, %v4837
      %v5100 = vmul.f32 %v4838, %v4838
      %v5101 = vmul.f32 %v4839, %v4839
      %v5102 = vmul.f32 %v4840, %v4840
      %v5103 = vmul.f32 %v4841, %v4841
      %v5104 = vmul.f32 %v4842, %v4842
      %v5105 = vmul.f32 %v4843, %v4843
      %v5106 = vmul.f32 %v4844, %v4844
      %v5107 = vmul.f32 %v4845, %v4845
      %v5108 = vmul.f32 %v4846, %v4846
      %v5109 = vmul.f32 %v4847, %v4847
      %v5110 = vmul.f32 %v4848, %v4848
      %v5111 = vmul.f32 %v4849, %v4849
      %v5112 = vsel %vm688, %v5080, 0.0
      %v5113 = vsel %vm688, %v5081, 0.0
      %v5114 = vadd.f32 %v5112, %v5113
      %v5115 = vsel %vm688, %v5082, 0.0
      %v5116 = vadd.f32 %v5114, %v5115
      %v5117 = vsel %vm688, %v5083, 0.0
      %v5118 = vadd.f32 %v5116, %v5117
      %v5119 = vsel %vm688, %v5084, 0.0
      %v5120 = vadd.f32 %v5118, %v5119
      %v5121 = vsel %vm688, %v5085, 0.0
      %v5122 = vadd.f32 %v5120, %v5121
      %v5123 = vsel %vm688, %v5086, 0.0
      %v5124 = vadd.f32 %v5122, %v5123
      %v5125 = vsel %vm688, %v5087, 0.0
      %v5126 = vadd.f32 %v5124, %v5125
      %v5127 = vsel %vm688, %v5088, 0.0
      %v5128 = vadd.f32 %v5126, %v5127
      %v5129 = vsel %vm688, %v5089, 0.0
      %v5130 = vadd.f32 %v5128, %v5129
      %v5131 = vsel %vm688, %v5090, 0.0
      %v5132 = vadd.f32 %v5130, %v5131
      %v5133 = vsel %vm688, %v5091, 0.0
      %v5134 = vadd.f32 %v5132, %v5133
      %v5135 = vsel %vm688, %v5092, 0.0
      %v5136 = vadd.f32 %v5134, %v5135
      %v5137 = vsel %vm688, %v5093, 0.0
      %v5138 = vadd.f32 %v5136, %v5137
      %v5139 = vsel %vm688, %v5094, 0.0
      %v5140 = vadd.f32 %v5138, %v5139
      %v5141 = vsel %vm688, %v5095, 0.0
      %v5142 = vadd.f32 %v5140, %v5141
      %v5143 = vsel %vm688, %v5096, 0.0
      %v5144 = vadd.f32 %v5142, %v5143
      %v5145 = vsel %vm688, %v5097, 0.0
      %v5146 = vadd.f32 %v5144, %v5145
      %v5147 = vsel %vm688, %v5098, 0.0
      %v5148 = vadd.f32 %v5146, %v5147
      %v5149 = vsel %vm688, %v5099, 0.0
      %v5150 = vadd.f32 %v5148, %v5149
      %v5151 = vsel %vm688, %v5100, 0.0
      %v5152 = vadd.f32 %v5150, %v5151
      %v5153 = vsel %vm688, %v5101, 0.0
      %v5154 = vadd.f32 %v5152, %v5153
      %v5155 = vsel %vm688, %v5102, 0.0
      %v5156 = vadd.f32 %v5154, %v5155
      %v5157 = vsel %vm688, %v5103, 0.0
      %v5158 = vadd.f32 %v5156, %v5157
      %v5159 = vsel %vm688, %v5104, 0.0
      %v5160 = vadd.f32 %v5158, %v5159
      %v5161 = vsel %vm688, %v5105, 0.0
      %v5162 = vadd.f32 %v5160, %v5161
      %v5163 = vsel %vm688, %v5106, 0.0
      %v5164 = vadd.f32 %v5162, %v5163
      %v5165 = vsel %vm688, %v5107, 0.0
      %v5166 = vadd.f32 %v5164, %v5165
      %v5167 = vsel %vm688, %v5108, 0.0
      %v5168 = vadd.f32 %v5166, %v5167
      %v5169 = vsel %vm688, %v5109, 0.0
      %v5170 = vadd.f32 %v5168, %v5169
      %v5171 = vsel %vm688, %v5110, 0.0
      %v5172 = vadd.f32 %v5170, %v5171
      %v5173 = vsel %vm688, %v5111, 0.0
      %v5174 = vadd.f32 %v5172, %v5173
      %v5175 = vrot.slane %v5174, 4
      %v5176 = vadd.f32 %v5174, %v5175
      %v5177 = vrot.slane %v5176, 2
      %v5178 = vadd.f32 %v5176, %v5177
      %v5179 = vrot.slane %v5178, 1
      %v5180 = vadd.f32 %v5178, %v5179
      %vm5181 = vcmask 1040384
      %v5182 = vsel %vm5181, %v5079, %v5180
      %vm5183 = vcmask 254976
      %5184 = vst.msk [vmem:[%s182] sm:$0x3] %vm5183, %v5182
      %s5185 = smul.u32 32, %s15
      %p5186 = scmp.lt.s32.totalorder %s5185, 63
      %s5187 = scalar_select %p5186, %s5185, 63
      %s5188 = smul.addr %s5187, 4
      %s5189 = scalar_lea.vmem %s2, %s5188
      %p5190 = scmp.lt.s32.totalorder %s15, 1
      %s5191 = scalar_select %p5190, %s15, 1
      %s5192 = smul.addr %s5191, 2
      %s5193 = scalar_lea.vmem %s3, %s5192
      // Predicated region
      $region29: #{dpn_block_forward.4} parent=27 // pred_check
        %p5194 = pneg %p80
      $region30: #{dpn_block_forward.4} parent=27 // pred_check_branch
        %5196 = sbr.rel (%p5194) target = $region32
      $region31: #{dpn_block_forward.4} parent=27 // pred_region
        %s5197 = smul.u32 32, %s15
      $region32: #{dpn_block_forward.4} parent=27 // pred_fallthru
        _
      // Predicated region
      $region33: #{dpn_block_forward.4} parent=27 // pred_check
        %p5198 = pneg %p106
      $region34: #{dpn_block_forward.4} parent=27 // pred_check_branch
        %5200 = sbr.rel (%p5198) target = $region36
      $region35: #{dpn_block_forward.4} parent=27 // pred_region
        _
      $region36: #{dpn_block_forward.4} parent=27 // pred_fallthru
        _
    $region28: #{dpn_block_forward.4} parent=5 // pred_fallthru
      _
    %p5201 = scmp.le.s32.totalorder 2, %s10
    // Predicated region
    $region37: #{dpn_block_forward.4} parent=5 // pred_check
      %p5202 = pneg %p5201
    $region38: #{dpn_block_forward.4} parent=5 // pred_check_branch
      %5204 = sbr.rel (%p5202) target = $region40
    $region39: #{dpn_block_forward.4} parent=5 // pred_region
      %s5205 = ssub.s32 %s10, 2
      // Predicated region
      $region41: #{dpn_block_forward.4} parent=39 // pred_check
        %p5206 = pneg %p86
      $region42: #{dpn_block_forward.4} parent=39 // pred_check_branch
        %5208 = sbr.rel (%p5206) target = $region44
      $region43: #{dpn_block_forward.4} parent=39 // pred_region
        %s5209 = smul.u32 32, %s16
        %p5210 = scmp.lt.s32.totalorder %s5209, 63
        %s5211 = scalar_select %p5210, %s5209, 63
        %s5212 = smul.addr %s5211, 4
        %s5213 = scalar_lea.vmem %s2, %s5212
      $region44: #{dpn_block_forward.4} parent=39 // pred_fallthru
        _
      // Predicated region
      $region45: #{dpn_block_forward.4} parent=39 // pred_check
        %p5214 = pneg %p112
      $region46: #{dpn_block_forward.4} parent=39 // pred_check_branch
        %5216 = sbr.rel (%p5214) target = $region48
      $region47: #{dpn_block_forward.4} parent=39 // pred_region
        %p5217 = scmp.lt.s32.totalorder %s16, 1
        %s5218 = scalar_select %p5217, %s16, 1
        %s5219 = smul.addr %s5218, 2
        %s5220 = scalar_lea.vmem %s3, %s5219
      $region48: #{dpn_block_forward.4} parent=39 // pred_fallthru
        _
    $region40: #{dpn_block_forward.4} parent=5 // pred_fallthru
      _
  $region6: #{dpn_block_forward.4} parent=0 // loop_footer
    %s14 = sadd.s32 1, %s10
  $region7: #{dpn_block_forward.4} parent=0 // loop_footer_branch
    %9 = sbr.rel target = $region3
  $region8: #{dpn_block_forward.4} parent=0 // loop_exit
    _

</llo_original>
